<compile_context>
chip_gen: v5e
topology: v5e:2x2
jax: 0.10.0
libtpu: 0.0.40
codegen_flags: <defaults>
</compile_context>

<pallas_src>
import functools
import math

import jax
import jax.numpy as jnp
from jax.experimental import pallas as pl
from jax.experimental.pallas import tpu as pltpu


# ----------------------------- tiling helpers ------------------------------

def _pick_row_tile(m, cap=512):
    """Largest row tile <= cap that is a multiple of 8 and divides m; else a
    full-dim block (m <= cap) or cap with a cdiv grid (Pallas masks the tail)."""
    if m <= cap:
        return m
    for t in range(cap, 7, -8):
        if m % t == 0:
            return t
    return cap


def _pick_col_tile(n, cap=256, align=128):
    """Largest lane-dense (multiple-of-128) tile <= cap dividing n, else full n."""
    if n <= cap:
        return n
    for t in range(cap - cap % align, align - 1, -align):
        if n % t == 0:
            return t
    return n


def _pick_rows(Hs, Ws, tok_cap=512):
    """Rows per dwconv chunk: divides Hs, chunk token count multiple of 8,
    chunk <= tok_cap tokens when possible."""
    cands = [r for r in range(1, Hs + 1) if Hs % r == 0 and (r * Ws) % 8 == 0]
    if not cands:
        return Hs
    within = [r for r in cands if r * Ws <= tok_cap]
    return max(within) if within else min(cands)


def _lcm(a, b):
    return a * b // math.gcd(a, b)


def _vmem_capacity_bytes():
    try:
        info = pltpu.get_tpu_info()
        cap = getattr(info, "vmem_capacity_bytes", None)
        if cap:
            return int(cap)
    except Exception:
        pass
    return 64 << 20          # conservative default: v7x per-TensorCore VMEM


def _vmem_limit(est_bytes):
    """Explicit scoped-VMEM limit, clamped to physical VMEM minus headroom."""
    ceiling = max(_vmem_capacity_bytes() - (12 << 20), 16 << 20)
    want = max(2 * est_bytes + (4 << 20), 32 << 20)
    return int(min(want, ceiling))


# ----------------------------- linear kernel -------------------------------

def _linear_kernel(x_ref, w_ref, b_ref, o_ref, acc_ref, *, mxu_dtype):
    @pl.when(pl.program_id(2) == 0)
    def _():
        acc_ref[...] = jnp.zeros_like(acc_ref)

    x = x_ref[...]
    if x.dtype != mxu_dtype:
        x = x.astype(mxu_dtype)
    w = w_ref[...]
    if w.dtype != mxu_dtype:
        w = w.astype(mxu_dtype)
    acc_ref[...] += jnp.dot(x, w, preferred_element_type=jnp.float32)

    @pl.when(pl.program_id(2) == pl.num_programs(2) - 1)
    def _():
        o_ref[...] = (acc_ref[...] + b_ref[...].astype(jnp.float32)
                      ).astype(o_ref.dtype)


def linear_pallas(x2d, w, b, *, out_dtype=None, mxu_dtype=jnp.bfloat16):
    """y = x @ w + b   (M,K)x(K,N)->(M,N); bf16 MXU operands, f32 accumulate."""
    M, K = x2d.shape
    Kw, N = w.shape
    assert K == Kw
    out_dtype = out_dtype or x2d.dtype

    tm = _pick_row_tile(M, cap=512)
    tn = _pick_col_tile(N, cap=256)
    tk = _pick_col_tile(K, cap=256)
    grid = (pl.cdiv(M, tm), N // tn, K // tk)

    xb = jnp.dtype(x2d.dtype).itemsize
    wb = jnp.dtype(w.dtype).itemsize
    ob = jnp.dtype(out_dtype).itemsize
    est = 2 * (tm * tk * xb + tk * tn * wb + tn * 4 + tm * tn * ob) + tm * tn * 4

    kern = functools.partial(_linear_kernel, mxu_dtype=mxu_dtype)
    return pl.pallas_call(
        kern,
        out_shape=jax.ShapeDtypeStruct((M, N), out_dtype),
        grid_spec=pltpu.PrefetchScalarGridSpec(
            num_scalar_prefetch=0,
            grid=grid,
            in_specs=[
                pl.BlockSpec((tm, tk), lambda i, j, k: (i, k)),
                pl.BlockSpec((tk, tn), lambda i, j, k: (k, j)),
                pl.BlockSpec((1, tn), lambda i, j, k: (0, j)),
            ],
            out_specs=pl.BlockSpec((tm, tn), lambda i, j, k: (i, j)),
            scratch_shapes=[pltpu.VMEM((tm, tn), jnp.float32)],
        ),
        compiler_params=pltpu.CompilerParams(
            dimension_semantics=("parallel", "parallel", "arbitrary"),
            vmem_limit_bytes=_vmem_limit(est)),
    )(x2d, w, b.reshape(1, N).astype(jnp.float32))


# ----------------------- depthwise-conv + GELU kernel ------------------------

def _dwconv_gelu_kernel(mid_ref, up_ref, dn_ref, w_ref, b_ref, hid_ref, o_ref,
                        *, Ws, HB, P):
    """3x3 depthwise conv (stride 1, SAME) + exact GELU on a chunk of R image
    rows ((T, tc) tokens) with one halo row above/below.  `hid_ref` is the
    aliased full output buffer (untouched here)."""
    del hid_ref
    i = pl.program_id(2)
    nchunks = pl.num_programs(2)
    f32 = jnp.float32
    T, tc = o_ref.shape

    mid = mid_ref[...].astype(f32)                       # (T, tc)
    up_row = up_ref[HB - Ws:, :].astype(f32)             # (Ws, tc)
    dn_row = dn_ref[:Ws, :].astype(f32)                  # (Ws, tc)
    zero_row = jnp.zeros_like(up_row)
    up_row = jnp.where(i > 0, up_row, zero_row)          # top image row -> zero pad
    dn_row = jnp.where(i < nchunks - 1, dn_row, zero_row)
    zpad = jnp.zeros((P, tc), f32)                       # tiny aligned apron
    xp = jnp.concatenate([zpad, up_row, mid, dn_row, zpad], axis=0)

    # column-within-row coordinate: masks the row wrap of the +/-1 column taps
    tok = jax.lax.broadcasted_iota(jnp.int32, (T, tc), 0)
    col = (tok & (Ws - 1)) if (Ws & (Ws - 1)) == 0 else (tok % Ws)
    not_left = col != 0
    not_right = col != (Ws - 1)

    w = w_ref[...].astype(f32)                           # (3, 3, tc)
    acc = jnp.zeros((T, tc), f32)
    # TODO(synk): on v6e/v7x do these MACs in bf16 and use pltpu.roll for the
    # +/-1 column taps (XLU) instead of materialized shifted slices.
    for ky in range(3):
        for kx in range(3):
            start = P + ky * Ws + (kx - 1)
            tap = xp[start:start + T, :]
            if kx == 0:
                tap = jnp.where(not_left, tap, 0.0)
            elif kx == 2:
                tap = jnp.where(not_right, tap, 0.0)
            acc = acc + tap * w[ky, kx]

    z = acc + b_ref[...].astype(f32)
    # exact (erf) GELU fused here (torch.nn.GELU default): computed once per
    # element on the f32 accumulator instead of inside the fc2 K-grid.
    o_ref[...] = (0.5 * z * (1.0 + jax.lax.erf(z * 0.7071067811865476))
                  ).astype(o_ref.dtype)


def dwconv_gelu_scale(h, w33c, bias, hidden, *, tok_off, Hs, Ws):
    """GELU(dwconv3x3(h[:, tok_off:tok_off+Hs*Ws, :])) written in place into the
    matching token range of `hidden` (aliased output); returns the full buffer."""
    B, N, C = h.shape
    T_s = Hs * Ws
    assert tok_off % T_s == 0 and tok_off + T_s <= N

    tc = _pick_col_tile(C, cap=256)
    R = _pick_rows(Hs, Ws, tok_cap=512)
    chunk = R * Ws
    assert chunk % 8 == 0, (
        "dwconv chunk must be sublane aligned; odd Hs*Ws needs manual-DMA halos")
    n_chunks = Hs // R
    HB = _lcm(Ws, 8)                   # halo block: one image row, 8-aligned
    assert chunk % HB == 0 and tok_off % HB == 0 and tok_off % chunk == 0
    mid_base = tok_off // chunk
    row_base = tok_off // HB
    stride = chunk // HB
    last_hb = row_base + T_s // HB - 1
    P = 8                              # zero apron rows each side of the slab

    # rough per-step working set: in/out double buffers + f32 temporaries
    est = chunk * tc * (4 * 14) + 2 * HB * tc * 8 + 2 * chunk * tc * 4

    kern = functools.partial(_dwconv_gelu_kernel, Ws=Ws, HB=HB, P=P)
    return pl.pallas_call(
        kern,
        out_shape=jax.ShapeDtypeStruct((B, N, C), hidden.dtype),
        grid_spec=pltpu.PrefetchScalarGridSpec(
            num_scalar_prefetch=0,
            grid=(B, C // tc, n_chunks),
            in_specs=[
                pl.BlockSpec((None, chunk, tc),
                             lambda b, c, i: (b, mid_base + i, c)),
                pl.BlockSpec((None, HB, tc),
                             lambda b, c, i: (b, jnp.maximum(
                                 row_base + i * stride - 1, row_base), c)),
                pl.BlockSpec((None, HB, tc),
                             lambda b, c, i: (b, jnp.minimum(
                                 row_base + (i + 1) * stride, last_hb), c)),
                pl.BlockSpec((3, 3, tc), lambda b, c, i: (0, 0, c)),
                pl.BlockSpec((1, tc), lambda b, c, i: (0, c)),
                pl.BlockSpec(memory_space=pl.ANY),   # aliased destination (untouched)
            ],
            out_specs=pl.BlockSpec((None, chunk, tc),
                                   lambda b, c, i: (b, mid_base + i, c)),
        ),
        compiler_params=pltpu.CompilerParams(
            dimension_semantics=("parallel", "parallel", "arbitrary"),
            vmem_limit_bytes=_vmem_limit(est)),
        input_output_aliases={5: 0},
    )(h, h, h, w33c, bias.reshape(1, C).astype(jnp.float32), hidden)


# ------------------------------ ConvFFN glue --------------------------------

def init_params(key, in_features, hidden_features=None, out_features=None):
    out_features = out_features or in_features
    hidden_features = hidden_features or in_features
    k1, k2, k3, k4, k5, k6 = jax.random.split(key, 6)
    s1 = 1.0 / math.sqrt(in_features)
    s2 = 1.0 / math.sqrt(hidden_features)
    return {
        "fc1_w": jax.random.uniform(k1, (in_features, hidden_features),
                                    jnp.float32, -s1, s1),
        "fc1_b": jax.random.uniform(k2, (hidden_features,), jnp.float32, -s1, s1),
        "dw_w": jax.random.uniform(k3, (3, 3, hidden_features),
                                   jnp.float32, -1.0 / 3.0, 1.0 / 3.0),
        "dw_b": jax.random.uniform(k4, (hidden_features,), jnp.float32,
                                   -1.0 / 3.0, 1.0 / 3.0),
        "fc2_w": jax.random.uniform(k5, (hidden_features, out_features),
                                    jnp.float32, -s2, s2),
        "fc2_b": jax.random.uniform(k6, (out_features,), jnp.float32, -s2, s2),
    }


def conv_ffn_forward(params, x, H, W):
    """Matches ConvFFN.forward(x, H, W); x is (B, N, C_in) with N = 21*(H*W//4).
    drop = 0.0 => Dropout is the identity (inference semantics)."""
    B, N, Cin = x.shape
    n = N // 21
    assert N == 21 * n and H * W == 4 * n
    Chid = params["fc1_w"].shape[1]
    Cout = params["fc2_w"].shape[1]

    # weights pre-cast to bf16 once: halves weight DMA, no per-step cast
    w1 = params["fc1_w"].astype(jnp.bfloat16)
    w2 = params["fc2_w"].astype(jnp.bfloat16)

    # fc1: bf16 MXU operands, f32 accumulate, bf16 hidden activations in HBM
    h = linear_pallas(x.reshape(B * N, Cin), w1, params["fc1_b"],
                      out_dtype=jnp.bfloat16).reshape(B, N, Chid)

    # dwconv + fused GELU per spatial scale, all scales writing into one shared
    # (B, N, Chid) buffer (aliased output) -> no per-scale concat, single fc2.
    hidden = jnp.zeros((B, N, Chid), jnp.bfloat16)
    scales = ((2 * H, 2 * W, 0), (H, W, 16 * n), (H // 2, W // 2, 20 * n))
    for Hs, Ws, off in scales:
        hidden = dwconv_gelu_scale(h, params["dw_w"], params["dw_b"], hidden,
                                   tok_off=off, Hs=Hs, Ws=Ws)

    out = linear_pallas(hidden.reshape(B * N, Chid), w2, params["fc2_b"],
                        out_dtype=x.dtype)
    return out.reshape(B, N, Cout)


# ------------------------------ JAX reference --------------------------------

def ref_forward(params, x, H, W):
    B, N, Cin = x.shape
    n = N // 21
    h = x @ params["fc1_w"] + params["fc1_b"]
    C = h.shape[-1]

    def dw(t, Hs, Ws):
        t = t.reshape(B, Hs, Ws, C)
        w = params["dw_w"][:, :, None, :]  # (3,3,1,C) HWIO, depthwise
        o = jax.lax.conv_general_dilated(
            t, w, window_strides=(1, 1), padding="SAME",
            dimension_numbers=("NHWC", "HWIO", "NHWC"),
            feature_group_count=C)
        return (o + params["dw_b"]).reshape(B, Hs * Ws, C)

    y = jnp.concatenate([
        dw(h[:, : 16 * n, :], 2 * H, 2 * W),
        dw(h[:, 16 * n: 20 * n, :], H, W),
        dw(h[:, 20 * n:, :], H // 2, W // 2),
    ], axis=1)
    y = jax.nn.gelu(y, approximate=False)
    return y @ params["fc2_w"] + params["fc2_b"]


# ---------------------------------- main -------------------------------------

if __name__ == "__main__":
    B, H, W = 2, 8, 8
    in_features, hidden_features = 16, 32
    n = (H * W) // 4
    N = 21 * n  # 336 tokens across the 3 scales

    key = jax.random.PRNGKey(0)
    kx, kp = jax.random.split(key)
    x = jax.random.normal(kx, (B, N, in_features), jnp.float32)
    params = init_params(kp, in_features, hidden_features)

    fwd = jax.jit(conv_ffn_forward, static_argnums=(2, 3))
    out = jax.block_until_ready(fwd(params, x, H, W))
    ref = jax.block_until_ready(ref_forward(params, x, H, W))

    assert out.shape == (B, N, in_features), out.shape
    err = float(jnp.max(jnp.abs(out - ref)))
    # bf16 MXU operands + bf16 intermediate activations => loosened tolerance
    assert err < 2e-2, f"max abs err vs f32 reference: {err}"
    print("KERNEL_OK")
</pallas_src>

<mosaic_0001>
module attributes {stable_mosaic.version = 11 : i64} {
  func.func @_linear_kernel(%arg0: i32, %arg1: i32, %arg2: i32, %arg3: memref<336x16xf32, #tpu.memory_space<vmem>>, %arg4: memref<16x32xbf16, #tpu.memory_space<vmem>>, %arg5: memref<1x32xf32, #tpu.memory_space<vmem>>, %arg6: memref<336x32xbf16, #tpu.memory_space<vmem>>, %arg7: memref<336x32xf32, #tpu.memory_space<vmem>>) attributes {dimension_semantics = [#tpu.dimension_semantics<parallel>, #tpu.dimension_semantics<parallel>, #tpu.dimension_semantics<arbitrary>], iteration_bounds = array<i64: 2, 1, 1>, scalar_prefetch = 0 : i64, scratch_operands = 1 : i64, tpu.core_type = #tpu.core_type<tc>, window_params = [{transform_indices = @transform_0, window_bounds = array<i64: 336, 16>}, {transform_indices = @transform_1, window_bounds = array<i64: 16, 32>}, {transform_indices = @transform_2, window_bounds = array<i64: 1, 32>}, {transform_indices = @transform_3, window_bounds = array<i64: 336, 32>}]} {
    %c0_i32 = arith.constant 0 : i32
    %0 = arith.cmpi eq, %arg2, %c0_i32 : i32
    %1 = arith.extui %0 : i1 to i32
    %c0_i32_0 = arith.constant 0 : i32
    %2 = arith.cmpi ne, %1, %c0_i32_0 : i32
    scf.if %2 {
      %cst_10 = arith.constant 0.000000e+00 : f32
      %13 = vector.broadcast %cst_10 : f32 to vector<336x32xf32>
      %c0_11 = arith.constant 0 : index
      %c0_12 = arith.constant 0 : index
      %14 = vector.load %arg7[%c0_11, %c0_12] : memref<336x32xf32, #tpu.memory_space<vmem>>, vector<336x32xf32>
      tpu.vector_store %arg7[%c0_11, %c0_12], %13 {strides = array<i32>} : memref<336x32xf32, #tpu.memory_space<vmem>>, vector<336x32xf32>,
    } else {
    }
    %c0 = arith.constant 0 : index
    %c0_1 = arith.constant 0 : index
    %3 = vector.load %arg3[%c0, %c0_1] : memref<336x16xf32, #tpu.memory_space<vmem>>, vector<336x16xf32>
    %4 = arith.truncf %3 : vector<336x16xf32> to vector<336x16xbf16>
    %c0_2 = arith.constant 0 : index
    %c0_3 = arith.constant 0 : index
    %5 = vector.load %arg4[%c0_2, %c0_3] : memref<16x32xbf16, #tpu.memory_space<vmem>>, vector<16x32xbf16>
    %c0_4 = arith.constant 0 : index
    %c0_5 = arith.constant 0 : index
    %6 = vector.load %arg7[%c0_4, %c0_5] : memref<336x32xf32, #tpu.memory_space<vmem>>, vector<336x32xf32>
    %cst = arith.constant dense<0.000000e+00> : vector<336x32xf32>
    %7 = tpu.matmul %4, %5, %cst {dimension_numbers = #tpu.dot_dimension_numbers<[1], [0], [0], [1], [0, 0, 1, 1], [], []>} : vector<336x16xbf16>, vector<16x32xbf16>, vector<336x32xf32> -> vector<336x32xf32>
    %8 = arith.addf %6, %7 : vector<336x32xf32>
    %c0_6 = arith.constant 0 : index
    %c0_7 = arith.constant 0 : index
    %9 = vector.load %arg7[%c0_6, %c0_7] : memref<336x32xf32, #tpu.memory_space<vmem>>, vector<336x32xf32>
    tpu.vector_store %arg7[%c0_6, %c0_7], %8 {strides = array<i32>} : memref<336x32xf32, #tpu.memory_space<vmem>>, vector<336x32xf32>,
    %c0_i32_8 = arith.constant 0 : i32
    %10 = arith.cmpi eq, %arg2, %c0_i32_8 : i32
    %11 = arith.extui %10 : i1 to i32
    %c0_i32_9 = arith.constant 0 : i32
    %12 = arith.cmpi ne, %11, %c0_i32_9 : i32
    scf.if %12 {
      %c0_10 = arith.constant 0 : index
      %c0_11 = arith.constant 0 : index
      %13 = vector.load %arg7[%c0_10, %c0_11] : memref<336x32xf32, #tpu.memory_space<vmem>>, vector<336x32xf32>
      %c0_12 = arith.constant 0 : index
      %c0_13 = arith.constant 0 : index
      %14 = vector.load %arg5[%c0_12, %c0_13] : memref<1x32xf32, #tpu.memory_space<vmem>>, vector<1x32xf32>
      %15 = vector.broadcast %14 : vector<1x32xf32> to vector<336x32xf32>
      %16 = arith.addf %13, %15 : vector<336x32xf32>
      %17 = arith.truncf %16 : vector<336x32xf32> to vector<336x32xbf16>
      %c0_14 = arith.constant 0 : index
      %c0_15 = arith.constant 0 : index
      %18 = vector.load %arg6[%c0_14, %c0_15] : memref<336x32xbf16, #tpu.memory_space<vmem>>, vector<336x32xbf16>
      tpu.vector_store %arg6[%c0_14, %c0_15], %17 {strides = array<i32>} : memref<336x32xbf16, #tpu.memory_space<vmem>>, vector<336x32xbf16>,
    } else {
    }
    return
  }
  func.func @transform_0(%arg0: i32, %arg1: i32, %arg2: i32) -> (i32, i32) {
    %c0_i32 = arith.constant 0 : i32
    return %arg0, %arg2 : i32, i32
  }
  func.func @transform_1(%arg0: i32, %arg1: i32, %arg2: i32) -> (i32, i32) {
    %c0_i32 = arith.constant 0 : i32
    return %arg2, %arg1 : i32, i32
  }
  func.func @transform_2(%arg0: i32, %arg1: i32, %arg2: i32) -> (i32, i32) {
    %c0_i32 = arith.constant 0 : i32
    %c0_i32_0 = arith.constant 0 : i32
    return %c0_i32, %arg1 : i32, i32
  }
  func.func @transform_3(%arg0: i32, %arg1: i32, %arg2: i32) -> (i32, i32) {
    %c0_i32 = arith.constant 0 : i32
    return %arg0, %arg1 : i32, i32
  }
}

module attributes {stable_mosaic.version = 11 : i64} {
  func.func @_dwconv_gelu_kernel(%arg0: i32, %arg1: i32, %arg2: i32, %arg3: memref<1x256x32xbf16, #tpu.memory_space<vmem>>, %arg4: memref<1x16x32xbf16, #tpu.memory_space<vmem>>, %arg5: memref<1x16x32xbf16, #tpu.memory_space<vmem>>, %arg6: memref<3x3x32xf32, #tpu.memory_space<vmem>>, %arg7: memref<1x32xf32, #tpu.memory_space<vmem>>, %arg8: memref<2x336x32xbf16, #tpu.memory_space<any>>, %arg9: memref<1x256x32xbf16, #tpu.memory_space<vmem>>) attributes {dimension_semantics = [#tpu.dimension_semantics<parallel>, #tpu.dimension_semantics<parallel>, #tpu.dimension_semantics<arbitrary>], iteration_bounds = array<i64: 2, 1, 1>, scalar_prefetch = 0 : i64, scratch_operands = 0 : i64, tpu.core_type = #tpu.core_type<tc>, window_params = [{transform_indices = @transform_0, window_bounds = array<i64: 1, 256, 32>}, {transform_indices = @transform_1, window_bounds = array<i64: 1, 16, 32>}, {transform_indices = @transform_2, window_bounds = array<i64: 1, 16, 32>}, {transform_indices = @transform_3, window_bounds = array<i64: 3, 3, 32>}, {transform_indices = @transform_4, window_bounds = array<i64: 1, 32>}, {}, {transform_indices = @transform_6, window_bounds = array<i64: 1, 256, 32>}]} {
    %c0 = arith.constant 0 : index
    %c0_0 = arith.constant 0 : index
    %c0_1 = arith.constant 0 : index
    %0 = vector.load %arg3[%c0, %c0_0, %c0_1] : memref<1x256x32xbf16, #tpu.memory_space<vmem>>, vector<1x256x32xbf16>
    %1 = vector.shape_cast %0 : vector<1x256x32xbf16> to vector<256x32xbf16>
    %2 = arith.extf %1 : vector<256x32xbf16> to vector<256x32xf32>
    %c0_2 = arith.constant 0 : index
    %c0_3 = arith.constant 0 : index
    %c0_4 = arith.constant 0 : index
    %3 = vector.load %arg4[%c0_2, %c0_3, %c0_4] : memref<1x16x32xbf16, #tpu.memory_space<vmem>>, vector<1x16x32xbf16>
    %4 = vector.shape_cast %3 : vector<1x16x32xbf16> to vector<16x32xbf16>
    %5 = arith.extf %4 : vector<16x32xbf16> to vector<16x32xf32>
    %c0_5 = arith.constant 0 : index
    %c0_6 = arith.constant 0 : index
    %c0_7 = arith.constant 0 : index
    %6 = vector.load %arg5[%c0_5, %c0_6, %c0_7] : memref<1x16x32xbf16, #tpu.memory_space<vmem>>, vector<1x16x32xbf16>
    %7 = vector.shape_cast %6 : vector<1x16x32xbf16> to vector<16x32xbf16>
    %8 = arith.extf %7 : vector<16x32xbf16> to vector<16x32xf32>
    %cst = arith.constant 0.000000e+00 : f32
    %9 = vector.broadcast %cst : f32 to vector<16x32xf32>
    %c0_i32 = arith.constant 0 : i32
    %10 = arith.cmpi sgt, %arg2, %c0_i32 : i32
    %11 = arith.select %10, %5, %9 : vector<16x32xf32>
    %c0_i32_8 = arith.constant 0 : i32
    %12 = arith.cmpi slt, %arg2, %c0_i32_8 : i32
    %13 = arith.select %12, %8, %9 : vector<16x32xf32>
    %cst_9 = arith.constant 0.000000e+00 : f32
    %14 = vector.broadcast %cst_9 : f32 to vector<8x32xf32>
    %15 = tpu.concatenate %14, %11, %2, %13, %14 in 0 : vector<8x32xf32>, vector<16x32xf32>, vector<256x32xf32>, vector<16x32xf32>, vector<8x32xf32> -> vector<304x32xf32>
    %16 = tpu.iota {dimensions = array<i32: 0>} : vector<256x32xi32>
    %c15_i32 = arith.constant 15 : i32
    %17 = vector.broadcast %c15_i32 : i32 to vector<256x32xi32>
    %18 = arith.andi %16, %17 : vector<256x32xi32>
    %c0_i32_10 = arith.constant 0 : i32
    %19 = vector.broadcast %c0_i32_10 : i32 to vector<256x32xi32>
    %20 = arith.cmpi ne, %18, %19 : vector<256x32xi32>
    %c15_i32_11 = arith.constant 15 : i32
    %21 = vector.broadcast %c15_i32_11 : i32 to vector<256x32xi32>
    %22 = arith.cmpi ne, %18, %21 : vector<256x32xi32>
    %c0_12 = arith.constant 0 : index
    %c0_13 = arith.constant 0 : index
    %c0_14 = arith.constant 0 : index
    %23 = vector.load %arg6[%c0_12, %c0_13, %c0_14] : memref<3x3x32xf32, #tpu.memory_space<vmem>>, vector<3x3x32xf32>
    %cst_15 = arith.constant 0.000000e+00 : f32
    %24 = vector.broadcast %cst_15 : f32 to vector<256x32xf32>
    %25 = vector.extract_strided_slice %15 {offsets = [7, 0], sizes = [256, 32], strides = [1, 1]} : vector<304x32xf32> to vector<256x32xf32>
    %cst_16 = arith.constant 0.000000e+00 : f32
    %26 = vector.broadcast %cst_16 : f32 to vector<256x32xf32>
    %27 = arith.select %20, %25, %26 : vector<256x32xi1>, vector<256x32xf32>
    %28 = vector.extract_strided_slice %23 {offsets = [0, 0, 0], sizes = [1, 1, 32], strides = [1, 1, 1]} : vector<3x3x32xf32> to vector<1x1x32xf32>
    %29 = vector.shape_cast %28 : vector<1x1x32xf32> to vector<32xf32>
    %30 = vector.shape_cast %29 : vector<32xf32> to vector<1x32xf32>
    %31 = vector.broadcast %30 : vector<1x32xf32> to vector<256x32xf32>
    %32 = arith.mulf %27, %31 : vector<256x32xf32>
    %33 = arith.addf %24, %32 : vector<256x32xf32>
    %34 = vector.extract_strided_slice %15 {offsets = [8, 0], sizes = [256, 32], strides = [1, 1]} : vector<304x32xf32> to vector<256x32xf32>
    %35 = vector.extract_strided_slice %23 {offsets = [0, 1, 0], sizes = [1, 1, 32], strides = [1, 1, 1]} : vector<3x3x32xf32> to vector<1x1x32xf32>
    %36 = vector.shape_cast %35 : vector<1x1x32xf32> to vector<32xf32>
    %37 = vector.shape_cast %36 : vector<32xf32> to vector<1x32xf32>
    %38 = vector.broadcast %37 : vector<1x32xf32> to vector<256x32xf32>
    %39 = arith.mulf %34, %38 : vector<256x32xf32>
    %40 = arith.addf %33, %39 : vector<256x32xf32>
    %41 = vector.extract_strided_slice %15 {offsets = [9, 0], sizes = [256, 32], strides = [1, 1]} : vector<304x32xf32> to vector<256x32xf32>
    %cst_17 = arith.constant 0.000000e+00 : f32
    %42 = vector.broadcast %cst_17 : f32 to vector<256x32xf32>
    %43 = arith.select %22, %41, %42 : vector<256x32xi1>, vector<256x32xf32>
    %44 = vector.extract_strided_slice %23 {offsets = [0, 2, 0], sizes = [1, 1, 32], strides = [1, 1, 1]} : vector<3x3x32xf32> to vector<1x1x32xf32>
    %45 = vector.shape_cast %44 : vector<1x1x32xf32> to vector<32xf32>
    %46 = vector.shape_cast %45 : vector<32xf32> to vector<1x32xf32>
    %47 = vector.broadcast %46 : vector<1x32xf32> to vector<256x32xf32>
    %48 = arith.mulf %43, %47 : vector<256x32xf32>
    %49 = arith.addf %40, %48 : vector<256x32xf32>
    %50 = vector.extract_strided_slice %15 {offsets = [23, 0], sizes = [256, 32], strides = [1, 1]} : vector<304x32xf32> to vector<256x32xf32>
    %cst_18 = arith.constant 0.000000e+00 : f32
    %51 = vector.broadcast %cst_18 : f32 to vector<256x32xf32>
    %52 = arith.select %20, %50, %51 : vector<256x32xi1>, vector<256x32xf32>
    %53 = vector.extract_strided_slice %23 {offsets = [1, 0, 0], sizes = [1, 1, 32], strides = [1, 1, 1]} : vector<3x3x32xf32> to vector<1x1x32xf32>
    %54 = vector.shape_cast %53 : vector<1x1x32xf32> to vector<32xf32>
    %55 = vector.shape_cast %54 : vector<32xf32> to vector<1x32xf32>
    %56 = vector.broadcast %55 : vector<1x32xf32> to vector<256x32xf32>
    %57 = arith.mulf %52, %56 : vector<256x32xf32>
    %58 = arith.addf %49, %57 : vector<256x32xf32>
    %59 = vector.extract_strided_slice %15 {offsets = [24, 0], sizes = [256, 32], strides = [1, 1]} : vector<304x32xf32> to vector<256x32xf32>
    %60 = vector.extract_strided_slice %23 {offsets = [1, 1, 0], sizes = [1, 1, 32], strides = [1, 1, 1]} : vector<3x3x32xf32> to vector<1x1x32xf32>
    %61 = vector.shape_cast %60 : vector<1x1x32xf32> to vector<32xf32>
    %62 = vector.shape_cast %61 : vector<32xf32> to vector<1x32xf32>
    %63 = vector.broadcast %62 : vector<1x32xf32> to vector<256x32xf32>
    %64 = arith.mulf %59, %63 : vector<256x32xf32>
    %65 = arith.addf %58, %64 : vector<256x32xf32>
    %66 = vector.extract_strided_slice %15 {offsets = [25, 0], sizes = [256, 32], strides = [1, 1]} : vector<304x32xf32> to vector<256x32xf32>
    %cst_19 = arith.constant 0.000000e+00 : f32
    %67 = vector.broadcast %cst_19 : f32 to vector<256x32xf32>
    %68 = arith.select %22, %66, %67 : vector<256x32xi1>, vector<256x32xf32>
    %69 = vector.extract_strided_slice %23 {offsets = [1, 2, 0], sizes = [1, 1, 32], strides = [1, 1, 1]} : vector<3x3x32xf32> to vector<1x1x32xf32>
    %70 = vector.shape_cast %69 : vector<1x1x32xf32> to vector<32xf32>
    %71 = vector.shape_cast %70 : vector<32xf32> to vector<1x32xf32>
    %72 = vector.broadcast %71 : vector<1x32xf32> to vector<256x32xf32>
    %73 = arith.mulf %68, %72 : vector<256x32xf32>
    %74 = arith.addf %65, %73 : vector<256x32xf32>
    %75 = vector.extract_strided_slice %15 {offsets = [39, 0], sizes = [256, 32], strides = [1, 1]} : vector<304x32xf32> to vector<256x32xf32>
    %cst_20 = arith.constant 0.000000e+00 : f32
    %76 = vector.broadcast %cst_20 : f32 to vector<256x32xf32>
    %77 = arith.select %20, %75, %76 : vector<256x32xi1>, vector<256x32xf32>
    %78 = vector.extract_strided_slice %23 {offsets = [2, 0, 0], sizes = [1, 1, 32], strides = [1, 1, 1]} : vector<3x3x32xf32> to vector<1x1x32xf32>
    %79 = vector.shape_cast %78 : vector<1x1x32xf32> to vector<32xf32>
    %80 = vector.shape_cast %79 : vector<32xf32> to vector<1x32xf32>
    %81 = vector.broadcast %80 : vector<1x32xf32> to vector<256x32xf32>
    %82 = arith.mulf %77, %81 : vector<256x32xf32>
    %83 = arith.addf %74, %82 : vector<256x32xf32>
    %84 = vector.extract_strided_slice %15 {offsets = [40, 0], sizes = [256, 32], strides = [1, 1]} : vector<304x32xf32> to vector<256x32xf32>
    %85 = vector.extract_strided_slice %23 {offsets = [2, 1, 0], sizes = [1, 1, 32], strides = [1, 1, 1]} : vector<3x3x32xf32> to vector<1x1x32xf32>
    %86 = vector.shape_cast %85 : vector<1x1x32xf32> to vector<32xf32>
    %87 = vector.shape_cast %86 : vector<32xf32> to vector<1x32xf32>
    %88 = vector.broadcast %87 : vector<1x32xf32> to vector<256x32xf32>
    %89 = arith.mulf %84, %88 : vector<256x32xf32>
    %90 = arith.addf %83, %89 : vector<256x32xf32>
    %91 = vector.extract_strided_slice %15 {offsets = [41, 0], sizes = [256, 32], strides = [1, 1]} : vector<304x32xf32> to vector<256x32xf32>
    %cst_21 = arith.constant 0.000000e+00 : f32
    %92 = vector.broadcast %cst_21 : f32 to vector<256x32xf32>
    %93 = arith.select %22, %91, %92 : vector<256x32xi1>, vector<256x32xf32>
    %94 = vector.extract_strided_slice %23 {offsets = [2, 2, 0], sizes = [1, 1, 32], strides = [1, 1, 1]} : vector<3x3x32xf32> to vector<1x1x32xf32>
    %95 = vector.shape_cast %94 : vector<1x1x32xf32> to vector<32xf32>
    %96 = vector.shape_cast %95 : vector<32xf32> to vector<1x32xf32>
    %97 = vector.broadcast %96 : vector<1x32xf32> to vector<256x32xf32>
    %98 = arith.mulf %93, %97 : vector<256x32xf32>
    %99 = arith.addf %90, %98 : vector<256x32xf32>
    %c0_22 = arith.constant 0 : index
    %c0_23 = arith.constant 0 : index
    %100 = vector.load %arg7[%c0_22, %c0_23] : memref<1x32xf32, #tpu.memory_space<vmem>>, vector<1x32xf32>
    %101 = vector.broadcast %100 : vector<1x32xf32> to vector<256x32xf32>
    %102 = arith.addf %99, %101 : vector<256x32xf32>
    %cst_24 = arith.constant 5.000000e-01 : f32
    %103 = vector.broadcast %cst_24 : f32 to vector<256x32xf32>
    %104 = arith.mulf %103, %102 : vector<256x32xf32>
    %cst_25 = arith.constant 0.707106769 : f32
    %105 = vector.broadcast %cst_25 : f32 to vector<256x32xf32>
    %106 = arith.mulf %102, %105 : vector<256x32xf32>
    %107 = math.erf %106 : vector<256x32xf32>
    %cst_26 = arith.constant 1.000000e+00 : f32
    %108 = vector.broadcast %cst_26 : f32 to vector<256x32xf32>
    %109 = arith.addf %108, %107 : vector<256x32xf32>
    %110 = arith.mulf %104, %109 : vector<256x32xf32>
    %111 = arith.truncf %110 : vector<256x32xf32> to vector<256x32xbf16>
    %c0_27 = arith.constant 0 : index
    %c0_28 = arith.constant 0 : index
    %c0_29 = arith.constant 0 : index
    %112 = vector.load %arg9[%c0_27, %c0_28, %c0_29] : memref<1x256x32xbf16, #tpu.memory_space<vmem>>, vector<1x256x32xbf16>
    %113 = vector.shape_cast %112 : vector<1x256x32xbf16> to vector<256x32xbf16>
    %114 = vector.shape_cast %111 : vector<256x32xbf16> to vector<1x256x32xbf16>
    tpu.vector_store %arg9[%c0_27, %c0_28, %c0_29], %114 {strides = array<i32>} : memref<1x256x32xbf16, #tpu.memory_space<vmem>>, vector<1x256x32xbf16>,
    return
  }
  func.func @transform_0(%arg0: i32, %arg1: i32, %arg2: i32) -> (i32, i32, i32) {
    %c0_i32 = arith.constant 0 : i32
    %0 = arith.addi %c0_i32, %arg2 : i32
    %c0_i32_0 = arith.constant 0 : i32
    return %arg0, %0, %arg1 : i32, i32, i32
  }
  func.func @transform_1(%arg0: i32, %arg1: i32, %arg2: i32) -> (i32, i32, i32) {
    %c16_i32 = arith.constant 16 : i32
    %0 = arith.muli %arg2, %c16_i32 : i32
    %c0_i32 = arith.constant 0 : i32
    %1 = arith.addi %c0_i32, %0 : i32
    %c1_i32 = arith.constant 1 : i32
    %2 = arith.subi %1, %c1_i32 : i32
    %c0_i32_0 = arith.constant 0 : i32
    %3 = arith.maxsi %2, %c0_i32_0 : i32
    %c0_i32_1 = arith.constant 0 : i32
    return %arg0, %3, %arg1 : i32, i32, i32
  }
  func.func @transform_2(%arg0: i32, %arg1: i32, %arg2: i32) -> (i32, i32, i32) {
    %c1_i32 = arith.constant 1 : i32
    %0 = arith.addi %arg2, %c1_i32 : i32
    %c16_i32 = arith.constant 16 : i32
    %1 = arith.muli %0, %c16_i32 : i32
    %c0_i32 = arith.constant 0 : i32
    %2 = arith.addi %c0_i32, %1 : i32
    %c15_i32 = arith.constant 15 : i32
    %3 = arith.minsi %2, %c15_i32 : i32
    %c0_i32_0 = arith.constant 0 : i32
    return %arg0, %3, %arg1 : i32, i32, i32
  }
  func.func @transform_3(%arg0: i32, %arg1: i32, %arg2: i32) -> (i32, i32, i32) {
    %c0_i32 = arith.constant 0 : i32
    %c0_i32_0 = arith.constant 0 : i32
    %c0_i32_1 = arith.constant 0 : i32
    return %c0_i32, %c0_i32_0, %arg1 : i32, i32, i32
  }
  func.func @transform_4(%arg0: i32, %arg1: i32, %arg2: i32) -> (i32, i32) {
    %c0_i32 = arith.constant 0 : i32
    %c0_i32_0 = arith.constant 0 : i32
    return %c0_i32, %arg1 : i32, i32
  }
  func.func @transform_6(%arg0: i32, %arg1: i32, %arg2: i32) -> (i32, i32, i32) {
    %c0_i32 = arith.constant 0 : i32
    %0 = arith.addi %c0_i32, %arg2 : i32
    %c0_i32_0 = arith.constant 0 : i32
    return %arg0, %0, %arg1 : i32, i32, i32
  }
}

module attributes {stable_mosaic.version = 11 : i64} {
  func.func @_dwconv_gelu_kernel(%arg0: i32, %arg1: i32, %arg2: i32, %arg3: memref<1x64x32xbf16, #tpu.memory_space<vmem>>, %arg4: memref<1x8x32xbf16, #tpu.memory_space<vmem>>, %arg5: memref<1x8x32xbf16, #tpu.memory_space<vmem>>, %arg6: memref<3x3x32xf32, #tpu.memory_space<vmem>>, %arg7: memref<1x32xf32, #tpu.memory_space<vmem>>, %arg8: memref<2x336x32xbf16, #tpu.memory_space<any>>, %arg9: memref<1x64x32xbf16, #tpu.memory_space<vmem>>) attributes {dimension_semantics = [#tpu.dimension_semantics<parallel>, #tpu.dimension_semantics<parallel>, #tpu.dimension_semantics<arbitrary>], iteration_bounds = array<i64: 2, 1, 1>, scalar_prefetch = 0 : i64, scratch_operands = 0 : i64, tpu.core_type = #tpu.core_type<tc>, window_params = [{transform_indices = @transform_0, window_bounds = array<i64: 1, 64, 32>}, {transform_indices = @transform_1, window_bounds = array<i64: 1, 8, 32>}, {transform_indices = @transform_2, window_bounds = array<i64: 1, 8, 32>}, {transform_indices = @transform_3, window_bounds = array<i64: 3, 3, 32>}, {transform_indices = @transform_4, window_bounds = array<i64: 1, 32>}, {}, {transform_indices = @transform_6, window_bounds = array<i64: 1, 64, 32>}]} {
    %c0 = arith.constant 0 : index
    %c0_0 = arith.constant 0 : index
    %c0_1 = arith.constant 0 : index
    %0 = vector.load %arg3[%c0, %c0_0, %c0_1] : memref<1x64x32xbf16, #tpu.memory_space<vmem>>, vector<1x64x32xbf16>
    %1 = vector.shape_cast %0 : vector<1x64x32xbf16> to vector<64x32xbf16>
    %2 = arith.extf %1 : vector<64x32xbf16> to vector<64x32xf32>
    %c0_2 = arith.constant 0 : index
    %c0_3 = arith.constant 0 : index
    %c0_4 = arith.constant 0 : index
    %3 = vector.load %arg4[%c0_2, %c0_3, %c0_4] : memref<1x8x32xbf16, #tpu.memory_space<vmem>>, vector<1x8x32xbf16>
    %4 = vector.shape_cast %3 : vector<1x8x32xbf16> to vector<8x32xbf16>
    %5 = arith.extf %4 : vector<8x32xbf16> to vector<8x32xf32>
    %c0_5 = arith.constant 0 : index
    %c0_6 = arith.constant 0 : index
    %c0_7 = arith.constant 0 : index
    %6 = vector.load %arg5[%c0_5, %c0_6, %c0_7] : memref<1x8x32xbf16, #tpu.memory_space<vmem>>, vector<1x8x32xbf16>
    %7 = vector.shape_cast %6 : vector<1x8x32xbf16> to vector<8x32xbf16>
    %8 = arith.extf %7 : vector<8x32xbf16> to vector<8x32xf32>
    %cst = arith.constant 0.000000e+00 : f32
    %9 = vector.broadcast %cst : f32 to vector<8x32xf32>
    %c0_i32 = arith.constant 0 : i32
    %10 = arith.cmpi sgt, %arg2, %c0_i32 : i32
    %11 = arith.select %10, %5, %9 : vector<8x32xf32>
    %c0_i32_8 = arith.constant 0 : i32
    %12 = arith.cmpi slt, %arg2, %c0_i32_8 : i32
    %13 = arith.select %12, %8, %9 : vector<8x32xf32>
    %cst_9 = arith.constant 0.000000e+00 : f32
    %14 = vector.broadcast %cst_9 : f32 to vector<8x32xf32>
    %15 = tpu.concatenate %14, %11, %2, %13, %14 in 0 : vector<8x32xf32>, vector<8x32xf32>, vector<64x32xf32>, vector<8x32xf32>, vector<8x32xf32> -> vector<96x32xf32>
    %16 = tpu.iota {dimensions = array<i32: 0>} : vector<64x32xi32>
    %c7_i32 = arith.constant 7 : i32
    %17 = vector.broadcast %c7_i32 : i32 to vector<64x32xi32>
    %18 = arith.andi %16, %17 : vector<64x32xi32>
    %c0_i32_10 = arith.constant 0 : i32
    %19 = vector.broadcast %c0_i32_10 : i32 to vector<64x32xi32>
    %20 = arith.cmpi ne, %18, %19 : vector<64x32xi32>
    %c7_i32_11 = arith.constant 7 : i32
    %21 = vector.broadcast %c7_i32_11 : i32 to vector<64x32xi32>
    %22 = arith.cmpi ne, %18, %21 : vector<64x32xi32>
    %c0_12 = arith.constant 0 : index
    %c0_13 = arith.constant 0 : index
    %c0_14 = arith.constant 0 : index
    %23 = vector.load %arg6[%c0_12, %c0_13, %c0_14] : memref<3x3x32xf32, #tpu.memory_space<vmem>>, vector<3x3x32xf32>
    %cst_15 = arith.constant 0.000000e+00 : f32
    %24 = vector.broadcast %cst_15 : f32 to vector<64x32xf32>
    %25 = vector.extract_strided_slice %15 {offsets = [7, 0], sizes = [64, 32], strides = [1, 1]} : vector<96x32xf32> to vector<64x32xf32>
    %cst_16 = arith.constant 0.000000e+00 : f32
    %26 = vector.broadcast %cst_16 : f32 to vector<64x32xf32>
    %27 = arith.select %20, %25, %26 : vector<64x32xi1>, vector<64x32xf32>
    %28 = vector.extract_strided_slice %23 {offsets = [0, 0, 0], sizes = [1, 1, 32], strides = [1, 1, 1]} : vector<3x3x32xf32> to vector<1x1x32xf32>
    %29 = vector.shape_cast %28 : vector<1x1x32xf32> to vector<32xf32>
    %30 = vector.shape_cast %29 : vector<32xf32> to vector<1x32xf32>
    %31 = vector.broadcast %30 : vector<1x32xf32> to vector<64x32xf32>
    %32 = arith.mulf %27, %31 : vector<64x32xf32>
    %33 = arith.addf %24, %32 : vector<64x32xf32>
    %34 = vector.extract_strided_slice %15 {offsets = [8, 0], sizes = [64, 32], strides = [1, 1]} : vector<96x32xf32> to vector<64x32xf32>
    %35 = vector.extract_strided_slice %23 {offsets = [0, 1, 0], sizes = [1, 1, 32], strides = [1, 1, 1]} : vector<3x3x32xf32> to vector<1x1x32xf32>
    %36 = vector.shape_cast %35 : vector<1x1x32xf32> to vector<32xf32>
    %37 = vector.shape_cast %36 : vector<32xf32> to vector<1x32xf32>
    %38 = vector.broadcast %37 : vector<1x32xf32> to vector<64x32xf32>
    %39 = arith.mulf %34, %38 : vector<64x32xf32>
    %40 = arith.addf %33, %39 : vector<64x32xf32>
    %41 = vector.extract_strided_slice %15 {offsets = [9, 0], sizes = [64, 32], strides = [1, 1]} : vector<96x32xf32> to vector<64x32xf32>
    %cst_17 = arith.constant 0.000000e+00 : f32
    %42 = vector.broadcast %cst_17 : f32 to vector<64x32xf32>
    %43 = arith.select %22, %41, %42 : vector<64x32xi1>, vector<64x32xf32>
    %44 = vector.extract_strided_slice %23 {offsets = [0, 2, 0], sizes = [1, 1, 32], strides = [1, 1, 1]} : vector<3x3x32xf32> to vector<1x1x32xf32>
    %45 = vector.shape_cast %44 : vector<1x1x32xf32> to vector<32xf32>
    %46 = vector.shape_cast %45 : vector<32xf32> to vector<1x32xf32>
    %47 = vector.broadcast %46 : vector<1x32xf32> to vector<64x32xf32>
    %48 = arith.mulf %43, %47 : vector<64x32xf32>
    %49 = arith.addf %40, %48 : vector<64x32xf32>
    %50 = vector.extract_strided_slice %15 {offsets = [15, 0], sizes = [64, 32], strides = [1, 1]} : vector<96x32xf32> to vector<64x32xf32>
    %cst_18 = arith.constant 0.000000e+00 : f32
    %51 = vector.broadcast %cst_18 : f32 to vector<64x32xf32>
    %52 = arith.select %20, %50, %51 : vector<64x32xi1>, vector<64x32xf32>
    %53 = vector.extract_strided_slice %23 {offsets = [1, 0, 0], sizes = [1, 1, 32], strides = [1, 1, 1]} : vector<3x3x32xf32> to vector<1x1x32xf32>
    %54 = vector.shape_cast %53 : vector<1x1x32xf32> to vector<32xf32>
    %55 = vector.shape_cast %54 : vector<32xf32> to vector<1x32xf32>
    %56 = vector.broadcast %55 : vector<1x32xf32> to vector<64x32xf32>
    %57 = arith.mulf %52, %56 : vector<64x32xf32>
    %58 = arith.addf %49, %57 : vector<64x32xf32>
    %59 = vector.extract_strided_slice %15 {offsets = [16, 0], sizes = [64, 32], strides = [1, 1]} : vector<96x32xf32> to vector<64x32xf32>
    %60 = vector.extract_strided_slice %23 {offsets = [1, 1, 0], sizes = [1, 1, 32], strides = [1, 1, 1]} : vector<3x3x32xf32> to vector<1x1x32xf32>
    %61 = vector.shape_cast %60 : vector<1x1x32xf32> to vector<32xf32>
    %62 = vector.shape_cast %61 : vector<32xf32> to vector<1x32xf32>
    %63 = vector.broadcast %62 : vector<1x32xf32> to vector<64x32xf32>
    %64 = arith.mulf %59, %63 : vector<64x32xf32>
    %65 = arith.addf %58, %64 : vector<64x32xf32>
    %66 = vector.extract_strided_slice %15 {offsets = [17, 0], sizes = [64, 32], strides = [1, 1]} : vector<96x32xf32> to vector<64x32xf32>
    %cst_19 = arith.constant 0.000000e+00 : f32
    %67 = vector.broadcast %cst_19 : f32 to vector<64x32xf32>
    %68 = arith.select %22, %66, %67 : vector<64x32xi1>, vector<64x32xf32>
    %69 = vector.extract_strided_slice %23 {offsets = [1, 2, 0], sizes = [1, 1, 32], strides = [1, 1, 1]} : vector<3x3x32xf32> to vector<1x1x32xf32>
    %70 = vector.shape_cast %69 : vector<1x1x32xf32> to vector<32xf32>
    %71 = vector.shape_cast %70 : vector<32xf32> to vector<1x32xf32>
    %72 = vector.broadcast %71 : vector<1x32xf32> to vector<64x32xf32>
    %73 = arith.mulf %68, %72 : vector<64x32xf32>
    %74 = arith.addf %65, %73 : vector<64x32xf32>
    %75 = vector.extract_strided_slice %15 {offsets = [23, 0], sizes = [64, 32], strides = [1, 1]} : vector<96x32xf32> to vector<64x32xf32>
    %cst_20 = arith.constant 0.000000e+00 : f32
    %76 = vector.broadcast %cst_20 : f32 to vector<64x32xf32>
    %77 = arith.select %20, %75, %76 : vector<64x32xi1>, vector<64x32xf32>
    %78 = vector.extract_strided_slice %23 {offsets = [2, 0, 0], sizes = [1, 1, 32], strides = [1, 1, 1]} : vector<3x3x32xf32> to vector<1x1x32xf32>
    %79 = vector.shape_cast %78 : vector<1x1x32xf32> to vector<32xf32>
    %80 = vector.shape_cast %79 : vector<32xf32> to vector<1x32xf32>
    %81 = vector.broadcast %80 : vector<1x32xf32> to vector<64x32xf32>
    %82 = arith.mulf %77, %81 : vector<64x32xf32>
    %83 = arith.addf %74, %82 : vector<64x32xf32>
    %84 = vector.extract_strided_slice %15 {offsets = [24, 0], sizes = [64, 32], strides = [1, 1]} : vector<96x32xf32> to vector<64x32xf32>
    %85 = vector.extract_strided_slice %23 {offsets = [2, 1, 0], sizes = [1, 1, 32], strides = [1, 1, 1]} : vector<3x3x32xf32> to vector<1x1x32xf32>
    %86 = vector.shape_cast %85 : vector<1x1x32xf32> to vector<32xf32>
    %87 = vector.shape_cast %86 : vector<32xf32> to vector<1x32xf32>
    %88 = vector.broadcast %87 : vector<1x32xf32> to vector<64x32xf32>
    %89 = arith.mulf %84, %88 : vector<64x32xf32>
    %90 = arith.addf %83, %89 : vector<64x32xf32>
    %91 = vector.extract_strided_slice %15 {offsets = [25, 0], sizes = [64, 32], strides = [1, 1]} : vector<96x32xf32> to vector<64x32xf32>
    %cst_21 = arith.constant 0.000000e+00 : f32
    %92 = vector.broadcast %cst_21 : f32 to vector<64x32xf32>
    %93 = arith.select %22, %91, %92 : vector<64x32xi1>, vector<64x32xf32>
    %94 = vector.extract_strided_slice %23 {offsets = [2, 2, 0], sizes = [1, 1, 32], strides = [1, 1, 1]} : vector<3x3x32xf32> to vector<1x1x32xf32>
    %95 = vector.shape_cast %94 : vector<1x1x32xf32> to vector<32xf32>
    %96 = vector.shape_cast %95 : vector<32xf32> to vector<1x32xf32>
    %97 = vector.broadcast %96 : vector<1x32xf32> to vector<64x32xf32>
    %98 = arith.mulf %93, %97 : vector<64x32xf32>
    %99 = arith.addf %90, %98 : vector<64x32xf32>
    %c0_22 = arith.constant 0 : index
    %c0_23 = arith.constant 0 : index
    %100 = vector.load %arg7[%c0_22, %c0_23] : memref<1x32xf32, #tpu.memory_space<vmem>>, vector<1x32xf32>
    %101 = vector.broadcast %100 : vector<1x32xf32> to vector<64x32xf32>
    %102 = arith.addf %99, %101 : vector<64x32xf32>
    %cst_24 = arith.constant 5.000000e-01 : f32
    %103 = vector.broadcast %cst_24 : f32 to vector<64x32xf32>
    %104 = arith.mulf %103, %102 : vector<64x32xf32>
    %cst_25 = arith.constant 0.707106769 : f32
    %105 = vector.broadcast %cst_25 : f32 to vector<64x32xf32>
    %106 = arith.mulf %102, %105 : vector<64x32xf32>
    %107 = math.erf %106 : vector<64x32xf32>
    %cst_26 = arith.constant 1.000000e+00 : f32
    %108 = vector.broadcast %cst_26 : f32 to vector<64x32xf32>
    %109 = arith.addf %108, %107 : vector<64x32xf32>
    %110 = arith.mulf %104, %109 : vector<64x32xf32>
    %111 = arith.truncf %110 : vector<64x32xf32> to vector<64x32xbf16>
    %c0_27 = arith.constant 0 : index
    %c0_28 = arith.constant 0 : index
    %c0_29 = arith.constant 0 : index
    %112 = vector.load %arg9[%c0_27, %c0_28, %c0_29] : memref<1x64x32xbf16, #tpu.memory_space<vmem>>, vector<1x64x32xbf16>
    %113 = vector.shape_cast %112 : vector<1x64x32xbf16> to vector<64x32xbf16>
    %114 = vector.shape_cast %111 : vector<64x32xbf16> to vector<1x64x32xbf16>
    tpu.vector_store %arg9[%c0_27, %c0_28, %c0_29], %114 {strides = array<i32>} : memref<1x64x32xbf16, #tpu.memory_space<vmem>>, vector<1x64x32xbf16>,
    return
  }
  func.func @transform_0(%arg0: i32, %arg1: i32, %arg2: i32) -> (i32, i32, i32) {
    %c4_i32 = arith.constant 4 : i32
    %0 = arith.addi %c4_i32, %arg2 : i32
    %c0_i32 = arith.constant 0 : i32
    return %arg0, %0, %arg1 : i32, i32, i32
  }
  func.func @transform_1(%arg0: i32, %arg1: i32, %arg2: i32) -> (i32, i32, i32) {
    %c8_i32 = arith.constant 8 : i32
    %0 = arith.muli %arg2, %c8_i32 : i32
    %c32_i32 = arith.constant 32 : i32
    %1 = arith.addi %c32_i32, %0 : i32
    %c1_i32 = arith.constant 1 : i32
    %2 = arith.subi %1, %c1_i32 : i32
    %c32_i32_0 = arith.constant 32 : i32
    %3 = arith.maxsi %2, %c32_i32_0 : i32
    %c0_i32 = arith.constant 0 : i32
    return %arg0, %3, %arg1 : i32, i32, i32
  }
  func.func @transform_2(%arg0: i32, %arg1: i32, %arg2: i32) -> (i32, i32, i32) {
    %c1_i32 = arith.constant 1 : i32
    %0 = arith.addi %arg2, %c1_i32 : i32
    %c8_i32 = arith.constant 8 : i32
    %1 = arith.muli %0, %c8_i32 : i32
    %c32_i32 = arith.constant 32 : i32
    %2 = arith.addi %c32_i32, %1 : i32
    %c39_i32 = arith.constant 39 : i32
    %3 = arith.minsi %2, %c39_i32 : i32
    %c0_i32 = arith.constant 0 : i32
    return %arg0, %3, %arg1 : i32, i32, i32
  }
  func.func @transform_3(%arg0: i32, %arg1: i32, %arg2: i32) -> (i32, i32, i32) {
    %c0_i32 = arith.constant 0 : i32
    %c0_i32_0 = arith.constant 0 : i32
    %c0_i32_1 = arith.constant 0 : i32
    return %c0_i32, %c0_i32_0, %arg1 : i32, i32, i32
  }
  func.func @transform_4(%arg0: i32, %arg1: i32, %arg2: i32) -> (i32, i32) {
    %c0_i32 = arith.constant 0 : i32
    %c0_i32_0 = arith.constant 0 : i32
    return %c0_i32, %arg1 : i32, i32
  }
  func.func @transform_6(%arg0: i32, %arg1: i32, %arg2: i32) -> (i32, i32, i32) {
    %c4_i32 = arith.constant 4 : i32
    %0 = arith.addi %c4_i32, %arg2 : i32
    %c0_i32 = arith.constant 0 : i32
    return %arg0, %0, %arg1 : i32, i32, i32
  }
}

module attributes {stable_mosaic.version = 11 : i64} {
  func.func @_dwconv_gelu_kernel(%arg0: i32, %arg1: i32, %arg2: i32, %arg3: memref<1x16x32xbf16, #tpu.memory_space<vmem>>, %arg4: memref<1x8x32xbf16, #tpu.memory_space<vmem>>, %arg5: memref<1x8x32xbf16, #tpu.memory_space<vmem>>, %arg6: memref<3x3x32xf32, #tpu.memory_space<vmem>>, %arg7: memref<1x32xf32, #tpu.memory_space<vmem>>, %arg8: memref<2x336x32xbf16, #tpu.memory_space<any>>, %arg9: memref<1x16x32xbf16, #tpu.memory_space<vmem>>) attributes {dimension_semantics = [#tpu.dimension_semantics<parallel>, #tpu.dimension_semantics<parallel>, #tpu.dimension_semantics<arbitrary>], iteration_bounds = array<i64: 2, 1, 1>, scalar_prefetch = 0 : i64, scratch_operands = 0 : i64, tpu.core_type = #tpu.core_type<tc>, window_params = [{transform_indices = @transform_0, window_bounds = array<i64: 1, 16, 32>}, {transform_indices = @transform_1, window_bounds = array<i64: 1, 8, 32>}, {transform_indices = @transform_2, window_bounds = array<i64: 1, 8, 32>}, {transform_indices = @transform_3, window_bounds = array<i64: 3, 3, 32>}, {transform_indices = @transform_4, window_bounds = array<i64: 1, 32>}, {}, {transform_indices = @transform_6, window_bounds = array<i64: 1, 16, 32>}]} {
    %c0 = arith.constant 0 : index
    %c0_0 = arith.constant 0 : index
    %c0_1 = arith.constant 0 : index
    %0 = vector.load %arg3[%c0, %c0_0, %c0_1] : memref<1x16x32xbf16, #tpu.memory_space<vmem>>, vector<1x16x32xbf16>
    %1 = vector.shape_cast %0 : vector<1x16x32xbf16> to vector<16x32xbf16>
    %2 = arith.extf %1 : vector<16x32xbf16> to vector<16x32xf32>
    %c0_2 = arith.constant 0 : index
    %c4 = arith.constant 4 : index
    %c0_3 = arith.constant 0 : index
    %3 = vector.load %arg4[%c0_2, %c4, %c0_3] : memref<1x8x32xbf16, #tpu.memory_space<vmem>>, vector<1x4x32xbf16>
    %4 = vector.shape_cast %3 : vector<1x4x32xbf16> to vector<4x32xbf16>
    %5 = arith.extf %4 : vector<4x32xbf16> to vector<4x32xf32>
    %c0_4 = arith.constant 0 : index
    %c0_5 = arith.constant 0 : index
    %c0_6 = arith.constant 0 : index
    %6 = vector.load %arg5[%c0_4, %c0_5, %c0_6] : memref<1x8x32xbf16, #tpu.memory_space<vmem>>, vector<1x4x32xbf16>
    %7 = vector.shape_cast %6 : vector<1x4x32xbf16> to vector<4x32xbf16>
    %8 = arith.extf %7 : vector<4x32xbf16> to vector<4x32xf32>
    %cst = arith.constant 0.000000e+00 : f32
    %9 = vector.broadcast %cst : f32 to vector<4x32xf32>
    %c0_i32 = arith.constant 0 : i32
    %10 = arith.cmpi sgt, %arg2, %c0_i32 : i32
    %11 = arith.select %10, %5, %9 : vector<4x32xf32>
    %c0_i32_7 = arith.constant 0 : i32
    %12 = arith.cmpi slt, %arg2, %c0_i32_7 : i32
    %13 = arith.select %12, %8, %9 : vector<4x32xf32>
    %cst_8 = arith.constant 0.000000e+00 : f32
    %14 = vector.broadcast %cst_8 : f32 to vector<8x32xf32>
    %15 = tpu.concatenate %14, %11, %2, %13, %14 in 0 : vector<8x32xf32>, vector<4x32xf32>, vector<16x32xf32>, vector<4x32xf32>, vector<8x32xf32> -> vector<40x32xf32>
    %16 = tpu.iota {dimensions = array<i32: 0>} : vector<16x32xi32>
    %c3_i32 = arith.constant 3 : i32
    %17 = vector.broadcast %c3_i32 : i32 to vector<16x32xi32>
    %18 = arith.andi %16, %17 : vector<16x32xi32>
    %c0_i32_9 = arith.constant 0 : i32
    %19 = vector.broadcast %c0_i32_9 : i32 to vector<16x32xi32>
    %20 = arith.cmpi ne, %18, %19 : vector<16x32xi32>
    %c3_i32_10 = arith.constant 3 : i32
    %21 = vector.broadcast %c3_i32_10 : i32 to vector<16x32xi32>
    %22 = arith.cmpi ne, %18, %21 : vector<16x32xi32>
    %c0_11 = arith.constant 0 : index
    %c0_12 = arith.constant 0 : index
    %c0_13 = arith.constant 0 : index
    %23 = vector.load %arg6[%c0_11, %c0_12, %c0_13] : memref<3x3x32xf32, #tpu.memory_space<vmem>>, vector<3x3x32xf32>
    %cst_14 = arith.constant 0.000000e+00 : f32
    %24 = vector.broadcast %cst_14 : f32 to vector<16x32xf32>
    %25 = vector.extract_strided_slice %15 {offsets = [7, 0], sizes = [16, 32], strides = [1, 1]} : vector<40x32xf32> to vector<16x32xf32>
    %cst_15 = arith.constant 0.000000e+00 : f32
    %26 = vector.broadcast %cst_15 : f32 to vector<16x32xf32>
    %27 = arith.select %20, %25, %26 : vector<16x32xi1>, vector<16x32xf32>
    %28 = vector.extract_strided_slice %23 {offsets = [0, 0, 0], sizes = [1, 1, 32], strides = [1, 1, 1]} : vector<3x3x32xf32> to vector<1x1x32xf32>
    %29 = vector.shape_cast %28 : vector<1x1x32xf32> to vector<32xf32>
    %30 = vector.shape_cast %29 : vector<32xf32> to vector<1x32xf32>
    %31 = vector.broadcast %30 : vector<1x32xf32> to vector<16x32xf32>
    %32 = arith.mulf %27, %31 : vector<16x32xf32>
    %33 = arith.addf %24, %32 : vector<16x32xf32>
    %34 = vector.extract_strided_slice %15 {offsets = [8, 0], sizes = [16, 32], strides = [1, 1]} : vector<40x32xf32> to vector<16x32xf32>
    %35 = vector.extract_strided_slice %23 {offsets = [0, 1, 0], sizes = [1, 1, 32], strides = [1, 1, 1]} : vector<3x3x32xf32> to vector<1x1x32xf32>
    %36 = vector.shape_cast %35 : vector<1x1x32xf32> to vector<32xf32>
    %37 = vector.shape_cast %36 : vector<32xf32> to vector<1x32xf32>
    %38 = vector.broadcast %37 : vector<1x32xf32> to vector<16x32xf32>
    %39 = arith.mulf %34, %38 : vector<16x32xf32>
    %40 = arith.addf %33, %39 : vector<16x32xf32>
    %41 = vector.extract_strided_slice %15 {offsets = [9, 0], sizes = [16, 32], strides = [1, 1]} : vector<40x32xf32> to vector<16x32xf32>
    %cst_16 = arith.constant 0.000000e+00 : f32
    %42 = vector.broadcast %cst_16 : f32 to vector<16x32xf32>
    %43 = arith.select %22, %41, %42 : vector<16x32xi1>, vector<16x32xf32>
    %44 = vector.extract_strided_slice %23 {offsets = [0, 2, 0], sizes = [1, 1, 32], strides = [1, 1, 1]} : vector<3x3x32xf32> to vector<1x1x32xf32>
    %45 = vector.shape_cast %44 : vector<1x1x32xf32> to vector<32xf32>
    %46 = vector.shape_cast %45 : vector<32xf32> to vector<1x32xf32>
    %47 = vector.broadcast %46 : vector<1x32xf32> to vector<16x32xf32>
    %48 = arith.mulf %43, %47 : vector<16x32xf32>
    %49 = arith.addf %40, %48 : vector<16x32xf32>
    %50 = vector.extract_strided_slice %15 {offsets = [11, 0], sizes = [16, 32], strides = [1, 1]} : vector<40x32xf32> to vector<16x32xf32>
    %cst_17 = arith.constant 0.000000e+00 : f32
    %51 = vector.broadcast %cst_17 : f32 to vector<16x32xf32>
    %52 = arith.select %20, %50, %51 : vector<16x32xi1>, vector<16x32xf32>
    %53 = vector.extract_strided_slice %23 {offsets = [1, 0, 0], sizes = [1, 1, 32], strides = [1, 1, 1]} : vector<3x3x32xf32> to vector<1x1x32xf32>
    %54 = vector.shape_cast %53 : vector<1x1x32xf32> to vector<32xf32>
    %55 = vector.shape_cast %54 : vector<32xf32> to vector<1x32xf32>
    %56 = vector.broadcast %55 : vector<1x32xf32> to vector<16x32xf32>
    %57 = arith.mulf %52, %56 : vector<16x32xf32>
    %58 = arith.addf %49, %57 : vector<16x32xf32>
    %59 = vector.extract_strided_slice %15 {offsets = [12, 0], sizes = [16, 32], strides = [1, 1]} : vector<40x32xf32> to vector<16x32xf32>
    %60 = vector.extract_strided_slice %23 {offsets = [1, 1, 0], sizes = [1, 1, 32], strides = [1, 1, 1]} : vector<3x3x32xf32> to vector<1x1x32xf32>
    %61 = vector.shape_cast %60 : vector<1x1x32xf32> to vector<32xf32>
    %62 = vector.shape_cast %61 : vector<32xf32> to vector<1x32xf32>
    %63 = vector.broadcast %62 : vector<1x32xf32> to vector<16x32xf32>
    %64 = arith.mulf %59, %63 : vector<16x32xf32>
    %65 = arith.addf %58, %64 : vector<16x32xf32>
    %66 = vector.extract_strided_slice %15 {offsets = [13, 0], sizes = [16, 32], strides = [1, 1]} : vector<40x32xf32> to vector<16x32xf32>
    %cst_18 = arith.constant 0.000000e+00 : f32
    %67 = vector.broadcast %cst_18 : f32 to vector<16x32xf32>
    %68 = arith.select %22, %66, %67 : vector<16x32xi1>, vector<16x32xf32>
    %69 = vector.extract_strided_slice %23 {offsets = [1, 2, 0], sizes = [1, 1, 32], strides = [1, 1, 1]} : vector<3x3x32xf32> to vector<1x1x32xf32>
    %70 = vector.shape_cast %69 : vector<1x1x32xf32> to vector<32xf32>
    %71 = vector.shape_cast %70 : vector<32xf32> to vector<1x32xf32>
    %72 = vector.broadcast %71 : vector<1x32xf32> to vector<16x32xf32>
    %73 = arith.mulf %68, %72 : vector<16x32xf32>
    %74 = arith.addf %65, %73 : vector<16x32xf32>
    %75 = vector.extract_strided_slice %15 {offsets = [15, 0], sizes = [16, 32], strides = [1, 1]} : vector<40x32xf32> to vector<16x32xf32>
    %cst_19 = arith.constant 0.000000e+00 : f32
    %76 = vector.broadcast %cst_19 : f32 to vector<16x32xf32>
    %77 = arith.select %20, %75, %76 : vector<16x32xi1>, vector<16x32xf32>
    %78 = vector.extract_strided_slice %23 {offsets = [2, 0, 0], sizes = [1, 1, 32], strides = [1, 1, 1]} : vector<3x3x32xf32> to vector<1x1x32xf32>
    %79 = vector.shape_cast %78 : vector<1x1x32xf32> to vector<32xf32>
    %80 = vector.shape_cast %79 : vector<32xf32> to vector<1x32xf32>
    %81 = vector.broadcast %80 : vector<1x32xf32> to vector<16x32xf32>
    %82 = arith.mulf %77, %81 : vector<16x32xf32>
    %83 = arith.addf %74, %82 : vector<16x32xf32>
    %84 = vector.extract_strided_slice %15 {offsets = [16, 0], sizes = [16, 32], strides = [1, 1]} : vector<40x32xf32> to vector<16x32xf32>
    %85 = vector.extract_strided_slice %23 {offsets = [2, 1, 0], sizes = [1, 1, 32], strides = [1, 1, 1]} : vector<3x3x32xf32> to vector<1x1x32xf32>
    %86 = vector.shape_cast %85 : vector<1x1x32xf32> to vector<32xf32>
    %87 = vector.shape_cast %86 : vector<32xf32> to vector<1x32xf32>
    %88 = vector.broadcast %87 : vector<1x32xf32> to vector<16x32xf32>
    %89 = arith.mulf %84, %88 : vector<16x32xf32>
    %90 = arith.addf %83, %89 : vector<16x32xf32>
    %91 = vector.extract_strided_slice %15 {offsets = [17, 0], sizes = [16, 32], strides = [1, 1]} : vector<40x32xf32> to vector<16x32xf32>
    %cst_20 = arith.constant 0.000000e+00 : f32
    %92 = vector.broadcast %cst_20 : f32 to vector<16x32xf32>
    %93 = arith.select %22, %91, %92 : vector<16x32xi1>, vector<16x32xf32>
    %94 = vector.extract_strided_slice %23 {offsets = [2, 2, 0], sizes = [1, 1, 32], strides = [1, 1, 1]} : vector<3x3x32xf32> to vector<1x1x32xf32>
    %95 = vector.shape_cast %94 : vector<1x1x32xf32> to vector<32xf32>
    %96 = vector.shape_cast %95 : vector<32xf32> to vector<1x32xf32>
    %97 = vector.broadcast %96 : vector<1x32xf32> to vector<16x32xf32>
    %98 = arith.mulf %93, %97 : vector<16x32xf32>
    %99 = arith.addf %90, %98 : vector<16x32xf32>
    %c0_21 = arith.constant 0 : index
    %c0_22 = arith.constant 0 : index
    %100 = vector.load %arg7[%c0_21, %c0_22] : memref<1x32xf32, #tpu.memory_space<vmem>>, vector<1x32xf32>
    %101 = vector.broadcast %100 : vector<1x32xf32> to vector<16x32xf32>
    %102 = arith.addf %99, %101 : vector<16x32xf32>
    %cst_23 = arith.constant 5.000000e-01 : f32
    %103 = vector.broadcast %cst_23 : f32 to vector<16x32xf32>
    %104 = arith.mulf %103, %102 : vector<16x32xf32>
    %cst_24 = arith.constant 0.707106769 : f32
    %105 = vector.broadcast %cst_24 : f32 to vector<16x32xf32>
    %106 = arith.mulf %102, %105 : vector<16x32xf32>
    %107 = math.erf %106 : vector<16x32xf32>
    %cst_25 = arith.constant 1.000000e+00 : f32
    %108 = vector.broadcast %cst_25 : f32 to vector<16x32xf32>
    %109 = arith.addf %108, %107 : vector<16x32xf32>
    %110 = arith.mulf %104, %109 : vector<16x32xf32>
    %111 = arith.truncf %110 : vector<16x32xf32> to vector<16x32xbf16>
    %c0_26 = arith.constant 0 : index
    %c0_27 = arith.constant 0 : index
    %c0_28 = arith.constant 0 : index
    %112 = vector.load %arg9[%c0_26, %c0_27, %c0_28] : memref<1x16x32xbf16, #tpu.memory_space<vmem>>, vector<1x16x32xbf16>
    %113 = vector.shape_cast %112 : vector<1x16x32xbf16> to vector<16x32xbf16>
    %114 = vector.shape_cast %111 : vector<16x32xbf16> to vector<1x16x32xbf16>
    tpu.vector_store %arg9[%c0_26, %c0_27, %c0_28], %114 {strides = array<i32>} : memref<1x16x32xbf16, #tpu.memory_space<vmem>>, vector<1x16x32xbf16>,
    return
  }
  func.func @transform_0(%arg0: i32, %arg1: i32, %arg2: i32) -> (i32, i32, i32) {
    %c20_i32 = arith.constant 20 : i32
    %0 = arith.addi %c20_i32, %arg2 : i32
    %c0_i32 = arith.constant 0 : i32
    return %arg0, %0, %arg1 : i32, i32, i32
  }
  func.func @transform_1(%arg0: i32, %arg1: i32, %arg2: i32) -> (i32, i32, i32) {
    %c2_i32 = arith.constant 2 : i32
    %0 = arith.muli %arg2, %c2_i32 : i32
    %c40_i32 = arith.constant 40 : i32
    %1 = arith.addi %c40_i32, %0 : i32
    %c1_i32 = arith.constant 1 : i32
    %2 = arith.subi %1, %c1_i32 : i32
    %c40_i32_0 = arith.constant 40 : i32
    %3 = arith.maxsi %2, %c40_i32_0 : i32
    %c0_i32 = arith.constant 0 : i32
    return %arg0, %3, %arg1 : i32, i32, i32
  }
  func.func @transform_2(%arg0: i32, %arg1: i32, %arg2: i32) -> (i32, i32, i32) {
    %c1_i32 = arith.constant 1 : i32
    %0 = arith.addi %arg2, %c1_i32 : i32
    %c2_i32 = arith.constant 2 : i32
    %1 = arith.muli %0, %c2_i32 : i32
    %c40_i32 = arith.constant 40 : i32
    %2 = arith.addi %c40_i32, %1 : i32
    %c41_i32 = arith.constant 41 : i32
    %3 = arith.minsi %2, %c41_i32 : i32
    %c0_i32 = arith.constant 0 : i32
    return %arg0, %3, %arg1 : i32, i32, i32
  }
  func.func @transform_3(%arg0: i32, %arg1: i32, %arg2: i32) -> (i32, i32, i32) {
    %c0_i32 = arith.constant 0 : i32
    %c0_i32_0 = arith.constant 0 : i32
    %c0_i32_1 = arith.constant 0 : i32
    return %c0_i32, %c0_i32_0, %arg1 : i32, i32, i32
  }
  func.func @transform_4(%arg0: i32, %arg1: i32, %arg2: i32) -> (i32, i32) {
    %c0_i32 = arith.constant 0 : i32
    %c0_i32_0 = arith.constant 0 : i32
    return %c0_i32, %arg1 : i32, i32
  }
  func.func @transform_6(%arg0: i32, %arg1: i32, %arg2: i32) -> (i32, i32, i32) {
    %c20_i32 = arith.constant 20 : i32
    %0 = arith.addi %c20_i32, %arg2 : i32
    %c0_i32 = arith.constant 0 : i32
    return %arg0, %0, %arg1 : i32, i32, i32
  }
}

module attributes {stable_mosaic.version = 11 : i64} {
  func.func @_linear_kernel(%arg0: i32, %arg1: i32, %arg2: i32, %arg3: memref<336x32xbf16, #tpu.memory_space<vmem>>, %arg4: memref<32x16xbf16, #tpu.memory_space<vmem>>, %arg5: memref<1x16xf32, #tpu.memory_space<vmem>>, %arg6: memref<336x16xf32, #tpu.memory_space<vmem>>, %arg7: memref<336x16xf32, #tpu.memory_space<vmem>>) attributes {dimension_semantics = [#tpu.dimension_semantics<parallel>, #tpu.dimension_semantics<parallel>, #tpu.dimension_semantics<arbitrary>], iteration_bounds = array<i64: 2, 1, 1>, scalar_prefetch = 0 : i64, scratch_operands = 1 : i64, tpu.core_type = #tpu.core_type<tc>, window_params = [{transform_indices = @transform_0, window_bounds = array<i64: 336, 32>}, {transform_indices = @transform_1, window_bounds = array<i64: 32, 16>}, {transform_indices = @transform_2, window_bounds = array<i64: 1, 16>}, {transform_indices = @transform_3, window_bounds = array<i64: 336, 16>}]} {
    %c0_i32 = arith.constant 0 : i32
    %0 = arith.cmpi eq, %arg2, %c0_i32 : i32
    %1 = arith.extui %0 : i1 to i32
    %c0_i32_0 = arith.constant 0 : i32
    %2 = arith.cmpi ne, %1, %c0_i32_0 : i32
    scf.if %2 {
      %cst_10 = arith.constant 0.000000e+00 : f32
      %12 = vector.broadcast %cst_10 : f32 to vector<336x16xf32>
      %c0_11 = arith.constant 0 : index
      %c0_12 = arith.constant 0 : index
      %13 = vector.load %arg7[%c0_11, %c0_12] : memref<336x16xf32, #tpu.memory_space<vmem>>, vector<336x16xf32>
      tpu.vector_store %arg7[%c0_11, %c0_12], %12 {strides = array<i32>} : memref<336x16xf32, #tpu.memory_space<vmem>>, vector<336x16xf32>,
    } else {
    }
    %c0 = arith.constant 0 : index
    %c0_1 = arith.constant 0 : index
    %3 = vector.load %arg3[%c0, %c0_1] : memref<336x32xbf16, #tpu.memory_space<vmem>>, vector<336x32xbf16>
    %c0_2 = arith.constant 0 : index
    %c0_3 = arith.constant 0 : index
    %4 = vector.load %arg4[%c0_2, %c0_3] : memref<32x16xbf16, #tpu.memory_space<vmem>>, vector<32x16xbf16>
    %c0_4 = arith.constant 0 : index
    %c0_5 = arith.constant 0 : index
    %5 = vector.load %arg7[%c0_4, %c0_5] : memref<336x16xf32, #tpu.memory_space<vmem>>, vector<336x16xf32>
    %cst = arith.constant dense<0.000000e+00> : vector<336x16xf32>
    %6 = tpu.matmul %3, %4, %cst {dimension_numbers = #tpu.dot_dimension_numbers<[1], [0], [0], [1], [0, 0, 1, 1], [], []>} : vector<336x32xbf16>, vector<32x16xbf16>, vector<336x16xf32> -> vector<336x16xf32>
    %7 = arith.addf %5, %6 : vector<336x16xf32>
    %c0_6 = arith.constant 0 : index
    %c0_7 = arith.constant 0 : index
    %8 = vector.load %arg7[%c0_6, %c0_7] : memref<336x16xf32, #tpu.memory_space<vmem>>, vector<336x16xf32>
    tpu.vector_store %arg7[%c0_6, %c0_7], %7 {strides = array<i32>} : memref<336x16xf32, #tpu.memory_space<vmem>>, vector<336x16xf32>,
    %c0_i32_8 = arith.constant 0 : i32
    %9 = arith.cmpi eq, %arg2, %c0_i32_8 : i32
    %10 = arith.extui %9 : i1 to i32
    %c0_i32_9 = arith.constant 0 : i32
    %11 = arith.cmpi ne, %10, %c0_i32_9 : i32
    scf.if %11 {
      %c0_10 = arith.constant 0 : index
      %c0_11 = arith.constant 0 : index
      %12 = vector.load %arg7[%c0_10, %c0_11] : memref<336x16xf32, #tpu.memory_space<vmem>>, vector<336x16xf32>
      %c0_12 = arith.constant 0 : index
      %c0_13 = arith.constant 0 : index
      %13 = vector.load %arg5[%c0_12, %c0_13] : memref<1x16xf32, #tpu.memory_space<vmem>>, vector<1x16xf32>
      %14 = vector.broadcast %13 : vector<1x16xf32> to vector<336x16xf32>
      %15 = arith.addf %12, %14 : vector<336x16xf32>
      %c0_14 = arith.constant 0 : index
      %c0_15 = arith.constant 0 : index
      %16 = vector.load %arg6[%c0_14, %c0_15] : memref<336x16xf32, #tpu.memory_space<vmem>>, vector<336x16xf32>
      tpu.vector_store %arg6[%c0_14, %c0_15], %15 {strides = array<i32>} : memref<336x16xf32, #tpu.memory_space<vmem>>, vector<336x16xf32>,
    } else {
    }
    return
  }
  func.func @transform_0(%arg0: i32, %arg1: i32, %arg2: i32) -> (i32, i32) {
    %c0_i32 = arith.constant 0 : i32
    return %arg0, %arg2 : i32, i32
  }
  func.func @transform_1(%arg0: i32, %arg1: i32, %arg2: i32) -> (i32, i32) {
    %c0_i32 = arith.constant 0 : i32
    return %arg2, %arg1 : i32, i32
  }
  func.func @transform_2(%arg0: i32, %arg1: i32, %arg2: i32) -> (i32, i32) {
    %c0_i32 = arith.constant 0 : i32
    %c0_i32_0 = arith.constant 0 : i32
    return %c0_i32, %arg1 : i32, i32
  }
  func.func @transform_3(%arg0: i32, %arg1: i32, %arg2: i32) -> (i32, i32) {
    %c0_i32 = arith.constant 0 : i32
    return %arg0, %arg1 : i32, i32
  }
}

</mosaic_0001>

<llo_original>
// kernel: conv_ffn_forward.8
$region0: #{conv_ffn_forward.8}
  #allocation0 [shape = 'u32[]', space=smem, size = 0x4, offset = 0x4, fixed_abs, tag = 'smem constant byte address 0x4 - core index']
  #allocation1 [shape = 'u32[72,128]{1,0:T(1,128)}', space=vmem, size = 0x9000, scoped, tag = 'internal scratch']
  %s0 = inlined_call_operand.vmem [shape: bf16[2,336,32], index: 0, kind: input, shape index: {}, may-alias: {0,1,2}]
  %s1 = inlined_call_operand.vmem [shape: bf16[2,336,32], index: 1, kind: input, shape index: {}, may-alias: {0,1,2}]
  %s2 = inlined_call_operand.vmem [shape: bf16[2,336,32], index: 2, kind: input, shape index: {}, may-alias: {0,1,2}]
  %s3 = inlined_call_operand.vmem [shape: f32[3,3,32], index: 3, kind: input, shape index: {}]
  %s4 = inlined_call_operand.vmem [shape: f32[1,32], index: 4, kind: input, shape index: {}]
  %s5 = inlined_call_operand.vmem [shape: bf16[2,336,32], index: 5, kind: input, shape index: {}, may-alias: {5,6}]
  %s6 = inlined_call_operand.vmem [shape: bf16[2,336,32], index: 6, kind: output, shape index: {}, may-alias: {5,6}]
  %s7 = sld [smem:[#allocation0]]
  $region53: #{conv_ffn_forward.8} parent=0
    _
  %s9 = ssub.s32 1, %s7
  %s10 = scalar_select 0, %s9, %s7
  loop: start=0, step=1, limit=4
  $region2: #{conv_ffn_forward.8} parent=0 // loop_pre_header
    _
  $region3: #{conv_ffn_forward.8} parent=0 // loop_header
    %s12 = sphi 0, %s16
    %p13 = scmp.ge.s32.totalorder %s12, 4
    %s19 = sphi 0, %s38
    %s20 = sphi 0, %s34
    %s21 = sphi 0, %s30
    %s22 = sphi 0, %s19
    %s23 = sphi 0, %s20
    %s24 = sphi 0, %s21
    %s25 = sphi 0, %s22
    %s26 = sphi 0, %s23
    %s27 = sphi 0, %s24
    %s47 = sphi 0, %s49
    %s50 = sphi 0, %s47
    %s51 = sphi 0, %s50
    %s67 = sphi 0, %s51
    %s85 = sphi 0, %s87
    %s88 = sphi 0, %s85
    %s89 = sphi 0, %s88
    %s105 = sphi 0, %s89
    %s125 = sphi 0, %s127
    %s128 = sphi 0, %s125
    %s129 = sphi 0, %s128
    %s145 = sphi 0, %s129
    %s151 = sphi 0, %s153
    %s154 = sphi 0, %s151
    %s155 = sphi 0, %s154
    %s171 = sphi 0, %s155
    %s177 = sphi 0, %s179
    %s180 = sphi 0, %s177
    %s181 = sphi 0, %s180
    %s197 = sphi 0, %s181
    %s209 = sphi 0, %s211
    %s212 = sphi 0, %s209
    %s213 = sphi 0, %s212
    %s229 = sphi 0, %s213
  $region4: #{conv_ffn_forward.8} parent=0 // loop_header_branch
    %15 = sbr.rel (%p13) target = $region8
  $region5: #{conv_ffn_forward.8} parent=0 // loop_body
    %s17 = ssub.s32 %s12, 1
    %s18 = ssub.s32 %s12, 2
    %s28 = sadd.s32 1, %s21
    %p29 = scmp.ge.s32.totalorder %s28, 1
    %s30 = scalar_select %p29, 0, %s28
    %s31 = sadd.s32 1, %s20
    %s32 = scalar_select %p29, %s31, %s20
    %p33 = scmp.ge.s32.totalorder %s32, 1
    %s34 = scalar_select %p33, 0, %s32
    %s35 = sadd.s32 1, %s19
    %s36 = scalar_select %p33, %s35, %s19
    %p37 = scmp.ge.s32.totalorder %s36, 2
    %s38 = scalar_select %p37, 0, %s36
    %s39 = sadd.s32 %s21, 20
    %s40 = sadd.s32 %s30, 20
    %s41 = ssub.s32 %s19, %s38
    %s42 = ssub.s32 %s39, %s40
    %s43 = sor.u32 %s41, %s42
    %s44 = ssub.s32 %s20, %s34
    %s45 = sor.u32 %s43, %s44
    %p46 = scmp.eq.s32.totalorder %s45, 0
    %s48 = sadd.s32 %s47, 1
    %s49 = scalar_select %p46, %s47, %s48
    %p52 = pneg %p46
    %p53 = scmp.eq.s32.totalorder %s12, 1
    %p54 = por %p52, %p53
    %p55 = scmp.ne.s32.totalorder %s47, %s50
    %p56 = scmp.eq.s32.totalorder %s12, 0
    %p57 = por %p55, %p56
    %p58 = scmp.ne.s32.totalorder %s47, %s50
    %p59 = scmp.eq.s32.totalorder %s17, 1
    %p60 = por %p58, %p59
    %p61 = scmp.ne.s32.totalorder %s50, %s51
    %p62 = scmp.eq.s32.totalorder %s17, 0
    %p63 = por %p61, %p62
    %p64 = scmp.ne.s32.totalorder %s50, %s51
    %p65 = scmp.eq.s32.totalorder %s18, 1
    %p66 = por %p64, %p65
    %p68 = scmp.ne.s32.totalorder %s51, %s67
    %p69 = scmp.eq.s32.totalorder %s18, 0
    %p70 = por %p68, %p69
    %s71 = smul.u32 %s21, 2
    %s72 = sadd.s32 %s71, 39
    %p73 = scmp.gt.s32.totalorder %s72, 40
    %s74 = scalar_select %p73, %s72, 40
    %s75 = smul.u32 %s30, 2
    %s76 = sadd.s32 %s75, 39
    %p77 = scmp.gt.s32.totalorder %s76, 40
    %s78 = scalar_select %p77, %s76, 40
    %s79 = ssub.s32 %s19, %s38
    %s80 = ssub.s32 %s74, %s78
    %s81 = sor.u32 %s79, %s80
    %s82 = ssub.s32 %s20, %s34
    %s83 = sor.u32 %s81, %s82
    %p84 = scmp.eq.s32.totalorder %s83, 0
    %s86 = sadd.s32 %s85, 1
    %s87 = scalar_select %p84, %s85, %s86
    %p90 = pneg %p84
    %p91 = scmp.eq.s32.totalorder %s12, 1
    %p92 = por %p90, %p91
    %p93 = scmp.ne.s32.totalorder %s85, %s88
    %p94 = scmp.eq.s32.totalorder %s12, 0
    %p95 = por %p93, %p94
    %p96 = scmp.ne.s32.totalorder %s85, %s88
    %p97 = scmp.eq.s32.totalorder %s17, 1
    %p98 = por %p96, %p97
    %p99 = scmp.ne.s32.totalorder %s88, %s89
    %p100 = scmp.eq.s32.totalorder %s17, 0
    %p101 = por %p99, %p100
    %p102 = scmp.ne.s32.totalorder %s88, %s89
    %p103 = scmp.eq.s32.totalorder %s18, 1
    %p104 = por %p102, %p103
    %p106 = scmp.ne.s32.totalorder %s89, %s105
    %p107 = scmp.eq.s32.totalorder %s18, 0
    %p108 = por %p106, %p107
    %s109 = sadd.s32 %s21, 1
    %s110 = smul.u32 %s109, 2
    %s111 = sadd.s32 %s110, 40
    %p112 = scmp.lt.s32.totalorder %s111, 41
    %s113 = scalar_select %p112, %s111, 41
    %s114 = sadd.s32 %s30, 1
    %s115 = smul.u32 %s114, 2
    %s116 = sadd.s32 %s115, 40
    %p117 = scmp.lt.s32.totalorder %s116, 41
    %s118 = scalar_select %p117, %s116, 41
    %s119 = ssub.s32 %s19, %s38
    %s120 = ssub.s32 %s113, %s118
    %s121 = sor.u32 %s119, %s120
    %s122 = ssub.s32 %s20, %s34
    %s123 = sor.u32 %s121, %s122
    %p124 = scmp.eq.s32.totalorder %s123, 0
    %s126 = sadd.s32 %s125, 1
    %s127 = scalar_select %p124, %s125, %s126
    %p130 = pneg %p124
    %p131 = scmp.eq.s32.totalorder %s12, 1
    %p132 = por %p130, %p131
    %p133 = scmp.ne.s32.totalorder %s125, %s128
    %p134 = scmp.eq.s32.totalorder %s12, 0
    %p135 = por %p133, %p134
    %p136 = scmp.ne.s32.totalorder %s125, %s128
    %p137 = scmp.eq.s32.totalorder %s17, 1
    %p138 = por %p136, %p137
    %p139 = scmp.ne.s32.totalorder %s128, %s129
    %p140 = scmp.eq.s32.totalorder %s17, 0
    %p141 = por %p139, %p140
    %p142 = scmp.ne.s32.totalorder %s128, %s129
    %p143 = scmp.eq.s32.totalorder %s18, 1
    %p144 = por %p142, %p143
    %p146 = scmp.ne.s32.totalorder %s129, %s145
    %p147 = scmp.eq.s32.totalorder %s18, 0
    %p148 = por %p146, %p147
    %s149 = ssub.s32 %s20, %s34
    %p150 = scmp.eq.s32.totalorder %s149, 0
    %s152 = sadd.s32 %s151, 1
    %s153 = scalar_select %p150, %s151, %s152
    %p156 = pneg %p150
    %p157 = scmp.eq.s32.totalorder %s12, 1
    %p158 = por %p156, %p157
    %p159 = scmp.ne.s32.totalorder %s151, %s154
    %p160 = scmp.eq.s32.totalorder %s12, 0
    %p161 = por %p159, %p160
    %p162 = scmp.ne.s32.totalorder %s151, %s154
    %p163 = scmp.eq.s32.totalorder %s17, 1
    %p164 = por %p162, %p163
    %p165 = scmp.ne.s32.totalorder %s154, %s155
    %p166 = scmp.eq.s32.totalorder %s17, 0
    %p167 = por %p165, %p166
    %p168 = scmp.ne.s32.totalorder %s154, %s155
    %p169 = scmp.eq.s32.totalorder %s18, 1
    %p170 = por %p168, %p169
    %p172 = scmp.ne.s32.totalorder %s155, %s171
    %p173 = scmp.eq.s32.totalorder %s18, 0
    %p174 = por %p172, %p173
    %s175 = ssub.s32 %s20, %s34
    %p176 = scmp.eq.s32.totalorder %s175, 0
    %s178 = sadd.s32 %s177, 1
    %s179 = scalar_select %p176, %s177, %s178
    %p182 = pneg %p176
    %p183 = scmp.eq.s32.totalorder %s12, 1
    %p184 = por %p182, %p183
    %p185 = scmp.ne.s32.totalorder %s177, %s180
    %p186 = scmp.eq.s32.totalorder %s12, 0
    %p187 = por %p185, %p186
    %p188 = scmp.ne.s32.totalorder %s177, %s180
    %p189 = scmp.eq.s32.totalorder %s17, 1
    %p190 = por %p188, %p189
    %p191 = scmp.ne.s32.totalorder %s180, %s181
    %p192 = scmp.eq.s32.totalorder %s17, 0
    %p193 = por %p191, %p192
    %p194 = scmp.ne.s32.totalorder %s180, %s181
    %p195 = scmp.eq.s32.totalorder %s18, 1
    %p196 = por %p194, %p195
    %p198 = scmp.ne.s32.totalorder %s181, %s197
    %p199 = scmp.eq.s32.totalorder %s18, 0
    %p200 = por %p198, %p199
    %s201 = sadd.s32 %s21, 20
    %s202 = sadd.s32 %s30, 20
    %s203 = ssub.s32 %s19, %s38
    %s204 = ssub.s32 %s201, %s202
    %s205 = sor.u32 %s203, %s204
    %s206 = ssub.s32 %s20, %s34
    %s207 = sor.u32 %s205, %s206
    %p208 = scmp.eq.s32.totalorder %s207, 0
    %s210 = sadd.s32 %s209, 1
    %s211 = scalar_select %p208, %s209, %s210
    %p214 = pneg %p208
    %p215 = scmp.eq.s32.totalorder %s12, 1
    %p216 = por %p214, %p215
    %p217 = scmp.ne.s32.totalorder %s209, %s212
    %p218 = scmp.eq.s32.totalorder %s12, 0
    %p219 = por %p217, %p218
    %p220 = scmp.ne.s32.totalorder %s209, %s212
    %p221 = scmp.eq.s32.totalorder %s17, 1
    %p222 = por %p220, %p221
    %p223 = scmp.ne.s32.totalorder %s212, %s213
    %p224 = scmp.eq.s32.totalorder %s17, 0
    %p225 = por %p223, %p224
    %p226 = scmp.ne.s32.totalorder %s212, %s213
    %p227 = scmp.eq.s32.totalorder %s18, 1
    %p228 = por %p226, %p227
    %p230 = scmp.ne.s32.totalorder %s213, %s229
    %p231 = scmp.eq.s32.totalorder %s18, 0
    %p232 = por %p230, %p231
    %p233 = scmp.le.s32.totalorder 1, %s12
    %p234 = scmp.lt.s32.totalorder %s12, 3
    %p235 = pnand %p233, %p234
    %p236 = pneg %p235
    // Predicated region
    $region9: #{conv_ffn_forward.8} parent=5 // pred_check
      _
    $region10: #{conv_ffn_forward.8} parent=5 // pred_check_branch
      %238 = sbr.rel (%p235) target = $region12
    $region11: #{conv_ffn_forward.8} parent=5 // pred_region
      %s239 = ssub.s32 %s12, 1
      // Predicated region
      $region13: #{conv_ffn_forward.8} parent=11 // pred_check
        %p240 = pneg %p167
      $region14: #{conv_ffn_forward.8} parent=11 // pred_check_branch
        %242 = sbr.rel (%p240) target = $region16
      $region15: #{conv_ffn_forward.8} parent=11 // pred_region
        %p243 = scmp.lt.s32.totalorder %s23, 0
        %s244 = scalar_select %p243, %s23, 0
        %s245 = smul.addr %s244, 4
        %s246 = scalar_lea.vmem %s3, %s245
      $region16: #{conv_ffn_forward.8} parent=11 // pred_fallthru
        _
      // Predicated region
      $region17: #{conv_ffn_forward.8} parent=11 // pred_check
        %p247 = pneg %p193
      $region18: #{conv_ffn_forward.8} parent=11 // pred_check_branch
        %249 = sbr.rel (%p247) target = $region20
      $region19: #{conv_ffn_forward.8} parent=11 // pred_region
        %p250 = scmp.lt.s32.totalorder %s23, 0
        %s251 = scalar_select %p250, %s23, 0
        %s252 = scalar_lea.vmem %s4, %s251
      $region20: #{conv_ffn_forward.8} parent=11 // pred_fallthru
        _
    $region12: #{conv_ffn_forward.8} parent=5 // pred_fallthru
      _
    %p253 = scmp.lt.s32.totalorder %s12, 2
    // Predicated region
    $region21: #{conv_ffn_forward.8} parent=5 // pred_check
      %p254 = pneg %p253
    $region22: #{conv_ffn_forward.8} parent=5 // pred_check_branch
      %256 = sbr.rel (%p254) target = $region24
    $region23: #{conv_ffn_forward.8} parent=5 // pred_region
      // Predicated region
      $region25: #{conv_ffn_forward.8} parent=23 // pred_check
        %p257 = pneg %p57
      $region26: #{conv_ffn_forward.8} parent=23 // pred_check_branch
        %259 = sbr.rel (%p257) target = $region28
      $region27: #{conv_ffn_forward.8} parent=23 // pred_region
        %s260 = sadd.s32 %s21, 20
        %s261 = smul.u32 2, %s260
        %p262 = scmp.lt.s32.totalorder %s19, 1
        %s263 = scalar_select %p262, %s19, 1
        %p264 = scmp.lt.s32.totalorder %s261, 41
        %s265 = scalar_select %p264, %s261, 41
        %p266 = scmp.lt.s32.totalorder %s20, 0
        %s267 = scalar_select %p266, %s20, 0
        %s268 = sadd.s32 %s267, %s265
        %s269 = smul.addr %s263, 42
        %s270 = sadd.s32 %s268, %s269
        %s271 = smul.addr %s270, 4
        %s272 = scalar_lea.vmem %s0, %s271
        %s273 = sadd.s32 %s21, 20
        %s274 = smul.u32 2, %s273
      $region28: #{conv_ffn_forward.8} parent=23 // pred_fallthru
        _
      // Predicated region
      $region29: #{conv_ffn_forward.8} parent=23 // pred_check
        %p275 = pneg %p95
      $region30: #{conv_ffn_forward.8} parent=23 // pred_check_branch
        %277 = sbr.rel (%p275) target = $region32
      $region31: #{conv_ffn_forward.8} parent=23 // pred_region
        %s278 = smul.u32 %s21, 2
        %s279 = sadd.s32 %s278, 39
        %p280 = scmp.gt.s32.totalorder %s279, 40
        %s281 = scalar_select %p280, %s279, 40
        %p282 = scmp.lt.s32.totalorder %s19, 1
        %s283 = scalar_select %p282, %s19, 1
        %p284 = scmp.lt.s32.totalorder %s281, 41
        %s285 = scalar_select %p284, %s281, 41
        %p286 = scmp.lt.s32.totalorder %s20, 0
        %s287 = scalar_select %p286, %s20, 0
        %s288 = sadd.s32 %s287, %s285
        %s289 = smul.addr %s283, 42
        %s290 = sadd.s32 %s288, %s289
        %s291 = smul.addr %s290, 4
        %s292 = scalar_lea.vmem %s1, %s291
        %s293 = smul.u32 %s21, 2
        %s294 = sadd.s32 %s293, 39
        %p295 = scmp.gt.s32.totalorder %s294, 40
        %s296 = scalar_select %p295, %s294, 40
      $region32: #{conv_ffn_forward.8} parent=23 // pred_fallthru
        _
      // Predicated region
      $region33: #{conv_ffn_forward.8} parent=23 // pred_check
        %p297 = pneg %p135
      $region34: #{conv_ffn_forward.8} parent=23 // pred_check_branch
        %299 = sbr.rel (%p297) target = $region36
      $region35: #{conv_ffn_forward.8} parent=23 // pred_region
        %s300 = sadd.s32 %s21, 1
        %s301 = smul.u32 %s300, 2
        %s302 = sadd.s32 %s301, 40
        %p303 = scmp.lt.s32.totalorder %s302, 41
        %s304 = scalar_select %p303, %s302, 41
        %p305 = scmp.lt.s32.totalorder %s19, 1
        %s306 = scalar_select %p305, %s19, 1
        %p307 = scmp.lt.s32.totalorder %s304, 41
        %s308 = scalar_select %p307, %s304, 41
        %p309 = scmp.lt.s32.totalorder %s20, 0
        %s310 = scalar_select %p309, %s20, 0
        %s311 = sadd.s32 %s310, %s308
        %s312 = smul.addr %s306, 42
        %s313 = sadd.s32 %s311, %s312
        %s314 = smul.addr %s313, 4
        %s315 = scalar_lea.vmem %s2, %s314
        %s316 = sadd.s32 %s21, 1
        %s317 = smul.u32 %s316, 2
        %s318 = sadd.s32 %s317, 40
        %p319 = scmp.lt.s32.totalorder %s318, 41
        %s320 = scalar_select %p319, %s318, 41
      $region36: #{conv_ffn_forward.8} parent=23 // pred_fallthru
        _
    $region24: #{conv_ffn_forward.8} parent=5 // pred_fallthru
      _
    %p321 = scmp.le.s32.totalorder 1, %s12
    %p322 = scmp.lt.s32.totalorder %s12, 3
    %p323 = pnand %p321, %p322
    %p324 = pneg %p323
    // Predicated region
    $region37: #{conv_ffn_forward.8} parent=5 // pred_check
      _
    $region38: #{conv_ffn_forward.8} parent=5 // pred_check_branch
      %326 = sbr.rel (%p323) target = $region40
    $region39: #{conv_ffn_forward.8} parent=5 // pred_region
      %s327 = ssub.s32 %s12, 1
      %s328 = sadd.s32 %s24, 20
      %s329 = smul.u32 2, %s328
      %p330 = scmp.lt.s32.totalorder %s22, 1
      %s331 = scalar_select %p330, %s22, 1
      %p332 = scmp.lt.s32.totalorder %s329, 41
      %s333 = scalar_select %p332, %s329, 41
      %p334 = scmp.lt.s32.totalorder %s23, 0
      %s335 = scalar_select %p334, %s23, 0
      %s336 = sadd.s32 %s335, %s333
      %s337 = smul.addr %s331, 42
      %s338 = sadd.s32 %s336, %s337
      %s339 = smul.addr %s338, 4
      %s340 = scalar_lea.vmem %s0, %s339
      %p341 = pneg %p63
      %p342 = pneg %p60
      %s343 = smul.u32 %s24, 2
      %s344 = sadd.s32 %s343, 39
      %p345 = scmp.gt.s32.totalorder %s344, 40
      %s346 = scalar_select %p345, %s344, 40
      %p347 = scmp.lt.s32.totalorder %s22, 1
      %s348 = scalar_select %p347, %s22, 1
      %p349 = scmp.lt.s32.totalorder %s346, 41
      %s350 = scalar_select %p349, %s346, 41
      %p351 = scmp.lt.s32.totalorder %s23, 0
      %s352 = scalar_select %p351, %s23, 0
      %s353 = sadd.s32 %s352, %s350
      %s354 = smul.addr %s348, 42
      %s355 = sadd.s32 %s353, %s354
      %s356 = smul.addr %s355, 4
      %s357 = scalar_lea.vmem %s1, %s356
      %p358 = pneg %p101
      %p359 = pneg %p98
      %s360 = sadd.s32 %s24, 1
      %s361 = smul.u32 %s360, 2
      %s362 = sadd.s32 %s361, 40
      %p363 = scmp.lt.s32.totalorder %s362, 41
      %s364 = scalar_select %p363, %s362, 41
      %p365 = scmp.lt.s32.totalorder %s22, 1
      %s366 = scalar_select %p365, %s22, 1
      %p367 = scmp.lt.s32.totalorder %s364, 41
      %s368 = scalar_select %p367, %s364, 41
      %p369 = scmp.lt.s32.totalorder %s23, 0
      %s370 = scalar_select %p369, %s23, 0
      %s371 = sadd.s32 %s370, %s368
      %s372 = smul.addr %s366, 42
      %s373 = sadd.s32 %s371, %s372
      %s374 = smul.addr %s373, 4
      %s375 = scalar_lea.vmem %s2, %s374
      %p376 = pneg %p141
      %p377 = pneg %p138
      %p378 = scmp.lt.s32.totalorder %s23, 0
      %s379 = scalar_select %p378, %s23, 0
      %s380 = smul.addr %s379, 4
      %s381 = scalar_lea.vmem %s3, %s380
      %p382 = pneg %p167
      %p383 = pneg %p164
      %p384 = scmp.lt.s32.totalorder %s23, 0
      %s385 = scalar_select %p384, %s23, 0
      %s386 = scalar_lea.vmem %s4, %s385
      %p387 = pneg %p193
      %p388 = pneg %p190
      %p389 = pneg %p225
      %p390 = pneg %p222
      %s391 = sadd.s32 %s24, 20
      %s392 = smul.u32 2, %s391
      %p393 = scmp.lt.s32.totalorder %s22, 1
      %s394 = scalar_select %p393, %s22, 1
      %p395 = scmp.lt.s32.totalorder %s392, 41
      %s396 = scalar_select %p395, %s392, 41
      %p397 = scmp.lt.s32.totalorder %s23, 0
      %s398 = scalar_select %p397, %s23, 0
      %s399 = sadd.s32 %s398, %s396
      %s400 = smul.addr %s394, 42
      %s401 = sadd.s32 %s399, %s400
      %s402 = smul.addr %s401, 4
      %s403 = scalar_lea.vmem %s6, %s402
      %s404 = sadd.s32 %s24, 20
      %s405 = smul.u32 2, %s404
      %p406 = scmp.lt.s32.totalorder %s22, 1
      %s407 = scalar_select %p406, %s22, 1
      %p408 = scmp.lt.s32.totalorder %s405, 41
      %s409 = scalar_select %p408, %s405, 41
      %p410 = scmp.lt.s32.totalorder %s23, 0
      %s411 = scalar_select %p410, %s23, 0
      %s412 = sadd.s32 %s411, %s409
      %s413 = smul.addr %s407, 42
      %s414 = sadd.s32 %s412, %s413
      %s415 = smul.addr %s414, 4
      %s416 = scalar_lea.vmem %s0, %s415
      %s417 = sadd.s32 %s24, 20
      %s418 = smul.u32 2, %s417
      %s419 = smul.u32 %s24, 2
      %s420 = sadd.s32 %s419, 39
      %p421 = scmp.gt.s32.totalorder %s420, 40
      %s422 = scalar_select %p421, %s420, 40
      %p423 = scmp.lt.s32.totalorder %s22, 1
      %s424 = scalar_select %p423, %s22, 1
      %p425 = scmp.lt.s32.totalorder %s422, 41
      %s426 = scalar_select %p425, %s422, 41
      %p427 = scmp.lt.s32.totalorder %s23, 0
      %s428 = scalar_select %p427, %s23, 0
      %s429 = sadd.s32 %s428, %s426
      %s430 = smul.addr %s424, 42
      %s431 = sadd.s32 %s429, %s430
      %s432 = smul.addr %s431, 4
      %s433 = scalar_lea.vmem %s1, %s432
      %s434 = smul.u32 %s24, 2
      %s435 = sadd.s32 %s434, 39
      %p436 = scmp.gt.s32.totalorder %s435, 40
      %s437 = scalar_select %p436, %s435, 40
      %s438 = sadd.s32 %s24, 1
      %s439 = smul.u32 %s438, 2
      %s440 = sadd.s32 %s439, 40
      %p441 = scmp.lt.s32.totalorder %s440, 41
      %s442 = scalar_select %p441, %s440, 41
      %p443 = scmp.lt.s32.totalorder %s22, 1
      %s444 = scalar_select %p443, %s22, 1
      %p445 = scmp.lt.s32.totalorder %s442, 41
      %s446 = scalar_select %p445, %s442, 41
      %p447 = scmp.lt.s32.totalorder %s23, 0
      %s448 = scalar_select %p447, %s23, 0
      %s449 = sadd.s32 %s448, %s446
      %s450 = smul.addr %s444, 42
      %s451 = sadd.s32 %s449, %s450
      %s452 = smul.addr %s451, 4
      %s453 = scalar_lea.vmem %s2, %s452
      %s454 = sadd.s32 %s24, 1
      %s455 = smul.u32 %s454, 2
      %s456 = sadd.s32 %s455, 40
      %p457 = scmp.lt.s32.totalorder %s456, 41
      %s458 = scalar_select %p457, %s456, 41
      %p459 = scmp.lt.s32.totalorder %s23, 0
      %s460 = scalar_select %p459, %s23, 0
      %s461 = smul.addr %s460, 4
      %s462 = scalar_lea.vmem %s3, %s461
      %p463 = scmp.lt.s32.totalorder %s23, 0
      %s464 = scalar_select %p463, %s23, 0
      %s465 = scalar_lea.vmem %s4, %s464
      %s466 = sadd.s32 %s24, 20
      %s467 = smul.u32 2, %s466
      %p468 = scmp.lt.s32.totalorder %s22, 1
      %s469 = scalar_select %p468, %s22, 1
      %p470 = scmp.lt.s32.totalorder %s467, 41
      %s471 = scalar_select %p470, %s467, 41
      %p472 = scmp.lt.s32.totalorder %s23, 0
      %s473 = scalar_select %p472, %s23, 0
      %s474 = sadd.s32 %s473, %s471
      %s475 = smul.addr %s469, 42
      %s476 = sadd.s32 %s474, %s475
      %s477 = smul.addr %s476, 4
      %s478 = scalar_lea.vmem %s6, %s477
      %s479 = sadd.s32 %s24, 20
      %s480 = smul.u32 2, %s479
      %v481 = vld [vmem:[%s416] sm:$0xf]
      %v482 = vld [vmem:[%s416 + $0x4] sm:$0xf]
      %v483 = vunpack.c.l.bf16 %v481
      %v484 = vunpack.c.l.bf16 %v482
      %v485 = vld [vmem:[%s433] sm:$0xc]
      %v486 = vunpack.c.l.bf16 %v485
      %v487 = vld [vmem:[%s453] sm:$0x3]
      %v488 = vunpack.c.l.bf16 %v487
      %p489 = scmp.gt.s32.totalorder %s24, 0
      %s490 = scalar_select %p489, 1, 0
      %v491 = vstv %s490
      %vm492 = vcmp.eq.s32.totalorder %v491, 1
      %v493 = vsel %vm492, %v486, 0.0
      %p494 = scmp.lt.s32.totalorder %s24, 0
      %s495 = scalar_select %p494, 1, 0
      %v496 = vstv %s495
      %vm497 = vcmp.eq.s32.totalorder %v496, 1
      %v498 = vsel %vm497, %v488, 0.0
      %v500 = vrot.slane %v493, 4
      %vm504 = vcmask 1043456
      %v505 = vrot.slane %v483, 4
      %v506 = vrot.slane %v484, 4
      %v507 = vsel %vm504, %v505, %v506
      %v512 = vrot.slane %v498, 4
      %v514 = vsel %vm504, %v500, %v505
      %v515 = vsel %vm504, %v506, %v512
      %v516 = vlaneseq
      %v517 = vshrl.u32 %v516, 7
      %v518 = vadd.s32 %v517, 8
      %v519 = vand.u32 %v517, 3
      %v520 = vand.u32 %v518, 3
      %vm521 = vcmp.ne.s32.totalorder %v519, 0
      %vm522 = vcmp.ne.s32.totalorder %v520, 0
      %vm523 = vcmp.ne.s32.totalorder %v519, 3
      %vm524 = vcmp.ne.s32.totalorder %v520, 3
      %v525 = vld [vmem:[%s462] sm:$0x7]
      %v526 = vld [vmem:[%s462 + $0x4] sm:$0x7]
      %v527 = vld [vmem:[%s462 + $0x8] sm:$0x7]
      %vm530 = vcmask 1040384
      %v531 = vrot.slane 0.0, 7
      %v532 = vrot.slane %v514, 7
      %v533 = vsel %vm530, %v531, %v532
      %v534 = vrot.slane %v507, 7
      %v535 = vsel %vm530, %v532, %v534
      %v538 = vsel %vm521, %v533, 0.0
      %v539 = vsel %vm522, %v535, 0.0
      %v540 = vperm.slane %v525, 0
      %v541 = vmul.f32 %v538, %v540
      %v542 = vmul.f32 %v539, %v540
      %v543 = vadd.f32 %v541, 0.0
      %v544 = vadd.f32 %v542, 0.0
      %v545 = vperm.slane %v525, 1
      %v546 = vmul.f32 %v514, %v545
      %v547 = vmul.f32 %v507, %v545
      %v548 = vadd.f32 %v543, %v546
      %v549 = vadd.f32 %v544, %v547
      %vm551 = vcmask 1046528
      %v552 = vrot.slane %v514, 1
      %v553 = vrot.slane %v507, 1
      %v554 = vsel %vm551, %v552, %v553
      %v555 = vrot.slane %v515, 1
      %v556 = vsel %vm551, %v553, %v555
      %v559 = vsel %vm523, %v554, 0.0
      %v560 = vsel %vm524, %v556, 0.0
      %v561 = vperm.slane %v525, 2
      %v562 = vmul.f32 %v559, %v561
      %v563 = vmul.f32 %v560, %v561
      %v564 = vadd.f32 %v548, %v562
      %v565 = vadd.f32 %v549, %v563
      %vm566 = vcmask 1044480
      %v567 = vrot.slane %v514, 3
      %v568 = vrot.slane %v507, 3
      %v569 = vsel %vm566, %v567, %v568
      %v570 = vrot.slane %v515, 3
      %v571 = vsel %vm566, %v568, %v570
      %v574 = vsel %vm521, %v569, 0.0
      %v575 = vsel %vm522, %v571, 0.0
      %v576 = vperm.slane %v526, 0
      %v577 = vmul.f32 %v574, %v576
      %v578 = vmul.f32 %v575, %v576
      %v579 = vadd.f32 %v564, %v577
      %v580 = vadd.f32 %v565, %v578
      %v581 = vperm.slane %v526, 1
      %v582 = vmul.f32 %v514, %v581
      %v583 = vmul.f32 %v507, %v581
      %v584 = vmul.f32 %v515, %v581
      %v588 = vrot.slane %v582, 4
      %v589 = vrot.slane %v583, 4
      %v590 = vsel %vm504, %v588, %v589
      %v591 = vrot.slane %v584, 4
      %v592 = vsel %vm504, %v589, %v591
      %v595 = vadd.f32 %v579, %v590
      %v596 = vadd.f32 %v580, %v592
      %vm597 = vcmask 1042432
      %v598 = vrot.slane %v514, 5
      %v599 = vrot.slane %v507, 5
      %v600 = vsel %vm597, %v598, %v599
      %v601 = vrot.slane %v515, 5
      %v602 = vsel %vm597, %v599, %v601
      %v605 = vsel %vm523, %v600, 0.0
      %v606 = vsel %vm524, %v602, 0.0
      %v607 = vperm.slane %v526, 2
      %v608 = vmul.f32 %v605, %v607
      %v609 = vmul.f32 %v606, %v607
      %v610 = vadd.f32 %v595, %v608
      %v611 = vadd.f32 %v596, %v609
      %v612 = vrot.slane %v515, 7
      %v613 = vsel %vm530, %v534, %v612
      %v615 = vsel %vm521, %v535, 0.0
      %v616 = vsel %vm522, %v613, 0.0
      %v617 = vperm.slane %v527, 0
      %v618 = vmul.f32 %v615, %v617
      %v619 = vmul.f32 %v616, %v617
      %v620 = vadd.f32 %v610, %v618
      %v621 = vadd.f32 %v611, %v619
      %v622 = vperm.slane %v527, 1
      %v623 = vmul.f32 %v507, %v622
      %v624 = vmul.f32 %v515, %v622
      %v625 = vadd.f32 %v620, %v623
      %v626 = vadd.f32 %v621, %v624
      %v627 = vrot.slane 0.0, 1
      %v628 = vsel %vm551, %v555, %v627
      %v630 = vsel %vm523, %v556, 0.0
      %v631 = vsel %vm524, %v628, 0.0
      %v632 = vperm.slane %v527, 2
      %v633 = vmul.f32 %v630, %v632
      %v634 = vmul.f32 %v631, %v632
      %v635 = vadd.f32 %v625, %v633
      %v636 = vadd.f32 %v626, %v634
      %v637 = vld [vmem:[%s465] sm:$0x1]
      %v639 = vperm.slane %v637, 0
      %v641 = vadd.f32 %v635, %v639
      %v642 = vadd.f32 %v636, %v639
      %v643 = vmul.f32 %v641, 0.5
      %v644 = vmul.f32 %v642, 0.5
      %v645 = vmul.f32 %v641, 0.70710677
      %v646 = vmul.f32 %v642, 0.70710677
      %v647 = vmul.f32 %v645, %v645
      %v648 = vmin.f32 16.0, %v647
      %v649 = vmul.f32 %v648, 2.1237322e-06
      %v650 = vadd.f32 %v649, 0.00028619796
      %v651 = vmul.f32 %v648, %v650
      %v652 = vadd.f32 %v651, 0.0036580483
      %v653 = vmul.f32 %v648, %v652
      %v654 = vadd.f32 %v653, 0.05243302
      %v655 = vmul.f32 %v648, %v654
      %v656 = vadd.f32 %v655, 0.18741608
      %v657 = vmul.f32 %v648, %v656
      %v658 = vadd.f32 %v657, 1.1283791
      %v659 = vmul.f32 %v645, %v658
      %v660 = vmul.f32 %v648, 3.8918573e-05
      %v661 = vadd.f32 %v660, 0.001143296
      %v662 = vmul.f32 %v648, %v661
      %v663 = vadd.f32 %v662, 0.014752088
      %v664 = vmul.f32 %v648, %v663
      %v665 = vadd.f32 %v664, 0.112945676
      %v666 = vmul.f32 %v648, %v665
      %v667 = vadd.f32 %v666, 0.4994258
      %v668 = vmul.f32 %v648, %v667
      %v669 = vadd.f32 %v668, 1.0
      %v670 = vrcp.pop %v669
      %v671 = vmul.f32 %v669, %v670
      %v672 = vsub.f32 1.0, %v671
      %v673 = vmul.f32 %v670, %v672
      %v674 = vadd.f32 %v670, %v673
      %vm675 = vweird.f32 %v669
      %vm676 = vweird.f32 %v670
      %vm677 = vmor %vm675, %vm676
      %v678 = vsel %vm677, %v670, %v674
      %v679 = vand.u32 2147483647, %v669
      %vm680 = vcmp.eq.f32.partialorder %v679, 8.507059e+37
      %v681 = vand.u32 %v669, 2147483648
      %v682 = vor.u32 1.1754944e-38, %v681
      %v683 = vsel %vm680, %v682, %v678
      %v684 = vmul.f32 %v659, %v683
      %v685 = vmin.f32 %v684, 1.0
      %v686 = vmax.f32 %v685, -1.0
      %v687 = vmul.f32 %v646, %v646
      %v688 = vmin.f32 16.0, %v687
      %v689 = vmul.f32 %v688, 2.1237322e-06
      %v690 = vadd.f32 %v689, 0.00028619796
      %v691 = vmul.f32 %v688, %v690
      %v692 = vadd.f32 %v691, 0.0036580483
      %v693 = vmul.f32 %v688, %v692
      %v694 = vadd.f32 %v693, 0.05243302
      %v695 = vmul.f32 %v688, %v694
      %v696 = vadd.f32 %v695, 0.18741608
      %v697 = vmul.f32 %v688, %v696
      %v698 = vadd.f32 %v697, 1.1283791
      %v699 = vmul.f32 %v646, %v698
      %v700 = vmul.f32 %v688, 3.8918573e-05
      %v701 = vadd.f32 %v700, 0.001143296
      %v702 = vmul.f32 %v688, %v701
      %v703 = vadd.f32 %v702, 0.014752088
      %v704 = vmul.f32 %v688, %v703
      %v705 = vadd.f32 %v704, 0.112945676
      %v706 = vmul.f32 %v688, %v705
      %v707 = vadd.f32 %v706, 0.4994258
      %v708 = vmul.f32 %v688, %v707
      %v709 = vadd.f32 %v708, 1.0
      %v710 = vrcp.pop %v709
      %v711 = vmul.f32 %v709, %v710
      %v712 = vsub.f32 1.0, %v711
      %v713 = vmul.f32 %v710, %v712
      %v714 = vadd.f32 %v710, %v713
      %vm715 = vweird.f32 %v709
      %vm716 = vweird.f32 %v710
      %vm717 = vmor %vm715, %vm716
      %v718 = vsel %vm717, %v710, %v714
      %v719 = vand.u32 2147483647, %v709
      %vm720 = vcmp.eq.f32.partialorder %v719, 8.507059e+37
      %v721 = vand.u32 %v709, 2147483648
      %v722 = vor.u32 1.1754944e-38, %v721
      %v723 = vsel %vm720, %v722, %v718
      %v724 = vmul.f32 %v699, %v723
      %v725 = vmin.f32 %v724, 1.0
      %v726 = vmax.f32 %v725, -1.0
      %v727 = vadd.f32 %v686, 1.0
      %v728 = vadd.f32 %v726, 1.0
      %v729 = vmul.f32 %v643, %v727
      %v730 = vmul.f32 %v644, %v728
      %v731 = vpack.c.bf16 %v729, %v729
      %v732 = vpack.c.bf16 %v730, %v730
      %vm733 = vcmask 257024
      %734 = vst.msk [vmem:[%s478] sm:$0xf] %vm733, %v731
      %735 = vst.msk [vmem:[%s478 + $0x4] sm:$0xf] %vm733, %v732
      %s736 = sadd.s32 %s24, 20
      %s737 = smul.u32 2, %s736
      %p738 = scmp.lt.s32.totalorder %s22, 1
      %s739 = scalar_select %p738, %s22, 1
      %p740 = scmp.lt.s32.totalorder %s737, 41
      %s741 = scalar_select %p740, %s737, 41
      %p742 = scmp.lt.s32.totalorder %s23, 0
      %s743 = scalar_select %p742, %s23, 0
      %s744 = sadd.s32 %s743, %s741
      %s745 = smul.addr %s739, 42
      %s746 = sadd.s32 %s744, %s745
      %s747 = smul.addr %s746, 4
      %s748 = scalar_lea.vmem %s6, %s747
      // Predicated region
      $region41: #{conv_ffn_forward.8} parent=39 // pred_check
        %p749 = pneg %p222
      $region42: #{conv_ffn_forward.8} parent=39 // pred_check_branch
        %751 = sbr.rel (%p749) target = $region44
      $region43: #{conv_ffn_forward.8} parent=39 // pred_region
        %s752 = sadd.s32 %s24, 20
        %s753 = smul.u32 2, %s752
      $region44: #{conv_ffn_forward.8} parent=39 // pred_fallthru
        _
    $region40: #{conv_ffn_forward.8} parent=5 // pred_fallthru
      _
    %p754 = scmp.le.s32.totalorder 2, %s12
    // Predicated region
    $region45: #{conv_ffn_forward.8} parent=5 // pred_check
      %p755 = pneg %p754
    $region46: #{conv_ffn_forward.8} parent=5 // pred_check_branch
      %757 = sbr.rel (%p755) target = $region48
    $region47: #{conv_ffn_forward.8} parent=5 // pred_region
      %s758 = ssub.s32 %s12, 2
      // Predicated region
      $region49: #{conv_ffn_forward.8} parent=47 // pred_check
        %p759 = pneg %p228
      $region50: #{conv_ffn_forward.8} parent=47 // pred_check_branch
        %761 = sbr.rel (%p759) target = $region52
      $region51: #{conv_ffn_forward.8} parent=47 // pred_region
        %s762 = sadd.s32 %s27, 20
        %s763 = smul.u32 2, %s762
        %p764 = scmp.lt.s32.totalorder %s25, 1
        %s765 = scalar_select %p764, %s25, 1
        %p766 = scmp.lt.s32.totalorder %s763, 41
        %s767 = scalar_select %p766, %s763, 41
        %p768 = scmp.lt.s32.totalorder %s26, 0
        %s769 = scalar_select %p768, %s26, 0
        %s770 = sadd.s32 %s769, %s767
        %s771 = smul.addr %s765, 42
        %s772 = sadd.s32 %s770, %s771
        %s773 = smul.addr %s772, 4
        %s774 = scalar_lea.vmem %s6, %s773
      $region52: #{conv_ffn_forward.8} parent=47 // pred_fallthru
        _
    $region48: #{conv_ffn_forward.8} parent=5 // pred_fallthru
      _
  $region6: #{conv_ffn_forward.8} parent=0 // loop_footer
    %s16 = sadd.s32 1, %s12
  $region7: #{conv_ffn_forward.8} parent=0 // loop_footer_branch
    %11 = sbr.rel target = $region3
  $region8: #{conv_ffn_forward.8} parent=0 // loop_exit
    _

// kernel: conv_ffn_forward.5
$region0: #{conv_ffn_forward.5}
  #allocation0 [shape = 'u32[]', space=smem, size = 0x4, offset = 0x4, fixed_abs, tag = 'smem constant byte address 0x4 - core index']
  #allocation1 [shape = 'u32[72,128]{1,0:T(1,128)}', space=vmem, size = 0x9000, scoped, tag = 'internal scratch']
  #allocation2 [shape = 'f32[336,32]{1,0:T(8,128)}', space=vmem, size = 0x2a000, scoped, tag = 'scratch operand']
  %s0 = inlined_call_operand.vmem [shape: f32[672,16], index: 0, kind: input, shape index: {}]
  %s1 = inlined_call_operand.vmem [shape: bf16[16,32], index: 1, kind: input, shape index: {}]
  %s2 = inlined_call_operand.vmem [shape: f32[1,32], index: 2, kind: input, shape index: {}]
  %s3 = inlined_call_operand.vmem [shape: bf16[672,32], index: 3, kind: output, shape index: {}]
  %s4 = sld [smem:[#allocation0]]
  $region53: #{conv_ffn_forward.5} parent=0
    _
  %s6 = ssub.s32 1, %s4
  %s7 = scalar_select 0, %s6, %s4
  loop: start=0, step=1, limit=4
  $region2: #{conv_ffn_forward.5} parent=0 // loop_pre_header
    _
  $region3: #{conv_ffn_forward.5} parent=0 // loop_header
    %s9 = sphi 0, %s13
    %p10 = scmp.ge.s32.totalorder %s9, 4
    %s16 = sphi 0, %s35
    %s17 = sphi 0, %s31
    %s18 = sphi 0, %s27
    %s19 = sphi 0, %s16
    %s20 = sphi 0, %s17
    %s21 = sphi 0, %s18
    %s22 = sphi 0, %s19
    %s23 = sphi 0, %s20
    %s24 = sphi 0, %s21
    %s40 = sphi 0, %s42
    %s43 = sphi 0, %s40
    %s44 = sphi 0, %s43
    %s60 = sphi 0, %s44
    %s68 = sphi 0, %s70
    %s71 = sphi 0, %s68
    %s72 = sphi 0, %s71
    %s88 = sphi 0, %s72
    %s94 = sphi 0, %s96
    %s97 = sphi 0, %s94
    %s98 = sphi 0, %s97
    %s114 = sphi 0, %s98
    %s122 = sphi 0, %s124
    %s125 = sphi 0, %s122
    %s126 = sphi 0, %s125
    %s142 = sphi 0, %s126
  $region4: #{conv_ffn_forward.5} parent=0 // loop_header_branch
    %12 = sbr.rel (%p10) target = $region8
  $region5: #{conv_ffn_forward.5} parent=0 // loop_body
    %s14 = ssub.s32 %s9, 1
    %s15 = ssub.s32 %s9, 2
    %s25 = sadd.s32 1, %s18
    %p26 = scmp.ge.s32.totalorder %s25, 1
    %s27 = scalar_select %p26, 0, %s25
    %s28 = sadd.s32 1, %s17
    %s29 = scalar_select %p26, %s28, %s17
    %p30 = scmp.ge.s32.totalorder %s29, 1
    %s31 = scalar_select %p30, 0, %s29
    %s32 = sadd.s32 1, %s16
    %s33 = scalar_select %p30, %s32, %s16
    %p34 = scmp.ge.s32.totalorder %s33, 2
    %s35 = scalar_select %p34, 0, %s33
    %s36 = ssub.s32 %s16, %s35
    %s37 = ssub.s32 %s18, %s27
    %s38 = sor.u32 %s36, %s37
    %p39 = scmp.eq.s32.totalorder %s38, 0
    %s41 = sadd.s32 %s40, 1
    %s42 = scalar_select %p39, %s40, %s41
    %p45 = pneg %p39
    %p46 = scmp.eq.s32.totalorder %s9, 1
    %p47 = por %p45, %p46
    %p48 = scmp.ne.s32.totalorder %s40, %s43
    %p49 = scmp.eq.s32.totalorder %s9, 0
    %p50 = por %p48, %p49
    %p51 = scmp.ne.s32.totalorder %s40, %s43
    %p52 = scmp.eq.s32.totalorder %s14, 1
    %p53 = por %p51, %p52
    %p54 = scmp.ne.s32.totalorder %s43, %s44
    %p55 = scmp.eq.s32.totalorder %s14, 0
    %p56 = por %p54, %p55
    %p57 = scmp.ne.s32.totalorder %s43, %s44
    %p58 = scmp.eq.s32.totalorder %s15, 1
    %p59 = por %p57, %p58
    %p61 = scmp.ne.s32.totalorder %s44, %s60
    %p62 = scmp.eq.s32.totalorder %s15, 0
    %p63 = por %p61, %p62
    %s64 = ssub.s32 %s18, %s27
    %s65 = ssub.s32 %s17, %s31
    %s66 = sor.u32 %s64, %s65
    %p67 = scmp.eq.s32.totalorder %s66, 0
    %s69 = sadd.s32 %s68, 1
    %s70 = scalar_select %p67, %s68, %s69
    %p73 = pneg %p67
    %p74 = scmp.eq.s32.totalorder %s9, 1
    %p75 = por %p73, %p74
    %p76 = scmp.ne.s32.totalorder %s68, %s71
    %p77 = scmp.eq.s32.totalorder %s9, 0
    %p78 = por %p76, %p77
    %p79 = scmp.ne.s32.totalorder %s68, %s71
    %p80 = scmp.eq.s32.totalorder %s14, 1
    %p81 = por %p79, %p80
    %p82 = scmp.ne.s32.totalorder %s71, %s72
    %p83 = scmp.eq.s32.totalorder %s14, 0
    %p84 = por %p82, %p83
    %p85 = scmp.ne.s32.totalorder %s71, %s72
    %p86 = scmp.eq.s32.totalorder %s15, 1
    %p87 = por %p85, %p86
    %p89 = scmp.ne.s32.totalorder %s72, %s88
    %p90 = scmp.eq.s32.totalorder %s15, 0
    %p91 = por %p89, %p90
    %s92 = ssub.s32 %s17, %s31
    %p93 = scmp.eq.s32.totalorder %s92, 0
    %s95 = sadd.s32 %s94, 1
    %s96 = scalar_select %p93, %s94, %s95
    %p99 = pneg %p93
    %p100 = scmp.eq.s32.totalorder %s9, 1
    %p101 = por %p99, %p100
    %p102 = scmp.ne.s32.totalorder %s94, %s97
    %p103 = scmp.eq.s32.totalorder %s9, 0
    %p104 = por %p102, %p103
    %p105 = scmp.ne.s32.totalorder %s94, %s97
    %p106 = scmp.eq.s32.totalorder %s14, 1
    %p107 = por %p105, %p106
    %p108 = scmp.ne.s32.totalorder %s97, %s98
    %p109 = scmp.eq.s32.totalorder %s14, 0
    %p110 = por %p108, %p109
    %p111 = scmp.ne.s32.totalorder %s97, %s98
    %p112 = scmp.eq.s32.totalorder %s15, 1
    %p113 = por %p111, %p112
    %p115 = scmp.ne.s32.totalorder %s98, %s114
    %p116 = scmp.eq.s32.totalorder %s15, 0
    %p117 = por %p115, %p116
    %s118 = ssub.s32 %s16, %s35
    %s119 = ssub.s32 %s17, %s31
    %s120 = sor.u32 %s118, %s119
    %p121 = scmp.eq.s32.totalorder %s120, 0
    %s123 = sadd.s32 %s122, 1
    %s124 = scalar_select %p121, %s122, %s123
    %p127 = pneg %p121
    %p128 = scmp.eq.s32.totalorder %s9, 1
    %p129 = por %p127, %p128
    %p130 = scmp.ne.s32.totalorder %s122, %s125
    %p131 = scmp.eq.s32.totalorder %s9, 0
    %p132 = por %p130, %p131
    %p133 = scmp.ne.s32.totalorder %s122, %s125
    %p134 = scmp.eq.s32.totalorder %s14, 1
    %p135 = por %p133, %p134
    %p136 = scmp.ne.s32.totalorder %s125, %s126
    %p137 = scmp.eq.s32.totalorder %s14, 0
    %p138 = por %p136, %p137
    %p139 = scmp.ne.s32.totalorder %s125, %s126
    %p140 = scmp.eq.s32.totalorder %s15, 1
    %p141 = por %p139, %p140
    %p143 = scmp.ne.s32.totalorder %s126, %s142
    %p144 = scmp.eq.s32.totalorder %s15, 0
    %p145 = por %p143, %p144
    %p146 = scmp.le.s32.totalorder 1, %s9
    %p147 = scmp.lt.s32.totalorder %s9, 3
    %p148 = pnand %p146, %p147
    %p149 = pneg %p148
    // Predicated region
    $region9: #{conv_ffn_forward.5} parent=5 // pred_check
      _
    $region10: #{conv_ffn_forward.5} parent=5 // pred_check_branch
      %151 = sbr.rel (%p148) target = $region12
    $region11: #{conv_ffn_forward.5} parent=5 // pred_region
      %s152 = ssub.s32 %s9, 1
      // Predicated region
      $region13: #{conv_ffn_forward.5} parent=11 // pred_check
        %p153 = pneg %p84
      $region14: #{conv_ffn_forward.5} parent=11 // pred_check_branch
        %155 = sbr.rel (%p153) target = $region16
      $region15: #{conv_ffn_forward.5} parent=11 // pred_region
        %s156 = smul.u32 2, %s21
        %p157 = scmp.lt.s32.totalorder %s156, 1
        %s158 = scalar_select %p157, %s156, 1
        %p159 = scmp.lt.s32.totalorder %s20, 0
        %s160 = scalar_select %p159, %s20, 0
        %s161 = sadd.s32 %s160, %s158
        %s162 = smul.addr %s161, 4
        %s163 = scalar_lea.vmem %s1, %s162
        %s164 = smul.u32 2, %s21
      $region16: #{conv_ffn_forward.5} parent=11 // pred_fallthru
        _
      // Predicated region
      $region17: #{conv_ffn_forward.5} parent=11 // pred_check
        %p165 = pneg %p110
      $region18: #{conv_ffn_forward.5} parent=11 // pred_check_branch
        %167 = sbr.rel (%p165) target = $region20
      $region19: #{conv_ffn_forward.5} parent=11 // pred_region
        %p168 = scmp.lt.s32.totalorder %s20, 0
        %s169 = scalar_select %p168, %s20, 0
        %s170 = scalar_lea.vmem %s2, %s169
      $region20: #{conv_ffn_forward.5} parent=11 // pred_fallthru
        _
    $region12: #{conv_ffn_forward.5} parent=5 // pred_fallthru
      _
    %p171 = scmp.lt.s32.totalorder %s9, 2
    // Predicated region
    $region21: #{conv_ffn_forward.5} parent=5 // pred_check
      %p172 = pneg %p171
    $region22: #{conv_ffn_forward.5} parent=5 // pred_check_branch
      %174 = sbr.rel (%p172) target = $region24
    $region23: #{conv_ffn_forward.5} parent=5 // pred_region
      // Predicated region
      $region25: #{conv_ffn_forward.5} parent=23 // pred_check
        %p175 = pneg %p50
      $region26: #{conv_ffn_forward.5} parent=23 // pred_check_branch
        %177 = sbr.rel (%p175) target = $region28
      $region27: #{conv_ffn_forward.5} parent=23 // pred_region
        %s178 = smul.u32 42, %s16
        %p179 = scmp.lt.s32.totalorder %s178, 83
        %s180 = scalar_select %p179, %s178, 83
        %p181 = scmp.lt.s32.totalorder %s18, 0
        %s182 = scalar_select %p181, %s18, 0
        %s183 = sadd.s32 %s182, %s180
        %s184 = smul.addr %s183, 8
        %s185 = scalar_lea.vmem %s0, %s184
        %s186 = smul.u32 42, %s16
      $region28: #{conv_ffn_forward.5} parent=23 // pred_fallthru
        _
    $region24: #{conv_ffn_forward.5} parent=5 // pred_fallthru
      _
    %p187 = scmp.le.s32.totalorder 1, %s9
    %p188 = scmp.lt.s32.totalorder %s9, 3
    %p189 = pnand %p187, %p188
    %p190 = pneg %p189
    // Predicated region
    $region29: #{conv_ffn_forward.5} parent=5 // pred_check
      _
    $region30: #{conv_ffn_forward.5} parent=5 // pred_check_branch
      %192 = sbr.rel (%p189) target = $region32
    $region31: #{conv_ffn_forward.5} parent=5 // pred_region
      %s193 = ssub.s32 %s9, 1
      %s194 = smul.u32 42, %s19
      %p195 = scmp.lt.s32.totalorder %s194, 83
      %s196 = scalar_select %p195, %s194, 83
      %p197 = scmp.lt.s32.totalorder %s21, 0
      %s198 = scalar_select %p197, %s21, 0
      %s199 = sadd.s32 %s198, %s196
      %s200 = smul.addr %s199, 8
      %s201 = scalar_lea.vmem %s0, %s200
      %p202 = pneg %p56
      %p203 = pneg %p53
      %s204 = smul.u32 2, %s21
      %p205 = scmp.lt.s32.totalorder %s204, 1
      %s206 = scalar_select %p205, %s204, 1
      %p207 = scmp.lt.s32.totalorder %s20, 0
      %s208 = scalar_select %p207, %s20, 0
      %s209 = sadd.s32 %s208, %s206
      %s210 = smul.addr %s209, 4
      %s211 = scalar_lea.vmem %s1, %s210
      %p212 = pneg %p84
      %p213 = pneg %p81
      %p214 = scmp.lt.s32.totalorder %s20, 0
      %s215 = scalar_select %p214, %s20, 0
      %s216 = scalar_lea.vmem %s2, %s215
      %p217 = pneg %p110
      %p218 = pneg %p107
      %p219 = pneg %p138
      %p220 = pneg %p135
      %s221 = smul.u32 42, %s19
      %p222 = scmp.lt.s32.totalorder %s221, 83
      %s223 = scalar_select %p222, %s221, 83
      %p224 = scmp.lt.s32.totalorder %s20, 0
      %s225 = scalar_select %p224, %s20, 0
      %s226 = sadd.s32 %s225, %s223
      %s227 = smul.addr %s226, 4
      %s228 = scalar_lea.vmem %s3, %s227
      %s229 = smul.u32 42, %s19
      %p230 = scmp.lt.s32.totalorder %s229, 83
      %s231 = scalar_select %p230, %s229, 83
      %p232 = scmp.lt.s32.totalorder %s21, 0
      %s233 = scalar_select %p232, %s21, 0
      %s234 = sadd.s32 %s233, %s231
      %s235 = smul.addr %s234, 8
      %s236 = scalar_lea.vmem %s0, %s235
      %s237 = smul.u32 42, %s19
      %s238 = smul.u32 2, %s21
      %p239 = scmp.lt.s32.totalorder %s238, 1
      %s240 = scalar_select %p239, %s238, 1
      %p241 = scmp.lt.s32.totalorder %s20, 0
      %s242 = scalar_select %p241, %s20, 0
      %s243 = sadd.s32 %s242, %s240
      %s244 = smul.addr %s243, 4
      %s245 = scalar_lea.vmem %s1, %s244
      %s246 = smul.u32 2, %s21
      %p247 = scmp.lt.s32.totalorder %s20, 0
      %s248 = scalar_select %p247, %s20, 0
      %s249 = scalar_lea.vmem %s2, %s248
      %s250 = smul.u32 42, %s19
      %p251 = scmp.lt.s32.totalorder %s250, 83
      %s252 = scalar_select %p251, %s250, 83
      %p253 = scmp.lt.s32.totalorder %s20, 0
      %s254 = scalar_select %p253, %s20, 0
      %s255 = sadd.s32 %s254, %s252
      %s256 = smul.addr %s255, 4
      %s257 = scalar_lea.vmem %s3, %s256
      %s258 = smul.u32 42, %s19
      %p260 = scmp.eq.s32.totalorder %s21, 0
      // Predicated region
      $region33: #{conv_ffn_forward.5} parent=31 // pred_check
        %p261 = pneg %p260
      $region34: #{conv_ffn_forward.5} parent=31 // pred_check_branch
        %263 = sbr.rel (%p261) target = $region36
      $region35: #{conv_ffn_forward.5} parent=31 // pred_region
        %vm264 = vcmask 261120
        %265 = vst.msk [vmem:[#allocation2] sm:$0xff] %vm264, 0.0
        %266 = vst.msk [vmem:[#allocation2 + $0x8] sm:$0xff] %vm264, 0.0
        %267 = vst.msk [vmem:[#allocation2 + $0x10] sm:$0xff] %vm264, 0.0
        %268 = vst.msk [vmem:[#allocation2 + $0x18] sm:$0xff] %vm264, 0.0
        %269 = vst.msk [vmem:[#allocation2 + $0x20] sm:$0xff] %vm264, 0.0
        %270 = vst.msk [vmem:[#allocation2 + $0x28] sm:$0xff] %vm264, 0.0
        %271 = vst.msk [vmem:[#allocation2 + $0x30] sm:$0xff] %vm264, 0.0
        %272 = vst.msk [vmem:[#allocation2 + $0x38] sm:$0xff] %vm264, 0.0
        %273 = vst.msk [vmem:[#allocation2 + $0x40] sm:$0xff] %vm264, 0.0
        %274 = vst.msk [vmem:[#allocation2 + $0x48] sm:$0xff] %vm264, 0.0
        %275 = vst.msk [vmem:[#allocation2 + $0x50] sm:$0xff] %vm264, 0.0
        %276 = vst.msk [vmem:[#allocation2 + $0x58] sm:$0xff] %vm264, 0.0
        %277 = vst.msk [vmem:[#allocation2 + $0x60] sm:$0xff] %vm264, 0.0
        %278 = vst.msk [vmem:[#allocation2 + $0x68] sm:$0xff] %vm264, 0.0
        %279 = vst.msk [vmem:[#allocation2 + $0x70] sm:$0xff] %vm264, 0.0
        %280 = vst.msk [vmem:[#allocation2 + $0x78] sm:$0xff] %vm264, 0.0
        %281 = vst.msk [vmem:[#allocation2 + $0x80] sm:$0xff] %vm264, 0.0
        %282 = vst.msk [vmem:[#allocation2 + $0x88] sm:$0xff] %vm264, 0.0
        %283 = vst.msk [vmem:[#allocation2 + $0x90] sm:$0xff] %vm264, 0.0
        %284 = vst.msk [vmem:[#allocation2 + $0x98] sm:$0xff] %vm264, 0.0
        %285 = vst.msk [vmem:[#allocation2 + $0xa0] sm:$0xff] %vm264, 0.0
        %286 = vst.msk [vmem:[#allocation2 + $0xa8] sm:$0xff] %vm264, 0.0
        %287 = vst.msk [vmem:[#allocation2 + $0xb0] sm:$0xff] %vm264, 0.0
        %288 = vst.msk [vmem:[#allocation2 + $0xb8] sm:$0xff] %vm264, 0.0
        %289 = vst.msk [vmem:[#allocation2 + $0xc0] sm:$0xff] %vm264, 0.0
        %290 = vst.msk [vmem:[#allocation2 + $0xc8] sm:$0xff] %vm264, 0.0
        %291 = vst.msk [vmem:[#allocation2 + $0xd0] sm:$0xff] %vm264, 0.0
        %292 = vst.msk [vmem:[#allocation2 + $0xd8] sm:$0xff] %vm264, 0.0
        %293 = vst.msk [vmem:[#allocation2 + $0xe0] sm:$0xff] %vm264, 0.0
        %294 = vst.msk [vmem:[#allocation2 + $0xe8] sm:$0xff] %vm264, 0.0
        %295 = vst.msk [vmem:[#allocation2 + $0xf0] sm:$0xff] %vm264, 0.0
        %296 = vst.msk [vmem:[#allocation2 + $0xf8] sm:$0xff] %vm264, 0.0
        %297 = vst.msk [vmem:[#allocation2 + $0x100] sm:$0xff] %vm264, 0.0
        %298 = vst.msk [vmem:[#allocation2 + $0x108] sm:$0xff] %vm264, 0.0
        %299 = vst.msk [vmem:[#allocation2 + $0x110] sm:$0xff] %vm264, 0.0
        %300 = vst.msk [vmem:[#allocation2 + $0x118] sm:$0xff] %vm264, 0.0
        %301 = vst.msk [vmem:[#allocation2 + $0x120] sm:$0xff] %vm264, 0.0
        %302 = vst.msk [vmem:[#allocation2 + $0x128] sm:$0xff] %vm264, 0.0
        %303 = vst.msk [vmem:[#allocation2 + $0x130] sm:$0xff] %vm264, 0.0
        %304 = vst.msk [vmem:[#allocation2 + $0x138] sm:$0xff] %vm264, 0.0
        %305 = vst.msk [vmem:[#allocation2 + $0x140] sm:$0xff] %vm264, 0.0
        %306 = vst.msk [vmem:[#allocation2 + $0x148] sm:$0xff] %vm264, 0.0
      $region36: #{conv_ffn_forward.5} parent=31 // pred_fallthru
        _
      %v307 = vld [vmem:[%s236] sm:$0xff]
      %v308 = vld [vmem:[%s236 + $0x8] sm:$0xff]
      %v309 = vld [vmem:[%s236 + $0x10] sm:$0xff]
      %v310 = vld [vmem:[%s236 + $0x18] sm:$0xff]
      %v311 = vld [vmem:[%s236 + $0x20] sm:$0xff]
      %v312 = vld [vmem:[%s236 + $0x28] sm:$0xff]
      %v313 = vld [vmem:[%s236 + $0x30] sm:$0xff]
      %v314 = vld [vmem:[%s236 + $0x38] sm:$0xff]
      %v315 = vld [vmem:[%s236 + $0x40] sm:$0xff]
      %v316 = vld [vmem:[%s236 + $0x48] sm:$0xff]
      %v317 = vld [vmem:[%s236 + $0x50] sm:$0xff]
      %v318 = vld [vmem:[%s236 + $0x58] sm:$0xff]
      %v319 = vld [vmem:[%s236 + $0x60] sm:$0xff]
      %v320 = vld [vmem:[%s236 + $0x68] sm:$0xff]
      %v321 = vld [vmem:[%s236 + $0x70] sm:$0xff]
      %v322 = vld [vmem:[%s236 + $0x78] sm:$0xff]
      %v323 = vld [vmem:[%s236 + $0x80] sm:$0xff]
      %v324 = vld [vmem:[%s236 + $0x88] sm:$0xff]
      %v325 = vld [vmem:[%s236 + $0x90] sm:$0xff]
      %v326 = vld [vmem:[%s236 + $0x98] sm:$0xff]
      %v327 = vld [vmem:[%s236 + $0xa0] sm:$0xff]
      %v328 = vld [vmem:[%s236 + $0xa8] sm:$0xff]
      %v329 = vld [vmem:[%s236 + $0xb0] sm:$0xff]
      %v330 = vld [vmem:[%s236 + $0xb8] sm:$0xff]
      %v331 = vld [vmem:[%s236 + $0xc0] sm:$0xff]
      %v332 = vld [vmem:[%s236 + $0xc8] sm:$0xff]
      %v333 = vld [vmem:[%s236 + $0xd0] sm:$0xff]
      %v334 = vld [vmem:[%s236 + $0xd8] sm:$0xff]
      %v335 = vld [vmem:[%s236 + $0xe0] sm:$0xff]
      %v336 = vld [vmem:[%s236 + $0xe8] sm:$0xff]
      %v337 = vld [vmem:[%s236 + $0xf0] sm:$0xff]
      %v338 = vld [vmem:[%s236 + $0xf8] sm:$0xff]
      %v339 = vld [vmem:[%s236 + $0x100] sm:$0xff]
      %v340 = vld [vmem:[%s236 + $0x108] sm:$0xff]
      %v341 = vld [vmem:[%s236 + $0x110] sm:$0xff]
      %v342 = vld [vmem:[%s236 + $0x118] sm:$0xff]
      %v343 = vld [vmem:[%s236 + $0x120] sm:$0xff]
      %v344 = vld [vmem:[%s236 + $0x128] sm:$0xff]
      %v345 = vld [vmem:[%s236 + $0x130] sm:$0xff]
      %v346 = vld [vmem:[%s236 + $0x138] sm:$0xff]
      %v347 = vld [vmem:[%s236 + $0x140] sm:$0xff]
      %v348 = vld [vmem:[%s236 + $0x148] sm:$0xff]
      %v349 = vpack.c.bf16 %v308, %v307
      %v350 = vpack.c.bf16 %v310, %v309
      %v351 = vpack.c.bf16 %v312, %v311
      %v352 = vpack.c.bf16 %v314, %v313
      %v353 = vpack.c.bf16 %v316, %v315
      %v354 = vpack.c.bf16 %v318, %v317
      %v355 = vpack.c.bf16 %v320, %v319
      %v356 = vpack.c.bf16 %v322, %v321
      %v357 = vpack.c.bf16 %v324, %v323
      %v358 = vpack.c.bf16 %v326, %v325
      %v359 = vpack.c.bf16 %v328, %v327
      %v360 = vpack.c.bf16 %v330, %v329
      %v361 = vpack.c.bf16 %v332, %v331
      %v362 = vpack.c.bf16 %v334, %v333
      %v363 = vpack.c.bf16 %v336, %v335
      %v364 = vpack.c.bf16 %v338, %v337
      %v365 = vpack.c.bf16 %v340, %v339
      %v366 = vpack.c.bf16 %v342, %v341
      %v367 = vpack.c.bf16 %v344, %v343
      %v368 = vpack.c.bf16 %v346, %v345
      %v369 = vpack.c.bf16 %v348, %v347
      %v370 = vld [vmem:[%s245] sm:$0xf]
      %v371 = vld [vmem:[%s245 + $0x4] sm:$0xf]
      %v372 = vld [vmem:[#allocation2] sm:$0xff]
      %v373 = vld [vmem:[#allocation2 + $0x8] sm:$0xff]
      %v374 = vld [vmem:[#allocation2 + $0x10] sm:$0xff]
      %v375 = vld [vmem:[#allocation2 + $0x18] sm:$0xff]
      %v376 = vld [vmem:[#allocation2 + $0x20] sm:$0xff]
      %v377 = vld [vmem:[#allocation2 + $0x28] sm:$0xff]
      %v378 = vld [vmem:[#allocation2 + $0x30] sm:$0xff]
      %v379 = vld [vmem:[#allocation2 + $0x38] sm:$0xff]
      %v380 = vld [vmem:[#allocation2 + $0x40] sm:$0xff]
      %v381 = vld [vmem:[#allocation2 + $0x48] sm:$0xff]
      %v382 = vld [vmem:[#allocation2 + $0x50] sm:$0xff]
      %v383 = vld [vmem:[#allocation2 + $0x58] sm:$0xff]
      %v384 = vld [vmem:[#allocation2 + $0x60] sm:$0xff]
      %v385 = vld [vmem:[#allocation2 + $0x68] sm:$0xff]
      %v386 = vld [vmem:[#allocation2 + $0x70] sm:$0xff]
      %v387 = vld [vmem:[#allocation2 + $0x78] sm:$0xff]
      %v388 = vld [vmem:[#allocation2 + $0x80] sm:$0xff]
      %v389 = vld [vmem:[#allocation2 + $0x88] sm:$0xff]
      %v390 = vld [vmem:[#allocation2 + $0x90] sm:$0xff]
      %v391 = vld [vmem:[#allocation2 + $0x98] sm:$0xff]
      %v392 = vld [vmem:[#allocation2 + $0xa0] sm:$0xff]
      %v393 = vld [vmem:[#allocation2 + $0xa8] sm:$0xff]
      %v394 = vld [vmem:[#allocation2 + $0xb0] sm:$0xff]
      %v395 = vld [vmem:[#allocation2 + $0xb8] sm:$0xff]
      %v396 = vld [vmem:[#allocation2 + $0xc0] sm:$0xff]
      %v397 = vld [vmem:[#allocation2 + $0xc8] sm:$0xff]
      %v398 = vld [vmem:[#allocation2 + $0xd0] sm:$0xff]
      %v399 = vld [vmem:[#allocation2 + $0xd8] sm:$0xff]
      %v400 = vld [vmem:[#allocation2 + $0xe0] sm:$0xff]
      %v401 = vld [vmem:[#allocation2 + $0xe8] sm:$0xff]
      %v402 = vld [vmem:[#allocation2 + $0xf0] sm:$0xff]
      %v403 = vld [vmem:[#allocation2 + $0xf8] sm:$0xff]
      %v404 = vld [vmem:[#allocation2 + $0x100] sm:$0xff]
      %v405 = vld [vmem:[#allocation2 + $0x108] sm:$0xff]
      %v406 = vld [vmem:[#allocation2 + $0x110] sm:$0xff]
      %v407 = vld [vmem:[#allocation2 + $0x118] sm:$0xff]
      %v408 = vld [vmem:[#allocation2 + $0x120] sm:$0xff]
      %v409 = vld [vmem:[#allocation2 + $0x128] sm:$0xff]
      %v410 = vld [vmem:[#allocation2 + $0x130] sm:$0xff]
      %v411 = vld [vmem:[#allocation2 + $0x138] sm:$0xff]
      %v412 = vld [vmem:[#allocation2 + $0x140] sm:$0xff]
      %v413 = vld [vmem:[#allocation2 + $0x148] sm:$0xff]
      %v416 = vunpack.c.l.b16 %v370
      %v417 = vunpack.c.l.b16 %v371
      %v418 = vpack.c.b16 %v417, %v416
      %vm420 = vcmask 130048
      %v422 = vsel %vm420, %v349, 0
      %v425 = vsel %vm420, %v350, 0
      %v428 = vsel %vm420, %v351, 0
      %v431 = vsel %vm420, %v352, 0
      %v434 = vsel %vm420, %v353, 0
      %v437 = vsel %vm420, %v354, 0
      %v440 = vsel %vm420, %v355, 0
      %v443 = vsel %vm420, %v356, 0
      %v446 = vsel %vm420, %v357, 0
      %v449 = vsel %vm420, %v358, 0
      %v452 = vsel %vm420, %v359, 0
      %v455 = vsel %vm420, %v360, 0
      %v458 = vsel %vm420, %v361, 0
      %v461 = vsel %vm420, %v362, 0
      %v464 = vsel %vm420, %v363, 0
      %v467 = vsel %vm420, %v364, 0
      %v470 = vsel %vm420, %v365, 0
      %v473 = vsel %vm420, %v366, 0
      %v476 = vsel %vm420, %v367, 0
      %v479 = vsel %vm420, %v368, 0
      %v482 = vsel %vm420, %v369, 0
      %484 = vmatpush.bf16.msra.mxu0 0
      %485 = vmatpush.bf16.msra.mxu0 0
      %486 = vmatpush.bf16.msra.mxu0 0
      %487 = vmatpush.bf16.msra.mxu0 0
      %488 = vmatpush.bf16.msra.mxu0 0
      %489 = vmatpush.bf16.msra.mxu0 0
      %490 = vmatpush.bf16.msra.mxu0 0
      %491 = vmatpush.bf16.msra.mxu0 %v418
      %492 = vmatmul.bf16.gmra.mxu0 %v422
      %v493 = vpop.f32.mrf.mxu0
      %v494 = vadd.f32 0.0, %v493
      %v495 = vpop.f32.mrf.mxu0
      %v496 = vadd.f32 0.0, %v495
      %497 = vmatmul.bf16.gmra.mxu0 %v425
      %v498 = vpop.f32.mrf.mxu0
      %v499 = vadd.f32 0.0, %v498
      %v500 = vpop.f32.mrf.mxu0
      %v501 = vadd.f32 0.0, %v500
      %502 = vmatmul.bf16.gmra.mxu0 %v428
      %v503 = vpop.f32.mrf.mxu0
      %v504 = vadd.f32 0.0, %v503
      %v505 = vpop.f32.mrf.mxu0
      %v506 = vadd.f32 0.0, %v505
      %507 = vmatmul.bf16.gmra.mxu0 %v431
      %v508 = vpop.f32.mrf.mxu0
      %v509 = vadd.f32 0.0, %v508
      %v510 = vpop.f32.mrf.mxu0
      %v511 = vadd.f32 0.0, %v510
      %512 = vmatmul.bf16.gmra.mxu0 %v434
      %v513 = vpop.f32.mrf.mxu0
      %v514 = vadd.f32 0.0, %v513
      %v515 = vpop.f32.mrf.mxu0
      %v516 = vadd.f32 0.0, %v515
      %517 = vmatmul.bf16.gmra.mxu0 %v437
      %v518 = vpop.f32.mrf.mxu0
      %v519 = vadd.f32 0.0, %v518
      %v520 = vpop.f32.mrf.mxu0
      %v521 = vadd.f32 0.0, %v520
      %522 = vmatmul.bf16.gmra.mxu0 %v440
      %v523 = vpop.f32.mrf.mxu0
      %v524 = vadd.f32 0.0, %v523
      %v525 = vpop.f32.mrf.mxu0
      %v526 = vadd.f32 0.0, %v525
      %527 = vmatmul.bf16.gmra.mxu0 %v443
      %v528 = vpop.f32.mrf.mxu0
      %v529 = vadd.f32 0.0, %v528
      %v530 = vpop.f32.mrf.mxu0
      %v531 = vadd.f32 0.0, %v530
      %532 = vmatmul.bf16.gmra.mxu0 %v446
      %v533 = vpop.f32.mrf.mxu0
      %v534 = vadd.f32 0.0, %v533
      %v535 = vpop.f32.mrf.mxu0
      %v536 = vadd.f32 0.0, %v535
      %537 = vmatmul.bf16.gmra.mxu0 %v449
      %v538 = vpop.f32.mrf.mxu0
      %v539 = vadd.f32 0.0, %v538
      %v540 = vpop.f32.mrf.mxu0
      %v541 = vadd.f32 0.0, %v540
      %542 = vmatmul.bf16.gmra.mxu0 %v452
      %v543 = vpop.f32.mrf.mxu0
      %v544 = vadd.f32 0.0, %v543
      %v545 = vpop.f32.mrf.mxu0
      %v546 = vadd.f32 0.0, %v545
      %547 = vmatmul.bf16.gmra.mxu0 %v455
      %v548 = vpop.f32.mrf.mxu0
      %v549 = vadd.f32 0.0, %v548
      %v550 = vpop.f32.mrf.mxu0
      %v551 = vadd.f32 0.0, %v550
      %552 = vmatmul.bf16.gmra.mxu0 %v458
      %v553 = vpop.f32.mrf.mxu0
      %v554 = vadd.f32 0.0, %v553
      %v555 = vpop.f32.mrf.mxu0
      %v556 = vadd.f32 0.0, %v555
      %557 = vmatmul.bf16.gmra.mxu0 %v461
      %v558 = vpop.f32.mrf.mxu0
      %v559 = vadd.f32 0.0, %v558
      %v560 = vpop.f32.mrf.mxu0
      %v561 = vadd.f32 0.0, %v560
      %562 = vmatmul.bf16.gmra.mxu0 %v464
      %v563 = vpop.f32.mrf.mxu0
      %v564 = vadd.f32 0.0, %v563
      %v565 = vpop.f32.mrf.mxu0
      %v566 = vadd.f32 0.0, %v565
      %567 = vmatmul.bf16.gmra.mxu0 %v467
      %v568 = vpop.f32.mrf.mxu0
      %v569 = vadd.f32 0.0, %v568
      %v570 = vpop.f32.mrf.mxu0
      %v571 = vadd.f32 0.0, %v570
      %572 = vmatmul.bf16.gmra.mxu0 %v470
      %v573 = vpop.f32.mrf.mxu0
      %v574 = vadd.f32 0.0, %v573
      %v575 = vpop.f32.mrf.mxu0
      %v576 = vadd.f32 0.0, %v575
      %577 = vmatmul.bf16.gmra.mxu0 %v473
      %v578 = vpop.f32.mrf.mxu0
      %v579 = vadd.f32 0.0, %v578
      %v580 = vpop.f32.mrf.mxu0
      %v581 = vadd.f32 0.0, %v580
      %582 = vmatmul.bf16.gmra.mxu0 %v476
      %v583 = vpop.f32.mrf.mxu0
      %v584 = vadd.f32 0.0, %v583
      %v585 = vpop.f32.mrf.mxu0
      %v586 = vadd.f32 0.0, %v585
      %587 = vmatmul.bf16.gmra.mxu0 %v479
      %v588 = vpop.f32.mrf.mxu0
      %v589 = vadd.f32 0.0, %v588
      %v590 = vpop.f32.mrf.mxu0
      %v591 = vadd.f32 0.0, %v590
      %592 = vmatmul.bf16.gmra.mxu0 %v482
      %v593 = vpop.f32.mrf.mxu0
      %v594 = vadd.f32 0.0, %v593
      %v595 = vpop.f32.mrf.mxu0
      %v596 = vadd.f32 0.0, %v595
      %597 = vdwg.mxu0
      %v598 = vadd.f32 %v372, %v494
      %v599 = vadd.f32 %v373, %v496
      %v600 = vadd.f32 %v374, %v499
      %v601 = vadd.f32 %v375, %v501
      %v602 = vadd.f32 %v376, %v504
      %v603 = vadd.f32 %v377, %v506
      %v604 = vadd.f32 %v378, %v509
      %v605 = vadd.f32 %v379, %v511
      %v606 = vadd.f32 %v380, %v514
      %v607 = vadd.f32 %v381, %v516
      %v608 = vadd.f32 %v382, %v519
      %v609 = vadd.f32 %v383, %v521
      %v610 = vadd.f32 %v384, %v524
      %v611 = vadd.f32 %v385, %v526
      %v612 = vadd.f32 %v386, %v529
      %v613 = vadd.f32 %v387, %v531
      %v614 = vadd.f32 %v388, %v534
      %v615 = vadd.f32 %v389, %v536
      %v616 = vadd.f32 %v390, %v539
      %v617 = vadd.f32 %v391, %v541
      %v618 = vadd.f32 %v392, %v544
      %v619 = vadd.f32 %v393, %v546
      %v620 = vadd.f32 %v394, %v549
      %v621 = vadd.f32 %v395, %v551
      %v622 = vadd.f32 %v396, %v554
      %v623 = vadd.f32 %v397, %v556
      %v624 = vadd.f32 %v398, %v559
      %v625 = vadd.f32 %v399, %v561
      %v626 = vadd.f32 %v400, %v564
      %v627 = vadd.f32 %v401, %v566
      %v628 = vadd.f32 %v402, %v569
      %v629 = vadd.f32 %v403, %v571
      %v630 = vadd.f32 %v404, %v574
      %v631 = vadd.f32 %v405, %v576
      %v632 = vadd.f32 %v406, %v579
      %v633 = vadd.f32 %v407, %v581
      %v634 = vadd.f32 %v408, %v584
      %v635 = vadd.f32 %v409, %v586
      %v636 = vadd.f32 %v410, %v589
      %v637 = vadd.f32 %v411, %v591
      %v638 = vadd.f32 %v412, %v594
      %v639 = vadd.f32 %v413, %v596
      %vm640 = vcmask 261120
      %641 = vst.msk [vmem:[#allocation2] sm:$0xff] %vm640, %v598
      %642 = vst.msk [vmem:[#allocation2 + $0x8] sm:$0xff] %vm640, %v599
      %643 = vst.msk [vmem:[#allocation2 + $0x10] sm:$0xff] %vm640, %v600
      %644 = vst.msk [vmem:[#allocation2 + $0x18] sm:$0xff] %vm640, %v601
      %645 = vst.msk [vmem:[#allocation2 + $0x20] sm:$0xff] %vm640, %v602
      %646 = vst.msk [vmem:[#allocation2 + $0x28] sm:$0xff] %vm640, %v603
      %647 = vst.msk [vmem:[#allocation2 + $0x30] sm:$0xff] %vm640, %v604
      %648 = vst.msk [vmem:[#allocation2 + $0x38] sm:$0xff] %vm640, %v605
      %649 = vst.msk [vmem:[#allocation2 + $0x40] sm:$0xff] %vm640, %v606
      %650 = vst.msk [vmem:[#allocation2 + $0x48] sm:$0xff] %vm640, %v607
      %651 = vst.msk [vmem:[#allocation2 + $0x50] sm:$0xff] %vm640, %v608
      %652 = vst.msk [vmem:[#allocation2 + $0x58] sm:$0xff] %vm640, %v609
      %653 = vst.msk [vmem:[#allocation2 + $0x60] sm:$0xff] %vm640, %v610
      %654 = vst.msk [vmem:[#allocation2 + $0x68] sm:$0xff] %vm640, %v611
      %655 = vst.msk [vmem:[#allocation2 + $0x70] sm:$0xff] %vm640, %v612
      %656 = vst.msk [vmem:[#allocation2 + $0x78] sm:$0xff] %vm640, %v613
      %657 = vst.msk [vmem:[#allocation2 + $0x80] sm:$0xff] %vm640, %v614
      %658 = vst.msk [vmem:[#allocation2 + $0x88] sm:$0xff] %vm640, %v615
      %659 = vst.msk [vmem:[#allocation2 + $0x90] sm:$0xff] %vm640, %v616
      %660 = vst.msk [vmem:[#allocation2 + $0x98] sm:$0xff] %vm640, %v617
      %661 = vst.msk [vmem:[#allocation2 + $0xa0] sm:$0xff] %vm640, %v618
      %662 = vst.msk [vmem:[#allocation2 + $0xa8] sm:$0xff] %vm640, %v619
      %663 = vst.msk [vmem:[#allocation2 + $0xb0] sm:$0xff] %vm640, %v620
      %664 = vst.msk [vmem:[#allocation2 + $0xb8] sm:$0xff] %vm640, %v621
      %665 = vst.msk [vmem:[#allocation2 + $0xc0] sm:$0xff] %vm640, %v622
      %666 = vst.msk [vmem:[#allocation2 + $0xc8] sm:$0xff] %vm640, %v623
      %667 = vst.msk [vmem:[#allocation2 + $0xd0] sm:$0xff] %vm640, %v624
      %668 = vst.msk [vmem:[#allocation2 + $0xd8] sm:$0xff] %vm640, %v625
      %669 = vst.msk [vmem:[#allocation2 + $0xe0] sm:$0xff] %vm640, %v626
      %670 = vst.msk [vmem:[#allocation2 + $0xe8] sm:$0xff] %vm640, %v627
      %671 = vst.msk [vmem:[#allocation2 + $0xf0] sm:$0xff] %vm640, %v628
      %672 = vst.msk [vmem:[#allocation2 + $0xf8] sm:$0xff] %vm640, %v629
      %673 = vst.msk [vmem:[#allocation2 + $0x100] sm:$0xff] %vm640, %v630
      %674 = vst.msk [vmem:[#allocation2 + $0x108] sm:$0xff] %vm640, %v631
      %675 = vst.msk [vmem:[#allocation2 + $0x110] sm:$0xff] %vm640, %v632
      %676 = vst.msk [vmem:[#allocation2 + $0x118] sm:$0xff] %vm640, %v633
      %677 = vst.msk [vmem:[#allocation2 + $0x120] sm:$0xff] %vm640, %v634
      %678 = vst.msk [vmem:[#allocation2 + $0x128] sm:$0xff] %vm640, %v635
      %679 = vst.msk [vmem:[#allocation2 + $0x130] sm:$0xff] %vm640, %v636
      %680 = vst.msk [vmem:[#allocation2 + $0x138] sm:$0xff] %vm640, %v637
      %681 = vst.msk [vmem:[#allocation2 + $0x140] sm:$0xff] %vm640, %v638
      %682 = vst.msk [vmem:[#allocation2 + $0x148] sm:$0xff] %vm640, %v639
      // Predicated region
      $region37: #{conv_ffn_forward.5} parent=31 // pred_check
        %p683 = pneg %p260
      $region38: #{conv_ffn_forward.5} parent=31 // pred_check_branch
        %685 = sbr.rel (%p683) target = $region40
      $region39: #{conv_ffn_forward.5} parent=31 // pred_region
        %v686 = vld [vmem:[#allocation2] sm:$0xff]
        %v687 = vld [vmem:[#allocation2 + $0x8] sm:$0xff]
        %v688 = vld [vmem:[#allocation2 + $0x10] sm:$0xff]
        %v689 = vld [vmem:[#allocation2 + $0x18] sm:$0xff]
        %v690 = vld [vmem:[#allocation2 + $0x20] sm:$0xff]
        %v691 = vld [vmem:[#allocation2 + $0x28] sm:$0xff]
        %v692 = vld [vmem:[#allocation2 + $0x30] sm:$0xff]
        %v693 = vld [vmem:[#allocation2 + $0x38] sm:$0xff]
        %v694 = vld [vmem:[#allocation2 + $0x40] sm:$0xff]
        %v695 = vld [vmem:[#allocation2 + $0x48] sm:$0xff]
        %v696 = vld [vmem:[#allocation2 + $0x50] sm:$0xff]
        %v697 = vld [vmem:[#allocation2 + $0x58] sm:$0xff]
        %v698 = vld [vmem:[#allocation2 + $0x60] sm:$0xff]
        %v699 = vld [vmem:[#allocation2 + $0x68] sm:$0xff]
        %v700 = vld [vmem:[#allocation2 + $0x70] sm:$0xff]
        %v701 = vld [vmem:[#allocation2 + $0x78] sm:$0xff]
        %v702 = vld [vmem:[#allocation2 + $0x80] sm:$0xff]
        %v703 = vld [vmem:[#allocation2 + $0x88] sm:$0xff]
        %v704 = vld [vmem:[#allocation2 + $0x90] sm:$0xff]
        %v705 = vld [vmem:[#allocation2 + $0x98] sm:$0xff]
        %v706 = vld [vmem:[#allocation2 + $0xa0] sm:$0xff]
        %v707 = vld [vmem:[#allocation2 + $0xa8] sm:$0xff]
        %v708 = vld [vmem:[#allocation2 + $0xb0] sm:$0xff]
        %v709 = vld [vmem:[#allocation2 + $0xb8] sm:$0xff]
        %v710 = vld [vmem:[#allocation2 + $0xc0] sm:$0xff]
        %v711 = vld [vmem:[#allocation2 + $0xc8] sm:$0xff]
        %v712 = vld [vmem:[#allocation2 + $0xd0] sm:$0xff]
        %v713 = vld [vmem:[#allocation2 + $0xd8] sm:$0xff]
        %v714 = vld [vmem:[#allocation2 + $0xe0] sm:$0xff]
        %v715 = vld [vmem:[#allocation2 + $0xe8] sm:$0xff]
        %v716 = vld [vmem:[#allocation2 + $0xf0] sm:$0xff]
        %v717 = vld [vmem:[#allocation2 + $0xf8] sm:$0xff]
        %v718 = vld [vmem:[#allocation2 + $0x100] sm:$0xff]
        %v719 = vld [vmem:[#allocation2 + $0x108] sm:$0xff]
        %v720 = vld [vmem:[#allocation2 + $0x110] sm:$0xff]
        %v721 = vld [vmem:[#allocation2 + $0x118] sm:$0xff]
        %v722 = vld [vmem:[#allocation2 + $0x120] sm:$0xff]
        %v723 = vld [vmem:[#allocation2 + $0x128] sm:$0xff]
        %v724 = vld [vmem:[#allocation2 + $0x130] sm:$0xff]
        %v725 = vld [vmem:[#allocation2 + $0x138] sm:$0xff]
        %v726 = vld [vmem:[#allocation2 + $0x140] sm:$0xff]
        %v727 = vld [vmem:[#allocation2 + $0x148] sm:$0xff]
        %v728 = vld [vmem:[%s249] sm:$0x1]
        %v730 = vperm.slane %v728, 0
        %v732 = vadd.f32 %v686, %v730
        %v733 = vadd.f32 %v687, %v730
        %v734 = vadd.f32 %v688, %v730
        %v735 = vadd.f32 %v689, %v730
        %v736 = vadd.f32 %v690, %v730
        %v737 = vadd.f32 %v691, %v730
        %v738 = vadd.f32 %v692, %v730
        %v739 = vadd.f32 %v693, %v730
        %v740 = vadd.f32 %v694, %v730
        %v741 = vadd.f32 %v695, %v730
        %v742 = vadd.f32 %v696, %v730
        %v743 = vadd.f32 %v697, %v730
        %v744 = vadd.f32 %v698, %v730
        %v745 = vadd.f32 %v699, %v730
        %v746 = vadd.f32 %v700, %v730
        %v747 = vadd.f32 %v701, %v730
        %v748 = vadd.f32 %v702, %v730
        %v749 = vadd.f32 %v703, %v730
        %v750 = vadd.f32 %v704, %v730
        %v751 = vadd.f32 %v705, %v730
        %v752 = vadd.f32 %v706, %v730
        %v753 = vadd.f32 %v707, %v730
        %v754 = vadd.f32 %v708, %v730
        %v755 = vadd.f32 %v709, %v730
        %v756 = vadd.f32 %v710, %v730
        %v757 = vadd.f32 %v711, %v730
        %v758 = vadd.f32 %v712, %v730
        %v759 = vadd.f32 %v713, %v730
        %v760 = vadd.f32 %v714, %v730
        %v761 = vadd.f32 %v715, %v730
        %v762 = vadd.f32 %v716, %v730
        %v763 = vadd.f32 %v717, %v730
        %v764 = vadd.f32 %v718, %v730
        %v765 = vadd.f32 %v719, %v730
        %v766 = vadd.f32 %v720, %v730
        %v767 = vadd.f32 %v721, %v730
        %v768 = vadd.f32 %v722, %v730
        %v769 = vadd.f32 %v723, %v730
        %v770 = vadd.f32 %v724, %v730
        %v771 = vadd.f32 %v725, %v730
        %v772 = vadd.f32 %v726, %v730
        %v773 = vadd.f32 %v727, %v730
        %v774 = vpack.c.bf16 %v732, %v732
        %v775 = vpack.c.bf16 %v733, %v733
        %v776 = vpack.c.bf16 %v734, %v734
        %v777 = vpack.c.bf16 %v735, %v735
        %v778 = vpack.c.bf16 %v736, %v736
        %v779 = vpack.c.bf16 %v737, %v737
        %v780 = vpack.c.bf16 %v738, %v738
        %v781 = vpack.c.bf16 %v739, %v739
        %v782 = vpack.c.bf16 %v740, %v740
        %v783 = vpack.c.bf16 %v741, %v741
        %v784 = vpack.c.bf16 %v742, %v742
        %v785 = vpack.c.bf16 %v743, %v743
        %v786 = vpack.c.bf16 %v744, %v744
        %v787 = vpack.c.bf16 %v745, %v745
        %v788 = vpack.c.bf16 %v746, %v746
        %v789 = vpack.c.bf16 %v747, %v747
        %v790 = vpack.c.bf16 %v748, %v748
        %v791 = vpack.c.bf16 %v749, %v749
        %v792 = vpack.c.bf16 %v750, %v750
        %v793 = vpack.c.bf16 %v751, %v751
        %v794 = vpack.c.bf16 %v752, %v752
        %v795 = vpack.c.bf16 %v753, %v753
        %v796 = vpack.c.bf16 %v754, %v754
        %v797 = vpack.c.bf16 %v755, %v755
        %v798 = vpack.c.bf16 %v756, %v756
        %v799 = vpack.c.bf16 %v757, %v757
        %v800 = vpack.c.bf16 %v758, %v758
        %v801 = vpack.c.bf16 %v759, %v759
        %v802 = vpack.c.bf16 %v760, %v760
        %v803 = vpack.c.bf16 %v761, %v761
        %v804 = vpack.c.bf16 %v762, %v762
        %v805 = vpack.c.bf16 %v763, %v763
        %v806 = vpack.c.bf16 %v764, %v764
        %v807 = vpack.c.bf16 %v765, %v765
        %v808 = vpack.c.bf16 %v766, %v766
        %v809 = vpack.c.bf16 %v767, %v767
        %v810 = vpack.c.bf16 %v768, %v768
        %v811 = vpack.c.bf16 %v769, %v769
        %v812 = vpack.c.bf16 %v770, %v770
        %v813 = vpack.c.bf16 %v771, %v771
        %v814 = vpack.c.bf16 %v772, %v772
        %v815 = vpack.c.bf16 %v773, %v773
        %vm816 = vcmask 257024
        %817 = vst.msk [vmem:[%s257] sm:$0xf] %vm816, %v774
        %818 = vst.msk [vmem:[%s257 + $0x4] sm:$0xf] %vm816, %v775
        %819 = vst.msk [vmem:[%s257 + $0x8] sm:$0xf] %vm816, %v776
        %820 = vst.msk [vmem:[%s257 + $0xc] sm:$0xf] %vm816, %v777
        %821 = vst.msk [vmem:[%s257 + $0x10] sm:$0xf] %vm816, %v778
        %822 = vst.msk [vmem:[%s257 + $0x14] sm:$0xf] %vm816, %v779
        %823 = vst.msk [vmem:[%s257 + $0x18] sm:$0xf] %vm816, %v780
        %824 = vst.msk [vmem:[%s257 + $0x1c] sm:$0xf] %vm816, %v781
        %825 = vst.msk [vmem:[%s257 + $0x20] sm:$0xf] %vm816, %v782
        %826 = vst.msk [vmem:[%s257 + $0x24] sm:$0xf] %vm816, %v783
        %827 = vst.msk [vmem:[%s257 + $0x28] sm:$0xf] %vm816, %v784
        %828 = vst.msk [vmem:[%s257 + $0x2c] sm:$0xf] %vm816, %v785
        %829 = vst.msk [vmem:[%s257 + $0x30] sm:$0xf] %vm816, %v786
        %830 = vst.msk [vmem:[%s257 + $0x34] sm:$0xf] %vm816, %v787
        %831 = vst.msk [vmem:[%s257 + $0x38] sm:$0xf] %vm816, %v788
        %832 = vst.msk [vmem:[%s257 + $0x3c] sm:$0xf] %vm816, %v789
        %833 = vst.msk [vmem:[%s257 + $0x40] sm:$0xf] %vm816, %v790
        %834 = vst.msk [vmem:[%s257 + $0x44] sm:$0xf] %vm816, %v791
        %835 = vst.msk [vmem:[%s257 + $0x48] sm:$0xf] %vm816, %v792
        %836 = vst.msk [vmem:[%s257 + $0x4c] sm:$0xf] %vm816, %v793
        %837 = vst.msk [vmem:[%s257 + $0x50] sm:$0xf] %vm816, %v794
        %838 = vst.msk [vmem:[%s257 + $0x54] sm:$0xf] %vm816, %v795
        %839 = vst.msk [vmem:[%s257 + $0x58] sm:$0xf] %vm816, %v796
        %840 = vst.msk [vmem:[%s257 + $0x5c] sm:$0xf] %vm816, %v797
        %841 = vst.msk [vmem:[%s257 + $0x60] sm:$0xf] %vm816, %v798
        %842 = vst.msk [vmem:[%s257 + $0x64] sm:$0xf] %vm816, %v799
        %843 = vst.msk [vmem:[%s257 + $0x68] sm:$0xf] %vm816, %v800
        %844 = vst.msk [vmem:[%s257 + $0x6c] sm:$0xf] %vm816, %v801
        %845 = vst.msk [vmem:[%s257 + $0x70] sm:$0xf] %vm816, %v802
        %846 = vst.msk [vmem:[%s257 + $0x74] sm:$0xf] %vm816, %v803
        %847 = vst.msk [vmem:[%s257 + $0x78] sm:$0xf] %vm816, %v804
        %848 = vst.msk [vmem:[%s257 + $0x7c] sm:$0xf] %vm816, %v805
        %849 = vst.msk [vmem:[%s257 + $0x80] sm:$0xf] %vm816, %v806
        %850 = vst.msk [vmem:[%s257 + $0x84] sm:$0xf] %vm816, %v807
        %851 = vst.msk [vmem:[%s257 + $0x88] sm:$0xf] %vm816, %v808
        %852 = vst.msk [vmem:[%s257 + $0x8c] sm:$0xf] %vm816, %v809
        %853 = vst.msk [vmem:[%s257 + $0x90] sm:$0xf] %vm816, %v810
        %854 = vst.msk [vmem:[%s257 + $0x94] sm:$0xf] %vm816, %v811
        %855 = vst.msk [vmem:[%s257 + $0x98] sm:$0xf] %vm816, %v812
        %856 = vst.msk [vmem:[%s257 + $0x9c] sm:$0xf] %vm816, %v813
        %857 = vst.msk [vmem:[%s257 + $0xa0] sm:$0xf] %vm816, %v814
        %858 = vst.msk [vmem:[%s257 + $0xa4] sm:$0xf] %vm816, %v815
      $region40: #{conv_ffn_forward.5} parent=31 // pred_fallthru
        _
      %s859 = smul.u32 42, %s19
      %p860 = scmp.lt.s32.totalorder %s859, 83
      %s861 = scalar_select %p860, %s859, 83
      %p862 = scmp.lt.s32.totalorder %s20, 0
      %s863 = scalar_select %p862, %s20, 0
      %s864 = sadd.s32 %s863, %s861
      %s865 = smul.addr %s864, 4
      %s866 = scalar_lea.vmem %s3, %s865
      // Predicated region
      $region41: #{conv_ffn_forward.5} parent=31 // pred_check
        %p867 = pneg %p135
      $region42: #{conv_ffn_forward.5} parent=31 // pred_check_branch
        %869 = sbr.rel (%p867) target = $region44
      $region43: #{conv_ffn_forward.5} parent=31 // pred_region
        %s870 = smul.u32 42, %s19
      $region44: #{conv_ffn_forward.5} parent=31 // pred_fallthru
        _
    $region32: #{conv_ffn_forward.5} parent=5 // pred_fallthru
      _
    %p871 = scmp.le.s32.totalorder 2, %s9
    // Predicated region
    $region45: #{conv_ffn_forward.5} parent=5 // pred_check
      %p872 = pneg %p871
    $region46: #{conv_ffn_forward.5} parent=5 // pred_check_branch
      %874 = sbr.rel (%p872) target = $region48
    $region47: #{conv_ffn_forward.5} parent=5 // pred_region
      %s875 = ssub.s32 %s9, 2
      // Predicated region
      $region49: #{conv_ffn_forward.5} parent=47 // pred_check
        %p876 = pneg %p141
      $region50: #{conv_ffn_forward.5} parent=47 // pred_check_branch
        %878 = sbr.rel (%p876) target = $region52
      $region51: #{conv_ffn_forward.5} parent=47 // pred_region
        %s879 = smul.u32 42, %s22
        %p880 = scmp.lt.s32.totalorder %s879, 83
        %s881 = scalar_select %p880, %s879, 83
        %p882 = scmp.lt.s32.totalorder %s23, 0
        %s883 = scalar_select %p882, %s23, 0
        %s884 = sadd.s32 %s883, %s881
        %s885 = smul.addr %s884, 4
        %s886 = scalar_lea.vmem %s3, %s885
      $region52: #{conv_ffn_forward.5} parent=47 // pred_fallthru
        _
    $region48: #{conv_ffn_forward.5} parent=5 // pred_fallthru
      _
  $region6: #{conv_ffn_forward.5} parent=0 // loop_footer
    %s13 = sadd.s32 1, %s9
  $region7: #{conv_ffn_forward.5} parent=0 // loop_footer_branch
    %8 = sbr.rel target = $region3
  $region8: #{conv_ffn_forward.5} parent=0 // loop_exit
    _

// kernel: conv_ffn_forward.7
$region0: #{conv_ffn_forward.7}
  #allocation0 [shape = 'u32[]', space=smem, size = 0x4, offset = 0x4, fixed_abs, tag = 'smem constant byte address 0x4 - core index']
  #allocation1 [shape = 'u32[72,128]{1,0:T(1,128)}', space=vmem, size = 0x9000, scoped, tag = 'internal scratch']
  %s0 = inlined_call_operand.vmem [shape: bf16[2,336,32], index: 0, kind: input, shape index: {}, may-alias: {0,1,2}]
  %s1 = inlined_call_operand.vmem [shape: bf16[2,336,32], index: 1, kind: input, shape index: {}, may-alias: {0,1,2}]
  %s2 = inlined_call_operand.vmem [shape: bf16[2,336,32], index: 2, kind: input, shape index: {}, may-alias: {0,1,2}]
  %s3 = inlined_call_operand.vmem [shape: f32[3,3,32], index: 3, kind: input, shape index: {}]
  %s4 = inlined_call_operand.vmem [shape: f32[1,32], index: 4, kind: input, shape index: {}]
  %s5 = inlined_call_operand.vmem [shape: bf16[2,336,32], index: 5, kind: input, shape index: {}, may-alias: {5,6}]
  %s6 = inlined_call_operand.vmem [shape: bf16[2,336,32], index: 6, kind: output, shape index: {}, may-alias: {5,6}]
  %s7 = sld [smem:[#allocation0]]
  $region97: #{conv_ffn_forward.7} parent=0
    _
  %s9 = ssub.s32 1, %s7
  %s10 = scalar_select 0, %s9, %s7
  $region1: #{conv_ffn_forward.7} parent=0
    #allocation2 [shape = 'u8[32768]{0}', space=vmem, size = 0x8000, scoped, tag = 'output window, operand 0']
    loop: start=0, step=1, limit=4
    $region2: #{conv_ffn_forward.7} parent=1 // loop_pre_header
      _
    $region3: #{conv_ffn_forward.7} parent=1 // loop_header
      %s12 = sphi 0, %s16
      %p13 = scmp.ge.s32.totalorder %s12, 4
      %s19 = sphi 0, %s38
      %s20 = sphi 0, %s34
      %s21 = sphi 0, %s30
      %s22 = sphi 0, %s19
      %s23 = sphi 0, %s20
      %s24 = sphi 0, %s21
      %s25 = sphi 0, %s22
      %s26 = sphi 0, %s23
      %s27 = sphi 0, %s24
      %s47 = sphi 0, %s49
      %s50 = sphi 0, %s47
      %s51 = sphi 0, %s50
      %s67 = sphi 0, %s51
      %s85 = sphi 0, %s87
      %s88 = sphi 0, %s85
      %s89 = sphi 0, %s88
      %s105 = sphi 0, %s89
      %s125 = sphi 0, %s127
      %s128 = sphi 0, %s125
      %s129 = sphi 0, %s128
      %s145 = sphi 0, %s129
      %s151 = sphi 0, %s153
      %s154 = sphi 0, %s151
      %s155 = sphi 0, %s154
      %s171 = sphi 0, %s155
      %s177 = sphi 0, %s179
      %s180 = sphi 0, %s177
      %s181 = sphi 0, %s180
      %s197 = sphi 0, %s181
      %s209 = sphi 0, %s211
      %s212 = sphi 0, %s209
      %s213 = sphi 0, %s212
      %s229 = sphi 0, %s213
    $region4: #{conv_ffn_forward.7} parent=1 // loop_header_branch
      %15 = sbr.rel (%p13) target = $region8
    $region5: #{conv_ffn_forward.7} parent=1 // loop_body
      %s17 = ssub.s32 %s12, 1
      %s18 = ssub.s32 %s12, 2
      %s28 = sadd.s32 1, %s21
      %p29 = scmp.ge.s32.totalorder %s28, 1
      %s30 = scalar_select %p29, 0, %s28
      %s31 = sadd.s32 1, %s20
      %s32 = scalar_select %p29, %s31, %s20
      %p33 = scmp.ge.s32.totalorder %s32, 1
      %s34 = scalar_select %p33, 0, %s32
      %s35 = sadd.s32 1, %s19
      %s36 = scalar_select %p33, %s35, %s19
      %p37 = scmp.ge.s32.totalorder %s36, 2
      %s38 = scalar_select %p37, 0, %s36
      %s39 = sadd.s32 %s21, 4
      %s40 = sadd.s32 %s30, 4
      %s41 = ssub.s32 %s19, %s38
      %s42 = ssub.s32 %s39, %s40
      %s43 = sor.u32 %s41, %s42
      %s44 = ssub.s32 %s20, %s34
      %s45 = sor.u32 %s43, %s44
      %p46 = scmp.eq.s32.totalorder %s45, 0
      %s48 = sadd.s32 %s47, 1
      %s49 = scalar_select %p46, %s47, %s48
      %p52 = pneg %p46
      %p53 = scmp.eq.s32.totalorder %s12, 1
      %p54 = por %p52, %p53
      %p55 = scmp.ne.s32.totalorder %s47, %s50
      %p56 = scmp.eq.s32.totalorder %s12, 0
      %p57 = por %p55, %p56
      %p58 = scmp.ne.s32.totalorder %s47, %s50
      %p59 = scmp.eq.s32.totalorder %s17, 1
      %p60 = por %p58, %p59
      %p61 = scmp.ne.s32.totalorder %s50, %s51
      %p62 = scmp.eq.s32.totalorder %s17, 0
      %p63 = por %p61, %p62
      %p64 = scmp.ne.s32.totalorder %s50, %s51
      %p65 = scmp.eq.s32.totalorder %s18, 1
      %p66 = por %p64, %p65
      %p68 = scmp.ne.s32.totalorder %s51, %s67
      %p69 = scmp.eq.s32.totalorder %s18, 0
      %p70 = por %p68, %p69
      %s71 = smul.u32 %s21, 8
      %s72 = sadd.s32 %s71, 31
      %p73 = scmp.gt.s32.totalorder %s72, 32
      %s74 = scalar_select %p73, %s72, 32
      %s75 = smul.u32 %s30, 8
      %s76 = sadd.s32 %s75, 31
      %p77 = scmp.gt.s32.totalorder %s76, 32
      %s78 = scalar_select %p77, %s76, 32
      %s79 = ssub.s32 %s19, %s38
      %s80 = ssub.s32 %s74, %s78
      %s81 = sor.u32 %s79, %s80
      %s82 = ssub.s32 %s20, %s34
      %s83 = sor.u32 %s81, %s82
      %p84 = scmp.eq.s32.totalorder %s83, 0
      %s86 = sadd.s32 %s85, 1
      %s87 = scalar_select %p84, %s85, %s86
      %p90 = pneg %p84
      %p91 = scmp.eq.s32.totalorder %s12, 1
      %p92 = por %p90, %p91
      %p93 = scmp.ne.s32.totalorder %s85, %s88
      %p94 = scmp.eq.s32.totalorder %s12, 0
      %p95 = por %p93, %p94
      %p96 = scmp.ne.s32.totalorder %s85, %s88
      %p97 = scmp.eq.s32.totalorder %s17, 1
      %p98 = por %p96, %p97
      %p99 = scmp.ne.s32.totalorder %s88, %s89
      %p100 = scmp.eq.s32.totalorder %s17, 0
      %p101 = por %p99, %p100
      %p102 = scmp.ne.s32.totalorder %s88, %s89
      %p103 = scmp.eq.s32.totalorder %s18, 1
      %p104 = por %p102, %p103
      %p106 = scmp.ne.s32.totalorder %s89, %s105
      %p107 = scmp.eq.s32.totalorder %s18, 0
      %p108 = por %p106, %p107
      %s109 = sadd.s32 %s21, 1
      %s110 = smul.u32 %s109, 8
      %s111 = sadd.s32 %s110, 32
      %p112 = scmp.lt.s32.totalorder %s111, 39
      %s113 = scalar_select %p112, %s111, 39
      %s114 = sadd.s32 %s30, 1
      %s115 = smul.u32 %s114, 8
      %s116 = sadd.s32 %s115, 32
      %p117 = scmp.lt.s32.totalorder %s116, 39
      %s118 = scalar_select %p117, %s116, 39
      %s119 = ssub.s32 %s19, %s38
      %s120 = ssub.s32 %s113, %s118
      %s121 = sor.u32 %s119, %s120
      %s122 = ssub.s32 %s20, %s34
      %s123 = sor.u32 %s121, %s122
      %p124 = scmp.eq.s32.totalorder %s123, 0
      %s126 = sadd.s32 %s125, 1
      %s127 = scalar_select %p124, %s125, %s126
      %p130 = pneg %p124
      %p131 = scmp.eq.s32.totalorder %s12, 1
      %p132 = por %p130, %p131
      %p133 = scmp.ne.s32.totalorder %s125, %s128
      %p134 = scmp.eq.s32.totalorder %s12, 0
      %p135 = por %p133, %p134
      %p136 = scmp.ne.s32.totalorder %s125, %s128
      %p137 = scmp.eq.s32.totalorder %s17, 1
      %p138 = por %p136, %p137
      %p139 = scmp.ne.s32.totalorder %s128, %s129
      %p140 = scmp.eq.s32.totalorder %s17, 0
      %p141 = por %p139, %p140
      %p142 = scmp.ne.s32.totalorder %s128, %s129
      %p143 = scmp.eq.s32.totalorder %s18, 1
      %p144 = por %p142, %p143
      %p146 = scmp.ne.s32.totalorder %s129, %s145
      %p147 = scmp.eq.s32.totalorder %s18, 0
      %p148 = por %p146, %p147
      %s149 = ssub.s32 %s20, %s34
      %p150 = scmp.eq.s32.totalorder %s149, 0
      %s152 = sadd.s32 %s151, 1
      %s153 = scalar_select %p150, %s151, %s152
      %p156 = pneg %p150
      %p157 = scmp.eq.s32.totalorder %s12, 1
      %p158 = por %p156, %p157
      %p159 = scmp.ne.s32.totalorder %s151, %s154
      %p160 = scmp.eq.s32.totalorder %s12, 0
      %p161 = por %p159, %p160
      %p162 = scmp.ne.s32.totalorder %s151, %s154
      %p163 = scmp.eq.s32.totalorder %s17, 1
      %p164 = por %p162, %p163
      %p165 = scmp.ne.s32.totalorder %s154, %s155
      %p166 = scmp.eq.s32.totalorder %s17, 0
      %p167 = por %p165, %p166
      %p168 = scmp.ne.s32.totalorder %s154, %s155
      %p169 = scmp.eq.s32.totalorder %s18, 1
      %p170 = por %p168, %p169
      %p172 = scmp.ne.s32.totalorder %s155, %s171
      %p173 = scmp.eq.s32.totalorder %s18, 0
      %p174 = por %p172, %p173
      %s175 = ssub.s32 %s20, %s34
      %p176 = scmp.eq.s32.totalorder %s175, 0
      %s178 = sadd.s32 %s177, 1
      %s179 = scalar_select %p176, %s177, %s178
      %p182 = pneg %p176
      %p183 = scmp.eq.s32.totalorder %s12, 1
      %p184 = por %p182, %p183
      %p185 = scmp.ne.s32.totalorder %s177, %s180
      %p186 = scmp.eq.s32.totalorder %s12, 0
      %p187 = por %p185, %p186
      %p188 = scmp.ne.s32.totalorder %s177, %s180
      %p189 = scmp.eq.s32.totalorder %s17, 1
      %p190 = por %p188, %p189
      %p191 = scmp.ne.s32.totalorder %s180, %s181
      %p192 = scmp.eq.s32.totalorder %s17, 0
      %p193 = por %p191, %p192
      %p194 = scmp.ne.s32.totalorder %s180, %s181
      %p195 = scmp.eq.s32.totalorder %s18, 1
      %p196 = por %p194, %p195
      %p198 = scmp.ne.s32.totalorder %s181, %s197
      %p199 = scmp.eq.s32.totalorder %s18, 0
      %p200 = por %p198, %p199
      %s201 = sadd.s32 %s21, 4
      %s202 = sadd.s32 %s30, 4
      %s203 = ssub.s32 %s19, %s38
      %s204 = ssub.s32 %s201, %s202
      %s205 = sor.u32 %s203, %s204
      %s206 = ssub.s32 %s20, %s34
      %s207 = sor.u32 %s205, %s206
      %p208 = scmp.eq.s32.totalorder %s207, 0
      %s210 = sadd.s32 %s209, 1
      %s211 = scalar_select %p208, %s209, %s210
      %p214 = pneg %p208
      %p215 = scmp.eq.s32.totalorder %s12, 1
      %p216 = por %p214, %p215
      %p217 = scmp.ne.s32.totalorder %s209, %s212
      %p218 = scmp.eq.s32.totalorder %s12, 0
      %p219 = por %p217, %p218
      %p220 = scmp.ne.s32.totalorder %s209, %s212
      %p221 = scmp.eq.s32.totalorder %s17, 1
      %p222 = por %p220, %p221
      %p223 = scmp.ne.s32.totalorder %s212, %s213
      %p224 = scmp.eq.s32.totalorder %s17, 0
      %p225 = por %p223, %p224
      %p226 = scmp.ne.s32.totalorder %s212, %s213
      %p227 = scmp.eq.s32.totalorder %s18, 1
      %p228 = por %p226, %p227
      %p230 = scmp.ne.s32.totalorder %s213, %s229
      %p231 = scmp.eq.s32.totalorder %s18, 0
      %p232 = por %p230, %p231
      %p233 = scmp.le.s32.totalorder 1, %s12
      %p234 = scmp.lt.s32.totalorder %s12, 3
      %p235 = pnand %p233, %p234
      %p236 = pneg %p235
      // Predicated region
      $region9: #{conv_ffn_forward.7} parent=5 // pred_check
        _
      $region10: #{conv_ffn_forward.7} parent=5 // pred_check_branch
        %238 = sbr.rel (%p235) target = $region12
      $region11: #{conv_ffn_forward.7} parent=5 // pred_region
        %s239 = ssub.s32 %s12, 1
        // Predicated region
        $region13: #{conv_ffn_forward.7} parent=11 // pred_check
          %p240 = pneg %p167
        $region14: #{conv_ffn_forward.7} parent=11 // pred_check_branch
          %242 = sbr.rel (%p240) target = $region16
        $region15: #{conv_ffn_forward.7} parent=11 // pred_region
          %p243 = scmp.lt.s32.totalorder %s23, 0
          %s244 = scalar_select %p243, %s23, 0
          %s245 = smul.addr %s244, 4
          %s246 = scalar_lea.vmem %s3, %s245
        $region16: #{conv_ffn_forward.7} parent=11 // pred_fallthru
          _
        // Predicated region
        $region17: #{conv_ffn_forward.7} parent=11 // pred_check
          %p247 = pneg %p193
        $region18: #{conv_ffn_forward.7} parent=11 // pred_check_branch
          %249 = sbr.rel (%p247) target = $region20
        $region19: #{conv_ffn_forward.7} parent=11 // pred_region
          %p250 = scmp.lt.s32.totalorder %s23, 0
          %s251 = scalar_select %p250, %s23, 0
          %s252 = scalar_lea.vmem %s4, %s251
        $region20: #{conv_ffn_forward.7} parent=11 // pred_fallthru
          _
      $region12: #{conv_ffn_forward.7} parent=5 // pred_fallthru
        _
      %p253 = scmp.lt.s32.totalorder %s12, 2
      // Predicated region
      $region21: #{conv_ffn_forward.7} parent=5 // pred_check
        %p254 = pneg %p253
      $region22: #{conv_ffn_forward.7} parent=5 // pred_check_branch
        %256 = sbr.rel (%p254) target = $region24
      $region23: #{conv_ffn_forward.7} parent=5 // pred_region
        // Predicated region
        $region25: #{conv_ffn_forward.7} parent=23 // pred_check
          %p257 = pneg %p57
        $region26: #{conv_ffn_forward.7} parent=23 // pred_check_branch
          %259 = sbr.rel (%p257) target = $region28
        $region27: #{conv_ffn_forward.7} parent=23 // pred_region
          %s260 = sadd.s32 %s21, 4
          %s261 = smul.u32 8, %s260
          %s262 = ssub.s32 42, %s261
          %p263 = scmp.lt.s32.totalorder %s262, 8
          %s264 = scalar_select %p263, %s262, 8
          %s265 = smul.u32 4, %s264
          %p266 = scmp.lt.s32.totalorder %s19, 1
          %s267 = scalar_select %p266, %s19, 1
          %p268 = scmp.lt.s32.totalorder %s261, 41
          %s269 = scalar_select %p268, %s261, 41
          %p270 = scmp.lt.s32.totalorder %s20, 0
          %s271 = scalar_select %p270, %s20, 0
          %s272 = sadd.s32 %s271, %s269
          %s273 = smul.addr %s267, 42
          %s274 = sadd.s32 %s272, %s273
          %s275 = smul.addr %s274, 4
          %s276 = scalar_lea.vmem %s0, %s275
          %s277 = sadd.s32 %s21, 4
          %s278 = smul.u32 8, %s277
          %s279 = ssub.s32 42, %s278
          %p280 = scmp.lt.s32.totalorder %s279, 8
          %s281 = scalar_select %p280, %s279, 8
          %s282 = smul.u32 4, %s281
        $region28: #{conv_ffn_forward.7} parent=23 // pred_fallthru
          _
        // Predicated region
        $region29: #{conv_ffn_forward.7} parent=23 // pred_check
          %p283 = pneg %p95
        $region30: #{conv_ffn_forward.7} parent=23 // pred_check_branch
          %285 = sbr.rel (%p283) target = $region32
        $region31: #{conv_ffn_forward.7} parent=23 // pred_region
          %s286 = smul.u32 %s21, 8
          %s287 = sadd.s32 %s286, 31
          %p288 = scmp.gt.s32.totalorder %s287, 32
          %s289 = scalar_select %p288, %s287, 32
          %p290 = scmp.lt.s32.totalorder %s19, 1
          %s291 = scalar_select %p290, %s19, 1
          %p292 = scmp.lt.s32.totalorder %s289, 41
          %s293 = scalar_select %p292, %s289, 41
          %p294 = scmp.lt.s32.totalorder %s20, 0
          %s295 = scalar_select %p294, %s20, 0
          %s296 = sadd.s32 %s295, %s293
          %s297 = smul.addr %s291, 42
          %s298 = sadd.s32 %s296, %s297
          %s299 = smul.addr %s298, 4
          %s300 = scalar_lea.vmem %s1, %s299
          %s301 = smul.u32 %s21, 8
          %s302 = sadd.s32 %s301, 31
          %p303 = scmp.gt.s32.totalorder %s302, 32
          %s304 = scalar_select %p303, %s302, 32
        $region32: #{conv_ffn_forward.7} parent=23 // pred_fallthru
          _
        // Predicated region
        $region33: #{conv_ffn_forward.7} parent=23 // pred_check
          %p305 = pneg %p135
        $region34: #{conv_ffn_forward.7} parent=23 // pred_check_branch
          %307 = sbr.rel (%p305) target = $region36
        $region35: #{conv_ffn_forward.7} parent=23 // pred_region
          %s308 = sadd.s32 %s21, 1
          %s309 = smul.u32 %s308, 8
          %s310 = sadd.s32 %s309, 32
          %p311 = scmp.lt.s32.totalorder %s310, 39
          %s312 = scalar_select %p311, %s310, 39
          %p313 = scmp.lt.s32.totalorder %s19, 1
          %s314 = scalar_select %p313, %s19, 1
          %p315 = scmp.lt.s32.totalorder %s312, 41
          %s316 = scalar_select %p315, %s312, 41
          %p317 = scmp.lt.s32.totalorder %s20, 0
          %s318 = scalar_select %p317, %s20, 0
          %s319 = sadd.s32 %s318, %s316
          %s320 = smul.addr %s314, 42
          %s321 = sadd.s32 %s319, %s320
          %s322 = smul.addr %s321, 4
          %s323 = scalar_lea.vmem %s2, %s322
          %s324 = sadd.s32 %s21, 1
          %s325 = smul.u32 %s324, 8
          %s326 = sadd.s32 %s325, 32
          %p327 = scmp.lt.s32.totalorder %s326, 39
          %s328 = scalar_select %p327, %s326, 39
        $region36: #{conv_ffn_forward.7} parent=23 // pred_fallthru
          _
      $region24: #{conv_ffn_forward.7} parent=5 // pred_fallthru
        _
      %p329 = scmp.le.s32.totalorder 1, %s12
      %p330 = scmp.lt.s32.totalorder %s12, 3
      %p331 = pnand %p329, %p330
      %p332 = pneg %p331
      // Predicated region
      $region37: #{conv_ffn_forward.7} parent=5 // pred_check
        _
      $region38: #{conv_ffn_forward.7} parent=5 // pred_check_branch
        %334 = sbr.rel (%p331) target = $region40
      $region39: #{conv_ffn_forward.7} parent=5 // pred_region
        %s335 = ssub.s32 %s12, 1
        %s336 = sadd.s32 %s24, 4
        %s337 = smul.u32 8, %s336
        %s338 = ssub.s32 42, %s337
        %p339 = scmp.lt.s32.totalorder %s338, 8
        %s340 = scalar_select %p339, %s338, 8
        %s341 = smul.u32 4, %s340
        %p342 = scmp.lt.s32.totalorder %s22, 1
        %s343 = scalar_select %p342, %s22, 1
        %p344 = scmp.lt.s32.totalorder %s337, 41
        %s345 = scalar_select %p344, %s337, 41
        %p346 = scmp.lt.s32.totalorder %s23, 0
        %s347 = scalar_select %p346, %s23, 0
        %s348 = sadd.s32 %s347, %s345
        %s349 = smul.addr %s343, 42
        %s350 = sadd.s32 %s348, %s349
        %s351 = smul.addr %s350, 4
        %s352 = scalar_lea.vmem %s0, %s351
        %p353 = pneg %p63
        %p354 = pneg %p60
        %s355 = smul.u32 %s24, 8
        %s356 = sadd.s32 %s355, 31
        %p357 = scmp.gt.s32.totalorder %s356, 32
        %s358 = scalar_select %p357, %s356, 32
        %p359 = scmp.lt.s32.totalorder %s22, 1
        %s360 = scalar_select %p359, %s22, 1
        %p361 = scmp.lt.s32.totalorder %s358, 41
        %s362 = scalar_select %p361, %s358, 41
        %p363 = scmp.lt.s32.totalorder %s23, 0
        %s364 = scalar_select %p363, %s23, 0
        %s365 = sadd.s32 %s364, %s362
        %s366 = smul.addr %s360, 42
        %s367 = sadd.s32 %s365, %s366
        %s368 = smul.addr %s367, 4
        %s369 = scalar_lea.vmem %s1, %s368
        %p370 = pneg %p101
        %p371 = pneg %p98
        %s372 = sadd.s32 %s24, 1
        %s373 = smul.u32 %s372, 8
        %s374 = sadd.s32 %s373, 32
        %p375 = scmp.lt.s32.totalorder %s374, 39
        %s376 = scalar_select %p375, %s374, 39
        %p377 = scmp.lt.s32.totalorder %s22, 1
        %s378 = scalar_select %p377, %s22, 1
        %p379 = scmp.lt.s32.totalorder %s376, 41
        %s380 = scalar_select %p379, %s376, 41
        %p381 = scmp.lt.s32.totalorder %s23, 0
        %s382 = scalar_select %p381, %s23, 0
        %s383 = sadd.s32 %s382, %s380
        %s384 = smul.addr %s378, 42
        %s385 = sadd.s32 %s383, %s384
        %s386 = smul.addr %s385, 4
        %s387 = scalar_lea.vmem %s2, %s386
        %p388 = pneg %p141
        %p389 = pneg %p138
        %p390 = scmp.lt.s32.totalorder %s23, 0
        %s391 = scalar_select %p390, %s23, 0
        %s392 = smul.addr %s391, 4
        %s393 = scalar_lea.vmem %s3, %s392
        %p394 = pneg %p167
        %p395 = pneg %p164
        %p396 = scmp.lt.s32.totalorder %s23, 0
        %s397 = scalar_select %p396, %s23, 0
        %s398 = scalar_lea.vmem %s4, %s397
        %p399 = pneg %p193
        %p400 = pneg %p190
        %p401 = pneg %p225
        %p402 = pneg %p222
        %s403 = sand.u32 %s212, 1
        %s404 = sand.u32 %s212, 1
        %s405 = smul.addr %s404, 32
        %s406 = scalar_lea.vmem [#allocation2], %s405
        %s407 = sadd.s32 %s24, 4
        %s408 = smul.u32 8, %s407
        %s409 = ssub.s32 42, %s408
        %p410 = scmp.lt.s32.totalorder %s409, 8
        %s411 = scalar_select %p410, %s409, 8
        %s412 = smul.u32 4, %s411
        %p413 = scmp.lt.s32.totalorder %s22, 1
        %s414 = scalar_select %p413, %s22, 1
        %p415 = scmp.lt.s32.totalorder %s408, 41
        %s416 = scalar_select %p415, %s408, 41
        %p417 = scmp.lt.s32.totalorder %s23, 0
        %s418 = scalar_select %p417, %s23, 0
        %s419 = sadd.s32 %s418, %s416
        %s420 = smul.addr %s414, 42
        %s421 = sadd.s32 %s419, %s420
        %s422 = smul.addr %s421, 4
        %s423 = scalar_lea.vmem %s0, %s422
        %s424 = sadd.s32 %s24, 4
        %s425 = smul.u32 8, %s424
        %s426 = ssub.s32 42, %s425
        %p427 = scmp.lt.s32.totalorder %s426, 8
        %s428 = scalar_select %p427, %s426, 8
        %s429 = smul.u32 4, %s428
        %s430 = smul.u32 %s24, 8
        %s431 = sadd.s32 %s430, 31
        %p432 = scmp.gt.s32.totalorder %s431, 32
        %s433 = scalar_select %p432, %s431, 32
        %p434 = scmp.lt.s32.totalorder %s22, 1
        %s435 = scalar_select %p434, %s22, 1
        %p436 = scmp.lt.s32.totalorder %s433, 41
        %s437 = scalar_select %p436, %s433, 41
        %p438 = scmp.lt.s32.totalorder %s23, 0
        %s439 = scalar_select %p438, %s23, 0
        %s440 = sadd.s32 %s439, %s437
        %s441 = smul.addr %s435, 42
        %s442 = sadd.s32 %s440, %s441
        %s443 = smul.addr %s442, 4
        %s444 = scalar_lea.vmem %s1, %s443
        %s445 = smul.u32 %s24, 8
        %s446 = sadd.s32 %s445, 31
        %p447 = scmp.gt.s32.totalorder %s446, 32
        %s448 = scalar_select %p447, %s446, 32
        %s449 = sadd.s32 %s24, 1
        %s450 = smul.u32 %s449, 8
        %s451 = sadd.s32 %s450, 32
        %p452 = scmp.lt.s32.totalorder %s451, 39
        %s453 = scalar_select %p452, %s451, 39
        %p454 = scmp.lt.s32.totalorder %s22, 1
        %s455 = scalar_select %p454, %s22, 1
        %p456 = scmp.lt.s32.totalorder %s453, 41
        %s457 = scalar_select %p456, %s453, 41
        %p458 = scmp.lt.s32.totalorder %s23, 0
        %s459 = scalar_select %p458, %s23, 0
        %s460 = sadd.s32 %s459, %s457
        %s461 = smul.addr %s455, 42
        %s462 = sadd.s32 %s460, %s461
        %s463 = smul.addr %s462, 4
        %s464 = scalar_lea.vmem %s2, %s463
        %s465 = sadd.s32 %s24, 1
        %s466 = smul.u32 %s465, 8
        %s467 = sadd.s32 %s466, 32
        %p468 = scmp.lt.s32.totalorder %s467, 39
        %s469 = scalar_select %p468, %s467, 39
        %p470 = scmp.lt.s32.totalorder %s23, 0
        %s471 = scalar_select %p470, %s23, 0
        %s472 = smul.addr %s471, 4
        %s473 = scalar_lea.vmem %s3, %s472
        %p474 = scmp.lt.s32.totalorder %s23, 0
        %s475 = scalar_select %p474, %s23, 0
        %s476 = scalar_lea.vmem %s4, %s475
        %s477 = sadd.s32 %s24, 4
        %s478 = smul.u32 8, %s477
        %s479 = ssub.s32 42, %s478
        %p480 = scmp.lt.s32.totalorder %s479, 8
        %s481 = scalar_select %p480, %s479, 8
        %s482 = smul.u32 4, %s481
        %v483 = vld [vmem:[%s423] sm:$0xf]
        %v484 = vld [vmem:[%s423 + $0x4] sm:$0xf]
        %v485 = vld [vmem:[%s423 + $0x8] sm:$0xf]
        %v486 = vld [vmem:[%s423 + $0xc] sm:$0xf]
        %v487 = vld [vmem:[%s423 + $0x10] sm:$0xf]
        %v488 = vld [vmem:[%s423 + $0x14] sm:$0xf]
        %v489 = vld [vmem:[%s423 + $0x18] sm:$0xf]
        %v490 = vld [vmem:[%s423 + $0x1c] sm:$0xf]
        %v491 = vunpack.c.l.bf16 %v483
        %v492 = vunpack.c.l.bf16 %v484
        %v493 = vunpack.c.l.bf16 %v485
        %v494 = vunpack.c.l.bf16 %v486
        %v495 = vunpack.c.l.bf16 %v487
        %v496 = vunpack.c.l.bf16 %v488
        %v497 = vunpack.c.l.bf16 %v489
        %v498 = vunpack.c.l.bf16 %v490
        %v499 = vld [vmem:[%s444] sm:$0xf]
        %v500 = vunpack.c.l.bf16 %v499
        %v501 = vld [vmem:[%s464] sm:$0xf]
        %v502 = vunpack.c.l.bf16 %v501
        %p503 = scmp.gt.s32.totalorder %s24, 0
        %s504 = scalar_select %p503, 1, 0
        %v505 = vstv %s504
        %vm506 = vcmp.eq.s32.totalorder %v505, 1
        %v507 = vsel %vm506, %v500, 0.0
        %p508 = scmp.lt.s32.totalorder %s24, 0
        %s509 = scalar_select %p508, 1, 0
        %v510 = vstv %s509
        %vm511 = vcmp.eq.s32.totalorder %v510, 1
        %v512 = vsel %vm511, %v502, 0.0
        %v513 = vlaneseq
        %v514 = vshrl.u32 %v513, 7
        %v515 = vadd.s32 %v514, 8
        %v516 = vadd.s32 %v514, 16
        %v517 = vadd.s32 %v514, 24
        %v518 = vadd.s32 %v514, 32
        %v519 = vadd.s32 %v514, 40
        %v520 = vadd.s32 %v514, 48
        %v521 = vadd.s32 %v514, 56
        %v522 = vand.u32 %v514, 7
        %v523 = vand.u32 %v515, 7
        %v524 = vand.u32 %v516, 7
        %v525 = vand.u32 %v517, 7
        %v526 = vand.u32 %v518, 7
        %v527 = vand.u32 %v519, 7
        %v528 = vand.u32 %v520, 7
        %v529 = vand.u32 %v521, 7
        %vm530 = vcmp.ne.s32.totalorder %v522, 0
        %vm531 = vcmp.ne.s32.totalorder %v523, 0
        %vm532 = vcmp.ne.s32.totalorder %v524, 0
        %vm533 = vcmp.ne.s32.totalorder %v525, 0
        %vm534 = vcmp.ne.s32.totalorder %v526, 0
        %vm535 = vcmp.ne.s32.totalorder %v527, 0
        %vm536 = vcmp.ne.s32.totalorder %v528, 0
        %vm537 = vcmp.ne.s32.totalorder %v529, 0
        %vm538 = vcmp.ne.s32.totalorder %v522, 7
        %vm539 = vcmp.ne.s32.totalorder %v523, 7
        %vm540 = vcmp.ne.s32.totalorder %v524, 7
        %vm541 = vcmp.ne.s32.totalorder %v525, 7
        %vm542 = vcmp.ne.s32.totalorder %v526, 7
        %vm543 = vcmp.ne.s32.totalorder %v527, 7
        %vm544 = vcmp.ne.s32.totalorder %v528, 7
        %vm545 = vcmp.ne.s32.totalorder %v529, 7
        %v546 = vld [vmem:[%s473] sm:$0x7]
        %v547 = vld [vmem:[%s473 + $0x4] sm:$0x7]
        %v548 = vld [vmem:[%s473 + $0x8] sm:$0x7]
        %vm558 = vcmask 1040384
        %v559 = vrot.slane 0.0, 7
        %v560 = vrot.slane %v507, 7
        %v561 = vsel %vm558, %v559, %v560
        %v562 = vrot.slane %v491, 7
        %v563 = vsel %vm558, %v560, %v562
        %v564 = vrot.slane %v492, 7
        %v565 = vsel %vm558, %v562, %v564
        %v566 = vrot.slane %v493, 7
        %v567 = vsel %vm558, %v564, %v566
        %v568 = vrot.slane %v494, 7
        %v569 = vsel %vm558, %v566, %v568
        %v570 = vrot.slane %v495, 7
        %v571 = vsel %vm558, %v568, %v570
        %v572 = vrot.slane %v496, 7
        %v573 = vsel %vm558, %v570, %v572
        %v574 = vrot.slane %v497, 7
        %v575 = vsel %vm558, %v572, %v574
        %v584 = vsel %vm530, %v561, 0.0
        %v585 = vsel %vm531, %v563, 0.0
        %v586 = vsel %vm532, %v565, 0.0
        %v587 = vsel %vm533, %v567, 0.0
        %v588 = vsel %vm534, %v569, 0.0
        %v589 = vsel %vm535, %v571, 0.0
        %v590 = vsel %vm536, %v573, 0.0
        %v591 = vsel %vm537, %v575, 0.0
        %v592 = vperm.slane %v546, 0
        %v593 = vmul.f32 %v584, %v592
        %v594 = vmul.f32 %v585, %v592
        %v595 = vmul.f32 %v586, %v592
        %v596 = vmul.f32 %v587, %v592
        %v597 = vmul.f32 %v588, %v592
        %v598 = vmul.f32 %v589, %v592
        %v599 = vmul.f32 %v590, %v592
        %v600 = vmul.f32 %v591, %v592
        %v601 = vadd.f32 %v593, 0.0
        %v602 = vadd.f32 %v594, 0.0
        %v603 = vadd.f32 %v595, 0.0
        %v604 = vadd.f32 %v596, 0.0
        %v605 = vadd.f32 %v597, 0.0
        %v606 = vadd.f32 %v598, 0.0
        %v607 = vadd.f32 %v599, 0.0
        %v608 = vadd.f32 %v600, 0.0
        %v609 = vperm.slane %v546, 1
        %v610 = vmul.f32 %v507, %v609
        %v611 = vmul.f32 %v491, %v609
        %v612 = vmul.f32 %v492, %v609
        %v613 = vmul.f32 %v493, %v609
        %v614 = vmul.f32 %v494, %v609
        %v615 = vmul.f32 %v495, %v609
        %v616 = vmul.f32 %v496, %v609
        %v617 = vmul.f32 %v497, %v609
        %v618 = vadd.f32 %v601, %v610
        %v619 = vadd.f32 %v602, %v611
        %v620 = vadd.f32 %v603, %v612
        %v621 = vadd.f32 %v604, %v613
        %v622 = vadd.f32 %v605, %v614
        %v623 = vadd.f32 %v606, %v615
        %v624 = vadd.f32 %v607, %v616
        %v625 = vadd.f32 %v608, %v617
        %vm627 = vcmask 1046528
        %v628 = vrot.slane %v507, 1
        %v629 = vrot.slane %v491, 1
        %v630 = vsel %vm627, %v628, %v629
        %v631 = vrot.slane %v492, 1
        %v632 = vsel %vm627, %v629, %v631
        %v633 = vrot.slane %v493, 1
        %v634 = vsel %vm627, %v631, %v633
        %v635 = vrot.slane %v494, 1
        %v636 = vsel %vm627, %v633, %v635
        %v637 = vrot.slane %v495, 1
        %v638 = vsel %vm627, %v635, %v637
        %v639 = vrot.slane %v496, 1
        %v640 = vsel %vm627, %v637, %v639
        %v641 = vrot.slane %v497, 1
        %v642 = vsel %vm627, %v639, %v641
        %v643 = vrot.slane %v498, 1
        %v644 = vsel %vm627, %v641, %v643
        %v653 = vsel %vm538, %v630, 0.0
        %v654 = vsel %vm539, %v632, 0.0
        %v655 = vsel %vm540, %v634, 0.0
        %v656 = vsel %vm541, %v636, 0.0
        %v657 = vsel %vm542, %v638, 0.0
        %v658 = vsel %vm543, %v640, 0.0
        %v659 = vsel %vm544, %v642, 0.0
        %v660 = vsel %vm545, %v644, 0.0
        %v661 = vperm.slane %v546, 2
        %v662 = vmul.f32 %v653, %v661
        %v663 = vmul.f32 %v654, %v661
        %v664 = vmul.f32 %v655, %v661
        %v665 = vmul.f32 %v656, %v661
        %v666 = vmul.f32 %v657, %v661
        %v667 = vmul.f32 %v658, %v661
        %v668 = vmul.f32 %v659, %v661
        %v669 = vmul.f32 %v660, %v661
        %v670 = vadd.f32 %v618, %v662
        %v671 = vadd.f32 %v619, %v663
        %v672 = vadd.f32 %v620, %v664
        %v673 = vadd.f32 %v621, %v665
        %v674 = vadd.f32 %v622, %v666
        %v675 = vadd.f32 %v623, %v667
        %v676 = vadd.f32 %v624, %v668
        %v677 = vadd.f32 %v625, %v669
        %v678 = vrot.slane %v498, 7
        %v679 = vsel %vm558, %v574, %v678
        %v681 = vsel %vm530, %v563, 0.0
        %v682 = vsel %vm531, %v565, 0.0
        %v683 = vsel %vm532, %v567, 0.0
        %v684 = vsel %vm533, %v569, 0.0
        %v685 = vsel %vm534, %v571, 0.0
        %v686 = vsel %vm535, %v573, 0.0
        %v687 = vsel %vm536, %v575, 0.0
        %v688 = vsel %vm537, %v679, 0.0
        %v689 = vperm.slane %v547, 0
        %v690 = vmul.f32 %v681, %v689
        %v691 = vmul.f32 %v682, %v689
        %v692 = vmul.f32 %v683, %v689
        %v693 = vmul.f32 %v684, %v689
        %v694 = vmul.f32 %v685, %v689
        %v695 = vmul.f32 %v686, %v689
        %v696 = vmul.f32 %v687, %v689
        %v697 = vmul.f32 %v688, %v689
        %v698 = vadd.f32 %v670, %v690
        %v699 = vadd.f32 %v671, %v691
        %v700 = vadd.f32 %v672, %v692
        %v701 = vadd.f32 %v673, %v693
        %v702 = vadd.f32 %v674, %v694
        %v703 = vadd.f32 %v675, %v695
        %v704 = vadd.f32 %v676, %v696
        %v705 = vadd.f32 %v677, %v697
        %v706 = vperm.slane %v547, 1
        %v707 = vmul.f32 %v491, %v706
        %v708 = vmul.f32 %v492, %v706
        %v709 = vmul.f32 %v493, %v706
        %v710 = vmul.f32 %v494, %v706
        %v711 = vmul.f32 %v495, %v706
        %v712 = vmul.f32 %v496, %v706
        %v713 = vmul.f32 %v497, %v706
        %v714 = vmul.f32 %v498, %v706
        %v715 = vadd.f32 %v698, %v707
        %v716 = vadd.f32 %v699, %v708
        %v717 = vadd.f32 %v700, %v709
        %v718 = vadd.f32 %v701, %v710
        %v719 = vadd.f32 %v702, %v711
        %v720 = vadd.f32 %v703, %v712
        %v721 = vadd.f32 %v704, %v713
        %v722 = vadd.f32 %v705, %v714
        %v724 = vrot.slane %v512, 1
        %v725 = vsel %vm627, %v643, %v724
        %v727 = vsel %vm538, %v632, 0.0
        %v728 = vsel %vm539, %v634, 0.0
        %v729 = vsel %vm540, %v636, 0.0
        %v730 = vsel %vm541, %v638, 0.0
        %v731 = vsel %vm542, %v640, 0.0
        %v732 = vsel %vm543, %v642, 0.0
        %v733 = vsel %vm544, %v644, 0.0
        %v734 = vsel %vm545, %v725, 0.0
        %v735 = vperm.slane %v547, 2
        %v736 = vmul.f32 %v727, %v735
        %v737 = vmul.f32 %v728, %v735
        %v738 = vmul.f32 %v729, %v735
        %v739 = vmul.f32 %v730, %v735
        %v740 = vmul.f32 %v731, %v735
        %v741 = vmul.f32 %v732, %v735
        %v742 = vmul.f32 %v733, %v735
        %v743 = vmul.f32 %v734, %v735
        %v744 = vadd.f32 %v715, %v736
        %v745 = vadd.f32 %v716, %v737
        %v746 = vadd.f32 %v717, %v738
        %v747 = vadd.f32 %v718, %v739
        %v748 = vadd.f32 %v719, %v740
        %v749 = vadd.f32 %v720, %v741
        %v750 = vadd.f32 %v721, %v742
        %v751 = vadd.f32 %v722, %v743
        %v752 = vrot.slane %v512, 7
        %v753 = vsel %vm558, %v678, %v752
        %v755 = vsel %vm530, %v565, 0.0
        %v756 = vsel %vm531, %v567, 0.0
        %v757 = vsel %vm532, %v569, 0.0
        %v758 = vsel %vm533, %v571, 0.0
        %v759 = vsel %vm534, %v573, 0.0
        %v760 = vsel %vm535, %v575, 0.0
        %v761 = vsel %vm536, %v679, 0.0
        %v762 = vsel %vm537, %v753, 0.0
        %v763 = vperm.slane %v548, 0
        %v764 = vmul.f32 %v755, %v763
        %v765 = vmul.f32 %v756, %v763
        %v766 = vmul.f32 %v757, %v763
        %v767 = vmul.f32 %v758, %v763
        %v768 = vmul.f32 %v759, %v763
        %v769 = vmul.f32 %v760, %v763
        %v770 = vmul.f32 %v761, %v763
        %v771 = vmul.f32 %v762, %v763
        %v772 = vadd.f32 %v744, %v764
        %v773 = vadd.f32 %v745, %v765
        %v774 = vadd.f32 %v746, %v766
        %v775 = vadd.f32 %v747, %v767
        %v776 = vadd.f32 %v748, %v768
        %v777 = vadd.f32 %v749, %v769
        %v778 = vadd.f32 %v750, %v770
        %v779 = vadd.f32 %v751, %v771
        %v780 = vperm.slane %v548, 1
        %v781 = vmul.f32 %v492, %v780
        %v782 = vmul.f32 %v493, %v780
        %v783 = vmul.f32 %v494, %v780
        %v784 = vmul.f32 %v495, %v780
        %v785 = vmul.f32 %v496, %v780
        %v786 = vmul.f32 %v497, %v780
        %v787 = vmul.f32 %v498, %v780
        %v788 = vmul.f32 %v512, %v780
        %v789 = vadd.f32 %v772, %v781
        %v790 = vadd.f32 %v773, %v782
        %v791 = vadd.f32 %v774, %v783
        %v792 = vadd.f32 %v775, %v784
        %v793 = vadd.f32 %v776, %v785
        %v794 = vadd.f32 %v777, %v786
        %v795 = vadd.f32 %v778, %v787
        %v796 = vadd.f32 %v779, %v788
        %v797 = vrot.slane 0.0, 1
        %v798 = vsel %vm627, %v724, %v797
        %v800 = vsel %vm538, %v634, 0.0
        %v801 = vsel %vm539, %v636, 0.0
        %v802 = vsel %vm540, %v638, 0.0
        %v803 = vsel %vm541, %v640, 0.0
        %v804 = vsel %vm542, %v642, 0.0
        %v805 = vsel %vm543, %v644, 0.0
        %v806 = vsel %vm544, %v725, 0.0
        %v807 = vsel %vm545, %v798, 0.0
        %v808 = vperm.slane %v548, 2
        %v809 = vmul.f32 %v800, %v808
        %v810 = vmul.f32 %v801, %v808
        %v811 = vmul.f32 %v802, %v808
        %v812 = vmul.f32 %v803, %v808
        %v813 = vmul.f32 %v804, %v808
        %v814 = vmul.f32 %v805, %v808
        %v815 = vmul.f32 %v806, %v808
        %v816 = vmul.f32 %v807, %v808
        %v817 = vadd.f32 %v789, %v809
        %v818 = vadd.f32 %v790, %v810
        %v819 = vadd.f32 %v791, %v811
        %v820 = vadd.f32 %v792, %v812
        %v821 = vadd.f32 %v793, %v813
        %v822 = vadd.f32 %v794, %v814
        %v823 = vadd.f32 %v795, %v815
        %v824 = vadd.f32 %v796, %v816
        %v825 = vld [vmem:[%s476] sm:$0x1]
        %v827 = vperm.slane %v825, 0
        %v829 = vadd.f32 %v817, %v827
        %v830 = vadd.f32 %v818, %v827
        %v831 = vadd.f32 %v819, %v827
        %v832 = vadd.f32 %v820, %v827
        %v833 = vadd.f32 %v821, %v827
        %v834 = vadd.f32 %v822, %v827
        %v835 = vadd.f32 %v823, %v827
        %v836 = vadd.f32 %v824, %v827
        %v837 = vmul.f32 %v829, 0.5
        %v838 = vmul.f32 %v830, 0.5
        %v839 = vmul.f32 %v831, 0.5
        %v840 = vmul.f32 %v832, 0.5
        %v841 = vmul.f32 %v833, 0.5
        %v842 = vmul.f32 %v834, 0.5
        %v843 = vmul.f32 %v835, 0.5
        %v844 = vmul.f32 %v836, 0.5
        %v845 = vmul.f32 %v829, 0.70710677
        %v846 = vmul.f32 %v830, 0.70710677
        %v847 = vmul.f32 %v831, 0.70710677
        %v848 = vmul.f32 %v832, 0.70710677
        %v849 = vmul.f32 %v833, 0.70710677
        %v850 = vmul.f32 %v834, 0.70710677
        %v851 = vmul.f32 %v835, 0.70710677
        %v852 = vmul.f32 %v836, 0.70710677
        %v853 = vmul.f32 %v845, %v845
        %v854 = vmin.f32 16.0, %v853
        %v855 = vmul.f32 %v854, 2.1237322e-06
        %v856 = vadd.f32 %v855, 0.00028619796
        %v857 = vmul.f32 %v854, %v856
        %v858 = vadd.f32 %v857, 0.0036580483
        %v859 = vmul.f32 %v854, %v858
        %v860 = vadd.f32 %v859, 0.05243302
        %v861 = vmul.f32 %v854, %v860
        %v862 = vadd.f32 %v861, 0.18741608
        %v863 = vmul.f32 %v854, %v862
        %v864 = vadd.f32 %v863, 1.1283791
        %v865 = vmul.f32 %v845, %v864
        %v866 = vmul.f32 %v854, 3.8918573e-05
        %v867 = vadd.f32 %v866, 0.001143296
        %v868 = vmul.f32 %v854, %v867
        %v869 = vadd.f32 %v868, 0.014752088
        %v870 = vmul.f32 %v854, %v869
        %v871 = vadd.f32 %v870, 0.112945676
        %v872 = vmul.f32 %v854, %v871
        %v873 = vadd.f32 %v872, 0.4994258
        %v874 = vmul.f32 %v854, %v873
        %v875 = vadd.f32 %v874, 1.0
        %v876 = vrcp.pop %v875
        %v877 = vmul.f32 %v875, %v876
        %v878 = vsub.f32 1.0, %v877
        %v879 = vmul.f32 %v876, %v878
        %v880 = vadd.f32 %v876, %v879
        %vm881 = vweird.f32 %v875
        %vm882 = vweird.f32 %v876
        %vm883 = vmor %vm881, %vm882
        %v884 = vsel %vm883, %v876, %v880
        %v885 = vand.u32 2147483647, %v875
        %vm886 = vcmp.eq.f32.partialorder %v885, 8.507059e+37
        %v887 = vand.u32 %v875, 2147483648
        %v888 = vor.u32 1.1754944e-38, %v887
        %v889 = vsel %vm886, %v888, %v884
        %v890 = vmul.f32 %v865, %v889
        %v891 = vmin.f32 %v890, 1.0
        %v892 = vmax.f32 %v891, -1.0
        %v893 = vmul.f32 %v846, %v846
        %v894 = vmin.f32 16.0, %v893
        %v895 = vmul.f32 %v894, 2.1237322e-06
        %v896 = vadd.f32 %v895, 0.00028619796
        %v897 = vmul.f32 %v894, %v896
        %v898 = vadd.f32 %v897, 0.0036580483
        %v899 = vmul.f32 %v894, %v898
        %v900 = vadd.f32 %v899, 0.05243302
        %v901 = vmul.f32 %v894, %v900
        %v902 = vadd.f32 %v901, 0.18741608
        %v903 = vmul.f32 %v894, %v902
        %v904 = vadd.f32 %v903, 1.1283791
        %v905 = vmul.f32 %v846, %v904
        %v906 = vmul.f32 %v894, 3.8918573e-05
        %v907 = vadd.f32 %v906, 0.001143296
        %v908 = vmul.f32 %v894, %v907
        %v909 = vadd.f32 %v908, 0.014752088
        %v910 = vmul.f32 %v894, %v909
        %v911 = vadd.f32 %v910, 0.112945676
        %v912 = vmul.f32 %v894, %v911
        %v913 = vadd.f32 %v912, 0.4994258
        %v914 = vmul.f32 %v894, %v913
        %v915 = vadd.f32 %v914, 1.0
        %v916 = vrcp.pop %v915
        %v917 = vmul.f32 %v915, %v916
        %v918 = vsub.f32 1.0, %v917
        %v919 = vmul.f32 %v916, %v918
        %v920 = vadd.f32 %v916, %v919
        %vm921 = vweird.f32 %v915
        %vm922 = vweird.f32 %v916
        %vm923 = vmor %vm921, %vm922
        %v924 = vsel %vm923, %v916, %v920
        %v925 = vand.u32 2147483647, %v915
        %vm926 = vcmp.eq.f32.partialorder %v925, 8.507059e+37
        %v927 = vand.u32 %v915, 2147483648
        %v928 = vor.u32 1.1754944e-38, %v927
        %v929 = vsel %vm926, %v928, %v924
        %v930 = vmul.f32 %v905, %v929
        %v931 = vmin.f32 %v930, 1.0
        %v932 = vmax.f32 %v931, -1.0
        %v933 = vmul.f32 %v847, %v847
        %v934 = vmin.f32 16.0, %v933
        %v935 = vmul.f32 %v934, 2.1237322e-06
        %v936 = vadd.f32 %v935, 0.00028619796
        %v937 = vmul.f32 %v934, %v936
        %v938 = vadd.f32 %v937, 0.0036580483
        %v939 = vmul.f32 %v934, %v938
        %v940 = vadd.f32 %v939, 0.05243302
        %v941 = vmul.f32 %v934, %v940
        %v942 = vadd.f32 %v941, 0.18741608
        %v943 = vmul.f32 %v934, %v942
        %v944 = vadd.f32 %v943, 1.1283791
        %v945 = vmul.f32 %v847, %v944
        %v946 = vmul.f32 %v934, 3.8918573e-05
        %v947 = vadd.f32 %v946, 0.001143296
        %v948 = vmul.f32 %v934, %v947
        %v949 = vadd.f32 %v948, 0.014752088
        %v950 = vmul.f32 %v934, %v949
        %v951 = vadd.f32 %v950, 0.112945676
        %v952 = vmul.f32 %v934, %v951
        %v953 = vadd.f32 %v952, 0.4994258
        %v954 = vmul.f32 %v934, %v953
        %v955 = vadd.f32 %v954, 1.0
        %v956 = vrcp.pop %v955
        %v957 = vmul.f32 %v955, %v956
        %v958 = vsub.f32 1.0, %v957
        %v959 = vmul.f32 %v956, %v958
        %v960 = vadd.f32 %v956, %v959
        %vm961 = vweird.f32 %v955
        %vm962 = vweird.f32 %v956
        %vm963 = vmor %vm961, %vm962
        %v964 = vsel %vm963, %v956, %v960
        %v965 = vand.u32 2147483647, %v955
        %vm966 = vcmp.eq.f32.partialorder %v965, 8.507059e+37
        %v967 = vand.u32 %v955, 2147483648
        %v968 = vor.u32 1.1754944e-38, %v967
        %v969 = vsel %vm966, %v968, %v964
        %v970 = vmul.f32 %v945, %v969
        %v971 = vmin.f32 %v970, 1.0
        %v972 = vmax.f32 %v971, -1.0
        %v973 = vmul.f32 %v848, %v848
        %v974 = vmin.f32 16.0, %v973
        %v975 = vmul.f32 %v974, 2.1237322e-06
        %v976 = vadd.f32 %v975, 0.00028619796
        %v977 = vmul.f32 %v974, %v976
        %v978 = vadd.f32 %v977, 0.0036580483
        %v979 = vmul.f32 %v974, %v978
        %v980 = vadd.f32 %v979, 0.05243302
        %v981 = vmul.f32 %v974, %v980
        %v982 = vadd.f32 %v981, 0.18741608
        %v983 = vmul.f32 %v974, %v982
        %v984 = vadd.f32 %v983, 1.1283791
        %v985 = vmul.f32 %v848, %v984
        %v986 = vmul.f32 %v974, 3.8918573e-05
        %v987 = vadd.f32 %v986, 0.001143296
        %v988 = vmul.f32 %v974, %v987
        %v989 = vadd.f32 %v988, 0.014752088
        %v990 = vmul.f32 %v974, %v989
        %v991 = vadd.f32 %v990, 0.112945676
        %v992 = vmul.f32 %v974, %v991
        %v993 = vadd.f32 %v992, 0.4994258
        %v994 = vmul.f32 %v974, %v993
        %v995 = vadd.f32 %v994, 1.0
        %v996 = vrcp.pop %v995
        %v997 = vmul.f32 %v995, %v996
        %v998 = vsub.f32 1.0, %v997
        %v999 = vmul.f32 %v996, %v998
        %v1000 = vadd.f32 %v996, %v999
        %vm1001 = vweird.f32 %v995
        %vm1002 = vweird.f32 %v996
        %vm1003 = vmor %vm1001, %vm1002
        %v1004 = vsel %vm1003, %v996, %v1000
        %v1005 = vand.u32 2147483647, %v995
        %vm1006 = vcmp.eq.f32.partialorder %v1005, 8.507059e+37
        %v1007 = vand.u32 %v995, 2147483648
        %v1008 = vor.u32 1.1754944e-38, %v1007
        %v1009 = vsel %vm1006, %v1008, %v1004
        %v1010 = vmul.f32 %v985, %v1009
        %v1011 = vmin.f32 %v1010, 1.0
        %v1012 = vmax.f32 %v1011, -1.0
        %v1013 = vmul.f32 %v849, %v849
        %v1014 = vmin.f32 16.0, %v1013
        %v1015 = vmul.f32 %v1014, 2.1237322e-06
        %v1016 = vadd.f32 %v1015, 0.00028619796
        %v1017 = vmul.f32 %v1014, %v1016
        %v1018 = vadd.f32 %v1017, 0.0036580483
        %v1019 = vmul.f32 %v1014, %v1018
        %v1020 = vadd.f32 %v1019, 0.05243302
        %v1021 = vmul.f32 %v1014, %v1020
        %v1022 = vadd.f32 %v1021, 0.18741608
        %v1023 = vmul.f32 %v1014, %v1022
        %v1024 = vadd.f32 %v1023, 1.1283791
        %v1025 = vmul.f32 %v849, %v1024
        %v1026 = vmul.f32 %v1014, 3.8918573e-05
        %v1027 = vadd.f32 %v1026, 0.001143296
        %v1028 = vmul.f32 %v1014, %v1027
        %v1029 = vadd.f32 %v1028, 0.014752088
        %v1030 = vmul.f32 %v1014, %v1029
        %v1031 = vadd.f32 %v1030, 0.112945676
        %v1032 = vmul.f32 %v1014, %v1031
        %v1033 = vadd.f32 %v1032, 0.4994258
        %v1034 = vmul.f32 %v1014, %v1033
        %v1035 = vadd.f32 %v1034, 1.0
        %v1036 = vrcp.pop %v1035
        %v1037 = vmul.f32 %v1035, %v1036
        %v1038 = vsub.f32 1.0, %v1037
        %v1039 = vmul.f32 %v1036, %v1038
        %v1040 = vadd.f32 %v1036, %v1039
        %vm1041 = vweird.f32 %v1035
        %vm1042 = vweird.f32 %v1036
        %vm1043 = vmor %vm1041, %vm1042
        %v1044 = vsel %vm1043, %v1036, %v1040
        %v1045 = vand.u32 2147483647, %v1035
        %vm1046 = vcmp.eq.f32.partialorder %v1045, 8.507059e+37
        %v1047 = vand.u32 %v1035, 2147483648
        %v1048 = vor.u32 1.1754944e-38, %v1047
        %v1049 = vsel %vm1046, %v1048, %v1044
        %v1050 = vmul.f32 %v1025, %v1049
        %v1051 = vmin.f32 %v1050, 1.0
        %v1052 = vmax.f32 %v1051, -1.0
        %v1053 = vmul.f32 %v850, %v850
        %v1054 = vmin.f32 16.0, %v1053
        %v1055 = vmul.f32 %v1054, 2.1237322e-06
        %v1056 = vadd.f32 %v1055, 0.00028619796
        %v1057 = vmul.f32 %v1054, %v1056
        %v1058 = vadd.f32 %v1057, 0.0036580483
        %v1059 = vmul.f32 %v1054, %v1058
        %v1060 = vadd.f32 %v1059, 0.05243302
        %v1061 = vmul.f32 %v1054, %v1060
        %v1062 = vadd.f32 %v1061, 0.18741608
        %v1063 = vmul.f32 %v1054, %v1062
        %v1064 = vadd.f32 %v1063, 1.1283791
        %v1065 = vmul.f32 %v850, %v1064
        %v1066 = vmul.f32 %v1054, 3.8918573e-05
        %v1067 = vadd.f32 %v1066, 0.001143296
        %v1068 = vmul.f32 %v1054, %v1067
        %v1069 = vadd.f32 %v1068, 0.014752088
        %v1070 = vmul.f32 %v1054, %v1069
        %v1071 = vadd.f32 %v1070, 0.112945676
        %v1072 = vmul.f32 %v1054, %v1071
        %v1073 = vadd.f32 %v1072, 0.4994258
        %v1074 = vmul.f32 %v1054, %v1073
        %v1075 = vadd.f32 %v1074, 1.0
        %v1076 = vrcp.pop %v1075
        %v1077 = vmul.f32 %v1075, %v1076
        %v1078 = vsub.f32 1.0, %v1077
        %v1079 = vmul.f32 %v1076, %v1078
        %v1080 = vadd.f32 %v1076, %v1079
        %vm1081 = vweird.f32 %v1075
        %vm1082 = vweird.f32 %v1076
        %vm1083 = vmor %vm1081, %vm1082
        %v1084 = vsel %vm1083, %v1076, %v1080
        %v1085 = vand.u32 2147483647, %v1075
        %vm1086 = vcmp.eq.f32.partialorder %v1085, 8.507059e+37
        %v1087 = vand.u32 %v1075, 2147483648
        %v1088 = vor.u32 1.1754944e-38, %v1087
        %v1089 = vsel %vm1086, %v1088, %v1084
        %v1090 = vmul.f32 %v1065, %v1089
        %v1091 = vmin.f32 %v1090, 1.0
        %v1092 = vmax.f32 %v1091, -1.0
        %v1093 = vmul.f32 %v851, %v851
        %v1094 = vmin.f32 16.0, %v1093
        %v1095 = vmul.f32 %v1094, 2.1237322e-06
        %v1096 = vadd.f32 %v1095, 0.00028619796
        %v1097 = vmul.f32 %v1094, %v1096
        %v1098 = vadd.f32 %v1097, 0.0036580483
        %v1099 = vmul.f32 %v1094, %v1098
        %v1100 = vadd.f32 %v1099, 0.05243302
        %v1101 = vmul.f32 %v1094, %v1100
        %v1102 = vadd.f32 %v1101, 0.18741608
        %v1103 = vmul.f32 %v1094, %v1102
        %v1104 = vadd.f32 %v1103, 1.1283791
        %v1105 = vmul.f32 %v851, %v1104
        %v1106 = vmul.f32 %v1094, 3.8918573e-05
        %v1107 = vadd.f32 %v1106, 0.001143296
        %v1108 = vmul.f32 %v1094, %v1107
        %v1109 = vadd.f32 %v1108, 0.014752088
        %v1110 = vmul.f32 %v1094, %v1109
        %v1111 = vadd.f32 %v1110, 0.112945676
        %v1112 = vmul.f32 %v1094, %v1111
        %v1113 = vadd.f32 %v1112, 0.4994258
        %v1114 = vmul.f32 %v1094, %v1113
        %v1115 = vadd.f32 %v1114, 1.0
        %v1116 = vrcp.pop %v1115
        %v1117 = vmul.f32 %v1115, %v1116
        %v1118 = vsub.f32 1.0, %v1117
        %v1119 = vmul.f32 %v1116, %v1118
        %v1120 = vadd.f32 %v1116, %v1119
        %vm1121 = vweird.f32 %v1115
        %vm1122 = vweird.f32 %v1116
        %vm1123 = vmor %vm1121, %vm1122
        %v1124 = vsel %vm1123, %v1116, %v1120
        %v1125 = vand.u32 2147483647, %v1115
        %vm1126 = vcmp.eq.f32.partialorder %v1125, 8.507059e+37
        %v1127 = vand.u32 %v1115, 2147483648
        %v1128 = vor.u32 1.1754944e-38, %v1127
        %v1129 = vsel %vm1126, %v1128, %v1124
        %v1130 = vmul.f32 %v1105, %v1129
        %v1131 = vmin.f32 %v1130, 1.0
        %v1132 = vmax.f32 %v1131, -1.0
        %v1133 = vmul.f32 %v852, %v852
        %v1134 = vmin.f32 16.0, %v1133
        %v1135 = vmul.f32 %v1134, 2.1237322e-06
        %v1136 = vadd.f32 %v1135, 0.00028619796
        %v1137 = vmul.f32 %v1134, %v1136
        %v1138 = vadd.f32 %v1137, 0.0036580483
        %v1139 = vmul.f32 %v1134, %v1138
        %v1140 = vadd.f32 %v1139, 0.05243302
        %v1141 = vmul.f32 %v1134, %v1140
        %v1142 = vadd.f32 %v1141, 0.18741608
        %v1143 = vmul.f32 %v1134, %v1142
        %v1144 = vadd.f32 %v1143, 1.1283791
        %v1145 = vmul.f32 %v852, %v1144
        %v1146 = vmul.f32 %v1134, 3.8918573e-05
        %v1147 = vadd.f32 %v1146, 0.001143296
        %v1148 = vmul.f32 %v1134, %v1147
        %v1149 = vadd.f32 %v1148, 0.014752088
        %v1150 = vmul.f32 %v1134, %v1149
        %v1151 = vadd.f32 %v1150, 0.112945676
        %v1152 = vmul.f32 %v1134, %v1151
        %v1153 = vadd.f32 %v1152, 0.4994258
        %v1154 = vmul.f32 %v1134, %v1153
        %v1155 = vadd.f32 %v1154, 1.0
        %v1156 = vrcp.pop %v1155
        %v1157 = vmul.f32 %v1155, %v1156
        %v1158 = vsub.f32 1.0, %v1157
        %v1159 = vmul.f32 %v1156, %v1158
        %v1160 = vadd.f32 %v1156, %v1159
        %vm1161 = vweird.f32 %v1155
        %vm1162 = vweird.f32 %v1156
        %vm1163 = vmor %vm1161, %vm1162
        %v1164 = vsel %vm1163, %v1156, %v1160
        %v1165 = vand.u32 2147483647, %v1155
        %vm1166 = vcmp.eq.f32.partialorder %v1165, 8.507059e+37
        %v1167 = vand.u32 %v1155, 2147483648
        %v1168 = vor.u32 1.1754944e-38, %v1167
        %v1169 = vsel %vm1166, %v1168, %v1164
        %v1170 = vmul.f32 %v1145, %v1169
        %v1171 = vmin.f32 %v1170, 1.0
        %v1172 = vmax.f32 %v1171, -1.0
        %v1173 = vadd.f32 %v892, 1.0
        %v1174 = vadd.f32 %v932, 1.0
        %v1175 = vadd.f32 %v972, 1.0
        %v1176 = vadd.f32 %v1012, 1.0
        %v1177 = vadd.f32 %v1052, 1.0
        %v1178 = vadd.f32 %v1092, 1.0
        %v1179 = vadd.f32 %v1132, 1.0
        %v1180 = vadd.f32 %v1172, 1.0
        %v1181 = vmul.f32 %v837, %v1173
        %v1182 = vmul.f32 %v838, %v1174
        %v1183 = vmul.f32 %v839, %v1175
        %v1184 = vmul.f32 %v840, %v1176
        %v1185 = vmul.f32 %v841, %v1177
        %v1186 = vmul.f32 %v842, %v1178
        %v1187 = vmul.f32 %v843, %v1179
        %v1188 = vmul.f32 %v844, %v1180
        %v1189 = vpack.c.bf16 %v1181, %v1181
        %v1190 = vpack.c.bf16 %v1182, %v1182
        %v1191 = vpack.c.bf16 %v1183, %v1183
        %v1192 = vpack.c.bf16 %v1184, %v1184
        %v1193 = vpack.c.bf16 %v1185, %v1185
        %v1194 = vpack.c.bf16 %v1186, %v1186
        %v1195 = vpack.c.bf16 %v1187, %v1187
        %v1196 = vpack.c.bf16 %v1188, %v1188
        %vm1197 = vcmask 257024
        %1198 = vst.msk [vmem:[%s406] sm:$0xf] %vm1197, %v1189
        %1199 = vst.msk [vmem:[%s406 + $0x4] sm:$0xf] %vm1197, %v1190
        %1200 = vst.msk [vmem:[%s406 + $0x8] sm:$0xf] %vm1197, %v1191
        %1201 = vst.msk [vmem:[%s406 + $0xc] sm:$0xf] %vm1197, %v1192
        %1202 = vst.msk [vmem:[%s406 + $0x10] sm:$0xf] %vm1197, %v1193
        %1203 = vst.msk [vmem:[%s406 + $0x14] sm:$0xf] %vm1197, %v1194
        %1204 = vst.msk [vmem:[%s406 + $0x18] sm:$0xf] %vm1197, %v1195
        %1205 = vst.msk [vmem:[%s406 + $0x1c] sm:$0xf] %vm1197, %v1196
        %s1206 = sand.u32 %s212, 1
        %s1207 = sand.u32 %s212, 1
        %s1208 = smul.addr %s1207, 32
        %s1209 = scalar_lea.vmem [#allocation2], %s1208
        // Predicated region
        $region41: #{conv_ffn_forward.7} parent=39 // pred_check
          %p1210 = pneg %p222
        $region42: #{conv_ffn_forward.7} parent=39 // pred_check_branch
          %1212 = sbr.rel (%p1210) target = $region44
        $region43: #{conv_ffn_forward.7} parent=39 // pred_region
          %s1213 = sadd.s32 %s24, 4
          %s1214 = smul.u32 8, %s1213
          %s1215 = ssub.s32 42, %s1214
          %p1216 = scmp.lt.s32.totalorder %s1215, 8
          %s1217 = scalar_select %p1216, %s1215, 8
          %s1218 = smul.u32 4, %s1217
          %p1219 = scmp.ne.s32.totalorder 0, %s1218
          %s1220 = sadd.s32 %s23, %s1214
          %s1221 = smul.addr %s22, 42
          %s1222 = sadd.s32 %s1220, %s1221
          %s1223 = smul.addr %s1222, 4
          %s1224 = scalar_lea.vmem %s6, %s1223
          // Predicated region
          $region45: #{conv_ffn_forward.7} parent=43 // pred_check
            %p1225 = pneg %p1219
          $region46: #{conv_ffn_forward.7} parent=43 // pred_check_branch
            %1227 = sbr.rel (%p1225) target = $region48
          $region47: #{conv_ffn_forward.7} parent=43 // pred_region
            // Predicated region
            $region49: #{conv_ffn_forward.7} parent=47 // pred_check
              _
            $region50: #{conv_ffn_forward.7} parent=47 // pred_check_branch
              %1229 = sbr.rel target = $region52
            $region51: #{conv_ffn_forward.7} parent=47 // pred_region
              // Predicated region
              $region71: #{conv_ffn_forward.7} parent=51 // pred_check
                _
              $region72: #{conv_ffn_forward.7} parent=51 // pred_check_branch
                %1293 = sbr.rel (0) target = $region74
              $region73: #{conv_ffn_forward.7} parent=51 // pred_region
                %s1295 = ssub.s32 16, 1
                %s1296 = sshrl.u32 %s1217, 3
                // While loop
                $region75: #{conv_ffn_forward.7} parent=73 // loop_pre_header
                  _
                $region76: #{conv_ffn_forward.7} parent=73 // loop_header
                  %s1298 = sphi 0, %s1300
                  %p1299 = scmp.ge.s32.totalorder %s1298, %s1296
                  %s1303 = sphi 0, %s1324
                  %s1304 = sphi %s1209, %s1327
                  %s1305 = sphi %s1224, %s1328
                $region77: #{conv_ffn_forward.7} parent=73 // loop_header_branch
                  %1302 = sbr.rel (%p1299) target = $region81
                $region78: #{conv_ffn_forward.7} parent=73 // loop_body
                  %v1306 = vld [vmem:[%s1304] sm:%s1295]
                  %1307 = vst [vmem:[%s1305] sm:%s1295] %v1306
                  %v1308 = vld [vmem:[%s1304 + $0x4] sm:%s1295]
                  %1309 = vst [vmem:[%s1305 + $0x4] sm:%s1295] %v1308
                  %v1310 = vld [vmem:[%s1304 + $0x8] sm:%s1295]
                  %1311 = vst [vmem:[%s1305 + $0x8] sm:%s1295] %v1310
                  %v1312 = vld [vmem:[%s1304 + $0xc] sm:%s1295]
                  %1313 = vst [vmem:[%s1305 + $0xc] sm:%s1295] %v1312
                  %v1314 = vld [vmem:[%s1304 + $0x10] sm:%s1295]
                  %1315 = vst [vmem:[%s1305 + $0x10] sm:%s1295] %v1314
                  %v1316 = vld [vmem:[%s1304 + $0x14] sm:%s1295]
                  %1317 = vst [vmem:[%s1305 + $0x14] sm:%s1295] %v1316
                  %v1318 = vld [vmem:[%s1304 + $0x18] sm:%s1295]
                  %1319 = vst [vmem:[%s1305 + $0x18] sm:%s1295] %v1318
                  %v1320 = vld [vmem:[%s1304 + $0x1c] sm:%s1295]
                  %1321 = vst [vmem:[%s1305 + $0x1c] sm:%s1295] %v1320
                  %s1322 = sadd.s32 1, %s1303
                  %p1323 = scmp.ge.s32.totalorder %s1322, %s1296
                  %s1324 = scalar_select %p1323, 0, %s1322
                  %s1325 = smul.u32 %s1324, 32
                  %s1326 = smul.u32 %s1324, 32
                  %s1327 = scalar_lea.vmem %s1209, %s1325 [#allocation2]
                  %s1328 = scalar_lea.vmem %s1224, %s1326
                $region79: #{conv_ffn_forward.7} parent=73 // loop_footer
                  %s1300 = sadd.s32 %s1298, 1
                $region80: #{conv_ffn_forward.7} parent=73 // loop_footer_branch
                  %1297 = sbr.rel target = $region76
                $region81: #{conv_ffn_forward.7} parent=73 // loop_exit
                  _
                %s1329 = sshrl.u32 %s1217, 3
                %s1330 = sand.u32 %s1217, 7
                %s1331 = smul.u32 %s1329, 8
                %s1332 = smul.u32 4, %s1331
                %s1333 = scalar_lea.vmem %s1209, %s1332 [#allocation2]
                %s1334 = smul.u32 4, %s1331
                %s1335 = scalar_lea.vmem %s1224, %s1334
                // While loop
                $region82: #{conv_ffn_forward.7} parent=73 // loop_pre_header
                  _
                $region83: #{conv_ffn_forward.7} parent=73 // loop_header
                  %s1337 = sphi 0, %s1339
                  %p1338 = scmp.ge.s32.totalorder %s1337, %s1330
                  %s1342 = sphi 0, %s1349
                  %s1343 = sphi %s1333, %s1352
                  %s1344 = sphi %s1335, %s1353
                $region84: #{conv_ffn_forward.7} parent=73 // loop_header_branch
                  %1341 = sbr.rel (%p1338) target = $region88
                $region85: #{conv_ffn_forward.7} parent=73 // loop_body
                  %v1345 = vld [vmem:[%s1343] sm:%s1295]
                  %1346 = vst [vmem:[%s1344] sm:%s1295] %v1345
                  %s1347 = sadd.s32 1, %s1342
                  %p1348 = scmp.ge.s32.totalorder %s1347, %s1330
                  %s1349 = scalar_select %p1348, 0, %s1347
                  %s1350 = smul.u32 %s1349, 4
                  %s1351 = smul.u32 %s1349, 4
                  %s1352 = scalar_lea.vmem %s1333, %s1350 [#allocation2]
                  %s1353 = scalar_lea.vmem %s1335, %s1351
                $region86: #{conv_ffn_forward.7} parent=73 // loop_footer
                  %s1339 = sadd.s32 %s1337, 1
                $region87: #{conv_ffn_forward.7} parent=73 // loop_footer_branch
                  %1336 = sbr.rel target = $region83
                $region88: #{conv_ffn_forward.7} parent=73 // loop_exit
                  _
              $region74: #{conv_ffn_forward.7} parent=51 // pred_fallthru
                _
            $region52: #{conv_ffn_forward.7} parent=47 // pred_fallthru
              _
            // Predicated region
            $region53: #{conv_ffn_forward.7} parent=47 // pred_check
              _
            $region54: #{conv_ffn_forward.7} parent=47 // pred_check_branch
              %1231 = sbr.rel (0) target = $region56
            $region55: #{conv_ffn_forward.7} parent=47 // pred_region
              %s1233 = ssub.s32 16, 1
              %s1234 = sshrl.u32 %s1217, 3
              // While loop
              $region57: #{conv_ffn_forward.7} parent=55 // loop_pre_header
                _
              $region58: #{conv_ffn_forward.7} parent=55 // loop_header
                %s1236 = sphi 0, %s1238
                %p1237 = scmp.ge.s32.totalorder %s1236, %s1234
                %s1241 = sphi 0, %s1262
                %s1242 = sphi %s1209, %s1265
                %s1243 = sphi %s1224, %s1266
              $region59: #{conv_ffn_forward.7} parent=55 // loop_header_branch
                %1240 = sbr.rel (%p1237) target = $region63
              $region60: #{conv_ffn_forward.7} parent=55 // loop_body
                %v1244 = vld [vmem:[%s1242] sm:%s1233]
                %1245 = vst [vmem:[%s1243] sm:%s1233] %v1244
                %v1246 = vld [vmem:[%s1242 + $0x4] sm:%s1233]
                %1247 = vst [vmem:[%s1243 + $0x4] sm:%s1233] %v1246
                %v1248 = vld [vmem:[%s1242 + $0x8] sm:%s1233]
                %1249 = vst [vmem:[%s1243 + $0x8] sm:%s1233] %v1248
                %v1250 = vld [vmem:[%s1242 + $0xc] sm:%s1233]
                %1251 = vst [vmem:[%s1243 + $0xc] sm:%s1233] %v1250
                %v1252 = vld [vmem:[%s1242 + $0x10] sm:%s1233]
                %1253 = vst [vmem:[%s1243 + $0x10] sm:%s1233] %v1252
                %v1254 = vld [vmem:[%s1242 + $0x14] sm:%s1233]
                %1255 = vst [vmem:[%s1243 + $0x14] sm:%s1233] %v1254
                %v1256 = vld [vmem:[%s1242 + $0x18] sm:%s1233]
                %1257 = vst [vmem:[%s1243 + $0x18] sm:%s1233] %v1256
                %v1258 = vld [vmem:[%s1242 + $0x1c] sm:%s1233]
                %1259 = vst [vmem:[%s1243 + $0x1c] sm:%s1233] %v1258
                %s1260 = sadd.s32 1, %s1241
                %p1261 = scmp.ge.s32.totalorder %s1260, %s1234
                %s1262 = scalar_select %p1261, 0, %s1260
                %s1263 = smul.u32 %s1262, 32
                %s1264 = smul.u32 %s1262, 32
                %s1265 = scalar_lea.vmem %s1209, %s1263 [#allocation2]
                %s1266 = scalar_lea.vmem %s1224, %s1264
              $region61: #{conv_ffn_forward.7} parent=55 // loop_footer
                %s1238 = sadd.s32 %s1236, 1
              $region62: #{conv_ffn_forward.7} parent=55 // loop_footer_branch
                %1235 = sbr.rel target = $region58
              $region63: #{conv_ffn_forward.7} parent=55 // loop_exit
                _
              %s1267 = sshrl.u32 %s1217, 3
              %s1268 = sand.u32 %s1217, 7
              %s1269 = smul.u32 %s1267, 8
              %s1270 = smul.u32 4, %s1269
              %s1271 = scalar_lea.vmem %s1209, %s1270 [#allocation2]
              %s1272 = smul.u32 4, %s1269
              %s1273 = scalar_lea.vmem %s1224, %s1272
              // While loop
              $region64: #{conv_ffn_forward.7} parent=55 // loop_pre_header
                _
              $region65: #{conv_ffn_forward.7} parent=55 // loop_header
                %s1275 = sphi 0, %s1277
                %p1276 = scmp.ge.s32.totalorder %s1275, %s1268
                %s1280 = sphi 0, %s1287
                %s1281 = sphi %s1271, %s1290
                %s1282 = sphi %s1273, %s1291
              $region66: #{conv_ffn_forward.7} parent=55 // loop_header_branch
                %1279 = sbr.rel (%p1276) target = $region70
              $region67: #{conv_ffn_forward.7} parent=55 // loop_body
                %v1283 = vld [vmem:[%s1281] sm:%s1233]
                %1284 = vst [vmem:[%s1282] sm:%s1233] %v1283
                %s1285 = sadd.s32 1, %s1280
                %p1286 = scmp.ge.s32.totalorder %s1285, %s1268
                %s1287 = scalar_select %p1286, 0, %s1285
                %s1288 = smul.u32 %s1287, 4
                %s1289 = smul.u32 %s1287, 4
                %s1290 = scalar_lea.vmem %s1271, %s1288 [#allocation2]
                %s1291 = scalar_lea.vmem %s1273, %s1289
              $region68: #{conv_ffn_forward.7} parent=55 // loop_footer
                %s1277 = sadd.s32 %s1275, 1
              $region69: #{conv_ffn_forward.7} parent=55 // loop_footer_branch
                %1274 = sbr.rel target = $region65
              $region70: #{conv_ffn_forward.7} parent=55 // loop_exit
                _
            $region56: #{conv_ffn_forward.7} parent=47 // pred_fallthru
              _
          $region48: #{conv_ffn_forward.7} parent=43 // pred_fallthru
            _
          %1354 = vnop
        $region44: #{conv_ffn_forward.7} parent=39 // pred_fallthru
          _
      $region40: #{conv_ffn_forward.7} parent=5 // pred_fallthru
        _
      %p1355 = scmp.le.s32.totalorder 2, %s12
      // Predicated region
      $region89: #{conv_ffn_forward.7} parent=5 // pred_check
        %p1356 = pneg %p1355
      $region90: #{conv_ffn_forward.7} parent=5 // pred_check_branch
        %1358 = sbr.rel (%p1356) target = $region92
      $region91: #{conv_ffn_forward.7} parent=5 // pred_region
        %s1359 = ssub.s32 %s12, 2
        // Predicated region
        $region93: #{conv_ffn_forward.7} parent=91 // pred_check
          %p1360 = pneg %p228
        $region94: #{conv_ffn_forward.7} parent=91 // pred_check_branch
          %1362 = sbr.rel (%p1360) target = $region96
        $region95: #{conv_ffn_forward.7} parent=91 // pred_region
          %s1363 = sand.u32 %s213, 1
          %s1364 = sand.u32 %s213, 1
          %s1365 = smul.addr %s1364, 32
          %s1366 = scalar_lea.vmem [#allocation2], %s1365
        $region96: #{conv_ffn_forward.7} parent=91 // pred_fallthru
          _
      $region92: #{conv_ffn_forward.7} parent=5 // pred_fallthru
        _
    $region6: #{conv_ffn_forward.7} parent=1 // loop_footer
      %s16 = sadd.s32 1, %s12
    $region7: #{conv_ffn_forward.7} parent=1 // loop_footer_branch
      %11 = sbr.rel target = $region3
    $region8: #{conv_ffn_forward.7} parent=1 // loop_exit
      _

// kernel: conv_ffn_forward.6
$region0: #{conv_ffn_forward.6}
  #allocation0 [shape = 'u32[]', space=smem, size = 0x4, offset = 0x4, fixed_abs, tag = 'smem constant byte address 0x4 - core index']
  #allocation1 [shape = 'u32[72,128]{1,0:T(1,128)}', space=vmem, size = 0x9000, scoped, tag = 'internal scratch']
  %s0 = inlined_call_operand.vmem [shape: bf16[2,336,32], index: 0, kind: input, shape index: {}, may-alias: {0,1,2}]
  %s1 = inlined_call_operand.vmem [shape: bf16[2,336,32], index: 1, kind: input, shape index: {}, may-alias: {0,1,2}]
  %s2 = inlined_call_operand.vmem [shape: bf16[2,336,32], index: 2, kind: input, shape index: {}, may-alias: {0,1,2}]
  %s3 = inlined_call_operand.vmem [shape: f32[3,3,32], index: 3, kind: input, shape index: {}]
  %s4 = inlined_call_operand.vmem [shape: f32[1,32], index: 4, kind: input, shape index: {}]
  %s5 = inlined_call_operand.vmem [shape: bf16[2,336,32], index: 5, kind: input, shape index: {}, may-alias: {5,6}]
  %s6 = inlined_call_operand.vmem [shape: bf16[2,336,32], index: 6, kind: output, shape index: {}, may-alias: {5,6}]
  %s7 = sld [smem:[#allocation0]]
  $region97: #{conv_ffn_forward.6} parent=0
    _
  %s9 = ssub.s32 1, %s7
  %s10 = scalar_select 0, %s9, %s7
  $region1: #{conv_ffn_forward.6} parent=0
    #allocation2 [shape = 'u8[131072]{0}', space=vmem, size = 0x20000, scoped, tag = 'output window, operand 0']
    loop: start=0, step=1, limit=4
    $region2: #{conv_ffn_forward.6} parent=1 // loop_pre_header
      _
    $region3: #{conv_ffn_forward.6} parent=1 // loop_header
      %s12 = sphi 0, %s16
      %p13 = scmp.ge.s32.totalorder %s12, 4
      %s19 = sphi 0, %s38
      %s20 = sphi 0, %s34
      %s21 = sphi 0, %s30
      %s22 = sphi 0, %s19
      %s23 = sphi 0, %s20
      %s24 = sphi 0, %s21
      %s25 = sphi 0, %s22
      %s26 = sphi 0, %s23
      %s27 = sphi 0, %s24
      %s45 = sphi 0, %s47
      %s48 = sphi 0, %s45
      %s49 = sphi 0, %s48
      %s65 = sphi 0, %s49
      %s83 = sphi 0, %s85
      %s86 = sphi 0, %s83
      %s87 = sphi 0, %s86
      %s103 = sphi 0, %s87
      %s121 = sphi 0, %s123
      %s124 = sphi 0, %s121
      %s125 = sphi 0, %s124
      %s141 = sphi 0, %s125
      %s147 = sphi 0, %s149
      %s150 = sphi 0, %s147
      %s151 = sphi 0, %s150
      %s167 = sphi 0, %s151
      %s173 = sphi 0, %s175
      %s176 = sphi 0, %s173
      %s177 = sphi 0, %s176
      %s193 = sphi 0, %s177
      %s203 = sphi 0, %s205
      %s206 = sphi 0, %s203
      %s207 = sphi 0, %s206
      %s223 = sphi 0, %s207
    $region4: #{conv_ffn_forward.6} parent=1 // loop_header_branch
      %15 = sbr.rel (%p13) target = $region8
    $region5: #{conv_ffn_forward.6} parent=1 // loop_body
      %s17 = ssub.s32 %s12, 1
      %s18 = ssub.s32 %s12, 2
      %s28 = sadd.s32 1, %s21
      %p29 = scmp.ge.s32.totalorder %s28, 1
      %s30 = scalar_select %p29, 0, %s28
      %s31 = sadd.s32 1, %s20
      %s32 = scalar_select %p29, %s31, %s20
      %p33 = scmp.ge.s32.totalorder %s32, 1
      %s34 = scalar_select %p33, 0, %s32
      %s35 = sadd.s32 1, %s19
      %s36 = scalar_select %p33, %s35, %s19
      %p37 = scmp.ge.s32.totalorder %s36, 2
      %s38 = scalar_select %p37, 0, %s36
      %s39 = ssub.s32 %s19, %s38
      %s40 = ssub.s32 %s21, %s30
      %s41 = sor.u32 %s39, %s40
      %s42 = ssub.s32 %s20, %s34
      %s43 = sor.u32 %s41, %s42
      %p44 = scmp.eq.s32.totalorder %s43, 0
      %s46 = sadd.s32 %s45, 1
      %s47 = scalar_select %p44, %s45, %s46
      %p50 = pneg %p44
      %p51 = scmp.eq.s32.totalorder %s12, 1
      %p52 = por %p50, %p51
      %p53 = scmp.ne.s32.totalorder %s45, %s48
      %p54 = scmp.eq.s32.totalorder %s12, 0
      %p55 = por %p53, %p54
      %p56 = scmp.ne.s32.totalorder %s45, %s48
      %p57 = scmp.eq.s32.totalorder %s17, 1
      %p58 = por %p56, %p57
      %p59 = scmp.ne.s32.totalorder %s48, %s49
      %p60 = scmp.eq.s32.totalorder %s17, 0
      %p61 = por %p59, %p60
      %p62 = scmp.ne.s32.totalorder %s48, %s49
      %p63 = scmp.eq.s32.totalorder %s18, 1
      %p64 = por %p62, %p63
      %p66 = scmp.ne.s32.totalorder %s49, %s65
      %p67 = scmp.eq.s32.totalorder %s18, 0
      %p68 = por %p66, %p67
      %s69 = smul.u32 %s21, 16
      %s70 = ssub.s32 %s69, 1
      %p71 = scmp.gt.s32.totalorder %s70, 0
      %s72 = scalar_select %p71, %s70, 0
      %s73 = smul.u32 %s30, 16
      %s74 = ssub.s32 %s73, 1
      %p75 = scmp.gt.s32.totalorder %s74, 0
      %s76 = scalar_select %p75, %s74, 0
      %s77 = ssub.s32 %s19, %s38
      %s78 = ssub.s32 %s72, %s76
      %s79 = sor.u32 %s77, %s78
      %s80 = ssub.s32 %s20, %s34
      %s81 = sor.u32 %s79, %s80
      %p82 = scmp.eq.s32.totalorder %s81, 0
      %s84 = sadd.s32 %s83, 1
      %s85 = scalar_select %p82, %s83, %s84
      %p88 = pneg %p82
      %p89 = scmp.eq.s32.totalorder %s12, 1
      %p90 = por %p88, %p89
      %p91 = scmp.ne.s32.totalorder %s83, %s86
      %p92 = scmp.eq.s32.totalorder %s12, 0
      %p93 = por %p91, %p92
      %p94 = scmp.ne.s32.totalorder %s83, %s86
      %p95 = scmp.eq.s32.totalorder %s17, 1
      %p96 = por %p94, %p95
      %p97 = scmp.ne.s32.totalorder %s86, %s87
      %p98 = scmp.eq.s32.totalorder %s17, 0
      %p99 = por %p97, %p98
      %p100 = scmp.ne.s32.totalorder %s86, %s87
      %p101 = scmp.eq.s32.totalorder %s18, 1
      %p102 = por %p100, %p101
      %p104 = scmp.ne.s32.totalorder %s87, %s103
      %p105 = scmp.eq.s32.totalorder %s18, 0
      %p106 = por %p104, %p105
      %s107 = sadd.s32 %s21, 1
      %s108 = smul.u32 %s107, 16
      %p109 = scmp.lt.s32.totalorder %s108, 15
      %s110 = scalar_select %p109, %s108, 15
      %s111 = sadd.s32 %s30, 1
      %s112 = smul.u32 %s111, 16
      %p113 = scmp.lt.s32.totalorder %s112, 15
      %s114 = scalar_select %p113, %s112, 15
      %s115 = ssub.s32 %s19, %s38
      %s116 = ssub.s32 %s110, %s114
      %s117 = sor.u32 %s115, %s116
      %s118 = ssub.s32 %s20, %s34
      %s119 = sor.u32 %s117, %s118
      %p120 = scmp.eq.s32.totalorder %s119, 0
      %s122 = sadd.s32 %s121, 1
      %s123 = scalar_select %p120, %s121, %s122
      %p126 = pneg %p120
      %p127 = scmp.eq.s32.totalorder %s12, 1
      %p128 = por %p126, %p127
      %p129 = scmp.ne.s32.totalorder %s121, %s124
      %p130 = scmp.eq.s32.totalorder %s12, 0
      %p131 = por %p129, %p130
      %p132 = scmp.ne.s32.totalorder %s121, %s124
      %p133 = scmp.eq.s32.totalorder %s17, 1
      %p134 = por %p132, %p133
      %p135 = scmp.ne.s32.totalorder %s124, %s125
      %p136 = scmp.eq.s32.totalorder %s17, 0
      %p137 = por %p135, %p136
      %p138 = scmp.ne.s32.totalorder %s124, %s125
      %p139 = scmp.eq.s32.totalorder %s18, 1
      %p140 = por %p138, %p139
      %p142 = scmp.ne.s32.totalorder %s125, %s141
      %p143 = scmp.eq.s32.totalorder %s18, 0
      %p144 = por %p142, %p143
      %s145 = ssub.s32 %s20, %s34
      %p146 = scmp.eq.s32.totalorder %s145, 0
      %s148 = sadd.s32 %s147, 1
      %s149 = scalar_select %p146, %s147, %s148
      %p152 = pneg %p146
      %p153 = scmp.eq.s32.totalorder %s12, 1
      %p154 = por %p152, %p153
      %p155 = scmp.ne.s32.totalorder %s147, %s150
      %p156 = scmp.eq.s32.totalorder %s12, 0
      %p157 = por %p155, %p156
      %p158 = scmp.ne.s32.totalorder %s147, %s150
      %p159 = scmp.eq.s32.totalorder %s17, 1
      %p160 = por %p158, %p159
      %p161 = scmp.ne.s32.totalorder %s150, %s151
      %p162 = scmp.eq.s32.totalorder %s17, 0
      %p163 = por %p161, %p162
      %p164 = scmp.ne.s32.totalorder %s150, %s151
      %p165 = scmp.eq.s32.totalorder %s18, 1
      %p166 = por %p164, %p165
      %p168 = scmp.ne.s32.totalorder %s151, %s167
      %p169 = scmp.eq.s32.totalorder %s18, 0
      %p170 = por %p168, %p169
      %s171 = ssub.s32 %s20, %s34
      %p172 = scmp.eq.s32.totalorder %s171, 0
      %s174 = sadd.s32 %s173, 1
      %s175 = scalar_select %p172, %s173, %s174
      %p178 = pneg %p172
      %p179 = scmp.eq.s32.totalorder %s12, 1
      %p180 = por %p178, %p179
      %p181 = scmp.ne.s32.totalorder %s173, %s176
      %p182 = scmp.eq.s32.totalorder %s12, 0
      %p183 = por %p181, %p182
      %p184 = scmp.ne.s32.totalorder %s173, %s176
      %p185 = scmp.eq.s32.totalorder %s17, 1
      %p186 = por %p184, %p185
      %p187 = scmp.ne.s32.totalorder %s176, %s177
      %p188 = scmp.eq.s32.totalorder %s17, 0
      %p189 = por %p187, %p188
      %p190 = scmp.ne.s32.totalorder %s176, %s177
      %p191 = scmp.eq.s32.totalorder %s18, 1
      %p192 = por %p190, %p191
      %p194 = scmp.ne.s32.totalorder %s177, %s193
      %p195 = scmp.eq.s32.totalorder %s18, 0
      %p196 = por %p194, %p195
      %s197 = ssub.s32 %s19, %s38
      %s198 = ssub.s32 %s21, %s30
      %s199 = sor.u32 %s197, %s198
      %s200 = ssub.s32 %s20, %s34
      %s201 = sor.u32 %s199, %s200
      %p202 = scmp.eq.s32.totalorder %s201, 0
      %s204 = sadd.s32 %s203, 1
      %s205 = scalar_select %p202, %s203, %s204
      %p208 = pneg %p202
      %p209 = scmp.eq.s32.totalorder %s12, 1
      %p210 = por %p208, %p209
      %p211 = scmp.ne.s32.totalorder %s203, %s206
      %p212 = scmp.eq.s32.totalorder %s12, 0
      %p213 = por %p211, %p212
      %p214 = scmp.ne.s32.totalorder %s203, %s206
      %p215 = scmp.eq.s32.totalorder %s17, 1
      %p216 = por %p214, %p215
      %p217 = scmp.ne.s32.totalorder %s206, %s207
      %p218 = scmp.eq.s32.totalorder %s17, 0
      %p219 = por %p217, %p218
      %p220 = scmp.ne.s32.totalorder %s206, %s207
      %p221 = scmp.eq.s32.totalorder %s18, 1
      %p222 = por %p220, %p221
      %p224 = scmp.ne.s32.totalorder %s207, %s223
      %p225 = scmp.eq.s32.totalorder %s18, 0
      %p226 = por %p224, %p225
      %p227 = scmp.le.s32.totalorder 1, %s12
      %p228 = scmp.lt.s32.totalorder %s12, 3
      %p229 = pnand %p227, %p228
      %p230 = pneg %p229
      // Predicated region
      $region9: #{conv_ffn_forward.6} parent=5 // pred_check
        _
      $region10: #{conv_ffn_forward.6} parent=5 // pred_check_branch
        %232 = sbr.rel (%p229) target = $region12
      $region11: #{conv_ffn_forward.6} parent=5 // pred_region
        %s233 = ssub.s32 %s12, 1
        // Predicated region
        $region13: #{conv_ffn_forward.6} parent=11 // pred_check
          %p234 = pneg %p163
        $region14: #{conv_ffn_forward.6} parent=11 // pred_check_branch
          %236 = sbr.rel (%p234) target = $region16
        $region15: #{conv_ffn_forward.6} parent=11 // pred_region
          %p237 = scmp.lt.s32.totalorder %s23, 0
          %s238 = scalar_select %p237, %s23, 0
          %s239 = smul.addr %s238, 4
          %s240 = scalar_lea.vmem %s3, %s239
        $region16: #{conv_ffn_forward.6} parent=11 // pred_fallthru
          _
        // Predicated region
        $region17: #{conv_ffn_forward.6} parent=11 // pred_check
          %p241 = pneg %p189
        $region18: #{conv_ffn_forward.6} parent=11 // pred_check_branch
          %243 = sbr.rel (%p241) target = $region20
        $region19: #{conv_ffn_forward.6} parent=11 // pred_region
          %p244 = scmp.lt.s32.totalorder %s23, 0
          %s245 = scalar_select %p244, %s23, 0
          %s246 = scalar_lea.vmem %s4, %s245
        $region20: #{conv_ffn_forward.6} parent=11 // pred_fallthru
          _
      $region12: #{conv_ffn_forward.6} parent=5 // pred_fallthru
        _
      %p247 = scmp.lt.s32.totalorder %s12, 2
      // Predicated region
      $region21: #{conv_ffn_forward.6} parent=5 // pred_check
        %p248 = pneg %p247
      $region22: #{conv_ffn_forward.6} parent=5 // pred_check_branch
        %250 = sbr.rel (%p248) target = $region24
      $region23: #{conv_ffn_forward.6} parent=5 // pred_region
        // Predicated region
        $region25: #{conv_ffn_forward.6} parent=23 // pred_check
          %p251 = pneg %p55
        $region26: #{conv_ffn_forward.6} parent=23 // pred_check_branch
          %253 = sbr.rel (%p251) target = $region28
        $region27: #{conv_ffn_forward.6} parent=23 // pred_region
          %s254 = smul.u32 32, %s21
          %s255 = ssub.s32 42, %s254
          %p256 = scmp.lt.s32.totalorder %s255, 32
          %s257 = scalar_select %p256, %s255, 32
          %s258 = smul.u32 4, %s257
          %p259 = scmp.lt.s32.totalorder %s19, 1
          %s260 = scalar_select %p259, %s19, 1
          %p261 = scmp.lt.s32.totalorder %s254, 41
          %s262 = scalar_select %p261, %s254, 41
          %p263 = scmp.lt.s32.totalorder %s20, 0
          %s264 = scalar_select %p263, %s20, 0
          %s265 = sadd.s32 %s264, %s262
          %s266 = smul.addr %s260, 42
          %s267 = sadd.s32 %s265, %s266
          %s268 = smul.addr %s267, 4
          %s269 = scalar_lea.vmem %s0, %s268
          %s270 = smul.u32 32, %s21
          %s271 = ssub.s32 42, %s270
          %p272 = scmp.lt.s32.totalorder %s271, 32
          %s273 = scalar_select %p272, %s271, 32
          %s274 = smul.u32 4, %s273
        $region28: #{conv_ffn_forward.6} parent=23 // pred_fallthru
          _
        // Predicated region
        $region29: #{conv_ffn_forward.6} parent=23 // pred_check
          %p275 = pneg %p93
        $region30: #{conv_ffn_forward.6} parent=23 // pred_check_branch
          %277 = sbr.rel (%p275) target = $region32
        $region31: #{conv_ffn_forward.6} parent=23 // pred_region
          %s278 = smul.u32 %s21, 16
          %s279 = ssub.s32 %s278, 1
          %p280 = scmp.gt.s32.totalorder %s279, 0
          %s281 = scalar_select %p280, %s279, 0
          %s282 = smul.u32 2, %s281
          %p283 = scmp.lt.s32.totalorder %s19, 1
          %s284 = scalar_select %p283, %s19, 1
          %p285 = scmp.lt.s32.totalorder %s282, 41
          %s286 = scalar_select %p285, %s282, 41
          %p287 = scmp.lt.s32.totalorder %s20, 0
          %s288 = scalar_select %p287, %s20, 0
          %s289 = sadd.s32 %s288, %s286
          %s290 = smul.addr %s284, 42
          %s291 = sadd.s32 %s289, %s290
          %s292 = smul.addr %s291, 4
          %s293 = scalar_lea.vmem %s1, %s292
          %s294 = smul.u32 %s21, 16
          %s295 = ssub.s32 %s294, 1
          %p296 = scmp.gt.s32.totalorder %s295, 0
          %s297 = scalar_select %p296, %s295, 0
          %s298 = smul.u32 2, %s297
        $region32: #{conv_ffn_forward.6} parent=23 // pred_fallthru
          _
        // Predicated region
        $region33: #{conv_ffn_forward.6} parent=23 // pred_check
          %p299 = pneg %p131
        $region34: #{conv_ffn_forward.6} parent=23 // pred_check_branch
          %301 = sbr.rel (%p299) target = $region36
        $region35: #{conv_ffn_forward.6} parent=23 // pred_region
          %s302 = sadd.s32 %s21, 1
          %s303 = smul.u32 %s302, 16
          %p304 = scmp.lt.s32.totalorder %s303, 15
          %s305 = scalar_select %p304, %s303, 15
          %s306 = smul.u32 2, %s305
          %p307 = scmp.lt.s32.totalorder %s19, 1
          %s308 = scalar_select %p307, %s19, 1
          %p309 = scmp.lt.s32.totalorder %s306, 41
          %s310 = scalar_select %p309, %s306, 41
          %p311 = scmp.lt.s32.totalorder %s20, 0
          %s312 = scalar_select %p311, %s20, 0
          %s313 = sadd.s32 %s312, %s310
          %s314 = smul.addr %s308, 42
          %s315 = sadd.s32 %s313, %s314
          %s316 = smul.addr %s315, 4
          %s317 = scalar_lea.vmem %s2, %s316
          %s318 = sadd.s32 %s21, 1
          %s319 = smul.u32 %s318, 16
          %p320 = scmp.lt.s32.totalorder %s319, 15
          %s321 = scalar_select %p320, %s319, 15
          %s322 = smul.u32 2, %s321
        $region36: #{conv_ffn_forward.6} parent=23 // pred_fallthru
          _
      $region24: #{conv_ffn_forward.6} parent=5 // pred_fallthru
        _
      %p323 = scmp.le.s32.totalorder 1, %s12
      %p324 = scmp.lt.s32.totalorder %s12, 3
      %p325 = pnand %p323, %p324
      %p326 = pneg %p325
      // Predicated region
      $region37: #{conv_ffn_forward.6} parent=5 // pred_check
        _
      $region38: #{conv_ffn_forward.6} parent=5 // pred_check_branch
        %328 = sbr.rel (%p325) target = $region40
      $region39: #{conv_ffn_forward.6} parent=5 // pred_region
        %s329 = ssub.s32 %s12, 1
        %s330 = smul.u32 32, %s24
        %s331 = ssub.s32 42, %s330
        %p332 = scmp.lt.s32.totalorder %s331, 32
        %s333 = scalar_select %p332, %s331, 32
        %s334 = smul.u32 4, %s333
        %p335 = scmp.lt.s32.totalorder %s22, 1
        %s336 = scalar_select %p335, %s22, 1
        %p337 = scmp.lt.s32.totalorder %s330, 41
        %s338 = scalar_select %p337, %s330, 41
        %p339 = scmp.lt.s32.totalorder %s23, 0
        %s340 = scalar_select %p339, %s23, 0
        %s341 = sadd.s32 %s340, %s338
        %s342 = smul.addr %s336, 42
        %s343 = sadd.s32 %s341, %s342
        %s344 = smul.addr %s343, 4
        %s345 = scalar_lea.vmem %s0, %s344
        %p346 = pneg %p61
        %p347 = pneg %p58
        %s348 = smul.u32 %s24, 16
        %s349 = ssub.s32 %s348, 1
        %p350 = scmp.gt.s32.totalorder %s349, 0
        %s351 = scalar_select %p350, %s349, 0
        %s352 = smul.u32 2, %s351
        %p353 = scmp.lt.s32.totalorder %s22, 1
        %s354 = scalar_select %p353, %s22, 1
        %p355 = scmp.lt.s32.totalorder %s352, 41
        %s356 = scalar_select %p355, %s352, 41
        %p357 = scmp.lt.s32.totalorder %s23, 0
        %s358 = scalar_select %p357, %s23, 0
        %s359 = sadd.s32 %s358, %s356
        %s360 = smul.addr %s354, 42
        %s361 = sadd.s32 %s359, %s360
        %s362 = smul.addr %s361, 4
        %s363 = scalar_lea.vmem %s1, %s362
        %p364 = pneg %p99
        %p365 = pneg %p96
        %s366 = sadd.s32 %s24, 1
        %s367 = smul.u32 %s366, 16
        %p368 = scmp.lt.s32.totalorder %s367, 15
        %s369 = scalar_select %p368, %s367, 15
        %s370 = smul.u32 2, %s369
        %p371 = scmp.lt.s32.totalorder %s22, 1
        %s372 = scalar_select %p371, %s22, 1
        %p373 = scmp.lt.s32.totalorder %s370, 41
        %s374 = scalar_select %p373, %s370, 41
        %p375 = scmp.lt.s32.totalorder %s23, 0
        %s376 = scalar_select %p375, %s23, 0
        %s377 = sadd.s32 %s376, %s374
        %s378 = smul.addr %s372, 42
        %s379 = sadd.s32 %s377, %s378
        %s380 = smul.addr %s379, 4
        %s381 = scalar_lea.vmem %s2, %s380
        %p382 = pneg %p137
        %p383 = pneg %p134
        %p384 = scmp.lt.s32.totalorder %s23, 0
        %s385 = scalar_select %p384, %s23, 0
        %s386 = smul.addr %s385, 4
        %s387 = scalar_lea.vmem %s3, %s386
        %p388 = pneg %p163
        %p389 = pneg %p160
        %p390 = scmp.lt.s32.totalorder %s23, 0
        %s391 = scalar_select %p390, %s23, 0
        %s392 = scalar_lea.vmem %s4, %s391
        %p393 = pneg %p189
        %p394 = pneg %p186
        %p395 = pneg %p219
        %p396 = pneg %p216
        %s397 = sand.u32 %s206, 1
        %s398 = sand.u32 %s206, 1
        %s399 = smul.addr %s398, 128
        %s400 = scalar_lea.vmem [#allocation2], %s399
        %s401 = smul.u32 32, %s24
        %s402 = ssub.s32 42, %s401
        %p403 = scmp.lt.s32.totalorder %s402, 32
        %s404 = scalar_select %p403, %s402, 32
        %s405 = smul.u32 4, %s404
        %p406 = scmp.lt.s32.totalorder %s22, 1
        %s407 = scalar_select %p406, %s22, 1
        %p408 = scmp.lt.s32.totalorder %s401, 41
        %s409 = scalar_select %p408, %s401, 41
        %p410 = scmp.lt.s32.totalorder %s23, 0
        %s411 = scalar_select %p410, %s23, 0
        %s412 = sadd.s32 %s411, %s409
        %s413 = smul.addr %s407, 42
        %s414 = sadd.s32 %s412, %s413
        %s415 = smul.addr %s414, 4
        %s416 = scalar_lea.vmem %s0, %s415
        %s417 = smul.u32 32, %s24
        %s418 = ssub.s32 42, %s417
        %p419 = scmp.lt.s32.totalorder %s418, 32
        %s420 = scalar_select %p419, %s418, 32
        %s421 = smul.u32 4, %s420
        %s422 = smul.u32 %s24, 16
        %s423 = ssub.s32 %s422, 1
        %p424 = scmp.gt.s32.totalorder %s423, 0
        %s425 = scalar_select %p424, %s423, 0
        %s426 = smul.u32 2, %s425
        %p427 = scmp.lt.s32.totalorder %s22, 1
        %s428 = scalar_select %p427, %s22, 1
        %p429 = scmp.lt.s32.totalorder %s426, 41
        %s430 = scalar_select %p429, %s426, 41
        %p431 = scmp.lt.s32.totalorder %s23, 0
        %s432 = scalar_select %p431, %s23, 0
        %s433 = sadd.s32 %s432, %s430
        %s434 = smul.addr %s428, 42
        %s435 = sadd.s32 %s433, %s434
        %s436 = smul.addr %s435, 4
        %s437 = scalar_lea.vmem %s1, %s436
        %s438 = smul.u32 %s24, 16
        %s439 = ssub.s32 %s438, 1
        %p440 = scmp.gt.s32.totalorder %s439, 0
        %s441 = scalar_select %p440, %s439, 0
        %s442 = smul.u32 2, %s441
        %s443 = sadd.s32 %s24, 1
        %s444 = smul.u32 %s443, 16
        %p445 = scmp.lt.s32.totalorder %s444, 15
        %s446 = scalar_select %p445, %s444, 15
        %s447 = smul.u32 2, %s446
        %p448 = scmp.lt.s32.totalorder %s22, 1
        %s449 = scalar_select %p448, %s22, 1
        %p450 = scmp.lt.s32.totalorder %s447, 41
        %s451 = scalar_select %p450, %s447, 41
        %p452 = scmp.lt.s32.totalorder %s23, 0
        %s453 = scalar_select %p452, %s23, 0
        %s454 = sadd.s32 %s453, %s451
        %s455 = smul.addr %s449, 42
        %s456 = sadd.s32 %s454, %s455
        %s457 = smul.addr %s456, 4
        %s458 = scalar_lea.vmem %s2, %s457
        %s459 = sadd.s32 %s24, 1
        %s460 = smul.u32 %s459, 16
        %p461 = scmp.lt.s32.totalorder %s460, 15
        %s462 = scalar_select %p461, %s460, 15
        %s463 = smul.u32 2, %s462
        %p464 = scmp.lt.s32.totalorder %s23, 0
        %s465 = scalar_select %p464, %s23, 0
        %s466 = smul.addr %s465, 4
        %s467 = scalar_lea.vmem %s3, %s466
        %p468 = scmp.lt.s32.totalorder %s23, 0
        %s469 = scalar_select %p468, %s23, 0
        %s470 = scalar_lea.vmem %s4, %s469
        %s471 = smul.u32 32, %s24
        %s472 = ssub.s32 42, %s471
        %p473 = scmp.lt.s32.totalorder %s472, 32
        %s474 = scalar_select %p473, %s472, 32
        %s475 = smul.u32 4, %s474
        %v476 = vld [vmem:[%s416] sm:$0xf]
        %v477 = vld [vmem:[%s416 + $0x4] sm:$0xf]
        %v478 = vld [vmem:[%s416 + $0x8] sm:$0xf]
        %v479 = vld [vmem:[%s416 + $0xc] sm:$0xf]
        %v480 = vld [vmem:[%s416 + $0x10] sm:$0xf]
        %v481 = vld [vmem:[%s416 + $0x14] sm:$0xf]
        %v482 = vld [vmem:[%s416 + $0x18] sm:$0xf]
        %v483 = vld [vmem:[%s416 + $0x1c] sm:$0xf]
        %v484 = vld [vmem:[%s416 + $0x20] sm:$0xf]
        %v485 = vld [vmem:[%s416 + $0x24] sm:$0xf]
        %v486 = vld [vmem:[%s416 + $0x28] sm:$0xf]
        %v487 = vld [vmem:[%s416 + $0x2c] sm:$0xf]
        %v488 = vld [vmem:[%s416 + $0x30] sm:$0xf]
        %v489 = vld [vmem:[%s416 + $0x34] sm:$0xf]
        %v490 = vld [vmem:[%s416 + $0x38] sm:$0xf]
        %v491 = vld [vmem:[%s416 + $0x3c] sm:$0xf]
        %v492 = vld [vmem:[%s416 + $0x40] sm:$0xf]
        %v493 = vld [vmem:[%s416 + $0x44] sm:$0xf]
        %v494 = vld [vmem:[%s416 + $0x48] sm:$0xf]
        %v495 = vld [vmem:[%s416 + $0x4c] sm:$0xf]
        %v496 = vld [vmem:[%s416 + $0x50] sm:$0xf]
        %v497 = vld [vmem:[%s416 + $0x54] sm:$0xf]
        %v498 = vld [vmem:[%s416 + $0x58] sm:$0xf]
        %v499 = vld [vmem:[%s416 + $0x5c] sm:$0xf]
        %v500 = vld [vmem:[%s416 + $0x60] sm:$0xf]
        %v501 = vld [vmem:[%s416 + $0x64] sm:$0xf]
        %v502 = vld [vmem:[%s416 + $0x68] sm:$0xf]
        %v503 = vld [vmem:[%s416 + $0x6c] sm:$0xf]
        %v504 = vld [vmem:[%s416 + $0x70] sm:$0xf]
        %v505 = vld [vmem:[%s416 + $0x74] sm:$0xf]
        %v506 = vld [vmem:[%s416 + $0x78] sm:$0xf]
        %v507 = vld [vmem:[%s416 + $0x7c] sm:$0xf]
        %v508 = vunpack.c.l.bf16 %v476
        %v509 = vunpack.c.l.bf16 %v477
        %v510 = vunpack.c.l.bf16 %v478
        %v511 = vunpack.c.l.bf16 %v479
        %v512 = vunpack.c.l.bf16 %v480
        %v513 = vunpack.c.l.bf16 %v481
        %v514 = vunpack.c.l.bf16 %v482
        %v515 = vunpack.c.l.bf16 %v483
        %v516 = vunpack.c.l.bf16 %v484
        %v517 = vunpack.c.l.bf16 %v485
        %v518 = vunpack.c.l.bf16 %v486
        %v519 = vunpack.c.l.bf16 %v487
        %v520 = vunpack.c.l.bf16 %v488
        %v521 = vunpack.c.l.bf16 %v489
        %v522 = vunpack.c.l.bf16 %v490
        %v523 = vunpack.c.l.bf16 %v491
        %v524 = vunpack.c.l.bf16 %v492
        %v525 = vunpack.c.l.bf16 %v493
        %v526 = vunpack.c.l.bf16 %v494
        %v527 = vunpack.c.l.bf16 %v495
        %v528 = vunpack.c.l.bf16 %v496
        %v529 = vunpack.c.l.bf16 %v497
        %v530 = vunpack.c.l.bf16 %v498
        %v531 = vunpack.c.l.bf16 %v499
        %v532 = vunpack.c.l.bf16 %v500
        %v533 = vunpack.c.l.bf16 %v501
        %v534 = vunpack.c.l.bf16 %v502
        %v535 = vunpack.c.l.bf16 %v503
        %v536 = vunpack.c.l.bf16 %v504
        %v537 = vunpack.c.l.bf16 %v505
        %v538 = vunpack.c.l.bf16 %v506
        %v539 = vunpack.c.l.bf16 %v507
        %v540 = vld [vmem:[%s437] sm:$0xf]
        %v541 = vld [vmem:[%s437 + $0x4] sm:$0xf]
        %v542 = vunpack.c.l.bf16 %v540
        %v543 = vunpack.c.l.bf16 %v541
        %v544 = vld [vmem:[%s458] sm:$0xf]
        %v545 = vld [vmem:[%s458 + $0x4] sm:$0xf]
        %v546 = vunpack.c.l.bf16 %v544
        %v547 = vunpack.c.l.bf16 %v545
        %p548 = scmp.gt.s32.totalorder %s24, 0
        %s549 = scalar_select %p548, 1, 0
        %v550 = vstv %s549
        %vm551 = vcmp.eq.s32.totalorder %v550, 1
        %v552 = vsel %vm551, %v542, 0.0
        %v553 = vsel %vm551, %v543, 0.0
        %p554 = scmp.lt.s32.totalorder %s24, 0
        %s555 = scalar_select %p554, 1, 0
        %v556 = vstv %s555
        %vm557 = vcmp.eq.s32.totalorder %v556, 1
        %v558 = vsel %vm557, %v546, 0.0
        %v559 = vsel %vm557, %v547, 0.0
        %v560 = vlaneseq
        %v561 = vshrl.u32 %v560, 7
        %v562 = vadd.s32 %v561, 8
        %v563 = vadd.s32 %v561, 16
        %v564 = vadd.s32 %v561, 24
        %v565 = vadd.s32 %v561, 32
        %v566 = vadd.s32 %v561, 40
        %v567 = vadd.s32 %v561, 48
        %v568 = vadd.s32 %v561, 56
        %v569 = vadd.s32 %v561, 64
        %v570 = vadd.s32 %v561, 72
        %v571 = vadd.s32 %v561, 80
        %v572 = vadd.s32 %v561, 88
        %v573 = vadd.s32 %v561, 96
        %v574 = vadd.s32 %v561, 104
        %v575 = vadd.s32 %v561, 112
        %v576 = vadd.s32 %v561, 120
        %v577 = vadd.s32 %v561, 128
        %v578 = vadd.s32 %v561, 136
        %v579 = vadd.s32 %v561, 144
        %v580 = vadd.s32 %v561, 152
        %v581 = vadd.s32 %v561, 160
        %v582 = vadd.s32 %v561, 168
        %v583 = vadd.s32 %v561, 176
        %v584 = vadd.s32 %v561, 184
        %v585 = vadd.s32 %v561, 192
        %v586 = vadd.s32 %v561, 200
        %v587 = vadd.s32 %v561, 208
        %v588 = vadd.s32 %v561, 216
        %v589 = vadd.s32 %v561, 224
        %v590 = vadd.s32 %v561, 232
        %v591 = vadd.s32 %v561, 240
        %v592 = vadd.s32 %v561, 248
        %v593 = vand.u32 %v561, 15
        %v594 = vand.u32 %v562, 15
        %v595 = vand.u32 %v563, 15
        %v596 = vand.u32 %v564, 15
        %v597 = vand.u32 %v565, 15
        %v598 = vand.u32 %v566, 15
        %v599 = vand.u32 %v567, 15
        %v600 = vand.u32 %v568, 15
        %v601 = vand.u32 %v569, 15
        %v602 = vand.u32 %v570, 15
        %v603 = vand.u32 %v571, 15
        %v604 = vand.u32 %v572, 15
        %v605 = vand.u32 %v573, 15
        %v606 = vand.u32 %v574, 15
        %v607 = vand.u32 %v575, 15
        %v608 = vand.u32 %v576, 15
        %v609 = vand.u32 %v577, 15
        %v610 = vand.u32 %v578, 15
        %v611 = vand.u32 %v579, 15
        %v612 = vand.u32 %v580, 15
        %v613 = vand.u32 %v581, 15
        %v614 = vand.u32 %v582, 15
        %v615 = vand.u32 %v583, 15
        %v616 = vand.u32 %v584, 15
        %v617 = vand.u32 %v585, 15
        %v618 = vand.u32 %v586, 15
        %v619 = vand.u32 %v587, 15
        %v620 = vand.u32 %v588, 15
        %v621 = vand.u32 %v589, 15
        %v622 = vand.u32 %v590, 15
        %v623 = vand.u32 %v591, 15
        %v624 = vand.u32 %v592, 15
        %vm625 = vcmp.ne.s32.totalorder %v593, 0
        %vm626 = vcmp.ne.s32.totalorder %v594, 0
        %vm627 = vcmp.ne.s32.totalorder %v595, 0
        %vm628 = vcmp.ne.s32.totalorder %v596, 0
        %vm629 = vcmp.ne.s32.totalorder %v597, 0
        %vm630 = vcmp.ne.s32.totalorder %v598, 0
        %vm631 = vcmp.ne.s32.totalorder %v599, 0
        %vm632 = vcmp.ne.s32.totalorder %v600, 0
        %vm633 = vcmp.ne.s32.totalorder %v601, 0
        %vm634 = vcmp.ne.s32.totalorder %v602, 0
        %vm635 = vcmp.ne.s32.totalorder %v603, 0
        %vm636 = vcmp.ne.s32.totalorder %v604, 0
        %vm637 = vcmp.ne.s32.totalorder %v605, 0
        %vm638 = vcmp.ne.s32.totalorder %v606, 0
        %vm639 = vcmp.ne.s32.totalorder %v607, 0
        %vm640 = vcmp.ne.s32.totalorder %v608, 0
        %vm641 = vcmp.ne.s32.totalorder %v609, 0
        %vm642 = vcmp.ne.s32.totalorder %v610, 0
        %vm643 = vcmp.ne.s32.totalorder %v611, 0
        %vm644 = vcmp.ne.s32.totalorder %v612, 0
        %vm645 = vcmp.ne.s32.totalorder %v613, 0
        %vm646 = vcmp.ne.s32.totalorder %v614, 0
        %vm647 = vcmp.ne.s32.totalorder %v615, 0
        %vm648 = vcmp.ne.s32.totalorder %v616, 0
        %vm649 = vcmp.ne.s32.totalorder %v617, 0
        %vm650 = vcmp.ne.s32.totalorder %v618, 0
        %vm651 = vcmp.ne.s32.totalorder %v619, 0
        %vm652 = vcmp.ne.s32.totalorder %v620, 0
        %vm653 = vcmp.ne.s32.totalorder %v621, 0
        %vm654 = vcmp.ne.s32.totalorder %v622, 0
        %vm655 = vcmp.ne.s32.totalorder %v623, 0
        %vm656 = vcmp.ne.s32.totalorder %v624, 0
        %vm657 = vcmp.ne.s32.totalorder %v593, 15
        %vm658 = vcmp.ne.s32.totalorder %v594, 15
        %vm659 = vcmp.ne.s32.totalorder %v595, 15
        %vm660 = vcmp.ne.s32.totalorder %v596, 15
        %vm661 = vcmp.ne.s32.totalorder %v597, 15
        %vm662 = vcmp.ne.s32.totalorder %v598, 15
        %vm663 = vcmp.ne.s32.totalorder %v599, 15
        %vm664 = vcmp.ne.s32.totalorder %v600, 15
        %vm665 = vcmp.ne.s32.totalorder %v601, 15
        %vm666 = vcmp.ne.s32.totalorder %v602, 15
        %vm667 = vcmp.ne.s32.totalorder %v603, 15
        %vm668 = vcmp.ne.s32.totalorder %v604, 15
        %vm669 = vcmp.ne.s32.totalorder %v605, 15
        %vm670 = vcmp.ne.s32.totalorder %v606, 15
        %vm671 = vcmp.ne.s32.totalorder %v607, 15
        %vm672 = vcmp.ne.s32.totalorder %v608, 15
        %vm673 = vcmp.ne.s32.totalorder %v609, 15
        %vm674 = vcmp.ne.s32.totalorder %v610, 15
        %vm675 = vcmp.ne.s32.totalorder %v611, 15
        %vm676 = vcmp.ne.s32.totalorder %v612, 15
        %vm677 = vcmp.ne.s32.totalorder %v613, 15
        %vm678 = vcmp.ne.s32.totalorder %v614, 15
        %vm679 = vcmp.ne.s32.totalorder %v615, 15
        %vm680 = vcmp.ne.s32.totalorder %v616, 15
        %vm681 = vcmp.ne.s32.totalorder %v617, 15
        %vm682 = vcmp.ne.s32.totalorder %v618, 15
        %vm683 = vcmp.ne.s32.totalorder %v619, 15
        %vm684 = vcmp.ne.s32.totalorder %v620, 15
        %vm685 = vcmp.ne.s32.totalorder %v621, 15
        %vm686 = vcmp.ne.s32.totalorder %v622, 15
        %vm687 = vcmp.ne.s32.totalorder %v623, 15
        %vm688 = vcmp.ne.s32.totalorder %v624, 15
        %v689 = vld [vmem:[%s467] sm:$0x7]
        %v690 = vld [vmem:[%s467 + $0x4] sm:$0x7]
        %v691 = vld [vmem:[%s467 + $0x8] sm:$0x7]
        %vm725 = vcmask 1040384
        %v726 = vrot.slane 0.0, 7
        %v727 = vrot.slane %v552, 7
        %v728 = vsel %vm725, %v726, %v727
        %v729 = vrot.slane %v553, 7
        %v730 = vsel %vm725, %v727, %v729
        %v731 = vrot.slane %v508, 7
        %v732 = vsel %vm725, %v729, %v731
        %v733 = vrot.slane %v509, 7
        %v734 = vsel %vm725, %v731, %v733
        %v735 = vrot.slane %v510, 7
        %v736 = vsel %vm725, %v733, %v735
        %v737 = vrot.slane %v511, 7
        %v738 = vsel %vm725, %v735, %v737
        %v739 = vrot.slane %v512, 7
        %v740 = vsel %vm725, %v737, %v739
        %v741 = vrot.slane %v513, 7
        %v742 = vsel %vm725, %v739, %v741
        %v743 = vrot.slane %v514, 7
        %v744 = vsel %vm725, %v741, %v743
        %v745 = vrot.slane %v515, 7
        %v746 = vsel %vm725, %v743, %v745
        %v747 = vrot.slane %v516, 7
        %v748 = vsel %vm725, %v745, %v747
        %v749 = vrot.slane %v517, 7
        %v750 = vsel %vm725, %v747, %v749
        %v751 = vrot.slane %v518, 7
        %v752 = vsel %vm725, %v749, %v751
        %v753 = vrot.slane %v519, 7
        %v754 = vsel %vm725, %v751, %v753
        %v755 = vrot.slane %v520, 7
        %v756 = vsel %vm725, %v753, %v755
        %v757 = vrot.slane %v521, 7
        %v758 = vsel %vm725, %v755, %v757
        %v759 = vrot.slane %v522, 7
        %v760 = vsel %vm725, %v757, %v759
        %v761 = vrot.slane %v523, 7
        %v762 = vsel %vm725, %v759, %v761
        %v763 = vrot.slane %v524, 7
        %v764 = vsel %vm725, %v761, %v763
        %v765 = vrot.slane %v525, 7
        %v766 = vsel %vm725, %v763, %v765
        %v767 = vrot.slane %v526, 7
        %v768 = vsel %vm725, %v765, %v767
        %v769 = vrot.slane %v527, 7
        %v770 = vsel %vm725, %v767, %v769
        %v771 = vrot.slane %v528, 7
        %v772 = vsel %vm725, %v769, %v771
        %v773 = vrot.slane %v529, 7
        %v774 = vsel %vm725, %v771, %v773
        %v775 = vrot.slane %v530, 7
        %v776 = vsel %vm725, %v773, %v775
        %v777 = vrot.slane %v531, 7
        %v778 = vsel %vm725, %v775, %v777
        %v779 = vrot.slane %v532, 7
        %v780 = vsel %vm725, %v777, %v779
        %v781 = vrot.slane %v533, 7
        %v782 = vsel %vm725, %v779, %v781
        %v783 = vrot.slane %v534, 7
        %v784 = vsel %vm725, %v781, %v783
        %v785 = vrot.slane %v535, 7
        %v786 = vsel %vm725, %v783, %v785
        %v787 = vrot.slane %v536, 7
        %v788 = vsel %vm725, %v785, %v787
        %v789 = vrot.slane %v537, 7
        %v790 = vsel %vm725, %v787, %v789
        %v823 = vsel %vm625, %v728, 0.0
        %v824 = vsel %vm626, %v730, 0.0
        %v825 = vsel %vm627, %v732, 0.0
        %v826 = vsel %vm628, %v734, 0.0
        %v827 = vsel %vm629, %v736, 0.0
        %v828 = vsel %vm630, %v738, 0.0
        %v829 = vsel %vm631, %v740, 0.0
        %v830 = vsel %vm632, %v742, 0.0
        %v831 = vsel %vm633, %v744, 0.0
        %v832 = vsel %vm634, %v746, 0.0
        %v833 = vsel %vm635, %v748, 0.0
        %v834 = vsel %vm636, %v750, 0.0
        %v835 = vsel %vm637, %v752, 0.0
        %v836 = vsel %vm638, %v754, 0.0
        %v837 = vsel %vm639, %v756, 0.0
        %v838 = vsel %vm640, %v758, 0.0
        %v839 = vsel %vm641, %v760, 0.0
        %v840 = vsel %vm642, %v762, 0.0
        %v841 = vsel %vm643, %v764, 0.0
        %v842 = vsel %vm644, %v766, 0.0
        %v843 = vsel %vm645, %v768, 0.0
        %v844 = vsel %vm646, %v770, 0.0
        %v845 = vsel %vm647, %v772, 0.0
        %v846 = vsel %vm648, %v774, 0.0
        %v847 = vsel %vm649, %v776, 0.0
        %v848 = vsel %vm650, %v778, 0.0
        %v849 = vsel %vm651, %v780, 0.0
        %v850 = vsel %vm652, %v782, 0.0
        %v851 = vsel %vm653, %v784, 0.0
        %v852 = vsel %vm654, %v786, 0.0
        %v853 = vsel %vm655, %v788, 0.0
        %v854 = vsel %vm656, %v790, 0.0
        %v855 = vperm.slane %v689, 0
        %v856 = vmul.f32 %v823, %v855
        %v857 = vmul.f32 %v824, %v855
        %v858 = vmul.f32 %v825, %v855
        %v859 = vmul.f32 %v826, %v855
        %v860 = vmul.f32 %v827, %v855
        %v861 = vmul.f32 %v828, %v855
        %v862 = vmul.f32 %v829, %v855
        %v863 = vmul.f32 %v830, %v855
        %v864 = vmul.f32 %v831, %v855
        %v865 = vmul.f32 %v832, %v855
        %v866 = vmul.f32 %v833, %v855
        %v867 = vmul.f32 %v834, %v855
        %v868 = vmul.f32 %v835, %v855
        %v869 = vmul.f32 %v836, %v855
        %v870 = vmul.f32 %v837, %v855
        %v871 = vmul.f32 %v838, %v855
        %v872 = vmul.f32 %v839, %v855
        %v873 = vmul.f32 %v840, %v855
        %v874 = vmul.f32 %v841, %v855
        %v875 = vmul.f32 %v842, %v855
        %v876 = vmul.f32 %v843, %v855
        %v877 = vmul.f32 %v844, %v855
        %v878 = vmul.f32 %v845, %v855
        %v879 = vmul.f32 %v846, %v855
        %v880 = vmul.f32 %v847, %v855
        %v881 = vmul.f32 %v848, %v855
        %v882 = vmul.f32 %v849, %v855
        %v883 = vmul.f32 %v850, %v855
        %v884 = vmul.f32 %v851, %v855
        %v885 = vmul.f32 %v852, %v855
        %v886 = vmul.f32 %v853, %v855
        %v887 = vmul.f32 %v854, %v855
        %v888 = vadd.f32 %v856, 0.0
        %v889 = vadd.f32 %v857, 0.0
        %v890 = vadd.f32 %v858, 0.0
        %v891 = vadd.f32 %v859, 0.0
        %v892 = vadd.f32 %v860, 0.0
        %v893 = vadd.f32 %v861, 0.0
        %v894 = vadd.f32 %v862, 0.0
        %v895 = vadd.f32 %v863, 0.0
        %v896 = vadd.f32 %v864, 0.0
        %v897 = vadd.f32 %v865, 0.0
        %v898 = vadd.f32 %v866, 0.0
        %v899 = vadd.f32 %v867, 0.0
        %v900 = vadd.f32 %v868, 0.0
        %v901 = vadd.f32 %v869, 0.0
        %v902 = vadd.f32 %v870, 0.0
        %v903 = vadd.f32 %v871, 0.0
        %v904 = vadd.f32 %v872, 0.0
        %v905 = vadd.f32 %v873, 0.0
        %v906 = vadd.f32 %v874, 0.0
        %v907 = vadd.f32 %v875, 0.0
        %v908 = vadd.f32 %v876, 0.0
        %v909 = vadd.f32 %v877, 0.0
        %v910 = vadd.f32 %v878, 0.0
        %v911 = vadd.f32 %v879, 0.0
        %v912 = vadd.f32 %v880, 0.0
        %v913 = vadd.f32 %v881, 0.0
        %v914 = vadd.f32 %v882, 0.0
        %v915 = vadd.f32 %v883, 0.0
        %v916 = vadd.f32 %v884, 0.0
        %v917 = vadd.f32 %v885, 0.0
        %v918 = vadd.f32 %v886, 0.0
        %v919 = vadd.f32 %v887, 0.0
        %v920 = vperm.slane %v689, 1
        %v921 = vmul.f32 %v552, %v920
        %v922 = vmul.f32 %v553, %v920
        %v923 = vmul.f32 %v508, %v920
        %v924 = vmul.f32 %v509, %v920
        %v925 = vmul.f32 %v510, %v920
        %v926 = vmul.f32 %v511, %v920
        %v927 = vmul.f32 %v512, %v920
        %v928 = vmul.f32 %v513, %v920
        %v929 = vmul.f32 %v514, %v920
        %v930 = vmul.f32 %v515, %v920
        %v931 = vmul.f32 %v516, %v920
        %v932 = vmul.f32 %v517, %v920
        %v933 = vmul.f32 %v518, %v920
        %v934 = vmul.f32 %v519, %v920
        %v935 = vmul.f32 %v520, %v920
        %v936 = vmul.f32 %v521, %v920
        %v937 = vmul.f32 %v522, %v920
        %v938 = vmul.f32 %v523, %v920
        %v939 = vmul.f32 %v524, %v920
        %v940 = vmul.f32 %v525, %v920
        %v941 = vmul.f32 %v526, %v920
        %v942 = vmul.f32 %v527, %v920
        %v943 = vmul.f32 %v528, %v920
        %v944 = vmul.f32 %v529, %v920
        %v945 = vmul.f32 %v530, %v920
        %v946 = vmul.f32 %v531, %v920
        %v947 = vmul.f32 %v532, %v920
        %v948 = vmul.f32 %v533, %v920
        %v949 = vmul.f32 %v534, %v920
        %v950 = vmul.f32 %v535, %v920
        %v951 = vmul.f32 %v536, %v920
        %v952 = vmul.f32 %v537, %v920
        %v953 = vadd.f32 %v888, %v921
        %v954 = vadd.f32 %v889, %v922
        %v955 = vadd.f32 %v890, %v923
        %v956 = vadd.f32 %v891, %v924
        %v957 = vadd.f32 %v892, %v925
        %v958 = vadd.f32 %v893, %v926
        %v959 = vadd.f32 %v894, %v927
        %v960 = vadd.f32 %v895, %v928
        %v961 = vadd.f32 %v896, %v929
        %v962 = vadd.f32 %v897, %v930
        %v963 = vadd.f32 %v898, %v931
        %v964 = vadd.f32 %v899, %v932
        %v965 = vadd.f32 %v900, %v933
        %v966 = vadd.f32 %v901, %v934
        %v967 = vadd.f32 %v902, %v935
        %v968 = vadd.f32 %v903, %v936
        %v969 = vadd.f32 %v904, %v937
        %v970 = vadd.f32 %v905, %v938
        %v971 = vadd.f32 %v906, %v939
        %v972 = vadd.f32 %v907, %v940
        %v973 = vadd.f32 %v908, %v941
        %v974 = vadd.f32 %v909, %v942
        %v975 = vadd.f32 %v910, %v943
        %v976 = vadd.f32 %v911, %v944
        %v977 = vadd.f32 %v912, %v945
        %v978 = vadd.f32 %v913, %v946
        %v979 = vadd.f32 %v914, %v947
        %v980 = vadd.f32 %v915, %v948
        %v981 = vadd.f32 %v916, %v949
        %v982 = vadd.f32 %v917, %v950
        %v983 = vadd.f32 %v918, %v951
        %v984 = vadd.f32 %v919, %v952
        %vm986 = vcmask 1046528
        %v987 = vrot.slane %v552, 1
        %v988 = vrot.slane %v553, 1
        %v989 = vsel %vm986, %v987, %v988
        %v990 = vrot.slane %v508, 1
        %v991 = vsel %vm986, %v988, %v990
        %v992 = vrot.slane %v509, 1
        %v993 = vsel %vm986, %v990, %v992
        %v994 = vrot.slane %v510, 1
        %v995 = vsel %vm986, %v992, %v994
        %v996 = vrot.slane %v511, 1
        %v997 = vsel %vm986, %v994, %v996
        %v998 = vrot.slane %v512, 1
        %v999 = vsel %vm986, %v996, %v998
        %v1000 = vrot.slane %v513, 1
        %v1001 = vsel %vm986, %v998, %v1000
        %v1002 = vrot.slane %v514, 1
        %v1003 = vsel %vm986, %v1000, %v1002
        %v1004 = vrot.slane %v515, 1
        %v1005 = vsel %vm986, %v1002, %v1004
        %v1006 = vrot.slane %v516, 1
        %v1007 = vsel %vm986, %v1004, %v1006
        %v1008 = vrot.slane %v517, 1
        %v1009 = vsel %vm986, %v1006, %v1008
        %v1010 = vrot.slane %v518, 1
        %v1011 = vsel %vm986, %v1008, %v1010
        %v1012 = vrot.slane %v519, 1
        %v1013 = vsel %vm986, %v1010, %v1012
        %v1014 = vrot.slane %v520, 1
        %v1015 = vsel %vm986, %v1012, %v1014
        %v1016 = vrot.slane %v521, 1
        %v1017 = vsel %vm986, %v1014, %v1016
        %v1018 = vrot.slane %v522, 1
        %v1019 = vsel %vm986, %v1016, %v1018
        %v1020 = vrot.slane %v523, 1
        %v1021 = vsel %vm986, %v1018, %v1020
        %v1022 = vrot.slane %v524, 1
        %v1023 = vsel %vm986, %v1020, %v1022
        %v1024 = vrot.slane %v525, 1
        %v1025 = vsel %vm986, %v1022, %v1024
        %v1026 = vrot.slane %v526, 1
        %v1027 = vsel %vm986, %v1024, %v1026
        %v1028 = vrot.slane %v527, 1
        %v1029 = vsel %vm986, %v1026, %v1028
        %v1030 = vrot.slane %v528, 1
        %v1031 = vsel %vm986, %v1028, %v1030
        %v1032 = vrot.slane %v529, 1
        %v1033 = vsel %vm986, %v1030, %v1032
        %v1034 = vrot.slane %v530, 1
        %v1035 = vsel %vm986, %v1032, %v1034
        %v1036 = vrot.slane %v531, 1
        %v1037 = vsel %vm986, %v1034, %v1036
        %v1038 = vrot.slane %v532, 1
        %v1039 = vsel %vm986, %v1036, %v1038
        %v1040 = vrot.slane %v533, 1
        %v1041 = vsel %vm986, %v1038, %v1040
        %v1042 = vrot.slane %v534, 1
        %v1043 = vsel %vm986, %v1040, %v1042
        %v1044 = vrot.slane %v535, 1
        %v1045 = vsel %vm986, %v1042, %v1044
        %v1046 = vrot.slane %v536, 1
        %v1047 = vsel %vm986, %v1044, %v1046
        %v1048 = vrot.slane %v537, 1
        %v1049 = vsel %vm986, %v1046, %v1048
        %v1050 = vrot.slane %v538, 1
        %v1051 = vsel %vm986, %v1048, %v1050
        %v1084 = vsel %vm657, %v989, 0.0
        %v1085 = vsel %vm658, %v991, 0.0
        %v1086 = vsel %vm659, %v993, 0.0
        %v1087 = vsel %vm660, %v995, 0.0
        %v1088 = vsel %vm661, %v997, 0.0
        %v1089 = vsel %vm662, %v999, 0.0
        %v1090 = vsel %vm663, %v1001, 0.0
        %v1091 = vsel %vm664, %v1003, 0.0
        %v1092 = vsel %vm665, %v1005, 0.0
        %v1093 = vsel %vm666, %v1007, 0.0
        %v1094 = vsel %vm667, %v1009, 0.0
        %v1095 = vsel %vm668, %v1011, 0.0
        %v1096 = vsel %vm669, %v1013, 0.0
        %v1097 = vsel %vm670, %v1015, 0.0
        %v1098 = vsel %vm671, %v1017, 0.0
        %v1099 = vsel %vm672, %v1019, 0.0
        %v1100 = vsel %vm673, %v1021, 0.0
        %v1101 = vsel %vm674, %v1023, 0.0
        %v1102 = vsel %vm675, %v1025, 0.0
        %v1103 = vsel %vm676, %v1027, 0.0
        %v1104 = vsel %vm677, %v1029, 0.0
        %v1105 = vsel %vm678, %v1031, 0.0
        %v1106 = vsel %vm679, %v1033, 0.0
        %v1107 = vsel %vm680, %v1035, 0.0
        %v1108 = vsel %vm681, %v1037, 0.0
        %v1109 = vsel %vm682, %v1039, 0.0
        %v1110 = vsel %vm683, %v1041, 0.0
        %v1111 = vsel %vm684, %v1043, 0.0
        %v1112 = vsel %vm685, %v1045, 0.0
        %v1113 = vsel %vm686, %v1047, 0.0
        %v1114 = vsel %vm687, %v1049, 0.0
        %v1115 = vsel %vm688, %v1051, 0.0
        %v1116 = vperm.slane %v689, 2
        %v1117 = vmul.f32 %v1084, %v1116
        %v1118 = vmul.f32 %v1085, %v1116
        %v1119 = vmul.f32 %v1086, %v1116
        %v1120 = vmul.f32 %v1087, %v1116
        %v1121 = vmul.f32 %v1088, %v1116
        %v1122 = vmul.f32 %v1089, %v1116
        %v1123 = vmul.f32 %v1090, %v1116
        %v1124 = vmul.f32 %v1091, %v1116
        %v1125 = vmul.f32 %v1092, %v1116
        %v1126 = vmul.f32 %v1093, %v1116
        %v1127 = vmul.f32 %v1094, %v1116
        %v1128 = vmul.f32 %v1095, %v1116
        %v1129 = vmul.f32 %v1096, %v1116
        %v1130 = vmul.f32 %v1097, %v1116
        %v1131 = vmul.f32 %v1098, %v1116
        %v1132 = vmul.f32 %v1099, %v1116
        %v1133 = vmul.f32 %v1100, %v1116
        %v1134 = vmul.f32 %v1101, %v1116
        %v1135 = vmul.f32 %v1102, %v1116
        %v1136 = vmul.f32 %v1103, %v1116
        %v1137 = vmul.f32 %v1104, %v1116
        %v1138 = vmul.f32 %v1105, %v1116
        %v1139 = vmul.f32 %v1106, %v1116
        %v1140 = vmul.f32 %v1107, %v1116
        %v1141 = vmul.f32 %v1108, %v1116
        %v1142 = vmul.f32 %v1109, %v1116
        %v1143 = vmul.f32 %v1110, %v1116
        %v1144 = vmul.f32 %v1111, %v1116
        %v1145 = vmul.f32 %v1112, %v1116
        %v1146 = vmul.f32 %v1113, %v1116
        %v1147 = vmul.f32 %v1114, %v1116
        %v1148 = vmul.f32 %v1115, %v1116
        %v1149 = vadd.f32 %v953, %v1117
        %v1150 = vadd.f32 %v954, %v1118
        %v1151 = vadd.f32 %v955, %v1119
        %v1152 = vadd.f32 %v956, %v1120
        %v1153 = vadd.f32 %v957, %v1121
        %v1154 = vadd.f32 %v958, %v1122
        %v1155 = vadd.f32 %v959, %v1123
        %v1156 = vadd.f32 %v960, %v1124
        %v1157 = vadd.f32 %v961, %v1125
        %v1158 = vadd.f32 %v962, %v1126
        %v1159 = vadd.f32 %v963, %v1127
        %v1160 = vadd.f32 %v964, %v1128
        %v1161 = vadd.f32 %v965, %v1129
        %v1162 = vadd.f32 %v966, %v1130
        %v1163 = vadd.f32 %v967, %v1131
        %v1164 = vadd.f32 %v968, %v1132
        %v1165 = vadd.f32 %v969, %v1133
        %v1166 = vadd.f32 %v970, %v1134
        %v1167 = vadd.f32 %v971, %v1135
        %v1168 = vadd.f32 %v972, %v1136
        %v1169 = vadd.f32 %v973, %v1137
        %v1170 = vadd.f32 %v974, %v1138
        %v1171 = vadd.f32 %v975, %v1139
        %v1172 = vadd.f32 %v976, %v1140
        %v1173 = vadd.f32 %v977, %v1141
        %v1174 = vadd.f32 %v978, %v1142
        %v1175 = vadd.f32 %v979, %v1143
        %v1176 = vadd.f32 %v980, %v1144
        %v1177 = vadd.f32 %v981, %v1145
        %v1178 = vadd.f32 %v982, %v1146
        %v1179 = vadd.f32 %v983, %v1147
        %v1180 = vadd.f32 %v984, %v1148
        %v1182 = vrot.slane %v538, 7
        %v1183 = vsel %vm725, %v789, %v1182
        %v1184 = vrot.slane %v539, 7
        %v1185 = vsel %vm725, %v1182, %v1184
        %v1188 = vsel %vm625, %v732, 0.0
        %v1189 = vsel %vm626, %v734, 0.0
        %v1190 = vsel %vm627, %v736, 0.0
        %v1191 = vsel %vm628, %v738, 0.0
        %v1192 = vsel %vm629, %v740, 0.0
        %v1193 = vsel %vm630, %v742, 0.0
        %v1194 = vsel %vm631, %v744, 0.0
        %v1195 = vsel %vm632, %v746, 0.0
        %v1196 = vsel %vm633, %v748, 0.0
        %v1197 = vsel %vm634, %v750, 0.0
        %v1198 = vsel %vm635, %v752, 0.0
        %v1199 = vsel %vm636, %v754, 0.0
        %v1200 = vsel %vm637, %v756, 0.0
        %v1201 = vsel %vm638, %v758, 0.0
        %v1202 = vsel %vm639, %v760, 0.0
        %v1203 = vsel %vm640, %v762, 0.0
        %v1204 = vsel %vm641, %v764, 0.0
        %v1205 = vsel %vm642, %v766, 0.0
        %v1206 = vsel %vm643, %v768, 0.0
        %v1207 = vsel %vm644, %v770, 0.0
        %v1208 = vsel %vm645, %v772, 0.0
        %v1209 = vsel %vm646, %v774, 0.0
        %v1210 = vsel %vm647, %v776, 0.0
        %v1211 = vsel %vm648, %v778, 0.0
        %v1212 = vsel %vm649, %v780, 0.0
        %v1213 = vsel %vm650, %v782, 0.0
        %v1214 = vsel %vm651, %v784, 0.0
        %v1215 = vsel %vm652, %v786, 0.0
        %v1216 = vsel %vm653, %v788, 0.0
        %v1217 = vsel %vm654, %v790, 0.0
        %v1218 = vsel %vm655, %v1183, 0.0
        %v1219 = vsel %vm656, %v1185, 0.0
        %v1220 = vperm.slane %v690, 0
        %v1221 = vmul.f32 %v1188, %v1220
        %v1222 = vmul.f32 %v1189, %v1220
        %v1223 = vmul.f32 %v1190, %v1220
        %v1224 = vmul.f32 %v1191, %v1220
        %v1225 = vmul.f32 %v1192, %v1220
        %v1226 = vmul.f32 %v1193, %v1220
        %v1227 = vmul.f32 %v1194, %v1220
        %v1228 = vmul.f32 %v1195, %v1220
        %v1229 = vmul.f32 %v1196, %v1220
        %v1230 = vmul.f32 %v1197, %v1220
        %v1231 = vmul.f32 %v1198, %v1220
        %v1232 = vmul.f32 %v1199, %v1220
        %v1233 = vmul.f32 %v1200, %v1220
        %v1234 = vmul.f32 %v1201, %v1220
        %v1235 = vmul.f32 %v1202, %v1220
        %v1236 = vmul.f32 %v1203, %v1220
        %v1237 = vmul.f32 %v1204, %v1220
        %v1238 = vmul.f32 %v1205, %v1220
        %v1239 = vmul.f32 %v1206, %v1220
        %v1240 = vmul.f32 %v1207, %v1220
        %v1241 = vmul.f32 %v1208, %v1220
        %v1242 = vmul.f32 %v1209, %v1220
        %v1243 = vmul.f32 %v1210, %v1220
        %v1244 = vmul.f32 %v1211, %v1220
        %v1245 = vmul.f32 %v1212, %v1220
        %v1246 = vmul.f32 %v1213, %v1220
        %v1247 = vmul.f32 %v1214, %v1220
        %v1248 = vmul.f32 %v1215, %v1220
        %v1249 = vmul.f32 %v1216, %v1220
        %v1250 = vmul.f32 %v1217, %v1220
        %v1251 = vmul.f32 %v1218, %v1220
        %v1252 = vmul.f32 %v1219, %v1220
        %v1253 = vadd.f32 %v1149, %v1221
        %v1254 = vadd.f32 %v1150, %v1222
        %v1255 = vadd.f32 %v1151, %v1223
        %v1256 = vadd.f32 %v1152, %v1224
        %v1257 = vadd.f32 %v1153, %v1225
        %v1258 = vadd.f32 %v1154, %v1226
        %v1259 = vadd.f32 %v1155, %v1227
        %v1260 = vadd.f32 %v1156, %v1228
        %v1261 = vadd.f32 %v1157, %v1229
        %v1262 = vadd.f32 %v1158, %v1230
        %v1263 = vadd.f32 %v1159, %v1231
        %v1264 = vadd.f32 %v1160, %v1232
        %v1265 = vadd.f32 %v1161, %v1233
        %v1266 = vadd.f32 %v1162, %v1234
        %v1267 = vadd.f32 %v1163, %v1235
        %v1268 = vadd.f32 %v1164, %v1236
        %v1269 = vadd.f32 %v1165, %v1237
        %v1270 = vadd.f32 %v1166, %v1238
        %v1271 = vadd.f32 %v1167, %v1239
        %v1272 = vadd.f32 %v1168, %v1240
        %v1273 = vadd.f32 %v1169, %v1241
        %v1274 = vadd.f32 %v1170, %v1242
        %v1275 = vadd.f32 %v1171, %v1243
        %v1276 = vadd.f32 %v1172, %v1244
        %v1277 = vadd.f32 %v1173, %v1245
        %v1278 = vadd.f32 %v1174, %v1246
        %v1279 = vadd.f32 %v1175, %v1247
        %v1280 = vadd.f32 %v1176, %v1248
        %v1281 = vadd.f32 %v1177, %v1249
        %v1282 = vadd.f32 %v1178, %v1250
        %v1283 = vadd.f32 %v1179, %v1251
        %v1284 = vadd.f32 %v1180, %v1252
        %v1285 = vperm.slane %v690, 1
        %v1286 = vmul.f32 %v508, %v1285
        %v1287 = vmul.f32 %v509, %v1285
        %v1288 = vmul.f32 %v510, %v1285
        %v1289 = vmul.f32 %v511, %v1285
        %v1290 = vmul.f32 %v512, %v1285
        %v1291 = vmul.f32 %v513, %v1285
        %v1292 = vmul.f32 %v514, %v1285
        %v1293 = vmul.f32 %v515, %v1285
        %v1294 = vmul.f32 %v516, %v1285
        %v1295 = vmul.f32 %v517, %v1285
        %v1296 = vmul.f32 %v518, %v1285
        %v1297 = vmul.f32 %v519, %v1285
        %v1298 = vmul.f32 %v520, %v1285
        %v1299 = vmul.f32 %v521, %v1285
        %v1300 = vmul.f32 %v522, %v1285
        %v1301 = vmul.f32 %v523, %v1285
        %v1302 = vmul.f32 %v524, %v1285
        %v1303 = vmul.f32 %v525, %v1285
        %v1304 = vmul.f32 %v526, %v1285
        %v1305 = vmul.f32 %v527, %v1285
        %v1306 = vmul.f32 %v528, %v1285
        %v1307 = vmul.f32 %v529, %v1285
        %v1308 = vmul.f32 %v530, %v1285
        %v1309 = vmul.f32 %v531, %v1285
        %v1310 = vmul.f32 %v532, %v1285
        %v1311 = vmul.f32 %v533, %v1285
        %v1312 = vmul.f32 %v534, %v1285
        %v1313 = vmul.f32 %v535, %v1285
        %v1314 = vmul.f32 %v536, %v1285
        %v1315 = vmul.f32 %v537, %v1285
        %v1316 = vmul.f32 %v538, %v1285
        %v1317 = vmul.f32 %v539, %v1285
        %v1318 = vadd.f32 %v1253, %v1286
        %v1319 = vadd.f32 %v1254, %v1287
        %v1320 = vadd.f32 %v1255, %v1288
        %v1321 = vadd.f32 %v1256, %v1289
        %v1322 = vadd.f32 %v1257, %v1290
        %v1323 = vadd.f32 %v1258, %v1291
        %v1324 = vadd.f32 %v1259, %v1292
        %v1325 = vadd.f32 %v1260, %v1293
        %v1326 = vadd.f32 %v1261, %v1294
        %v1327 = vadd.f32 %v1262, %v1295
        %v1328 = vadd.f32 %v1263, %v1296
        %v1329 = vadd.f32 %v1264, %v1297
        %v1330 = vadd.f32 %v1265, %v1298
        %v1331 = vadd.f32 %v1266, %v1299
        %v1332 = vadd.f32 %v1267, %v1300
        %v1333 = vadd.f32 %v1268, %v1301
        %v1334 = vadd.f32 %v1269, %v1302
        %v1335 = vadd.f32 %v1270, %v1303
        %v1336 = vadd.f32 %v1271, %v1304
        %v1337 = vadd.f32 %v1272, %v1305
        %v1338 = vadd.f32 %v1273, %v1306
        %v1339 = vadd.f32 %v1274, %v1307
        %v1340 = vadd.f32 %v1275, %v1308
        %v1341 = vadd.f32 %v1276, %v1309
        %v1342 = vadd.f32 %v1277, %v1310
        %v1343 = vadd.f32 %v1278, %v1311
        %v1344 = vadd.f32 %v1279, %v1312
        %v1345 = vadd.f32 %v1280, %v1313
        %v1346 = vadd.f32 %v1281, %v1314
        %v1347 = vadd.f32 %v1282, %v1315
        %v1348 = vadd.f32 %v1283, %v1316
        %v1349 = vadd.f32 %v1284, %v1317
        %v1351 = vrot.slane %v539, 1
        %v1352 = vsel %vm986, %v1050, %v1351
        %v1353 = vrot.slane %v558, 1
        %v1354 = vsel %vm986, %v1351, %v1353
        %v1357 = vsel %vm657, %v993, 0.0
        %v1358 = vsel %vm658, %v995, 0.0
        %v1359 = vsel %vm659, %v997, 0.0
        %v1360 = vsel %vm660, %v999, 0.0
        %v1361 = vsel %vm661, %v1001, 0.0
        %v1362 = vsel %vm662, %v1003, 0.0
        %v1363 = vsel %vm663, %v1005, 0.0
        %v1364 = vsel %vm664, %v1007, 0.0
        %v1365 = vsel %vm665, %v1009, 0.0
        %v1366 = vsel %vm666, %v1011, 0.0
        %v1367 = vsel %vm667, %v1013, 0.0
        %v1368 = vsel %vm668, %v1015, 0.0
        %v1369 = vsel %vm669, %v1017, 0.0
        %v1370 = vsel %vm670, %v1019, 0.0
        %v1371 = vsel %vm671, %v1021, 0.0
        %v1372 = vsel %vm672, %v1023, 0.0
        %v1373 = vsel %vm673, %v1025, 0.0
        %v1374 = vsel %vm674, %v1027, 0.0
        %v1375 = vsel %vm675, %v1029, 0.0
        %v1376 = vsel %vm676, %v1031, 0.0
        %v1377 = vsel %vm677, %v1033, 0.0
        %v1378 = vsel %vm678, %v1035, 0.0
        %v1379 = vsel %vm679, %v1037, 0.0
        %v1380 = vsel %vm680, %v1039, 0.0
        %v1381 = vsel %vm681, %v1041, 0.0
        %v1382 = vsel %vm682, %v1043, 0.0
        %v1383 = vsel %vm683, %v1045, 0.0
        %v1384 = vsel %vm684, %v1047, 0.0
        %v1385 = vsel %vm685, %v1049, 0.0
        %v1386 = vsel %vm686, %v1051, 0.0
        %v1387 = vsel %vm687, %v1352, 0.0
        %v1388 = vsel %vm688, %v1354, 0.0
        %v1389 = vperm.slane %v690, 2
        %v1390 = vmul.f32 %v1357, %v1389
        %v1391 = vmul.f32 %v1358, %v1389
        %v1392 = vmul.f32 %v1359, %v1389
        %v1393 = vmul.f32 %v1360, %v1389
        %v1394 = vmul.f32 %v1361, %v1389
        %v1395 = vmul.f32 %v1362, %v1389
        %v1396 = vmul.f32 %v1363, %v1389
        %v1397 = vmul.f32 %v1364, %v1389
        %v1398 = vmul.f32 %v1365, %v1389
        %v1399 = vmul.f32 %v1366, %v1389
        %v1400 = vmul.f32 %v1367, %v1389
        %v1401 = vmul.f32 %v1368, %v1389
        %v1402 = vmul.f32 %v1369, %v1389
        %v1403 = vmul.f32 %v1370, %v1389
        %v1404 = vmul.f32 %v1371, %v1389
        %v1405 = vmul.f32 %v1372, %v1389
        %v1406 = vmul.f32 %v1373, %v1389
        %v1407 = vmul.f32 %v1374, %v1389
        %v1408 = vmul.f32 %v1375, %v1389
        %v1409 = vmul.f32 %v1376, %v1389
        %v1410 = vmul.f32 %v1377, %v1389
        %v1411 = vmul.f32 %v1378, %v1389
        %v1412 = vmul.f32 %v1379, %v1389
        %v1413 = vmul.f32 %v1380, %v1389
        %v1414 = vmul.f32 %v1381, %v1389
        %v1415 = vmul.f32 %v1382, %v1389
        %v1416 = vmul.f32 %v1383, %v1389
        %v1417 = vmul.f32 %v1384, %v1389
        %v1418 = vmul.f32 %v1385, %v1389
        %v1419 = vmul.f32 %v1386, %v1389
        %v1420 = vmul.f32 %v1387, %v1389
        %v1421 = vmul.f32 %v1388, %v1389
        %v1422 = vadd.f32 %v1318, %v1390
        %v1423 = vadd.f32 %v1319, %v1391
        %v1424 = vadd.f32 %v1320, %v1392
        %v1425 = vadd.f32 %v1321, %v1393
        %v1426 = vadd.f32 %v1322, %v1394
        %v1427 = vadd.f32 %v1323, %v1395
        %v1428 = vadd.f32 %v1324, %v1396
        %v1429 = vadd.f32 %v1325, %v1397
        %v1430 = vadd.f32 %v1326, %v1398
        %v1431 = vadd.f32 %v1327, %v1399
        %v1432 = vadd.f32 %v1328, %v1400
        %v1433 = vadd.f32 %v1329, %v1401
        %v1434 = vadd.f32 %v1330, %v1402
        %v1435 = vadd.f32 %v1331, %v1403
        %v1436 = vadd.f32 %v1332, %v1404
        %v1437 = vadd.f32 %v1333, %v1405
        %v1438 = vadd.f32 %v1334, %v1406
        %v1439 = vadd.f32 %v1335, %v1407
        %v1440 = vadd.f32 %v1336, %v1408
        %v1441 = vadd.f32 %v1337, %v1409
        %v1442 = vadd.f32 %v1338, %v1410
        %v1443 = vadd.f32 %v1339, %v1411
        %v1444 = vadd.f32 %v1340, %v1412
        %v1445 = vadd.f32 %v1341, %v1413
        %v1446 = vadd.f32 %v1342, %v1414
        %v1447 = vadd.f32 %v1343, %v1415
        %v1448 = vadd.f32 %v1344, %v1416
        %v1449 = vadd.f32 %v1345, %v1417
        %v1450 = vadd.f32 %v1346, %v1418
        %v1451 = vadd.f32 %v1347, %v1419
        %v1452 = vadd.f32 %v1348, %v1420
        %v1453 = vadd.f32 %v1349, %v1421
        %v1455 = vrot.slane %v558, 7
        %v1456 = vsel %vm725, %v1184, %v1455
        %v1457 = vrot.slane %v559, 7
        %v1458 = vsel %vm725, %v1455, %v1457
        %v1461 = vsel %vm625, %v736, 0.0
        %v1462 = vsel %vm626, %v738, 0.0
        %v1463 = vsel %vm627, %v740, 0.0
        %v1464 = vsel %vm628, %v742, 0.0
        %v1465 = vsel %vm629, %v744, 0.0
        %v1466 = vsel %vm630, %v746, 0.0
        %v1467 = vsel %vm631, %v748, 0.0
        %v1468 = vsel %vm632, %v750, 0.0
        %v1469 = vsel %vm633, %v752, 0.0
        %v1470 = vsel %vm634, %v754, 0.0
        %v1471 = vsel %vm635, %v756, 0.0
        %v1472 = vsel %vm636, %v758, 0.0
        %v1473 = vsel %vm637, %v760, 0.0
        %v1474 = vsel %vm638, %v762, 0.0
        %v1475 = vsel %vm639, %v764, 0.0
        %v1476 = vsel %vm640, %v766, 0.0
        %v1477 = vsel %vm641, %v768, 0.0
        %v1478 = vsel %vm642, %v770, 0.0
        %v1479 = vsel %vm643, %v772, 0.0
        %v1480 = vsel %vm644, %v774, 0.0
        %v1481 = vsel %vm645, %v776, 0.0
        %v1482 = vsel %vm646, %v778, 0.0
        %v1483 = vsel %vm647, %v780, 0.0
        %v1484 = vsel %vm648, %v782, 0.0
        %v1485 = vsel %vm649, %v784, 0.0
        %v1486 = vsel %vm650, %v786, 0.0
        %v1487 = vsel %vm651, %v788, 0.0
        %v1488 = vsel %vm652, %v790, 0.0
        %v1489 = vsel %vm653, %v1183, 0.0
        %v1490 = vsel %vm654, %v1185, 0.0
        %v1491 = vsel %vm655, %v1456, 0.0
        %v1492 = vsel %vm656, %v1458, 0.0
        %v1493 = vperm.slane %v691, 0
        %v1494 = vmul.f32 %v1461, %v1493
        %v1495 = vmul.f32 %v1462, %v1493
        %v1496 = vmul.f32 %v1463, %v1493
        %v1497 = vmul.f32 %v1464, %v1493
        %v1498 = vmul.f32 %v1465, %v1493
        %v1499 = vmul.f32 %v1466, %v1493
        %v1500 = vmul.f32 %v1467, %v1493
        %v1501 = vmul.f32 %v1468, %v1493
        %v1502 = vmul.f32 %v1469, %v1493
        %v1503 = vmul.f32 %v1470, %v1493
        %v1504 = vmul.f32 %v1471, %v1493
        %v1505 = vmul.f32 %v1472, %v1493
        %v1506 = vmul.f32 %v1473, %v1493
        %v1507 = vmul.f32 %v1474, %v1493
        %v1508 = vmul.f32 %v1475, %v1493
        %v1509 = vmul.f32 %v1476, %v1493
        %v1510 = vmul.f32 %v1477, %v1493
        %v1511 = vmul.f32 %v1478, %v1493
        %v1512 = vmul.f32 %v1479, %v1493
        %v1513 = vmul.f32 %v1480, %v1493
        %v1514 = vmul.f32 %v1481, %v1493
        %v1515 = vmul.f32 %v1482, %v1493
        %v1516 = vmul.f32 %v1483, %v1493
        %v1517 = vmul.f32 %v1484, %v1493
        %v1518 = vmul.f32 %v1485, %v1493
        %v1519 = vmul.f32 %v1486, %v1493
        %v1520 = vmul.f32 %v1487, %v1493
        %v1521 = vmul.f32 %v1488, %v1493
        %v1522 = vmul.f32 %v1489, %v1493
        %v1523 = vmul.f32 %v1490, %v1493
        %v1524 = vmul.f32 %v1491, %v1493
        %v1525 = vmul.f32 %v1492, %v1493
        %v1526 = vadd.f32 %v1422, %v1494
        %v1527 = vadd.f32 %v1423, %v1495
        %v1528 = vadd.f32 %v1424, %v1496
        %v1529 = vadd.f32 %v1425, %v1497
        %v1530 = vadd.f32 %v1426, %v1498
        %v1531 = vadd.f32 %v1427, %v1499
        %v1532 = vadd.f32 %v1428, %v1500
        %v1533 = vadd.f32 %v1429, %v1501
        %v1534 = vadd.f32 %v1430, %v1502
        %v1535 = vadd.f32 %v1431, %v1503
        %v1536 = vadd.f32 %v1432, %v1504
        %v1537 = vadd.f32 %v1433, %v1505
        %v1538 = vadd.f32 %v1434, %v1506
        %v1539 = vadd.f32 %v1435, %v1507
        %v1540 = vadd.f32 %v1436, %v1508
        %v1541 = vadd.f32 %v1437, %v1509
        %v1542 = vadd.f32 %v1438, %v1510
        %v1543 = vadd.f32 %v1439, %v1511
        %v1544 = vadd.f32 %v1440, %v1512
        %v1545 = vadd.f32 %v1441, %v1513
        %v1546 = vadd.f32 %v1442, %v1514
        %v1547 = vadd.f32 %v1443, %v1515
        %v1548 = vadd.f32 %v1444, %v1516
        %v1549 = vadd.f32 %v1445, %v1517
        %v1550 = vadd.f32 %v1446, %v1518
        %v1551 = vadd.f32 %v1447, %v1519
        %v1552 = vadd.f32 %v1448, %v1520
        %v1553 = vadd.f32 %v1449, %v1521
        %v1554 = vadd.f32 %v1450, %v1522
        %v1555 = vadd.f32 %v1451, %v1523
        %v1556 = vadd.f32 %v1452, %v1524
        %v1557 = vadd.f32 %v1453, %v1525
        %v1558 = vperm.slane %v691, 1
        %v1559 = vmul.f32 %v510, %v1558
        %v1560 = vmul.f32 %v511, %v1558
        %v1561 = vmul.f32 %v512, %v1558
        %v1562 = vmul.f32 %v513, %v1558
        %v1563 = vmul.f32 %v514, %v1558
        %v1564 = vmul.f32 %v515, %v1558
        %v1565 = vmul.f32 %v516, %v1558
        %v1566 = vmul.f32 %v517, %v1558
        %v1567 = vmul.f32 %v518, %v1558
        %v1568 = vmul.f32 %v519, %v1558
        %v1569 = vmul.f32 %v520, %v1558
        %v1570 = vmul.f32 %v521, %v1558
        %v1571 = vmul.f32 %v522, %v1558
        %v1572 = vmul.f32 %v523, %v1558
        %v1573 = vmul.f32 %v524, %v1558
        %v1574 = vmul.f32 %v525, %v1558
        %v1575 = vmul.f32 %v526, %v1558
        %v1576 = vmul.f32 %v527, %v1558
        %v1577 = vmul.f32 %v528, %v1558
        %v1578 = vmul.f32 %v529, %v1558
        %v1579 = vmul.f32 %v530, %v1558
        %v1580 = vmul.f32 %v531, %v1558
        %v1581 = vmul.f32 %v532, %v1558
        %v1582 = vmul.f32 %v533, %v1558
        %v1583 = vmul.f32 %v534, %v1558
        %v1584 = vmul.f32 %v535, %v1558
        %v1585 = vmul.f32 %v536, %v1558
        %v1586 = vmul.f32 %v537, %v1558
        %v1587 = vmul.f32 %v538, %v1558
        %v1588 = vmul.f32 %v539, %v1558
        %v1589 = vmul.f32 %v558, %v1558
        %v1590 = vmul.f32 %v559, %v1558
        %v1591 = vadd.f32 %v1526, %v1559
        %v1592 = vadd.f32 %v1527, %v1560
        %v1593 = vadd.f32 %v1528, %v1561
        %v1594 = vadd.f32 %v1529, %v1562
        %v1595 = vadd.f32 %v1530, %v1563
        %v1596 = vadd.f32 %v1531, %v1564
        %v1597 = vadd.f32 %v1532, %v1565
        %v1598 = vadd.f32 %v1533, %v1566
        %v1599 = vadd.f32 %v1534, %v1567
        %v1600 = vadd.f32 %v1535, %v1568
        %v1601 = vadd.f32 %v1536, %v1569
        %v1602 = vadd.f32 %v1537, %v1570
        %v1603 = vadd.f32 %v1538, %v1571
        %v1604 = vadd.f32 %v1539, %v1572
        %v1605 = vadd.f32 %v1540, %v1573
        %v1606 = vadd.f32 %v1541, %v1574
        %v1607 = vadd.f32 %v1542, %v1575
        %v1608 = vadd.f32 %v1543, %v1576
        %v1609 = vadd.f32 %v1544, %v1577
        %v1610 = vadd.f32 %v1545, %v1578
        %v1611 = vadd.f32 %v1546, %v1579
        %v1612 = vadd.f32 %v1547, %v1580
        %v1613 = vadd.f32 %v1548, %v1581
        %v1614 = vadd.f32 %v1549, %v1582
        %v1615 = vadd.f32 %v1550, %v1583
        %v1616 = vadd.f32 %v1551, %v1584
        %v1617 = vadd.f32 %v1552, %v1585
        %v1618 = vadd.f32 %v1553, %v1586
        %v1619 = vadd.f32 %v1554, %v1587
        %v1620 = vadd.f32 %v1555, %v1588
        %v1621 = vadd.f32 %v1556, %v1589
        %v1622 = vadd.f32 %v1557, %v1590
        %v1623 = vrot.slane %v559, 1
        %v1624 = vsel %vm986, %v1353, %v1623
        %v1625 = vrot.slane 0.0, 1
        %v1626 = vsel %vm986, %v1623, %v1625
        %v1629 = vsel %vm657, %v997, 0.0
        %v1630 = vsel %vm658, %v999, 0.0
        %v1631 = vsel %vm659, %v1001, 0.0
        %v1632 = vsel %vm660, %v1003, 0.0
        %v1633 = vsel %vm661, %v1005, 0.0
        %v1634 = vsel %vm662, %v1007, 0.0
        %v1635 = vsel %vm663, %v1009, 0.0
        %v1636 = vsel %vm664, %v1011, 0.0
        %v1637 = vsel %vm665, %v1013, 0.0
        %v1638 = vsel %vm666, %v1015, 0.0
        %v1639 = vsel %vm667, %v1017, 0.0
        %v1640 = vsel %vm668, %v1019, 0.0
        %v1641 = vsel %vm669, %v1021, 0.0
        %v1642 = vsel %vm670, %v1023, 0.0
        %v1643 = vsel %vm671, %v1025, 0.0
        %v1644 = vsel %vm672, %v1027, 0.0
        %v1645 = vsel %vm673, %v1029, 0.0
        %v1646 = vsel %vm674, %v1031, 0.0
        %v1647 = vsel %vm675, %v1033, 0.0
        %v1648 = vsel %vm676, %v1035, 0.0
        %v1649 = vsel %vm677, %v1037, 0.0
        %v1650 = vsel %vm678, %v1039, 0.0
        %v1651 = vsel %vm679, %v1041, 0.0
        %v1652 = vsel %vm680, %v1043, 0.0
        %v1653 = vsel %vm681, %v1045, 0.0
        %v1654 = vsel %vm682, %v1047, 0.0
        %v1655 = vsel %vm683, %v1049, 0.0
        %v1656 = vsel %vm684, %v1051, 0.0
        %v1657 = vsel %vm685, %v1352, 0.0
        %v1658 = vsel %vm686, %v1354, 0.0
        %v1659 = vsel %vm687, %v1624, 0.0
        %v1660 = vsel %vm688, %v1626, 0.0
        %v1661 = vperm.slane %v691, 2
        %v1662 = vmul.f32 %v1629, %v1661
        %v1663 = vmul.f32 %v1630, %v1661
        %v1664 = vmul.f32 %v1631, %v1661
        %v1665 = vmul.f32 %v1632, %v1661
        %v1666 = vmul.f32 %v1633, %v1661
        %v1667 = vmul.f32 %v1634, %v1661
        %v1668 = vmul.f32 %v1635, %v1661
        %v1669 = vmul.f32 %v1636, %v1661
        %v1670 = vmul.f32 %v1637, %v1661
        %v1671 = vmul.f32 %v1638, %v1661
        %v1672 = vmul.f32 %v1639, %v1661
        %v1673 = vmul.f32 %v1640, %v1661
        %v1674 = vmul.f32 %v1641, %v1661
        %v1675 = vmul.f32 %v1642, %v1661
        %v1676 = vmul.f32 %v1643, %v1661
        %v1677 = vmul.f32 %v1644, %v1661
        %v1678 = vmul.f32 %v1645, %v1661
        %v1679 = vmul.f32 %v1646, %v1661
        %v1680 = vmul.f32 %v1647, %v1661
        %v1681 = vmul.f32 %v1648, %v1661
        %v1682 = vmul.f32 %v1649, %v1661
        %v1683 = vmul.f32 %v1650, %v1661
        %v1684 = vmul.f32 %v1651, %v1661
        %v1685 = vmul.f32 %v1652, %v1661
        %v1686 = vmul.f32 %v1653, %v1661
        %v1687 = vmul.f32 %v1654, %v1661
        %v1688 = vmul.f32 %v1655, %v1661
        %v1689 = vmul.f32 %v1656, %v1661
        %v1690 = vmul.f32 %v1657, %v1661
        %v1691 = vmul.f32 %v1658, %v1661
        %v1692 = vmul.f32 %v1659, %v1661
        %v1693 = vmul.f32 %v1660, %v1661
        %v1694 = vadd.f32 %v1591, %v1662
        %v1695 = vadd.f32 %v1592, %v1663
        %v1696 = vadd.f32 %v1593, %v1664
        %v1697 = vadd.f32 %v1594, %v1665
        %v1698 = vadd.f32 %v1595, %v1666
        %v1699 = vadd.f32 %v1596, %v1667
        %v1700 = vadd.f32 %v1597, %v1668
        %v1701 = vadd.f32 %v1598, %v1669
        %v1702 = vadd.f32 %v1599, %v1670
        %v1703 = vadd.f32 %v1600, %v1671
        %v1704 = vadd.f32 %v1601, %v1672
        %v1705 = vadd.f32 %v1602, %v1673
        %v1706 = vadd.f32 %v1603, %v1674
        %v1707 = vadd.f32 %v1604, %v1675
        %v1708 = vadd.f32 %v1605, %v1676
        %v1709 = vadd.f32 %v1606, %v1677
        %v1710 = vadd.f32 %v1607, %v1678
        %v1711 = vadd.f32 %v1608, %v1679
        %v1712 = vadd.f32 %v1609, %v1680
        %v1713 = vadd.f32 %v1610, %v1681
        %v1714 = vadd.f32 %v1611, %v1682
        %v1715 = vadd.f32 %v1612, %v1683
        %v1716 = vadd.f32 %v1613, %v1684
        %v1717 = vadd.f32 %v1614, %v1685
        %v1718 = vadd.f32 %v1615, %v1686
        %v1719 = vadd.f32 %v1616, %v1687
        %v1720 = vadd.f32 %v1617, %v1688
        %v1721 = vadd.f32 %v1618, %v1689
        %v1722 = vadd.f32 %v1619, %v1690
        %v1723 = vadd.f32 %v1620, %v1691
        %v1724 = vadd.f32 %v1621, %v1692
        %v1725 = vadd.f32 %v1622, %v1693
        %v1726 = vld [vmem:[%s470] sm:$0x1]
        %v1728 = vperm.slane %v1726, 0
        %v1730 = vadd.f32 %v1694, %v1728
        %v1731 = vadd.f32 %v1695, %v1728
        %v1732 = vadd.f32 %v1696, %v1728
        %v1733 = vadd.f32 %v1697, %v1728
        %v1734 = vadd.f32 %v1698, %v1728
        %v1735 = vadd.f32 %v1699, %v1728
        %v1736 = vadd.f32 %v1700, %v1728
        %v1737 = vadd.f32 %v1701, %v1728
        %v1738 = vadd.f32 %v1702, %v1728
        %v1739 = vadd.f32 %v1703, %v1728
        %v1740 = vadd.f32 %v1704, %v1728
        %v1741 = vadd.f32 %v1705, %v1728
        %v1742 = vadd.f32 %v1706, %v1728
        %v1743 = vadd.f32 %v1707, %v1728
        %v1744 = vadd.f32 %v1708, %v1728
        %v1745 = vadd.f32 %v1709, %v1728
        %v1746 = vadd.f32 %v1710, %v1728
        %v1747 = vadd.f32 %v1711, %v1728
        %v1748 = vadd.f32 %v1712, %v1728
        %v1749 = vadd.f32 %v1713, %v1728
        %v1750 = vadd.f32 %v1714, %v1728
        %v1751 = vadd.f32 %v1715, %v1728
        %v1752 = vadd.f32 %v1716, %v1728
        %v1753 = vadd.f32 %v1717, %v1728
        %v1754 = vadd.f32 %v1718, %v1728
        %v1755 = vadd.f32 %v1719, %v1728
        %v1756 = vadd.f32 %v1720, %v1728
        %v1757 = vadd.f32 %v1721, %v1728
        %v1758 = vadd.f32 %v1722, %v1728
        %v1759 = vadd.f32 %v1723, %v1728
        %v1760 = vadd.f32 %v1724, %v1728
        %v1761 = vadd.f32 %v1725, %v1728
        %v1762 = vmul.f32 %v1730, 0.5
        %v1763 = vmul.f32 %v1731, 0.5
        %v1764 = vmul.f32 %v1732, 0.5
        %v1765 = vmul.f32 %v1733, 0.5
        %v1766 = vmul.f32 %v1734, 0.5
        %v1767 = vmul.f32 %v1735, 0.5
        %v1768 = vmul.f32 %v1736, 0.5
        %v1769 = vmul.f32 %v1737, 0.5
        %v1770 = vmul.f32 %v1738, 0.5
        %v1771 = vmul.f32 %v1739, 0.5
        %v1772 = vmul.f32 %v1740, 0.5
        %v1773 = vmul.f32 %v1741, 0.5
        %v1774 = vmul.f32 %v1742, 0.5
        %v1775 = vmul.f32 %v1743, 0.5
        %v1776 = vmul.f32 %v1744, 0.5
        %v1777 = vmul.f32 %v1745, 0.5
        %v1778 = vmul.f32 %v1746, 0.5
        %v1779 = vmul.f32 %v1747, 0.5
        %v1780 = vmul.f32 %v1748, 0.5
        %v1781 = vmul.f32 %v1749, 0.5
        %v1782 = vmul.f32 %v1750, 0.5
        %v1783 = vmul.f32 %v1751, 0.5
        %v1784 = vmul.f32 %v1752, 0.5
        %v1785 = vmul.f32 %v1753, 0.5
        %v1786 = vmul.f32 %v1754, 0.5
        %v1787 = vmul.f32 %v1755, 0.5
        %v1788 = vmul.f32 %v1756, 0.5
        %v1789 = vmul.f32 %v1757, 0.5
        %v1790 = vmul.f32 %v1758, 0.5
        %v1791 = vmul.f32 %v1759, 0.5
        %v1792 = vmul.f32 %v1760, 0.5
        %v1793 = vmul.f32 %v1761, 0.5
        %v1794 = vmul.f32 %v1730, 0.70710677
        %v1795 = vmul.f32 %v1731, 0.70710677
        %v1796 = vmul.f32 %v1732, 0.70710677
        %v1797 = vmul.f32 %v1733, 0.70710677
        %v1798 = vmul.f32 %v1734, 0.70710677
        %v1799 = vmul.f32 %v1735, 0.70710677
        %v1800 = vmul.f32 %v1736, 0.70710677
        %v1801 = vmul.f32 %v1737, 0.70710677
        %v1802 = vmul.f32 %v1738, 0.70710677
        %v1803 = vmul.f32 %v1739, 0.70710677
        %v1804 = vmul.f32 %v1740, 0.70710677
        %v1805 = vmul.f32 %v1741, 0.70710677
        %v1806 = vmul.f32 %v1742, 0.70710677
        %v1807 = vmul.f32 %v1743, 0.70710677
        %v1808 = vmul.f32 %v1744, 0.70710677
        %v1809 = vmul.f32 %v1745, 0.70710677
        %v1810 = vmul.f32 %v1746, 0.70710677
        %v1811 = vmul.f32 %v1747, 0.70710677
        %v1812 = vmul.f32 %v1748, 0.70710677
        %v1813 = vmul.f32 %v1749, 0.70710677
        %v1814 = vmul.f32 %v1750, 0.70710677
        %v1815 = vmul.f32 %v1751, 0.70710677
        %v1816 = vmul.f32 %v1752, 0.70710677
        %v1817 = vmul.f32 %v1753, 0.70710677
        %v1818 = vmul.f32 %v1754, 0.70710677
        %v1819 = vmul.f32 %v1755, 0.70710677
        %v1820 = vmul.f32 %v1756, 0.70710677
        %v1821 = vmul.f32 %v1757, 0.70710677
        %v1822 = vmul.f32 %v1758, 0.70710677
        %v1823 = vmul.f32 %v1759, 0.70710677
        %v1824 = vmul.f32 %v1760, 0.70710677
        %v1825 = vmul.f32 %v1761, 0.70710677
        %v1826 = vmul.f32 %v1794, %v1794
        %v1827 = vmin.f32 16.0, %v1826
        %v1828 = vmul.f32 %v1827, 2.1237322e-06
        %v1829 = vadd.f32 %v1828, 0.00028619796
        %v1830 = vmul.f32 %v1827, %v1829
        %v1831 = vadd.f32 %v1830, 0.0036580483
        %v1832 = vmul.f32 %v1827, %v1831
        %v1833 = vadd.f32 %v1832, 0.05243302
        %v1834 = vmul.f32 %v1827, %v1833
        %v1835 = vadd.f32 %v1834, 0.18741608
        %v1836 = vmul.f32 %v1827, %v1835
        %v1837 = vadd.f32 %v1836, 1.1283791
        %v1838 = vmul.f32 %v1794, %v1837
        %v1839 = vmul.f32 %v1827, 3.8918573e-05
        %v1840 = vadd.f32 %v1839, 0.001143296
        %v1841 = vmul.f32 %v1827, %v1840
        %v1842 = vadd.f32 %v1841, 0.014752088
        %v1843 = vmul.f32 %v1827, %v1842
        %v1844 = vadd.f32 %v1843, 0.112945676
        %v1845 = vmul.f32 %v1827, %v1844
        %v1846 = vadd.f32 %v1845, 0.4994258
        %v1847 = vmul.f32 %v1827, %v1846
        %v1848 = vadd.f32 %v1847, 1.0
        %v1849 = vrcp.pop %v1848
        %v1850 = vmul.f32 %v1848, %v1849
        %v1851 = vsub.f32 1.0, %v1850
        %v1852 = vmul.f32 %v1849, %v1851
        %v1853 = vadd.f32 %v1849, %v1852
        %vm1854 = vweird.f32 %v1848
        %vm1855 = vweird.f32 %v1849
        %vm1856 = vmor %vm1854, %vm1855
        %v1857 = vsel %vm1856, %v1849, %v1853
        %v1858 = vand.u32 2147483647, %v1848
        %vm1859 = vcmp.eq.f32.partialorder %v1858, 8.507059e+37
        %v1860 = vand.u32 %v1848, 2147483648
        %v1861 = vor.u32 1.1754944e-38, %v1860
        %v1862 = vsel %vm1859, %v1861, %v1857
        %v1863 = vmul.f32 %v1838, %v1862
        %v1864 = vmin.f32 %v1863, 1.0
        %v1865 = vmax.f32 %v1864, -1.0
        %v1866 = vmul.f32 %v1795, %v1795
        %v1867 = vmin.f32 16.0, %v1866
        %v1868 = vmul.f32 %v1867, 2.1237322e-06
        %v1869 = vadd.f32 %v1868, 0.00028619796
        %v1870 = vmul.f32 %v1867, %v1869
        %v1871 = vadd.f32 %v1870, 0.0036580483
        %v1872 = vmul.f32 %v1867, %v1871
        %v1873 = vadd.f32 %v1872, 0.05243302
        %v1874 = vmul.f32 %v1867, %v1873
        %v1875 = vadd.f32 %v1874, 0.18741608
        %v1876 = vmul.f32 %v1867, %v1875
        %v1877 = vadd.f32 %v1876, 1.1283791
        %v1878 = vmul.f32 %v1795, %v1877
        %v1879 = vmul.f32 %v1867, 3.8918573e-05
        %v1880 = vadd.f32 %v1879, 0.001143296
        %v1881 = vmul.f32 %v1867, %v1880
        %v1882 = vadd.f32 %v1881, 0.014752088
        %v1883 = vmul.f32 %v1867, %v1882
        %v1884 = vadd.f32 %v1883, 0.112945676
        %v1885 = vmul.f32 %v1867, %v1884
        %v1886 = vadd.f32 %v1885, 0.4994258
        %v1887 = vmul.f32 %v1867, %v1886
        %v1888 = vadd.f32 %v1887, 1.0
        %v1889 = vrcp.pop %v1888
        %v1890 = vmul.f32 %v1888, %v1889
        %v1891 = vsub.f32 1.0, %v1890
        %v1892 = vmul.f32 %v1889, %v1891
        %v1893 = vadd.f32 %v1889, %v1892
        %vm1894 = vweird.f32 %v1888
        %vm1895 = vweird.f32 %v1889
        %vm1896 = vmor %vm1894, %vm1895
        %v1897 = vsel %vm1896, %v1889, %v1893
        %v1898 = vand.u32 2147483647, %v1888
        %vm1899 = vcmp.eq.f32.partialorder %v1898, 8.507059e+37
        %v1900 = vand.u32 %v1888, 2147483648
        %v1901 = vor.u32 1.1754944e-38, %v1900
        %v1902 = vsel %vm1899, %v1901, %v1897
        %v1903 = vmul.f32 %v1878, %v1902
        %v1904 = vmin.f32 %v1903, 1.0
        %v1905 = vmax.f32 %v1904, -1.0
        %v1906 = vmul.f32 %v1796, %v1796
        %v1907 = vmin.f32 16.0, %v1906
        %v1908 = vmul.f32 %v1907, 2.1237322e-06
        %v1909 = vadd.f32 %v1908, 0.00028619796
        %v1910 = vmul.f32 %v1907, %v1909
        %v1911 = vadd.f32 %v1910, 0.0036580483
        %v1912 = vmul.f32 %v1907, %v1911
        %v1913 = vadd.f32 %v1912, 0.05243302
        %v1914 = vmul.f32 %v1907, %v1913
        %v1915 = vadd.f32 %v1914, 0.18741608
        %v1916 = vmul.f32 %v1907, %v1915
        %v1917 = vadd.f32 %v1916, 1.1283791
        %v1918 = vmul.f32 %v1796, %v1917
        %v1919 = vmul.f32 %v1907, 3.8918573e-05
        %v1920 = vadd.f32 %v1919, 0.001143296
        %v1921 = vmul.f32 %v1907, %v1920
        %v1922 = vadd.f32 %v1921, 0.014752088
        %v1923 = vmul.f32 %v1907, %v1922
        %v1924 = vadd.f32 %v1923, 0.112945676
        %v1925 = vmul.f32 %v1907, %v1924
        %v1926 = vadd.f32 %v1925, 0.4994258
        %v1927 = vmul.f32 %v1907, %v1926
        %v1928 = vadd.f32 %v1927, 1.0
        %v1929 = vrcp.pop %v1928
        %v1930 = vmul.f32 %v1928, %v1929
        %v1931 = vsub.f32 1.0, %v1930
        %v1932 = vmul.f32 %v1929, %v1931
        %v1933 = vadd.f32 %v1929, %v1932
        %vm1934 = vweird.f32 %v1928
        %vm1935 = vweird.f32 %v1929
        %vm1936 = vmor %vm1934, %vm1935
        %v1937 = vsel %vm1936, %v1929, %v1933
        %v1938 = vand.u32 2147483647, %v1928
        %vm1939 = vcmp.eq.f32.partialorder %v1938, 8.507059e+37
        %v1940 = vand.u32 %v1928, 2147483648
        %v1941 = vor.u32 1.1754944e-38, %v1940
        %v1942 = vsel %vm1939, %v1941, %v1937
        %v1943 = vmul.f32 %v1918, %v1942
        %v1944 = vmin.f32 %v1943, 1.0
        %v1945 = vmax.f32 %v1944, -1.0
        %v1946 = vmul.f32 %v1797, %v1797
        %v1947 = vmin.f32 16.0, %v1946
        %v1948 = vmul.f32 %v1947, 2.1237322e-06
        %v1949 = vadd.f32 %v1948, 0.00028619796
        %v1950 = vmul.f32 %v1947, %v1949
        %v1951 = vadd.f32 %v1950, 0.0036580483
        %v1952 = vmul.f32 %v1947, %v1951
        %v1953 = vadd.f32 %v1952, 0.05243302
        %v1954 = vmul.f32 %v1947, %v1953
        %v1955 = vadd.f32 %v1954, 0.18741608
        %v1956 = vmul.f32 %v1947, %v1955
        %v1957 = vadd.f32 %v1956, 1.1283791
        %v1958 = vmul.f32 %v1797, %v1957
        %v1959 = vmul.f32 %v1947, 3.8918573e-05
        %v1960 = vadd.f32 %v1959, 0.001143296
        %v1961 = vmul.f32 %v1947, %v1960
        %v1962 = vadd.f32 %v1961, 0.014752088
        %v1963 = vmul.f32 %v1947, %v1962
        %v1964 = vadd.f32 %v1963, 0.112945676
        %v1965 = vmul.f32 %v1947, %v1964
        %v1966 = vadd.f32 %v1965, 0.4994258
        %v1967 = vmul.f32 %v1947, %v1966
        %v1968 = vadd.f32 %v1967, 1.0
        %v1969 = vrcp.pop %v1968
        %v1970 = vmul.f32 %v1968, %v1969
        %v1971 = vsub.f32 1.0, %v1970
        %v1972 = vmul.f32 %v1969, %v1971
        %v1973 = vadd.f32 %v1969, %v1972
        %vm1974 = vweird.f32 %v1968
        %vm1975 = vweird.f32 %v1969
        %vm1976 = vmor %vm1974, %vm1975
        %v1977 = vsel %vm1976, %v1969, %v1973
        %v1978 = vand.u32 2147483647, %v1968
        %vm1979 = vcmp.eq.f32.partialorder %v1978, 8.507059e+37
        %v1980 = vand.u32 %v1968, 2147483648
        %v1981 = vor.u32 1.1754944e-38, %v1980
        %v1982 = vsel %vm1979, %v1981, %v1977
        %v1983 = vmul.f32 %v1958, %v1982
        %v1984 = vmin.f32 %v1983, 1.0
        %v1985 = vmax.f32 %v1984, -1.0
        %v1986 = vmul.f32 %v1798, %v1798
        %v1987 = vmin.f32 16.0, %v1986
        %v1988 = vmul.f32 %v1987, 2.1237322e-06
        %v1989 = vadd.f32 %v1988, 0.00028619796
        %v1990 = vmul.f32 %v1987, %v1989
        %v1991 = vadd.f32 %v1990, 0.0036580483
        %v1992 = vmul.f32 %v1987, %v1991
        %v1993 = vadd.f32 %v1992, 0.05243302
        %v1994 = vmul.f32 %v1987, %v1993
        %v1995 = vadd.f32 %v1994, 0.18741608
        %v1996 = vmul.f32 %v1987, %v1995
        %v1997 = vadd.f32 %v1996, 1.1283791
        %v1998 = vmul.f32 %v1798, %v1997
        %v1999 = vmul.f32 %v1987, 3.8918573e-05
        %v2000 = vadd.f32 %v1999, 0.001143296
        %v2001 = vmul.f32 %v1987, %v2000
        %v2002 = vadd.f32 %v2001, 0.014752088
        %v2003 = vmul.f32 %v1987, %v2002
        %v2004 = vadd.f32 %v2003, 0.112945676
        %v2005 = vmul.f32 %v1987, %v2004
        %v2006 = vadd.f32 %v2005, 0.4994258
        %v2007 = vmul.f32 %v1987, %v2006
        %v2008 = vadd.f32 %v2007, 1.0
        %v2009 = vrcp.pop %v2008
        %v2010 = vmul.f32 %v2008, %v2009
        %v2011 = vsub.f32 1.0, %v2010
        %v2012 = vmul.f32 %v2009, %v2011
        %v2013 = vadd.f32 %v2009, %v2012
        %vm2014 = vweird.f32 %v2008
        %vm2015 = vweird.f32 %v2009
        %vm2016 = vmor %vm2014, %vm2015
        %v2017 = vsel %vm2016, %v2009, %v2013
        %v2018 = vand.u32 2147483647, %v2008
        %vm2019 = vcmp.eq.f32.partialorder %v2018, 8.507059e+37
        %v2020 = vand.u32 %v2008, 2147483648
        %v2021 = vor.u32 1.1754944e-38, %v2020
        %v2022 = vsel %vm2019, %v2021, %v2017
        %v2023 = vmul.f32 %v1998, %v2022
        %v2024 = vmin.f32 %v2023, 1.0
        %v2025 = vmax.f32 %v2024, -1.0
        %v2026 = vmul.f32 %v1799, %v1799
        %v2027 = vmin.f32 16.0, %v2026
        %v2028 = vmul.f32 %v2027, 2.1237322e-06
        %v2029 = vadd.f32 %v2028, 0.00028619796
        %v2030 = vmul.f32 %v2027, %v2029
        %v2031 = vadd.f32 %v2030, 0.0036580483
        %v2032 = vmul.f32 %v2027, %v2031
        %v2033 = vadd.f32 %v2032, 0.05243302
        %v2034 = vmul.f32 %v2027, %v2033
        %v2035 = vadd.f32 %v2034, 0.18741608
        %v2036 = vmul.f32 %v2027, %v2035
        %v2037 = vadd.f32 %v2036, 1.1283791
        %v2038 = vmul.f32 %v1799, %v2037
        %v2039 = vmul.f32 %v2027, 3.8918573e-05
        %v2040 = vadd.f32 %v2039, 0.001143296
        %v2041 = vmul.f32 %v2027, %v2040
        %v2042 = vadd.f32 %v2041, 0.014752088
        %v2043 = vmul.f32 %v2027, %v2042
        %v2044 = vadd.f32 %v2043, 0.112945676
        %v2045 = vmul.f32 %v2027, %v2044
        %v2046 = vadd.f32 %v2045, 0.4994258
        %v2047 = vmul.f32 %v2027, %v2046
        %v2048 = vadd.f32 %v2047, 1.0
        %v2049 = vrcp.pop %v2048
        %v2050 = vmul.f32 %v2048, %v2049
        %v2051 = vsub.f32 1.0, %v2050
        %v2052 = vmul.f32 %v2049, %v2051
        %v2053 = vadd.f32 %v2049, %v2052
        %vm2054 = vweird.f32 %v2048
        %vm2055 = vweird.f32 %v2049
        %vm2056 = vmor %vm2054, %vm2055
        %v2057 = vsel %vm2056, %v2049, %v2053
        %v2058 = vand.u32 2147483647, %v2048
        %vm2059 = vcmp.eq.f32.partialorder %v2058, 8.507059e+37
        %v2060 = vand.u32 %v2048, 2147483648
        %v2061 = vor.u32 1.1754944e-38, %v2060
        %v2062 = vsel %vm2059, %v2061, %v2057
        %v2063 = vmul.f32 %v2038, %v2062
        %v2064 = vmin.f32 %v2063, 1.0
        %v2065 = vmax.f32 %v2064, -1.0
        %v2066 = vmul.f32 %v1800, %v1800
        %v2067 = vmin.f32 16.0, %v2066
        %v2068 = vmul.f32 %v2067, 2.1237322e-06
        %v2069 = vadd.f32 %v2068, 0.00028619796
        %v2070 = vmul.f32 %v2067, %v2069
        %v2071 = vadd.f32 %v2070, 0.0036580483
        %v2072 = vmul.f32 %v2067, %v2071
        %v2073 = vadd.f32 %v2072, 0.05243302
        %v2074 = vmul.f32 %v2067, %v2073
        %v2075 = vadd.f32 %v2074, 0.18741608
        %v2076 = vmul.f32 %v2067, %v2075
        %v2077 = vadd.f32 %v2076, 1.1283791
        %v2078 = vmul.f32 %v1800, %v2077
        %v2079 = vmul.f32 %v2067, 3.8918573e-05
        %v2080 = vadd.f32 %v2079, 0.001143296
        %v2081 = vmul.f32 %v2067, %v2080
        %v2082 = vadd.f32 %v2081, 0.014752088
        %v2083 = vmul.f32 %v2067, %v2082
        %v2084 = vadd.f32 %v2083, 0.112945676
        %v2085 = vmul.f32 %v2067, %v2084
        %v2086 = vadd.f32 %v2085, 0.4994258
        %v2087 = vmul.f32 %v2067, %v2086
        %v2088 = vadd.f32 %v2087, 1.0
        %v2089 = vrcp.pop %v2088
        %v2090 = vmul.f32 %v2088, %v2089
        %v2091 = vsub.f32 1.0, %v2090
        %v2092 = vmul.f32 %v2089, %v2091
        %v2093 = vadd.f32 %v2089, %v2092
        %vm2094 = vweird.f32 %v2088
        %vm2095 = vweird.f32 %v2089
        %vm2096 = vmor %vm2094, %vm2095
        %v2097 = vsel %vm2096, %v2089, %v2093
        %v2098 = vand.u32 2147483647, %v2088
        %vm2099 = vcmp.eq.f32.partialorder %v2098, 8.507059e+37
        %v2100 = vand.u32 %v2088, 2147483648
        %v2101 = vor.u32 1.1754944e-38, %v2100
        %v2102 = vsel %vm2099, %v2101, %v2097
        %v2103 = vmul.f32 %v2078, %v2102
        %v2104 = vmin.f32 %v2103, 1.0
        %v2105 = vmax.f32 %v2104, -1.0
        %v2106 = vmul.f32 %v1801, %v1801
        %v2107 = vmin.f32 16.0, %v2106
        %v2108 = vmul.f32 %v2107, 2.1237322e-06
        %v2109 = vadd.f32 %v2108, 0.00028619796
        %v2110 = vmul.f32 %v2107, %v2109
        %v2111 = vadd.f32 %v2110, 0.0036580483
        %v2112 = vmul.f32 %v2107, %v2111
        %v2113 = vadd.f32 %v2112, 0.05243302
        %v2114 = vmul.f32 %v2107, %v2113
        %v2115 = vadd.f32 %v2114, 0.18741608
        %v2116 = vmul.f32 %v2107, %v2115
        %v2117 = vadd.f32 %v2116, 1.1283791
        %v2118 = vmul.f32 %v1801, %v2117
        %v2119 = vmul.f32 %v2107, 3.8918573e-05
        %v2120 = vadd.f32 %v2119, 0.001143296
        %v2121 = vmul.f32 %v2107, %v2120
        %v2122 = vadd.f32 %v2121, 0.014752088
        %v2123 = vmul.f32 %v2107, %v2122
        %v2124 = vadd.f32 %v2123, 0.112945676
        %v2125 = vmul.f32 %v2107, %v2124
        %v2126 = vadd.f32 %v2125, 0.4994258
        %v2127 = vmul.f32 %v2107, %v2126
        %v2128 = vadd.f32 %v2127, 1.0
        %v2129 = vrcp.pop %v2128
        %v2130 = vmul.f32 %v2128, %v2129
        %v2131 = vsub.f32 1.0, %v2130
        %v2132 = vmul.f32 %v2129, %v2131
        %v2133 = vadd.f32 %v2129, %v2132
        %vm2134 = vweird.f32 %v2128
        %vm2135 = vweird.f32 %v2129
        %vm2136 = vmor %vm2134, %vm2135
        %v2137 = vsel %vm2136, %v2129, %v2133
        %v2138 = vand.u32 2147483647, %v2128
        %vm2139 = vcmp.eq.f32.partialorder %v2138, 8.507059e+37
        %v2140 = vand.u32 %v2128, 2147483648
        %v2141 = vor.u32 1.1754944e-38, %v2140
        %v2142 = vsel %vm2139, %v2141, %v2137
        %v2143 = vmul.f32 %v2118, %v2142
        %v2144 = vmin.f32 %v2143, 1.0
        %v2145 = vmax.f32 %v2144, -1.0
        %v2146 = vmul.f32 %v1802, %v1802
        %v2147 = vmin.f32 16.0, %v2146
        %v2148 = vmul.f32 %v2147, 2.1237322e-06
        %v2149 = vadd.f32 %v2148, 0.00028619796
        %v2150 = vmul.f32 %v2147, %v2149
        %v2151 = vadd.f32 %v2150, 0.0036580483
        %v2152 = vmul.f32 %v2147, %v2151
        %v2153 = vadd.f32 %v2152, 0.05243302
        %v2154 = vmul.f32 %v2147, %v2153
        %v2155 = vadd.f32 %v2154, 0.18741608
        %v2156 = vmul.f32 %v2147, %v2155
        %v2157 = vadd.f32 %v2156, 1.1283791
        %v2158 = vmul.f32 %v1802, %v2157
        %v2159 = vmul.f32 %v2147, 3.8918573e-05
        %v2160 = vadd.f32 %v2159, 0.001143296
        %v2161 = vmul.f32 %v2147, %v2160
        %v2162 = vadd.f32 %v2161, 0.014752088
        %v2163 = vmul.f32 %v2147, %v2162
        %v2164 = vadd.f32 %v2163, 0.112945676
        %v2165 = vmul.f32 %v2147, %v2164
        %v2166 = vadd.f32 %v2165, 0.4994258
        %v2167 = vmul.f32 %v2147, %v2166
        %v2168 = vadd.f32 %v2167, 1.0
        %v2169 = vrcp.pop %v2168
        %v2170 = vmul.f32 %v2168, %v2169
        %v2171 = vsub.f32 1.0, %v2170
        %v2172 = vmul.f32 %v2169, %v2171
        %v2173 = vadd.f32 %v2169, %v2172
        %vm2174 = vweird.f32 %v2168
        %vm2175 = vweird.f32 %v2169
        %vm2176 = vmor %vm2174, %vm2175
        %v2177 = vsel %vm2176, %v2169, %v2173
        %v2178 = vand.u32 2147483647, %v2168
        %vm2179 = vcmp.eq.f32.partialorder %v2178, 8.507059e+37
        %v2180 = vand.u32 %v2168, 2147483648
        %v2181 = vor.u32 1.1754944e-38, %v2180
        %v2182 = vsel %vm2179, %v2181, %v2177
        %v2183 = vmul.f32 %v2158, %v2182
        %v2184 = vmin.f32 %v2183, 1.0
        %v2185 = vmax.f32 %v2184, -1.0
        %v2186 = vmul.f32 %v1803, %v1803
        %v2187 = vmin.f32 16.0, %v2186
        %v2188 = vmul.f32 %v2187, 2.1237322e-06
        %v2189 = vadd.f32 %v2188, 0.00028619796
        %v2190 = vmul.f32 %v2187, %v2189
        %v2191 = vadd.f32 %v2190, 0.0036580483
        %v2192 = vmul.f32 %v2187, %v2191
        %v2193 = vadd.f32 %v2192, 0.05243302
        %v2194 = vmul.f32 %v2187, %v2193
        %v2195 = vadd.f32 %v2194, 0.18741608
        %v2196 = vmul.f32 %v2187, %v2195
        %v2197 = vadd.f32 %v2196, 1.1283791
        %v2198 = vmul.f32 %v1803, %v2197
        %v2199 = vmul.f32 %v2187, 3.8918573e-05
        %v2200 = vadd.f32 %v2199, 0.001143296
        %v2201 = vmul.f32 %v2187, %v2200
        %v2202 = vadd.f32 %v2201, 0.014752088
        %v2203 = vmul.f32 %v2187, %v2202
        %v2204 = vadd.f32 %v2203, 0.112945676
        %v2205 = vmul.f32 %v2187, %v2204
        %v2206 = vadd.f32 %v2205, 0.4994258
        %v2207 = vmul.f32 %v2187, %v2206
        %v2208 = vadd.f32 %v2207, 1.0
        %v2209 = vrcp.pop %v2208
        %v2210 = vmul.f32 %v2208, %v2209
        %v2211 = vsub.f32 1.0, %v2210
        %v2212 = vmul.f32 %v2209, %v2211
        %v2213 = vadd.f32 %v2209, %v2212
        %vm2214 = vweird.f32 %v2208
        %vm2215 = vweird.f32 %v2209
        %vm2216 = vmor %vm2214, %vm2215
        %v2217 = vsel %vm2216, %v2209, %v2213
        %v2218 = vand.u32 2147483647, %v2208
        %vm2219 = vcmp.eq.f32.partialorder %v2218, 8.507059e+37
        %v2220 = vand.u32 %v2208, 2147483648
        %v2221 = vor.u32 1.1754944e-38, %v2220
        %v2222 = vsel %vm2219, %v2221, %v2217
        %v2223 = vmul.f32 %v2198, %v2222
        %v2224 = vmin.f32 %v2223, 1.0
        %v2225 = vmax.f32 %v2224, -1.0
        %v2226 = vmul.f32 %v1804, %v1804
        %v2227 = vmin.f32 16.0, %v2226
        %v2228 = vmul.f32 %v2227, 2.1237322e-06
        %v2229 = vadd.f32 %v2228, 0.00028619796
        %v2230 = vmul.f32 %v2227, %v2229
        %v2231 = vadd.f32 %v2230, 0.0036580483
        %v2232 = vmul.f32 %v2227, %v2231
        %v2233 = vadd.f32 %v2232, 0.05243302
        %v2234 = vmul.f32 %v2227, %v2233
        %v2235 = vadd.f32 %v2234, 0.18741608
        %v2236 = vmul.f32 %v2227, %v2235
        %v2237 = vadd.f32 %v2236, 1.1283791
        %v2238 = vmul.f32 %v1804, %v2237
        %v2239 = vmul.f32 %v2227, 3.8918573e-05
        %v2240 = vadd.f32 %v2239, 0.001143296
        %v2241 = vmul.f32 %v2227, %v2240
        %v2242 = vadd.f32 %v2241, 0.014752088
        %v2243 = vmul.f32 %v2227, %v2242
        %v2244 = vadd.f32 %v2243, 0.112945676
        %v2245 = vmul.f32 %v2227, %v2244
        %v2246 = vadd.f32 %v2245, 0.4994258
        %v2247 = vmul.f32 %v2227, %v2246
        %v2248 = vadd.f32 %v2247, 1.0
        %v2249 = vrcp.pop %v2248
        %v2250 = vmul.f32 %v2248, %v2249
        %v2251 = vsub.f32 1.0, %v2250
        %v2252 = vmul.f32 %v2249, %v2251
        %v2253 = vadd.f32 %v2249, %v2252
        %vm2254 = vweird.f32 %v2248
        %vm2255 = vweird.f32 %v2249
        %vm2256 = vmor %vm2254, %vm2255
        %v2257 = vsel %vm2256, %v2249, %v2253
        %v2258 = vand.u32 2147483647, %v2248
        %vm2259 = vcmp.eq.f32.partialorder %v2258, 8.507059e+37
        %v2260 = vand.u32 %v2248, 2147483648
        %v2261 = vor.u32 1.1754944e-38, %v2260
        %v2262 = vsel %vm2259, %v2261, %v2257
        %v2263 = vmul.f32 %v2238, %v2262
        %v2264 = vmin.f32 %v2263, 1.0
        %v2265 = vmax.f32 %v2264, -1.0
        %v2266 = vmul.f32 %v1805, %v1805
        %v2267 = vmin.f32 16.0, %v2266
        %v2268 = vmul.f32 %v2267, 2.1237322e-06
        %v2269 = vadd.f32 %v2268, 0.00028619796
        %v2270 = vmul.f32 %v2267, %v2269
        %v2271 = vadd.f32 %v2270, 0.0036580483
        %v2272 = vmul.f32 %v2267, %v2271
        %v2273 = vadd.f32 %v2272, 0.05243302
        %v2274 = vmul.f32 %v2267, %v2273
        %v2275 = vadd.f32 %v2274, 0.18741608
        %v2276 = vmul.f32 %v2267, %v2275
        %v2277 = vadd.f32 %v2276, 1.1283791
        %v2278 = vmul.f32 %v1805, %v2277
        %v2279 = vmul.f32 %v2267, 3.8918573e-05
        %v2280 = vadd.f32 %v2279, 0.001143296
        %v2281 = vmul.f32 %v2267, %v2280
        %v2282 = vadd.f32 %v2281, 0.014752088
        %v2283 = vmul.f32 %v2267, %v2282
        %v2284 = vadd.f32 %v2283, 0.112945676
        %v2285 = vmul.f32 %v2267, %v2284
        %v2286 = vadd.f32 %v2285, 0.4994258
        %v2287 = vmul.f32 %v2267, %v2286
        %v2288 = vadd.f32 %v2287, 1.0
        %v2289 = vrcp.pop %v2288
        %v2290 = vmul.f32 %v2288, %v2289
        %v2291 = vsub.f32 1.0, %v2290
        %v2292 = vmul.f32 %v2289, %v2291
        %v2293 = vadd.f32 %v2289, %v2292
        %vm2294 = vweird.f32 %v2288
        %vm2295 = vweird.f32 %v2289
        %vm2296 = vmor %vm2294, %vm2295
        %v2297 = vsel %vm2296, %v2289, %v2293
        %v2298 = vand.u32 2147483647, %v2288
        %vm2299 = vcmp.eq.f32.partialorder %v2298, 8.507059e+37
        %v2300 = vand.u32 %v2288, 2147483648
        %v2301 = vor.u32 1.1754944e-38, %v2300
        %v2302 = vsel %vm2299, %v2301, %v2297
        %v2303 = vmul.f32 %v2278, %v2302
        %v2304 = vmin.f32 %v2303, 1.0
        %v2305 = vmax.f32 %v2304, -1.0
        %v2306 = vmul.f32 %v1806, %v1806
        %v2307 = vmin.f32 16.0, %v2306
        %v2308 = vmul.f32 %v2307, 2.1237322e-06
        %v2309 = vadd.f32 %v2308, 0.00028619796
        %v2310 = vmul.f32 %v2307, %v2309
        %v2311 = vadd.f32 %v2310, 0.0036580483
        %v2312 = vmul.f32 %v2307, %v2311
        %v2313 = vadd.f32 %v2312, 0.05243302
        %v2314 = vmul.f32 %v2307, %v2313
        %v2315 = vadd.f32 %v2314, 0.18741608
        %v2316 = vmul.f32 %v2307, %v2315
        %v2317 = vadd.f32 %v2316, 1.1283791
        %v2318 = vmul.f32 %v1806, %v2317
        %v2319 = vmul.f32 %v2307, 3.8918573e-05
        %v2320 = vadd.f32 %v2319, 0.001143296
        %v2321 = vmul.f32 %v2307, %v2320
        %v2322 = vadd.f32 %v2321, 0.014752088
        %v2323 = vmul.f32 %v2307, %v2322
        %v2324 = vadd.f32 %v2323, 0.112945676
        %v2325 = vmul.f32 %v2307, %v2324
        %v2326 = vadd.f32 %v2325, 0.4994258
        %v2327 = vmul.f32 %v2307, %v2326
        %v2328 = vadd.f32 %v2327, 1.0
        %v2329 = vrcp.pop %v2328
        %v2330 = vmul.f32 %v2328, %v2329
        %v2331 = vsub.f32 1.0, %v2330
        %v2332 = vmul.f32 %v2329, %v2331
        %v2333 = vadd.f32 %v2329, %v2332
        %vm2334 = vweird.f32 %v2328
        %vm2335 = vweird.f32 %v2329
        %vm2336 = vmor %vm2334, %vm2335
        %v2337 = vsel %vm2336, %v2329, %v2333
        %v2338 = vand.u32 2147483647, %v2328
        %vm2339 = vcmp.eq.f32.partialorder %v2338, 8.507059e+37
        %v2340 = vand.u32 %v2328, 2147483648
        %v2341 = vor.u32 1.1754944e-38, %v2340
        %v2342 = vsel %vm2339, %v2341, %v2337
        %v2343 = vmul.f32 %v2318, %v2342
        %v2344 = vmin.f32 %v2343, 1.0
        %v2345 = vmax.f32 %v2344, -1.0
        %v2346 = vmul.f32 %v1807, %v1807
        %v2347 = vmin.f32 16.0, %v2346
        %v2348 = vmul.f32 %v2347, 2.1237322e-06
        %v2349 = vadd.f32 %v2348, 0.00028619796
        %v2350 = vmul.f32 %v2347, %v2349
        %v2351 = vadd.f32 %v2350, 0.0036580483
        %v2352 = vmul.f32 %v2347, %v2351
        %v2353 = vadd.f32 %v2352, 0.05243302
        %v2354 = vmul.f32 %v2347, %v2353
        %v2355 = vadd.f32 %v2354, 0.18741608
        %v2356 = vmul.f32 %v2347, %v2355
        %v2357 = vadd.f32 %v2356, 1.1283791
        %v2358 = vmul.f32 %v1807, %v2357
        %v2359 = vmul.f32 %v2347, 3.8918573e-05
        %v2360 = vadd.f32 %v2359, 0.001143296
        %v2361 = vmul.f32 %v2347, %v2360
        %v2362 = vadd.f32 %v2361, 0.014752088
        %v2363 = vmul.f32 %v2347, %v2362
        %v2364 = vadd.f32 %v2363, 0.112945676
        %v2365 = vmul.f32 %v2347, %v2364
        %v2366 = vadd.f32 %v2365, 0.4994258
        %v2367 = vmul.f32 %v2347, %v2366
        %v2368 = vadd.f32 %v2367, 1.0
        %v2369 = vrcp.pop %v2368
        %v2370 = vmul.f32 %v2368, %v2369
        %v2371 = vsub.f32 1.0, %v2370
        %v2372 = vmul.f32 %v2369, %v2371
        %v2373 = vadd.f32 %v2369, %v2372
        %vm2374 = vweird.f32 %v2368
        %vm2375 = vweird.f32 %v2369
        %vm2376 = vmor %vm2374, %vm2375
        %v2377 = vsel %vm2376, %v2369, %v2373
        %v2378 = vand.u32 2147483647, %v2368
        %vm2379 = vcmp.eq.f32.partialorder %v2378, 8.507059e+37
        %v2380 = vand.u32 %v2368, 2147483648
        %v2381 = vor.u32 1.1754944e-38, %v2380
        %v2382 = vsel %vm2379, %v2381, %v2377
        %v2383 = vmul.f32 %v2358, %v2382
        %v2384 = vmin.f32 %v2383, 1.0
        %v2385 = vmax.f32 %v2384, -1.0
        %v2386 = vmul.f32 %v1808, %v1808
        %v2387 = vmin.f32 16.0, %v2386
        %v2388 = vmul.f32 %v2387, 2.1237322e-06
        %v2389 = vadd.f32 %v2388, 0.00028619796
        %v2390 = vmul.f32 %v2387, %v2389
        %v2391 = vadd.f32 %v2390, 0.0036580483
        %v2392 = vmul.f32 %v2387, %v2391
        %v2393 = vadd.f32 %v2392, 0.05243302
        %v2394 = vmul.f32 %v2387, %v2393
        %v2395 = vadd.f32 %v2394, 0.18741608
        %v2396 = vmul.f32 %v2387, %v2395
        %v2397 = vadd.f32 %v2396, 1.1283791
        %v2398 = vmul.f32 %v1808, %v2397
        %v2399 = vmul.f32 %v2387, 3.8918573e-05
        %v2400 = vadd.f32 %v2399, 0.001143296
        %v2401 = vmul.f32 %v2387, %v2400
        %v2402 = vadd.f32 %v2401, 0.014752088
        %v2403 = vmul.f32 %v2387, %v2402
        %v2404 = vadd.f32 %v2403, 0.112945676
        %v2405 = vmul.f32 %v2387, %v2404
        %v2406 = vadd.f32 %v2405, 0.4994258
        %v2407 = vmul.f32 %v2387, %v2406
        %v2408 = vadd.f32 %v2407, 1.0
        %v2409 = vrcp.pop %v2408
        %v2410 = vmul.f32 %v2408, %v2409
        %v2411 = vsub.f32 1.0, %v2410
        %v2412 = vmul.f32 %v2409, %v2411
        %v2413 = vadd.f32 %v2409, %v2412
        %vm2414 = vweird.f32 %v2408
        %vm2415 = vweird.f32 %v2409
        %vm2416 = vmor %vm2414, %vm2415
        %v2417 = vsel %vm2416, %v2409, %v2413
        %v2418 = vand.u32 2147483647, %v2408
        %vm2419 = vcmp.eq.f32.partialorder %v2418, 8.507059e+37
        %v2420 = vand.u32 %v2408, 2147483648
        %v2421 = vor.u32 1.1754944e-38, %v2420
        %v2422 = vsel %vm2419, %v2421, %v2417
        %v2423 = vmul.f32 %v2398, %v2422
        %v2424 = vmin.f32 %v2423, 1.0
        %v2425 = vmax.f32 %v2424, -1.0
        %v2426 = vmul.f32 %v1809, %v1809
        %v2427 = vmin.f32 16.0, %v2426
        %v2428 = vmul.f32 %v2427, 2.1237322e-06
        %v2429 = vadd.f32 %v2428, 0.00028619796
        %v2430 = vmul.f32 %v2427, %v2429
        %v2431 = vadd.f32 %v2430, 0.0036580483
        %v2432 = vmul.f32 %v2427, %v2431
        %v2433 = vadd.f32 %v2432, 0.05243302
        %v2434 = vmul.f32 %v2427, %v2433
        %v2435 = vadd.f32 %v2434, 0.18741608
        %v2436 = vmul.f32 %v2427, %v2435
        %v2437 = vadd.f32 %v2436, 1.1283791
        %v2438 = vmul.f32 %v1809, %v2437
        %v2439 = vmul.f32 %v2427, 3.8918573e-05
        %v2440 = vadd.f32 %v2439, 0.001143296
        %v2441 = vmul.f32 %v2427, %v2440
        %v2442 = vadd.f32 %v2441, 0.014752088
        %v2443 = vmul.f32 %v2427, %v2442
        %v2444 = vadd.f32 %v2443, 0.112945676
        %v2445 = vmul.f32 %v2427, %v2444
        %v2446 = vadd.f32 %v2445, 0.4994258
        %v2447 = vmul.f32 %v2427, %v2446
        %v2448 = vadd.f32 %v2447, 1.0
        %v2449 = vrcp.pop %v2448
        %v2450 = vmul.f32 %v2448, %v2449
        %v2451 = vsub.f32 1.0, %v2450
        %v2452 = vmul.f32 %v2449, %v2451
        %v2453 = vadd.f32 %v2449, %v2452
        %vm2454 = vweird.f32 %v2448
        %vm2455 = vweird.f32 %v2449
        %vm2456 = vmor %vm2454, %vm2455
        %v2457 = vsel %vm2456, %v2449, %v2453
        %v2458 = vand.u32 2147483647, %v2448
        %vm2459 = vcmp.eq.f32.partialorder %v2458, 8.507059e+37
        %v2460 = vand.u32 %v2448, 2147483648
        %v2461 = vor.u32 1.1754944e-38, %v2460
        %v2462 = vsel %vm2459, %v2461, %v2457
        %v2463 = vmul.f32 %v2438, %v2462
        %v2464 = vmin.f32 %v2463, 1.0
        %v2465 = vmax.f32 %v2464, -1.0
        %v2466 = vmul.f32 %v1810, %v1810
        %v2467 = vmin.f32 16.0, %v2466
        %v2468 = vmul.f32 %v2467, 2.1237322e-06
        %v2469 = vadd.f32 %v2468, 0.00028619796
        %v2470 = vmul.f32 %v2467, %v2469
        %v2471 = vadd.f32 %v2470, 0.0036580483
        %v2472 = vmul.f32 %v2467, %v2471
        %v2473 = vadd.f32 %v2472, 0.05243302
        %v2474 = vmul.f32 %v2467, %v2473
        %v2475 = vadd.f32 %v2474, 0.18741608
        %v2476 = vmul.f32 %v2467, %v2475
        %v2477 = vadd.f32 %v2476, 1.1283791
        %v2478 = vmul.f32 %v1810, %v2477
        %v2479 = vmul.f32 %v2467, 3.8918573e-05
        %v2480 = vadd.f32 %v2479, 0.001143296
        %v2481 = vmul.f32 %v2467, %v2480
        %v2482 = vadd.f32 %v2481, 0.014752088
        %v2483 = vmul.f32 %v2467, %v2482
        %v2484 = vadd.f32 %v2483, 0.112945676
        %v2485 = vmul.f32 %v2467, %v2484
        %v2486 = vadd.f32 %v2485, 0.4994258
        %v2487 = vmul.f32 %v2467, %v2486
        %v2488 = vadd.f32 %v2487, 1.0
        %v2489 = vrcp.pop %v2488
        %v2490 = vmul.f32 %v2488, %v2489
        %v2491 = vsub.f32 1.0, %v2490
        %v2492 = vmul.f32 %v2489, %v2491
        %v2493 = vadd.f32 %v2489, %v2492
        %vm2494 = vweird.f32 %v2488
        %vm2495 = vweird.f32 %v2489
        %vm2496 = vmor %vm2494, %vm2495
        %v2497 = vsel %vm2496, %v2489, %v2493
        %v2498 = vand.u32 2147483647, %v2488
        %vm2499 = vcmp.eq.f32.partialorder %v2498, 8.507059e+37
        %v2500 = vand.u32 %v2488, 2147483648
        %v2501 = vor.u32 1.1754944e-38, %v2500
        %v2502 = vsel %vm2499, %v2501, %v2497
        %v2503 = vmul.f32 %v2478, %v2502
        %v2504 = vmin.f32 %v2503, 1.0
        %v2505 = vmax.f32 %v2504, -1.0
        %v2506 = vmul.f32 %v1811, %v1811
        %v2507 = vmin.f32 16.0, %v2506
        %v2508 = vmul.f32 %v2507, 2.1237322e-06
        %v2509 = vadd.f32 %v2508, 0.00028619796
        %v2510 = vmul.f32 %v2507, %v2509
        %v2511 = vadd.f32 %v2510, 0.0036580483
        %v2512 = vmul.f32 %v2507, %v2511
        %v2513 = vadd.f32 %v2512, 0.05243302
        %v2514 = vmul.f32 %v2507, %v2513
        %v2515 = vadd.f32 %v2514, 0.18741608
        %v2516 = vmul.f32 %v2507, %v2515
        %v2517 = vadd.f32 %v2516, 1.1283791
        %v2518 = vmul.f32 %v1811, %v2517
        %v2519 = vmul.f32 %v2507, 3.8918573e-05
        %v2520 = vadd.f32 %v2519, 0.001143296
        %v2521 = vmul.f32 %v2507, %v2520
        %v2522 = vadd.f32 %v2521, 0.014752088
        %v2523 = vmul.f32 %v2507, %v2522
        %v2524 = vadd.f32 %v2523, 0.112945676
        %v2525 = vmul.f32 %v2507, %v2524
        %v2526 = vadd.f32 %v2525, 0.4994258
        %v2527 = vmul.f32 %v2507, %v2526
        %v2528 = vadd.f32 %v2527, 1.0
        %v2529 = vrcp.pop %v2528
        %v2530 = vmul.f32 %v2528, %v2529
        %v2531 = vsub.f32 1.0, %v2530
        %v2532 = vmul.f32 %v2529, %v2531
        %v2533 = vadd.f32 %v2529, %v2532
        %vm2534 = vweird.f32 %v2528
        %vm2535 = vweird.f32 %v2529
        %vm2536 = vmor %vm2534, %vm2535
        %v2537 = vsel %vm2536, %v2529, %v2533
        %v2538 = vand.u32 2147483647, %v2528
        %vm2539 = vcmp.eq.f32.partialorder %v2538, 8.507059e+37
        %v2540 = vand.u32 %v2528, 2147483648
        %v2541 = vor.u32 1.1754944e-38, %v2540
        %v2542 = vsel %vm2539, %v2541, %v2537
        %v2543 = vmul.f32 %v2518, %v2542
        %v2544 = vmin.f32 %v2543, 1.0
        %v2545 = vmax.f32 %v2544, -1.0
        %v2546 = vmul.f32 %v1812, %v1812
        %v2547 = vmin.f32 16.0, %v2546
        %v2548 = vmul.f32 %v2547, 2.1237322e-06
        %v2549 = vadd.f32 %v2548, 0.00028619796
        %v2550 = vmul.f32 %v2547, %v2549
        %v2551 = vadd.f32 %v2550, 0.0036580483
        %v2552 = vmul.f32 %v2547, %v2551
        %v2553 = vadd.f32 %v2552, 0.05243302
        %v2554 = vmul.f32 %v2547, %v2553
        %v2555 = vadd.f32 %v2554, 0.18741608
        %v2556 = vmul.f32 %v2547, %v2555
        %v2557 = vadd.f32 %v2556, 1.1283791
        %v2558 = vmul.f32 %v1812, %v2557
        %v2559 = vmul.f32 %v2547, 3.8918573e-05
        %v2560 = vadd.f32 %v2559, 0.001143296
        %v2561 = vmul.f32 %v2547, %v2560
        %v2562 = vadd.f32 %v2561, 0.014752088
        %v2563 = vmul.f32 %v2547, %v2562
        %v2564 = vadd.f32 %v2563, 0.112945676
        %v2565 = vmul.f32 %v2547, %v2564
        %v2566 = vadd.f32 %v2565, 0.4994258
        %v2567 = vmul.f32 %v2547, %v2566
        %v2568 = vadd.f32 %v2567, 1.0
        %v2569 = vrcp.pop %v2568
        %v2570 = vmul.f32 %v2568, %v2569
        %v2571 = vsub.f32 1.0, %v2570
        %v2572 = vmul.f32 %v2569, %v2571
        %v2573 = vadd.f32 %v2569, %v2572
        %vm2574 = vweird.f32 %v2568
        %vm2575 = vweird.f32 %v2569
        %vm2576 = vmor %vm2574, %vm2575
        %v2577 = vsel %vm2576, %v2569, %v2573
        %v2578 = vand.u32 2147483647, %v2568
        %vm2579 = vcmp.eq.f32.partialorder %v2578, 8.507059e+37
        %v2580 = vand.u32 %v2568, 2147483648
        %v2581 = vor.u32 1.1754944e-38, %v2580
        %v2582 = vsel %vm2579, %v2581, %v2577
        %v2583 = vmul.f32 %v2558, %v2582
        %v2584 = vmin.f32 %v2583, 1.0
        %v2585 = vmax.f32 %v2584, -1.0
        %v2586 = vmul.f32 %v1813, %v1813
        %v2587 = vmin.f32 16.0, %v2586
        %v2588 = vmul.f32 %v2587, 2.1237322e-06
        %v2589 = vadd.f32 %v2588, 0.00028619796
        %v2590 = vmul.f32 %v2587, %v2589
        %v2591 = vadd.f32 %v2590, 0.0036580483
        %v2592 = vmul.f32 %v2587, %v2591
        %v2593 = vadd.f32 %v2592, 0.05243302
        %v2594 = vmul.f32 %v2587, %v2593
        %v2595 = vadd.f32 %v2594, 0.18741608
        %v2596 = vmul.f32 %v2587, %v2595
        %v2597 = vadd.f32 %v2596, 1.1283791
        %v2598 = vmul.f32 %v1813, %v2597
        %v2599 = vmul.f32 %v2587, 3.8918573e-05
        %v2600 = vadd.f32 %v2599, 0.001143296
        %v2601 = vmul.f32 %v2587, %v2600
        %v2602 = vadd.f32 %v2601, 0.014752088
        %v2603 = vmul.f32 %v2587, %v2602
        %v2604 = vadd.f32 %v2603, 0.112945676
        %v2605 = vmul.f32 %v2587, %v2604
        %v2606 = vadd.f32 %v2605, 0.4994258
        %v2607 = vmul.f32 %v2587, %v2606
        %v2608 = vadd.f32 %v2607, 1.0
        %v2609 = vrcp.pop %v2608
        %v2610 = vmul.f32 %v2608, %v2609
        %v2611 = vsub.f32 1.0, %v2610
        %v2612 = vmul.f32 %v2609, %v2611
        %v2613 = vadd.f32 %v2609, %v2612
        %vm2614 = vweird.f32 %v2608
        %vm2615 = vweird.f32 %v2609
        %vm2616 = vmor %vm2614, %vm2615
        %v2617 = vsel %vm2616, %v2609, %v2613
        %v2618 = vand.u32 2147483647, %v2608
        %vm2619 = vcmp.eq.f32.partialorder %v2618, 8.507059e+37
        %v2620 = vand.u32 %v2608, 2147483648
        %v2621 = vor.u32 1.1754944e-38, %v2620
        %v2622 = vsel %vm2619, %v2621, %v2617
        %v2623 = vmul.f32 %v2598, %v2622
        %v2624 = vmin.f32 %v2623, 1.0
        %v2625 = vmax.f32 %v2624, -1.0
        %v2626 = vmul.f32 %v1814, %v1814
        %v2627 = vmin.f32 16.0, %v2626
        %v2628 = vmul.f32 %v2627, 2.1237322e-06
        %v2629 = vadd.f32 %v2628, 0.00028619796
        %v2630 = vmul.f32 %v2627, %v2629
        %v2631 = vadd.f32 %v2630, 0.0036580483
        %v2632 = vmul.f32 %v2627, %v2631
        %v2633 = vadd.f32 %v2632, 0.05243302
        %v2634 = vmul.f32 %v2627, %v2633
        %v2635 = vadd.f32 %v2634, 0.18741608
        %v2636 = vmul.f32 %v2627, %v2635
        %v2637 = vadd.f32 %v2636, 1.1283791
        %v2638 = vmul.f32 %v1814, %v2637
        %v2639 = vmul.f32 %v2627, 3.8918573e-05
        %v2640 = vadd.f32 %v2639, 0.001143296
        %v2641 = vmul.f32 %v2627, %v2640
        %v2642 = vadd.f32 %v2641, 0.014752088
        %v2643 = vmul.f32 %v2627, %v2642
        %v2644 = vadd.f32 %v2643, 0.112945676
        %v2645 = vmul.f32 %v2627, %v2644
        %v2646 = vadd.f32 %v2645, 0.4994258
        %v2647 = vmul.f32 %v2627, %v2646
        %v2648 = vadd.f32 %v2647, 1.0
        %v2649 = vrcp.pop %v2648
        %v2650 = vmul.f32 %v2648, %v2649
        %v2651 = vsub.f32 1.0, %v2650
        %v2652 = vmul.f32 %v2649, %v2651
        %v2653 = vadd.f32 %v2649, %v2652
        %vm2654 = vweird.f32 %v2648
        %vm2655 = vweird.f32 %v2649
        %vm2656 = vmor %vm2654, %vm2655
        %v2657 = vsel %vm2656, %v2649, %v2653
        %v2658 = vand.u32 2147483647, %v2648
        %vm2659 = vcmp.eq.f32.partialorder %v2658, 8.507059e+37
        %v2660 = vand.u32 %v2648, 2147483648
        %v2661 = vor.u32 1.1754944e-38, %v2660
        %v2662 = vsel %vm2659, %v2661, %v2657
        %v2663 = vmul.f32 %v2638, %v2662
        %v2664 = vmin.f32 %v2663, 1.0
        %v2665 = vmax.f32 %v2664, -1.0
        %v2666 = vmul.f32 %v1815, %v1815
        %v2667 = vmin.f32 16.0, %v2666
        %v2668 = vmul.f32 %v2667, 2.1237322e-06
        %v2669 = vadd.f32 %v2668, 0.00028619796
        %v2670 = vmul.f32 %v2667, %v2669
        %v2671 = vadd.f32 %v2670, 0.0036580483
        %v2672 = vmul.f32 %v2667, %v2671
        %v2673 = vadd.f32 %v2672, 0.05243302
        %v2674 = vmul.f32 %v2667, %v2673
        %v2675 = vadd.f32 %v2674, 0.18741608
        %v2676 = vmul.f32 %v2667, %v2675
        %v2677 = vadd.f32 %v2676, 1.1283791
        %v2678 = vmul.f32 %v1815, %v2677
        %v2679 = vmul.f32 %v2667, 3.8918573e-05
        %v2680 = vadd.f32 %v2679, 0.001143296
        %v2681 = vmul.f32 %v2667, %v2680
        %v2682 = vadd.f32 %v2681, 0.014752088
        %v2683 = vmul.f32 %v2667, %v2682
        %v2684 = vadd.f32 %v2683, 0.112945676
        %v2685 = vmul.f32 %v2667, %v2684
        %v2686 = vadd.f32 %v2685, 0.4994258
        %v2687 = vmul.f32 %v2667, %v2686
        %v2688 = vadd.f32 %v2687, 1.0
        %v2689 = vrcp.pop %v2688
        %v2690 = vmul.f32 %v2688, %v2689
        %v2691 = vsub.f32 1.0, %v2690
        %v2692 = vmul.f32 %v2689, %v2691
        %v2693 = vadd.f32 %v2689, %v2692
        %vm2694 = vweird.f32 %v2688
        %vm2695 = vweird.f32 %v2689
        %vm2696 = vmor %vm2694, %vm2695
        %v2697 = vsel %vm2696, %v2689, %v2693
        %v2698 = vand.u32 2147483647, %v2688
        %vm2699 = vcmp.eq.f32.partialorder %v2698, 8.507059e+37
        %v2700 = vand.u32 %v2688, 2147483648
        %v2701 = vor.u32 1.1754944e-38, %v2700
        %v2702 = vsel %vm2699, %v2701, %v2697
        %v2703 = vmul.f32 %v2678, %v2702
        %v2704 = vmin.f32 %v2703, 1.0
        %v2705 = vmax.f32 %v2704, -1.0
        %v2706 = vmul.f32 %v1816, %v1816
        %v2707 = vmin.f32 16.0, %v2706
        %v2708 = vmul.f32 %v2707, 2.1237322e-06
        %v2709 = vadd.f32 %v2708, 0.00028619796
        %v2710 = vmul.f32 %v2707, %v2709
        %v2711 = vadd.f32 %v2710, 0.0036580483
        %v2712 = vmul.f32 %v2707, %v2711
        %v2713 = vadd.f32 %v2712, 0.05243302
        %v2714 = vmul.f32 %v2707, %v2713
        %v2715 = vadd.f32 %v2714, 0.18741608
        %v2716 = vmul.f32 %v2707, %v2715
        %v2717 = vadd.f32 %v2716, 1.1283791
        %v2718 = vmul.f32 %v1816, %v2717
        %v2719 = vmul.f32 %v2707, 3.8918573e-05
        %v2720 = vadd.f32 %v2719, 0.001143296
        %v2721 = vmul.f32 %v2707, %v2720
        %v2722 = vadd.f32 %v2721, 0.014752088
        %v2723 = vmul.f32 %v2707, %v2722
        %v2724 = vadd.f32 %v2723, 0.112945676
        %v2725 = vmul.f32 %v2707, %v2724
        %v2726 = vadd.f32 %v2725, 0.4994258
        %v2727 = vmul.f32 %v2707, %v2726
        %v2728 = vadd.f32 %v2727, 1.0
        %v2729 = vrcp.pop %v2728
        %v2730 = vmul.f32 %v2728, %v2729
        %v2731 = vsub.f32 1.0, %v2730
        %v2732 = vmul.f32 %v2729, %v2731
        %v2733 = vadd.f32 %v2729, %v2732
        %vm2734 = vweird.f32 %v2728
        %vm2735 = vweird.f32 %v2729
        %vm2736 = vmor %vm2734, %vm2735
        %v2737 = vsel %vm2736, %v2729, %v2733
        %v2738 = vand.u32 2147483647, %v2728
        %vm2739 = vcmp.eq.f32.partialorder %v2738, 8.507059e+37
        %v2740 = vand.u32 %v2728, 2147483648
        %v2741 = vor.u32 1.1754944e-38, %v2740
        %v2742 = vsel %vm2739, %v2741, %v2737
        %v2743 = vmul.f32 %v2718, %v2742
        %v2744 = vmin.f32 %v2743, 1.0
        %v2745 = vmax.f32 %v2744, -1.0
        %v2746 = vmul.f32 %v1817, %v1817
        %v2747 = vmin.f32 16.0, %v2746
        %v2748 = vmul.f32 %v2747, 2.1237322e-06
        %v2749 = vadd.f32 %v2748, 0.00028619796
        %v2750 = vmul.f32 %v2747, %v2749
        %v2751 = vadd.f32 %v2750, 0.0036580483
        %v2752 = vmul.f32 %v2747, %v2751
        %v2753 = vadd.f32 %v2752, 0.05243302
        %v2754 = vmul.f32 %v2747, %v2753
        %v2755 = vadd.f32 %v2754, 0.18741608
        %v2756 = vmul.f32 %v2747, %v2755
        %v2757 = vadd.f32 %v2756, 1.1283791
        %v2758 = vmul.f32 %v1817, %v2757
        %v2759 = vmul.f32 %v2747, 3.8918573e-05
        %v2760 = vadd.f32 %v2759, 0.001143296
        %v2761 = vmul.f32 %v2747, %v2760
        %v2762 = vadd.f32 %v2761, 0.014752088
        %v2763 = vmul.f32 %v2747, %v2762
        %v2764 = vadd.f32 %v2763, 0.112945676
        %v2765 = vmul.f32 %v2747, %v2764
        %v2766 = vadd.f32 %v2765, 0.4994258
        %v2767 = vmul.f32 %v2747, %v2766
        %v2768 = vadd.f32 %v2767, 1.0
        %v2769 = vrcp.pop %v2768
        %v2770 = vmul.f32 %v2768, %v2769
        %v2771 = vsub.f32 1.0, %v2770
        %v2772 = vmul.f32 %v2769, %v2771
        %v2773 = vadd.f32 %v2769, %v2772
        %vm2774 = vweird.f32 %v2768
        %vm2775 = vweird.f32 %v2769
        %vm2776 = vmor %vm2774, %vm2775
        %v2777 = vsel %vm2776, %v2769, %v2773
        %v2778 = vand.u32 2147483647, %v2768
        %vm2779 = vcmp.eq.f32.partialorder %v2778, 8.507059e+37
        %v2780 = vand.u32 %v2768, 2147483648
        %v2781 = vor.u32 1.1754944e-38, %v2780
        %v2782 = vsel %vm2779, %v2781, %v2777
        %v2783 = vmul.f32 %v2758, %v2782
        %v2784 = vmin.f32 %v2783, 1.0
        %v2785 = vmax.f32 %v2784, -1.0
        %v2786 = vmul.f32 %v1818, %v1818
        %v2787 = vmin.f32 16.0, %v2786
        %v2788 = vmul.f32 %v2787, 2.1237322e-06
        %v2789 = vadd.f32 %v2788, 0.00028619796
        %v2790 = vmul.f32 %v2787, %v2789
        %v2791 = vadd.f32 %v2790, 0.0036580483
        %v2792 = vmul.f32 %v2787, %v2791
        %v2793 = vadd.f32 %v2792, 0.05243302
        %v2794 = vmul.f32 %v2787, %v2793
        %v2795 = vadd.f32 %v2794, 0.18741608
        %v2796 = vmul.f32 %v2787, %v2795
        %v2797 = vadd.f32 %v2796, 1.1283791
        %v2798 = vmul.f32 %v1818, %v2797
        %v2799 = vmul.f32 %v2787, 3.8918573e-05
        %v2800 = vadd.f32 %v2799, 0.001143296
        %v2801 = vmul.f32 %v2787, %v2800
        %v2802 = vadd.f32 %v2801, 0.014752088
        %v2803 = vmul.f32 %v2787, %v2802
        %v2804 = vadd.f32 %v2803, 0.112945676
        %v2805 = vmul.f32 %v2787, %v2804
        %v2806 = vadd.f32 %v2805, 0.4994258
        %v2807 = vmul.f32 %v2787, %v2806
        %v2808 = vadd.f32 %v2807, 1.0
        %v2809 = vrcp.pop %v2808
        %v2810 = vmul.f32 %v2808, %v2809
        %v2811 = vsub.f32 1.0, %v2810
        %v2812 = vmul.f32 %v2809, %v2811
        %v2813 = vadd.f32 %v2809, %v2812
        %vm2814 = vweird.f32 %v2808
        %vm2815 = vweird.f32 %v2809
        %vm2816 = vmor %vm2814, %vm2815
        %v2817 = vsel %vm2816, %v2809, %v2813
        %v2818 = vand.u32 2147483647, %v2808
        %vm2819 = vcmp.eq.f32.partialorder %v2818, 8.507059e+37
        %v2820 = vand.u32 %v2808, 2147483648
        %v2821 = vor.u32 1.1754944e-38, %v2820
        %v2822 = vsel %vm2819, %v2821, %v2817
        %v2823 = vmul.f32 %v2798, %v2822
        %v2824 = vmin.f32 %v2823, 1.0
        %v2825 = vmax.f32 %v2824, -1.0
        %v2826 = vmul.f32 %v1819, %v1819
        %v2827 = vmin.f32 16.0, %v2826
        %v2828 = vmul.f32 %v2827, 2.1237322e-06
        %v2829 = vadd.f32 %v2828, 0.00028619796
        %v2830 = vmul.f32 %v2827, %v2829
        %v2831 = vadd.f32 %v2830, 0.0036580483
        %v2832 = vmul.f32 %v2827, %v2831
        %v2833 = vadd.f32 %v2832, 0.05243302
        %v2834 = vmul.f32 %v2827, %v2833
        %v2835 = vadd.f32 %v2834, 0.18741608
        %v2836 = vmul.f32 %v2827, %v2835
        %v2837 = vadd.f32 %v2836, 1.1283791
        %v2838 = vmul.f32 %v1819, %v2837
        %v2839 = vmul.f32 %v2827, 3.8918573e-05
        %v2840 = vadd.f32 %v2839, 0.001143296
        %v2841 = vmul.f32 %v2827, %v2840
        %v2842 = vadd.f32 %v2841, 0.014752088
        %v2843 = vmul.f32 %v2827, %v2842
        %v2844 = vadd.f32 %v2843, 0.112945676
        %v2845 = vmul.f32 %v2827, %v2844
        %v2846 = vadd.f32 %v2845, 0.4994258
        %v2847 = vmul.f32 %v2827, %v2846
        %v2848 = vadd.f32 %v2847, 1.0
        %v2849 = vrcp.pop %v2848
        %v2850 = vmul.f32 %v2848, %v2849
        %v2851 = vsub.f32 1.0, %v2850
        %v2852 = vmul.f32 %v2849, %v2851
        %v2853 = vadd.f32 %v2849, %v2852
        %vm2854 = vweird.f32 %v2848
        %vm2855 = vweird.f32 %v2849
        %vm2856 = vmor %vm2854, %vm2855
        %v2857 = vsel %vm2856, %v2849, %v2853
        %v2858 = vand.u32 2147483647, %v2848
        %vm2859 = vcmp.eq.f32.partialorder %v2858, 8.507059e+37
        %v2860 = vand.u32 %v2848, 2147483648
        %v2861 = vor.u32 1.1754944e-38, %v2860
        %v2862 = vsel %vm2859, %v2861, %v2857
        %v2863 = vmul.f32 %v2838, %v2862
        %v2864 = vmin.f32 %v2863, 1.0
        %v2865 = vmax.f32 %v2864, -1.0
        %v2866 = vmul.f32 %v1820, %v1820
        %v2867 = vmin.f32 16.0, %v2866
        %v2868 = vmul.f32 %v2867, 2.1237322e-06
        %v2869 = vadd.f32 %v2868, 0.00028619796
        %v2870 = vmul.f32 %v2867, %v2869
        %v2871 = vadd.f32 %v2870, 0.0036580483
        %v2872 = vmul.f32 %v2867, %v2871
        %v2873 = vadd.f32 %v2872, 0.05243302
        %v2874 = vmul.f32 %v2867, %v2873
        %v2875 = vadd.f32 %v2874, 0.18741608
        %v2876 = vmul.f32 %v2867, %v2875
        %v2877 = vadd.f32 %v2876, 1.1283791
        %v2878 = vmul.f32 %v1820, %v2877
        %v2879 = vmul.f32 %v2867, 3.8918573e-05
        %v2880 = vadd.f32 %v2879, 0.001143296
        %v2881 = vmul.f32 %v2867, %v2880
        %v2882 = vadd.f32 %v2881, 0.014752088
        %v2883 = vmul.f32 %v2867, %v2882
        %v2884 = vadd.f32 %v2883, 0.112945676
        %v2885 = vmul.f32 %v2867, %v2884
        %v2886 = vadd.f32 %v2885, 0.4994258
        %v2887 = vmul.f32 %v2867, %v2886
        %v2888 = vadd.f32 %v2887, 1.0
        %v2889 = vrcp.pop %v2888
        %v2890 = vmul.f32 %v2888, %v2889
        %v2891 = vsub.f32 1.0, %v2890
        %v2892 = vmul.f32 %v2889, %v2891
        %v2893 = vadd.f32 %v2889, %v2892
        %vm2894 = vweird.f32 %v2888
        %vm2895 = vweird.f32 %v2889
        %vm2896 = vmor %vm2894, %vm2895
        %v2897 = vsel %vm2896, %v2889, %v2893
        %v2898 = vand.u32 2147483647, %v2888
        %vm2899 = vcmp.eq.f32.partialorder %v2898, 8.507059e+37
        %v2900 = vand.u32 %v2888, 2147483648
        %v2901 = vor.u32 1.1754944e-38, %v2900
        %v2902 = vsel %vm2899, %v2901, %v2897
        %v2903 = vmul.f32 %v2878, %v2902
        %v2904 = vmin.f32 %v2903, 1.0
        %v2905 = vmax.f32 %v2904, -1.0
        %v2906 = vmul.f32 %v1821, %v1821
        %v2907 = vmin.f32 16.0, %v2906
        %v2908 = vmul.f32 %v2907, 2.1237322e-06
        %v2909 = vadd.f32 %v2908, 0.00028619796
        %v2910 = vmul.f32 %v2907, %v2909
        %v2911 = vadd.f32 %v2910, 0.0036580483
        %v2912 = vmul.f32 %v2907, %v2911
        %v2913 = vadd.f32 %v2912, 0.05243302
        %v2914 = vmul.f32 %v2907, %v2913
        %v2915 = vadd.f32 %v2914, 0.18741608
        %v2916 = vmul.f32 %v2907, %v2915
        %v2917 = vadd.f32 %v2916, 1.1283791
        %v2918 = vmul.f32 %v1821, %v2917
        %v2919 = vmul.f32 %v2907, 3.8918573e-05
        %v2920 = vadd.f32 %v2919, 0.001143296
        %v2921 = vmul.f32 %v2907, %v2920
        %v2922 = vadd.f32 %v2921, 0.014752088
        %v2923 = vmul.f32 %v2907, %v2922
        %v2924 = vadd.f32 %v2923, 0.112945676
        %v2925 = vmul.f32 %v2907, %v2924
        %v2926 = vadd.f32 %v2925, 0.4994258
        %v2927 = vmul.f32 %v2907, %v2926
        %v2928 = vadd.f32 %v2927, 1.0
        %v2929 = vrcp.pop %v2928
        %v2930 = vmul.f32 %v2928, %v2929
        %v2931 = vsub.f32 1.0, %v2930
        %v2932 = vmul.f32 %v2929, %v2931
        %v2933 = vadd.f32 %v2929, %v2932
        %vm2934 = vweird.f32 %v2928
        %vm2935 = vweird.f32 %v2929
        %vm2936 = vmor %vm2934, %vm2935
        %v2937 = vsel %vm2936, %v2929, %v2933
        %v2938 = vand.u32 2147483647, %v2928
        %vm2939 = vcmp.eq.f32.partialorder %v2938, 8.507059e+37
        %v2940 = vand.u32 %v2928, 2147483648
        %v2941 = vor.u32 1.1754944e-38, %v2940
        %v2942 = vsel %vm2939, %v2941, %v2937
        %v2943 = vmul.f32 %v2918, %v2942
        %v2944 = vmin.f32 %v2943, 1.0
        %v2945 = vmax.f32 %v2944, -1.0
        %v2946 = vmul.f32 %v1822, %v1822
        %v2947 = vmin.f32 16.0, %v2946
        %v2948 = vmul.f32 %v2947, 2.1237322e-06
        %v2949 = vadd.f32 %v2948, 0.00028619796
        %v2950 = vmul.f32 %v2947, %v2949
        %v2951 = vadd.f32 %v2950, 0.0036580483
        %v2952 = vmul.f32 %v2947, %v2951
        %v2953 = vadd.f32 %v2952, 0.05243302
        %v2954 = vmul.f32 %v2947, %v2953
        %v2955 = vadd.f32 %v2954, 0.18741608
        %v2956 = vmul.f32 %v2947, %v2955
        %v2957 = vadd.f32 %v2956, 1.1283791
        %v2958 = vmul.f32 %v1822, %v2957
        %v2959 = vmul.f32 %v2947, 3.8918573e-05
        %v2960 = vadd.f32 %v2959, 0.001143296
        %v2961 = vmul.f32 %v2947, %v2960
        %v2962 = vadd.f32 %v2961, 0.014752088
        %v2963 = vmul.f32 %v2947, %v2962
        %v2964 = vadd.f32 %v2963, 0.112945676
        %v2965 = vmul.f32 %v2947, %v2964
        %v2966 = vadd.f32 %v2965, 0.4994258
        %v2967 = vmul.f32 %v2947, %v2966
        %v2968 = vadd.f32 %v2967, 1.0
        %v2969 = vrcp.pop %v2968
        %v2970 = vmul.f32 %v2968, %v2969
        %v2971 = vsub.f32 1.0, %v2970
        %v2972 = vmul.f32 %v2969, %v2971
        %v2973 = vadd.f32 %v2969, %v2972
        %vm2974 = vweird.f32 %v2968
        %vm2975 = vweird.f32 %v2969
        %vm2976 = vmor %vm2974, %vm2975
        %v2977 = vsel %vm2976, %v2969, %v2973
        %v2978 = vand.u32 2147483647, %v2968
        %vm2979 = vcmp.eq.f32.partialorder %v2978, 8.507059e+37
        %v2980 = vand.u32 %v2968, 2147483648
        %v2981 = vor.u32 1.1754944e-38, %v2980
        %v2982 = vsel %vm2979, %v2981, %v2977
        %v2983 = vmul.f32 %v2958, %v2982
        %v2984 = vmin.f32 %v2983, 1.0
        %v2985 = vmax.f32 %v2984, -1.0
        %v2986 = vmul.f32 %v1823, %v1823
        %v2987 = vmin.f32 16.0, %v2986
        %v2988 = vmul.f32 %v2987, 2.1237322e-06
        %v2989 = vadd.f32 %v2988, 0.00028619796
        %v2990 = vmul.f32 %v2987, %v2989
        %v2991 = vadd.f32 %v2990, 0.0036580483
        %v2992 = vmul.f32 %v2987, %v2991
        %v2993 = vadd.f32 %v2992, 0.05243302
        %v2994 = vmul.f32 %v2987, %v2993
        %v2995 = vadd.f32 %v2994, 0.18741608
        %v2996 = vmul.f32 %v2987, %v2995
        %v2997 = vadd.f32 %v2996, 1.1283791
        %v2998 = vmul.f32 %v1823, %v2997
        %v2999 = vmul.f32 %v2987, 3.8918573e-05
        %v3000 = vadd.f32 %v2999, 0.001143296
        %v3001 = vmul.f32 %v2987, %v3000
        %v3002 = vadd.f32 %v3001, 0.014752088
        %v3003 = vmul.f32 %v2987, %v3002
        %v3004 = vadd.f32 %v3003, 0.112945676
        %v3005 = vmul.f32 %v2987, %v3004
        %v3006 = vadd.f32 %v3005, 0.4994258
        %v3007 = vmul.f32 %v2987, %v3006
        %v3008 = vadd.f32 %v3007, 1.0
        %v3009 = vrcp.pop %v3008
        %v3010 = vmul.f32 %v3008, %v3009
        %v3011 = vsub.f32 1.0, %v3010
        %v3012 = vmul.f32 %v3009, %v3011
        %v3013 = vadd.f32 %v3009, %v3012
        %vm3014 = vweird.f32 %v3008
        %vm3015 = vweird.f32 %v3009
        %vm3016 = vmor %vm3014, %vm3015
        %v3017 = vsel %vm3016, %v3009, %v3013
        %v3018 = vand.u32 2147483647, %v3008
        %vm3019 = vcmp.eq.f32.partialorder %v3018, 8.507059e+37
        %v3020 = vand.u32 %v3008, 2147483648
        %v3021 = vor.u32 1.1754944e-38, %v3020
        %v3022 = vsel %vm3019, %v3021, %v3017
        %v3023 = vmul.f32 %v2998, %v3022
        %v3024 = vmin.f32 %v3023, 1.0
        %v3025 = vmax.f32 %v3024, -1.0
        %v3026 = vmul.f32 %v1824, %v1824
        %v3027 = vmin.f32 16.0, %v3026
        %v3028 = vmul.f32 %v3027, 2.1237322e-06
        %v3029 = vadd.f32 %v3028, 0.00028619796
        %v3030 = vmul.f32 %v3027, %v3029
        %v3031 = vadd.f32 %v3030, 0.0036580483
        %v3032 = vmul.f32 %v3027, %v3031
        %v3033 = vadd.f32 %v3032, 0.05243302
        %v3034 = vmul.f32 %v3027, %v3033
        %v3035 = vadd.f32 %v3034, 0.18741608
        %v3036 = vmul.f32 %v3027, %v3035
        %v3037 = vadd.f32 %v3036, 1.1283791
        %v3038 = vmul.f32 %v1824, %v3037
        %v3039 = vmul.f32 %v3027, 3.8918573e-05
        %v3040 = vadd.f32 %v3039, 0.001143296
        %v3041 = vmul.f32 %v3027, %v3040
        %v3042 = vadd.f32 %v3041, 0.014752088
        %v3043 = vmul.f32 %v3027, %v3042
        %v3044 = vadd.f32 %v3043, 0.112945676
        %v3045 = vmul.f32 %v3027, %v3044
        %v3046 = vadd.f32 %v3045, 0.4994258
        %v3047 = vmul.f32 %v3027, %v3046
        %v3048 = vadd.f32 %v3047, 1.0
        %v3049 = vrcp.pop %v3048
        %v3050 = vmul.f32 %v3048, %v3049
        %v3051 = vsub.f32 1.0, %v3050
        %v3052 = vmul.f32 %v3049, %v3051
        %v3053 = vadd.f32 %v3049, %v3052
        %vm3054 = vweird.f32 %v3048
        %vm3055 = vweird.f32 %v3049
        %vm3056 = vmor %vm3054, %vm3055
        %v3057 = vsel %vm3056, %v3049, %v3053
        %v3058 = vand.u32 2147483647, %v3048
        %vm3059 = vcmp.eq.f32.partialorder %v3058, 8.507059e+37
        %v3060 = vand.u32 %v3048, 2147483648
        %v3061 = vor.u32 1.1754944e-38, %v3060
        %v3062 = vsel %vm3059, %v3061, %v3057
        %v3063 = vmul.f32 %v3038, %v3062
        %v3064 = vmin.f32 %v3063, 1.0
        %v3065 = vmax.f32 %v3064, -1.0
        %v3066 = vmul.f32 %v1825, %v1825
        %v3067 = vmin.f32 16.0, %v3066
        %v3068 = vmul.f32 %v3067, 2.1237322e-06
        %v3069 = vadd.f32 %v3068, 0.00028619796
        %v3070 = vmul.f32 %v3067, %v3069
        %v3071 = vadd.f32 %v3070, 0.0036580483
        %v3072 = vmul.f32 %v3067, %v3071
        %v3073 = vadd.f32 %v3072, 0.05243302
        %v3074 = vmul.f32 %v3067, %v3073
        %v3075 = vadd.f32 %v3074, 0.18741608
        %v3076 = vmul.f32 %v3067, %v3075
        %v3077 = vadd.f32 %v3076, 1.1283791
        %v3078 = vmul.f32 %v1825, %v3077
        %v3079 = vmul.f32 %v3067, 3.8918573e-05
        %v3080 = vadd.f32 %v3079, 0.001143296
        %v3081 = vmul.f32 %v3067, %v3080
        %v3082 = vadd.f32 %v3081, 0.014752088
        %v3083 = vmul.f32 %v3067, %v3082
        %v3084 = vadd.f32 %v3083, 0.112945676
        %v3085 = vmul.f32 %v3067, %v3084
        %v3086 = vadd.f32 %v3085, 0.4994258
        %v3087 = vmul.f32 %v3067, %v3086
        %v3088 = vadd.f32 %v3087, 1.0
        %v3089 = vrcp.pop %v3088
        %v3090 = vmul.f32 %v3088, %v3089
        %v3091 = vsub.f32 1.0, %v3090
        %v3092 = vmul.f32 %v3089, %v3091
        %v3093 = vadd.f32 %v3089, %v3092
        %vm3094 = vweird.f32 %v3088
        %vm3095 = vweird.f32 %v3089
        %vm3096 = vmor %vm3094, %vm3095
        %v3097 = vsel %vm3096, %v3089, %v3093
        %v3098 = vand.u32 2147483647, %v3088
        %vm3099 = vcmp.eq.f32.partialorder %v3098, 8.507059e+37
        %v3100 = vand.u32 %v3088, 2147483648
        %v3101 = vor.u32 1.1754944e-38, %v3100
        %v3102 = vsel %vm3099, %v3101, %v3097
        %v3103 = vmul.f32 %v3078, %v3102
        %v3104 = vmin.f32 %v3103, 1.0
        %v3105 = vmax.f32 %v3104, -1.0
        %v3106 = vadd.f32 %v1865, 1.0
        %v3107 = vadd.f32 %v1905, 1.0
        %v3108 = vadd.f32 %v1945, 1.0
        %v3109 = vadd.f32 %v1985, 1.0
        %v3110 = vadd.f32 %v2025, 1.0
        %v3111 = vadd.f32 %v2065, 1.0
        %v3112 = vadd.f32 %v2105, 1.0
        %v3113 = vadd.f32 %v2145, 1.0
        %v3114 = vadd.f32 %v2185, 1.0
        %v3115 = vadd.f32 %v2225, 1.0
        %v3116 = vadd.f32 %v2265, 1.0
        %v3117 = vadd.f32 %v2305, 1.0
        %v3118 = vadd.f32 %v2345, 1.0
        %v3119 = vadd.f32 %v2385, 1.0
        %v3120 = vadd.f32 %v2425, 1.0
        %v3121 = vadd.f32 %v2465, 1.0
        %v3122 = vadd.f32 %v2505, 1.0
        %v3123 = vadd.f32 %v2545, 1.0
        %v3124 = vadd.f32 %v2585, 1.0
        %v3125 = vadd.f32 %v2625, 1.0
        %v3126 = vadd.f32 %v2665, 1.0
        %v3127 = vadd.f32 %v2705, 1.0
        %v3128 = vadd.f32 %v2745, 1.0
        %v3129 = vadd.f32 %v2785, 1.0
        %v3130 = vadd.f32 %v2825, 1.0
        %v3131 = vadd.f32 %v2865, 1.0
        %v3132 = vadd.f32 %v2905, 1.0
        %v3133 = vadd.f32 %v2945, 1.0
        %v3134 = vadd.f32 %v2985, 1.0
        %v3135 = vadd.f32 %v3025, 1.0
        %v3136 = vadd.f32 %v3065, 1.0
        %v3137 = vadd.f32 %v3105, 1.0
        %v3138 = vmul.f32 %v1762, %v3106
        %v3139 = vmul.f32 %v1763, %v3107
        %v3140 = vmul.f32 %v1764, %v3108
        %v3141 = vmul.f32 %v1765, %v3109
        %v3142 = vmul.f32 %v1766, %v3110
        %v3143 = vmul.f32 %v1767, %v3111
        %v3144 = vmul.f32 %v1768, %v3112
        %v3145 = vmul.f32 %v1769, %v3113
        %v3146 = vmul.f32 %v1770, %v3114
        %v3147 = vmul.f32 %v1771, %v3115
        %v3148 = vmul.f32 %v1772, %v3116
        %v3149 = vmul.f32 %v1773, %v3117
        %v3150 = vmul.f32 %v1774, %v3118
        %v3151 = vmul.f32 %v1775, %v3119
        %v3152 = vmul.f32 %v1776, %v3120
        %v3153 = vmul.f32 %v1777, %v3121
        %v3154 = vmul.f32 %v1778, %v3122
        %v3155 = vmul.f32 %v1779, %v3123
        %v3156 = vmul.f32 %v1780, %v3124
        %v3157 = vmul.f32 %v1781, %v3125
        %v3158 = vmul.f32 %v1782, %v3126
        %v3159 = vmul.f32 %v1783, %v3127
        %v3160 = vmul.f32 %v1784, %v3128
        %v3161 = vmul.f32 %v1785, %v3129
        %v3162 = vmul.f32 %v1786, %v3130
        %v3163 = vmul.f32 %v1787, %v3131
        %v3164 = vmul.f32 %v1788, %v3132
        %v3165 = vmul.f32 %v1789, %v3133
        %v3166 = vmul.f32 %v1790, %v3134
        %v3167 = vmul.f32 %v1791, %v3135
        %v3168 = vmul.f32 %v1792, %v3136
        %v3169 = vmul.f32 %v1793, %v3137
        %v3170 = vpack.c.bf16 %v3138, %v3138
        %v3171 = vpack.c.bf16 %v3139, %v3139
        %v3172 = vpack.c.bf16 %v3140, %v3140
        %v3173 = vpack.c.bf16 %v3141, %v3141
        %v3174 = vpack.c.bf16 %v3142, %v3142
        %v3175 = vpack.c.bf16 %v3143, %v3143
        %v3176 = vpack.c.bf16 %v3144, %v3144
        %v3177 = vpack.c.bf16 %v3145, %v3145
        %v3178 = vpack.c.bf16 %v3146, %v3146
        %v3179 = vpack.c.bf16 %v3147, %v3147
        %v3180 = vpack.c.bf16 %v3148, %v3148
        %v3181 = vpack.c.bf16 %v3149, %v3149
        %v3182 = vpack.c.bf16 %v3150, %v3150
        %v3183 = vpack.c.bf16 %v3151, %v3151
        %v3184 = vpack.c.bf16 %v3152, %v3152
        %v3185 = vpack.c.bf16 %v3153, %v3153
        %v3186 = vpack.c.bf16 %v3154, %v3154
        %v3187 = vpack.c.bf16 %v3155, %v3155
        %v3188 = vpack.c.bf16 %v3156, %v3156
        %v3189 = vpack.c.bf16 %v3157, %v3157
        %v3190 = vpack.c.bf16 %v3158, %v3158
        %v3191 = vpack.c.bf16 %v3159, %v3159
        %v3192 = vpack.c.bf16 %v3160, %v3160
        %v3193 = vpack.c.bf16 %v3161, %v3161
        %v3194 = vpack.c.bf16 %v3162, %v3162
        %v3195 = vpack.c.bf16 %v3163, %v3163
        %v3196 = vpack.c.bf16 %v3164, %v3164
        %v3197 = vpack.c.bf16 %v3165, %v3165
        %v3198 = vpack.c.bf16 %v3166, %v3166
        %v3199 = vpack.c.bf16 %v3167, %v3167
        %v3200 = vpack.c.bf16 %v3168, %v3168
        %v3201 = vpack.c.bf16 %v3169, %v3169
        %vm3202 = vcmask 257024
        %3203 = vst.msk [vmem:[%s400] sm:$0xf] %vm3202, %v3170
        %3204 = vst.msk [vmem:[%s400 + $0x4] sm:$0xf] %vm3202, %v3171
        %3205 = vst.msk [vmem:[%s400 + $0x8] sm:$0xf] %vm3202, %v3172
        %3206 = vst.msk [vmem:[%s400 + $0xc] sm:$0xf] %vm3202, %v3173
        %3207 = vst.msk [vmem:[%s400 + $0x10] sm:$0xf] %vm3202, %v3174
        %3208 = vst.msk [vmem:[%s400 + $0x14] sm:$0xf] %vm3202, %v3175
        %3209 = vst.msk [vmem:[%s400 + $0x18] sm:$0xf] %vm3202, %v3176
        %3210 = vst.msk [vmem:[%s400 + $0x1c] sm:$0xf] %vm3202, %v3177
        %3211 = vst.msk [vmem:[%s400 + $0x20] sm:$0xf] %vm3202, %v3178
        %3212 = vst.msk [vmem:[%s400 + $0x24] sm:$0xf] %vm3202, %v3179
        %3213 = vst.msk [vmem:[%s400 + $0x28] sm:$0xf] %vm3202, %v3180
        %3214 = vst.msk [vmem:[%s400 + $0x2c] sm:$0xf] %vm3202, %v3181
        %3215 = vst.msk [vmem:[%s400 + $0x30] sm:$0xf] %vm3202, %v3182
        %3216 = vst.msk [vmem:[%s400 + $0x34] sm:$0xf] %vm3202, %v3183
        %3217 = vst.msk [vmem:[%s400 + $0x38] sm:$0xf] %vm3202, %v3184
        %3218 = vst.msk [vmem:[%s400 + $0x3c] sm:$0xf] %vm3202, %v3185
        %3219 = vst.msk [vmem:[%s400 + $0x40] sm:$0xf] %vm3202, %v3186
        %3220 = vst.msk [vmem:[%s400 + $0x44] sm:$0xf] %vm3202, %v3187
        %3221 = vst.msk [vmem:[%s400 + $0x48] sm:$0xf] %vm3202, %v3188
        %3222 = vst.msk [vmem:[%s400 + $0x4c] sm:$0xf] %vm3202, %v3189
        %3223 = vst.msk [vmem:[%s400 + $0x50] sm:$0xf] %vm3202, %v3190
        %3224 = vst.msk [vmem:[%s400 + $0x54] sm:$0xf] %vm3202, %v3191
        %3225 = vst.msk [vmem:[%s400 + $0x58] sm:$0xf] %vm3202, %v3192
        %3226 = vst.msk [vmem:[%s400 + $0x5c] sm:$0xf] %vm3202, %v3193
        %3227 = vst.msk [vmem:[%s400 + $0x60] sm:$0xf] %vm3202, %v3194
        %3228 = vst.msk [vmem:[%s400 + $0x64] sm:$0xf] %vm3202, %v3195
        %3229 = vst.msk [vmem:[%s400 + $0x68] sm:$0xf] %vm3202, %v3196
        %3230 = vst.msk [vmem:[%s400 + $0x6c] sm:$0xf] %vm3202, %v3197
        %3231 = vst.msk [vmem:[%s400 + $0x70] sm:$0xf] %vm3202, %v3198
        %3232 = vst.msk [vmem:[%s400 + $0x74] sm:$0xf] %vm3202, %v3199
        %3233 = vst.msk [vmem:[%s400 + $0x78] sm:$0xf] %vm3202, %v3200
        %3234 = vst.msk [vmem:[%s400 + $0x7c] sm:$0xf] %vm3202, %v3201
        %s3235 = sand.u32 %s206, 1
        %s3236 = sand.u32 %s206, 1
        %s3237 = smul.addr %s3236, 128
        %s3238 = scalar_lea.vmem [#allocation2], %s3237
        // Predicated region
        $region41: #{conv_ffn_forward.6} parent=39 // pred_check
          %p3239 = pneg %p216
        $region42: #{conv_ffn_forward.6} parent=39 // pred_check_branch
          %3241 = sbr.rel (%p3239) target = $region44
        $region43: #{conv_ffn_forward.6} parent=39 // pred_region
          %s3242 = smul.u32 32, %s24
          %s3243 = ssub.s32 42, %s3242
          %p3244 = scmp.lt.s32.totalorder %s3243, 32
          %s3245 = scalar_select %p3244, %s3243, 32
          %s3246 = smul.u32 4, %s3245
          %p3247 = scmp.ne.s32.totalorder 0, %s3246
          %s3248 = sadd.s32 %s23, %s3242
          %s3249 = smul.addr %s22, 42
          %s3250 = sadd.s32 %s3248, %s3249
          %s3251 = smul.addr %s3250, 4
          %s3252 = scalar_lea.vmem %s6, %s3251
          // Predicated region
          $region45: #{conv_ffn_forward.6} parent=43 // pred_check
            %p3253 = pneg %p3247
          $region46: #{conv_ffn_forward.6} parent=43 // pred_check_branch
            %3255 = sbr.rel (%p3253) target = $region48
          $region47: #{conv_ffn_forward.6} parent=43 // pred_region
            // Predicated region
            $region49: #{conv_ffn_forward.6} parent=47 // pred_check
              _
            $region50: #{conv_ffn_forward.6} parent=47 // pred_check_branch
              %3257 = sbr.rel target = $region52
            $region51: #{conv_ffn_forward.6} parent=47 // pred_region
              // Predicated region
              $region71: #{conv_ffn_forward.6} parent=51 // pred_check
                _
              $region72: #{conv_ffn_forward.6} parent=51 // pred_check_branch
                %3369 = sbr.rel (0) target = $region74
              $region73: #{conv_ffn_forward.6} parent=51 // pred_region
                %s3371 = ssub.s32 16, 1
                %s3372 = sshrl.u32 %s3245, 5
                // While loop
                $region75: #{conv_ffn_forward.6} parent=73 // loop_pre_header
                  _
                $region76: #{conv_ffn_forward.6} parent=73 // loop_header
                  %s3374 = sphi 0, %s3376
                  %p3375 = scmp.ge.s32.totalorder %s3374, %s3372
                  %s3379 = sphi 0, %s3448
                  %s3380 = sphi %s3238, %s3451
                  %s3381 = sphi %s3252, %s3452
                $region77: #{conv_ffn_forward.6} parent=73 // loop_header_branch
                  %3378 = sbr.rel (%p3375) target = $region81
                $region78: #{conv_ffn_forward.6} parent=73 // loop_body
                  %v3382 = vld [vmem:[%s3380] sm:%s3371]
                  %3383 = vst [vmem:[%s3381] sm:%s3371] %v3382
                  %v3384 = vld [vmem:[%s3380 + $0x4] sm:%s3371]
                  %3385 = vst [vmem:[%s3381 + $0x4] sm:%s3371] %v3384
                  %v3386 = vld [vmem:[%s3380 + $0x8] sm:%s3371]
                  %3387 = vst [vmem:[%s3381 + $0x8] sm:%s3371] %v3386
                  %v3388 = vld [vmem:[%s3380 + $0xc] sm:%s3371]
                  %3389 = vst [vmem:[%s3381 + $0xc] sm:%s3371] %v3388
                  %v3390 = vld [vmem:[%s3380 + $0x10] sm:%s3371]
                  %3391 = vst [vmem:[%s3381 + $0x10] sm:%s3371] %v3390
                  %v3392 = vld [vmem:[%s3380 + $0x14] sm:%s3371]
                  %3393 = vst [vmem:[%s3381 + $0x14] sm:%s3371] %v3392
                  %v3394 = vld [vmem:[%s3380 + $0x18] sm:%s3371]
                  %3395 = vst [vmem:[%s3381 + $0x18] sm:%s3371] %v3394
                  %v3396 = vld [vmem:[%s3380 + $0x1c] sm:%s3371]
                  %3397 = vst [vmem:[%s3381 + $0x1c] sm:%s3371] %v3396
                  %v3398 = vld [vmem:[%s3380 + $0x20] sm:%s3371]
                  %3399 = vst [vmem:[%s3381 + $0x20] sm:%s3371] %v3398
                  %v3400 = vld [vmem:[%s3380 + $0x24] sm:%s3371]
                  %3401 = vst [vmem:[%s3381 + $0x24] sm:%s3371] %v3400
                  %v3402 = vld [vmem:[%s3380 + $0x28] sm:%s3371]
                  %3403 = vst [vmem:[%s3381 + $0x28] sm:%s3371] %v3402
                  %v3404 = vld [vmem:[%s3380 + $0x2c] sm:%s3371]
                  %3405 = vst [vmem:[%s3381 + $0x2c] sm:%s3371] %v3404
                  %v3406 = vld [vmem:[%s3380 + $0x30] sm:%s3371]
                  %3407 = vst [vmem:[%s3381 + $0x30] sm:%s3371] %v3406
                  %v3408 = vld [vmem:[%s3380 + $0x34] sm:%s3371]
                  %3409 = vst [vmem:[%s3381 + $0x34] sm:%s3371] %v3408
                  %v3410 = vld [vmem:[%s3380 + $0x38] sm:%s3371]
                  %3411 = vst [vmem:[%s3381 + $0x38] sm:%s3371] %v3410
                  %v3412 = vld [vmem:[%s3380 + $0x3c] sm:%s3371]
                  %3413 = vst [vmem:[%s3381 + $0x3c] sm:%s3371] %v3412
                  %v3414 = vld [vmem:[%s3380 + $0x40] sm:%s3371]
                  %3415 = vst [vmem:[%s3381 + $0x40] sm:%s3371] %v3414
                  %v3416 = vld [vmem:[%s3380 + $0x44] sm:%s3371]
                  %3417 = vst [vmem:[%s3381 + $0x44] sm:%s3371] %v3416
                  %v3418 = vld [vmem:[%s3380 + $0x48] sm:%s3371]
                  %3419 = vst [vmem:[%s3381 + $0x48] sm:%s3371] %v3418
                  %v3420 = vld [vmem:[%s3380 + $0x4c] sm:%s3371]
                  %3421 = vst [vmem:[%s3381 + $0x4c] sm:%s3371] %v3420
                  %v3422 = vld [vmem:[%s3380 + $0x50] sm:%s3371]
                  %3423 = vst [vmem:[%s3381 + $0x50] sm:%s3371] %v3422
                  %v3424 = vld [vmem:[%s3380 + $0x54] sm:%s3371]
                  %3425 = vst [vmem:[%s3381 + $0x54] sm:%s3371] %v3424
                  %v3426 = vld [vmem:[%s3380 + $0x58] sm:%s3371]
                  %3427 = vst [vmem:[%s3381 + $0x58] sm:%s3371] %v3426
                  %v3428 = vld [vmem:[%s3380 + $0x5c] sm:%s3371]
                  %3429 = vst [vmem:[%s3381 + $0x5c] sm:%s3371] %v3428
                  %v3430 = vld [vmem:[%s3380 + $0x60] sm:%s3371]
                  %3431 = vst [vmem:[%s3381 + $0x60] sm:%s3371] %v3430
                  %v3432 = vld [vmem:[%s3380 + $0x64] sm:%s3371]
                  %3433 = vst [vmem:[%s3381 + $0x64] sm:%s3371] %v3432
                  %v3434 = vld [vmem:[%s3380 + $0x68] sm:%s3371]
                  %3435 = vst [vmem:[%s3381 + $0x68] sm:%s3371] %v3434
                  %v3436 = vld [vmem:[%s3380 + $0x6c] sm:%s3371]
                  %3437 = vst [vmem:[%s3381 + $0x6c] sm:%s3371] %v3436
                  %v3438 = vld [vmem:[%s3380 + $0x70] sm:%s3371]
                  %3439 = vst [vmem:[%s3381 + $0x70] sm:%s3371] %v3438
                  %v3440 = vld [vmem:[%s3380 + $0x74] sm:%s3371]
                  %3441 = vst [vmem:[%s3381 + $0x74] sm:%s3371] %v3440
                  %v3442 = vld [vmem:[%s3380 + $0x78] sm:%s3371]
                  %3443 = vst [vmem:[%s3381 + $0x78] sm:%s3371] %v3442
                  %v3444 = vld [vmem:[%s3380 + $0x7c] sm:%s3371]
                  %3445 = vst [vmem:[%s3381 + $0x7c] sm:%s3371] %v3444
                  %s3446 = sadd.s32 1, %s3379
                  %p3447 = scmp.ge.s32.totalorder %s3446, %s3372
                  %s3448 = scalar_select %p3447, 0, %s3446
                  %s3449 = smul.u32 %s3448, 128
                  %s3450 = smul.u32 %s3448, 128
                  %s3451 = scalar_lea.vmem %s3238, %s3449 [#allocation2]
                  %s3452 = scalar_lea.vmem %s3252, %s3450
                $region79: #{conv_ffn_forward.6} parent=73 // loop_footer
                  %s3376 = sadd.s32 %s3374, 1
                $region80: #{conv_ffn_forward.6} parent=73 // loop_footer_branch
                  %3373 = sbr.rel target = $region76
                $region81: #{conv_ffn_forward.6} parent=73 // loop_exit
                  _
                %s3453 = sshrl.u32 %s3245, 5
                %s3454 = sand.u32 %s3245, 31
                %s3455 = smul.u32 %s3453, 32
                %s3456 = smul.u32 4, %s3455
                %s3457 = scalar_lea.vmem %s3238, %s3456 [#allocation2]
                %s3458 = smul.u32 4, %s3455
                %s3459 = scalar_lea.vmem %s3252, %s3458
                // While loop
                $region82: #{conv_ffn_forward.6} parent=73 // loop_pre_header
                  _
                $region83: #{conv_ffn_forward.6} parent=73 // loop_header
                  %s3461 = sphi 0, %s3463
                  %p3462 = scmp.ge.s32.totalorder %s3461, %s3454
                  %s3466 = sphi 0, %s3473
                  %s3467 = sphi %s3457, %s3476
                  %s3468 = sphi %s3459, %s3477
                $region84: #{conv_ffn_forward.6} parent=73 // loop_header_branch
                  %3465 = sbr.rel (%p3462) target = $region88
                $region85: #{conv_ffn_forward.6} parent=73 // loop_body
                  %v3469 = vld [vmem:[%s3467] sm:%s3371]
                  %3470 = vst [vmem:[%s3468] sm:%s3371] %v3469
                  %s3471 = sadd.s32 1, %s3466
                  %p3472 = scmp.ge.s32.totalorder %s3471, %s3454
                  %s3473 = scalar_select %p3472, 0, %s3471
                  %s3474 = smul.u32 %s3473, 4
                  %s3475 = smul.u32 %s3473, 4
                  %s3476 = scalar_lea.vmem %s3457, %s3474 [#allocation2]
                  %s3477 = scalar_lea.vmem %s3459, %s3475
                $region86: #{conv_ffn_forward.6} parent=73 // loop_footer
                  %s3463 = sadd.s32 %s3461, 1
                $region87: #{conv_ffn_forward.6} parent=73 // loop_footer_branch
                  %3460 = sbr.rel target = $region83
                $region88: #{conv_ffn_forward.6} parent=73 // loop_exit
                  _
              $region74: #{conv_ffn_forward.6} parent=51 // pred_fallthru
                _
            $region52: #{conv_ffn_forward.6} parent=47 // pred_fallthru
              _
            // Predicated region
            $region53: #{conv_ffn_forward.6} parent=47 // pred_check
              _
            $region54: #{conv_ffn_forward.6} parent=47 // pred_check_branch
              %3259 = sbr.rel (0) target = $region56
            $region55: #{conv_ffn_forward.6} parent=47 // pred_region
              %s3261 = ssub.s32 16, 1
              %s3262 = sshrl.u32 %s3245, 5
              // While loop
              $region57: #{conv_ffn_forward.6} parent=55 // loop_pre_header
                _
              $region58: #{conv_ffn_forward.6} parent=55 // loop_header
                %s3264 = sphi 0, %s3266
                %p3265 = scmp.ge.s32.totalorder %s3264, %s3262
                %s3269 = sphi 0, %s3338
                %s3270 = sphi %s3238, %s3341
                %s3271 = sphi %s3252, %s3342
              $region59: #{conv_ffn_forward.6} parent=55 // loop_header_branch
                %3268 = sbr.rel (%p3265) target = $region63
              $region60: #{conv_ffn_forward.6} parent=55 // loop_body
                %v3272 = vld [vmem:[%s3270] sm:%s3261]
                %3273 = vst [vmem:[%s3271] sm:%s3261] %v3272
                %v3274 = vld [vmem:[%s3270 + $0x4] sm:%s3261]
                %3275 = vst [vmem:[%s3271 + $0x4] sm:%s3261] %v3274
                %v3276 = vld [vmem:[%s3270 + $0x8] sm:%s3261]
                %3277 = vst [vmem:[%s3271 + $0x8] sm:%s3261] %v3276
                %v3278 = vld [vmem:[%s3270 + $0xc] sm:%s3261]
                %3279 = vst [vmem:[%s3271 + $0xc] sm:%s3261] %v3278
                %v3280 = vld [vmem:[%s3270 + $0x10] sm:%s3261]
                %3281 = vst [vmem:[%s3271 + $0x10] sm:%s3261] %v3280
                %v3282 = vld [vmem:[%s3270 + $0x14] sm:%s3261]
                %3283 = vst [vmem:[%s3271 + $0x14] sm:%s3261] %v3282
                %v3284 = vld [vmem:[%s3270 + $0x18] sm:%s3261]
                %3285 = vst [vmem:[%s3271 + $0x18] sm:%s3261] %v3284
                %v3286 = vld [vmem:[%s3270 + $0x1c] sm:%s3261]
                %3287 = vst [vmem:[%s3271 + $0x1c] sm:%s3261] %v3286
                %v3288 = vld [vmem:[%s3270 + $0x20] sm:%s3261]
                %3289 = vst [vmem:[%s3271 + $0x20] sm:%s3261] %v3288
                %v3290 = vld [vmem:[%s3270 + $0x24] sm:%s3261]
                %3291 = vst [vmem:[%s3271 + $0x24] sm:%s3261] %v3290
                %v3292 = vld [vmem:[%s3270 + $0x28] sm:%s3261]
                %3293 = vst [vmem:[%s3271 + $0x28] sm:%s3261] %v3292
                %v3294 = vld [vmem:[%s3270 + $0x2c] sm:%s3261]
                %3295 = vst [vmem:[%s3271 + $0x2c] sm:%s3261] %v3294
                %v3296 = vld [vmem:[%s3270 + $0x30] sm:%s3261]
                %3297 = vst [vmem:[%s3271 + $0x30] sm:%s3261] %v3296
                %v3298 = vld [vmem:[%s3270 + $0x34] sm:%s3261]
                %3299 = vst [vmem:[%s3271 + $0x34] sm:%s3261] %v3298
                %v3300 = vld [vmem:[%s3270 + $0x38] sm:%s3261]
                %3301 = vst [vmem:[%s3271 + $0x38] sm:%s3261] %v3300
                %v3302 = vld [vmem:[%s3270 + $0x3c] sm:%s3261]
                %3303 = vst [vmem:[%s3271 + $0x3c] sm:%s3261] %v3302
                %v3304 = vld [vmem:[%s3270 + $0x40] sm:%s3261]
                %3305 = vst [vmem:[%s3271 + $0x40] sm:%s3261] %v3304
                %v3306 = vld [vmem:[%s3270 + $0x44] sm:%s3261]
                %3307 = vst [vmem:[%s3271 + $0x44] sm:%s3261] %v3306
                %v3308 = vld [vmem:[%s3270 + $0x48] sm:%s3261]
                %3309 = vst [vmem:[%s3271 + $0x48] sm:%s3261] %v3308
                %v3310 = vld [vmem:[%s3270 + $0x4c] sm:%s3261]
                %3311 = vst [vmem:[%s3271 + $0x4c] sm:%s3261] %v3310
                %v3312 = vld [vmem:[%s3270 + $0x50] sm:%s3261]
                %3313 = vst [vmem:[%s3271 + $0x50] sm:%s3261] %v3312
                %v3314 = vld [vmem:[%s3270 + $0x54] sm:%s3261]
                %3315 = vst [vmem:[%s3271 + $0x54] sm:%s3261] %v3314
                %v3316 = vld [vmem:[%s3270 + $0x58] sm:%s3261]
                %3317 = vst [vmem:[%s3271 + $0x58] sm:%s3261] %v3316
                %v3318 = vld [vmem:[%s3270 + $0x5c] sm:%s3261]
                %3319 = vst [vmem:[%s3271 + $0x5c] sm:%s3261] %v3318
                %v3320 = vld [vmem:[%s3270 + $0x60] sm:%s3261]
                %3321 = vst [vmem:[%s3271 + $0x60] sm:%s3261] %v3320
                %v3322 = vld [vmem:[%s3270 + $0x64] sm:%s3261]
                %3323 = vst [vmem:[%s3271 + $0x64] sm:%s3261] %v3322
                %v3324 = vld [vmem:[%s3270 + $0x68] sm:%s3261]
                %3325 = vst [vmem:[%s3271 + $0x68] sm:%s3261] %v3324
                %v3326 = vld [vmem:[%s3270 + $0x6c] sm:%s3261]
                %3327 = vst [vmem:[%s3271 + $0x6c] sm:%s3261] %v3326
                %v3328 = vld [vmem:[%s3270 + $0x70] sm:%s3261]
                %3329 = vst [vmem:[%s3271 + $0x70] sm:%s3261] %v3328
                %v3330 = vld [vmem:[%s3270 + $0x74] sm:%s3261]
                %3331 = vst [vmem:[%s3271 + $0x74] sm:%s3261] %v3330
                %v3332 = vld [vmem:[%s3270 + $0x78] sm:%s3261]
                %3333 = vst [vmem:[%s3271 + $0x78] sm:%s3261] %v3332
                %v3334 = vld [vmem:[%s3270 + $0x7c] sm:%s3261]
                %3335 = vst [vmem:[%s3271 + $0x7c] sm:%s3261] %v3334
                %s3336 = sadd.s32 1, %s3269
                %p3337 = scmp.ge.s32.totalorder %s3336, %s3262
                %s3338 = scalar_select %p3337, 0, %s3336
                %s3339 = smul.u32 %s3338, 128
                %s3340 = smul.u32 %s3338, 128
                %s3341 = scalar_lea.vmem %s3238, %s3339 [#allocation2]
                %s3342 = scalar_lea.vmem %s3252, %s3340
              $region61: #{conv_ffn_forward.6} parent=55 // loop_footer
                %s3266 = sadd.s32 %s3264, 1
              $region62: #{conv_ffn_forward.6} parent=55 // loop_footer_branch
                %3263 = sbr.rel target = $region58
              $region63: #{conv_ffn_forward.6} parent=55 // loop_exit
                _
              %s3343 = sshrl.u32 %s3245, 5
              %s3344 = sand.u32 %s3245, 31
              %s3345 = smul.u32 %s3343, 32
              %s3346 = smul.u32 4, %s3345
              %s3347 = scalar_lea.vmem %s3238, %s3346 [#allocation2]
              %s3348 = smul.u32 4, %s3345
              %s3349 = scalar_lea.vmem %s3252, %s3348
              // While loop
              $region64: #{conv_ffn_forward.6} parent=55 // loop_pre_header
                _
              $region65: #{conv_ffn_forward.6} parent=55 // loop_header
                %s3351 = sphi 0, %s3353
                %p3352 = scmp.ge.s32.totalorder %s3351, %s3344
                %s3356 = sphi 0, %s3363
                %s3357 = sphi %s3347, %s3366
                %s3358 = sphi %s3349, %s3367
              $region66: #{conv_ffn_forward.6} parent=55 // loop_header_branch
                %3355 = sbr.rel (%p3352) target = $region70
              $region67: #{conv_ffn_forward.6} parent=55 // loop_body
                %v3359 = vld [vmem:[%s3357] sm:%s3261]
                %3360 = vst [vmem:[%s3358] sm:%s3261] %v3359
                %s3361 = sadd.s32 1, %s3356
                %p3362 = scmp.ge.s32.totalorder %s3361, %s3344
                %s3363 = scalar_select %p3362, 0, %s3361
                %s3364 = smul.u32 %s3363, 4
                %s3365 = smul.u32 %s3363, 4
                %s3366 = scalar_lea.vmem %s3347, %s3364 [#allocation2]
                %s3367 = scalar_lea.vmem %s3349, %s3365
              $region68: #{conv_ffn_forward.6} parent=55 // loop_footer
                %s3353 = sadd.s32 %s3351, 1
              $region69: #{conv_ffn_forward.6} parent=55 // loop_footer_branch
                %3350 = sbr.rel target = $region65
              $region70: #{conv_ffn_forward.6} parent=55 // loop_exit
                _
            $region56: #{conv_ffn_forward.6} parent=47 // pred_fallthru
              _
          $region48: #{conv_ffn_forward.6} parent=43 // pred_fallthru
            _
          %3478 = vnop
        $region44: #{conv_ffn_forward.6} parent=39 // pred_fallthru
          _
      $region40: #{conv_ffn_forward.6} parent=5 // pred_fallthru
        _
      %p3479 = scmp.le.s32.totalorder 2, %s12
      // Predicated region
      $region89: #{conv_ffn_forward.6} parent=5 // pred_check
        %p3480 = pneg %p3479
      $region90: #{conv_ffn_forward.6} parent=5 // pred_check_branch
        %3482 = sbr.rel (%p3480) target = $region92
      $region91: #{conv_ffn_forward.6} parent=5 // pred_region
        %s3483 = ssub.s32 %s12, 2
        // Predicated region
        $region93: #{conv_ffn_forward.6} parent=91 // pred_check
          %p3484 = pneg %p222
        $region94: #{conv_ffn_forward.6} parent=91 // pred_check_branch
          %3486 = sbr.rel (%p3484) target = $region96
        $region95: #{conv_ffn_forward.6} parent=91 // pred_region
          %s3487 = sand.u32 %s207, 1
          %s3488 = sand.u32 %s207, 1
          %s3489 = smul.addr %s3488, 128
          %s3490 = scalar_lea.vmem [#allocation2], %s3489
        $region96: #{conv_ffn_forward.6} parent=91 // pred_fallthru
          _
      $region92: #{conv_ffn_forward.6} parent=5 // pred_fallthru
        _
    $region6: #{conv_ffn_forward.6} parent=1 // loop_footer
      %s16 = sadd.s32 1, %s12
    $region7: #{conv_ffn_forward.6} parent=1 // loop_footer_branch
      %11 = sbr.rel target = $region3
    $region8: #{conv_ffn_forward.6} parent=1 // loop_exit
      _

// kernel: conv_ffn_forward.9
$region0: #{conv_ffn_forward.9}
  #allocation0 [shape = 'u32[]', space=smem, size = 0x4, offset = 0x4, fixed_abs, tag = 'smem constant byte address 0x4 - core index']
  #allocation1 [shape = 'u32[72,128]{1,0:T(1,128)}', space=vmem, size = 0x9000, scoped, tag = 'internal scratch']
  #allocation2 [shape = 'f32[336,16]{1,0:T(8,128)}', space=vmem, size = 0x2a000, scoped, tag = 'scratch operand']
  %s0 = inlined_call_operand.vmem [shape: bf16[672,32], index: 0, kind: input, shape index: {}]
  %s1 = inlined_call_operand.vmem [shape: bf16[32,16], index: 1, kind: input, shape index: {}]
  %s2 = inlined_call_operand.vmem [shape: f32[1,16], index: 2, kind: input, shape index: {}]
  %s3 = inlined_call_operand.vmem [shape: f32[672,16], index: 3, kind: output, shape index: {}]
  %s4 = sld [smem:[#allocation0]]
  $region53: #{conv_ffn_forward.9} parent=0
    _
  %s6 = ssub.s32 1, %s4
  %s7 = scalar_select 0, %s6, %s4
  loop: start=0, step=1, limit=4
  $region2: #{conv_ffn_forward.9} parent=0 // loop_pre_header
    _
  $region3: #{conv_ffn_forward.9} parent=0 // loop_header
    %s9 = sphi 0, %s13
    %p10 = scmp.ge.s32.totalorder %s9, 4
    %s16 = sphi 0, %s35
    %s17 = sphi 0, %s31
    %s18 = sphi 0, %s27
    %s19 = sphi 0, %s16
    %s20 = sphi 0, %s17
    %s21 = sphi 0, %s18
    %s22 = sphi 0, %s19
    %s23 = sphi 0, %s20
    %s24 = sphi 0, %s21
    %s40 = sphi 0, %s42
    %s43 = sphi 0, %s40
    %s44 = sphi 0, %s43
    %s60 = sphi 0, %s44
    %s68 = sphi 0, %s70
    %s71 = sphi 0, %s68
    %s72 = sphi 0, %s71
    %s88 = sphi 0, %s72
    %s94 = sphi 0, %s96
    %s97 = sphi 0, %s94
    %s98 = sphi 0, %s97
    %s114 = sphi 0, %s98
    %s122 = sphi 0, %s124
    %s125 = sphi 0, %s122
    %s126 = sphi 0, %s125
    %s142 = sphi 0, %s126
  $region4: #{conv_ffn_forward.9} parent=0 // loop_header_branch
    %12 = sbr.rel (%p10) target = $region8
  $region5: #{conv_ffn_forward.9} parent=0 // loop_body
    %s14 = ssub.s32 %s9, 1
    %s15 = ssub.s32 %s9, 2
    %s25 = sadd.s32 1, %s18
    %p26 = scmp.ge.s32.totalorder %s25, 1
    %s27 = scalar_select %p26, 0, %s25
    %s28 = sadd.s32 1, %s17
    %s29 = scalar_select %p26, %s28, %s17
    %p30 = scmp.ge.s32.totalorder %s29, 1
    %s31 = scalar_select %p30, 0, %s29
    %s32 = sadd.s32 1, %s16
    %s33 = scalar_select %p30, %s32, %s16
    %p34 = scmp.ge.s32.totalorder %s33, 2
    %s35 = scalar_select %p34, 0, %s33
    %s36 = ssub.s32 %s16, %s35
    %s37 = ssub.s32 %s18, %s27
    %s38 = sor.u32 %s36, %s37
    %p39 = scmp.eq.s32.totalorder %s38, 0
    %s41 = sadd.s32 %s40, 1
    %s42 = scalar_select %p39, %s40, %s41
    %p45 = pneg %p39
    %p46 = scmp.eq.s32.totalorder %s9, 1
    %p47 = por %p45, %p46
    %p48 = scmp.ne.s32.totalorder %s40, %s43
    %p49 = scmp.eq.s32.totalorder %s9, 0
    %p50 = por %p48, %p49
    %p51 = scmp.ne.s32.totalorder %s40, %s43
    %p52 = scmp.eq.s32.totalorder %s14, 1
    %p53 = por %p51, %p52
    %p54 = scmp.ne.s32.totalorder %s43, %s44
    %p55 = scmp.eq.s32.totalorder %s14, 0
    %p56 = por %p54, %p55
    %p57 = scmp.ne.s32.totalorder %s43, %s44
    %p58 = scmp.eq.s32.totalorder %s15, 1
    %p59 = por %p57, %p58
    %p61 = scmp.ne.s32.totalorder %s44, %s60
    %p62 = scmp.eq.s32.totalorder %s15, 0
    %p63 = por %p61, %p62
    %s64 = ssub.s32 %s18, %s27
    %s65 = ssub.s32 %s17, %s31
    %s66 = sor.u32 %s64, %s65
    %p67 = scmp.eq.s32.totalorder %s66, 0
    %s69 = sadd.s32 %s68, 1
    %s70 = scalar_select %p67, %s68, %s69
    %p73 = pneg %p67
    %p74 = scmp.eq.s32.totalorder %s9, 1
    %p75 = por %p73, %p74
    %p76 = scmp.ne.s32.totalorder %s68, %s71
    %p77 = scmp.eq.s32.totalorder %s9, 0
    %p78 = por %p76, %p77
    %p79 = scmp.ne.s32.totalorder %s68, %s71
    %p80 = scmp.eq.s32.totalorder %s14, 1
    %p81 = por %p79, %p80
    %p82 = scmp.ne.s32.totalorder %s71, %s72
    %p83 = scmp.eq.s32.totalorder %s14, 0
    %p84 = por %p82, %p83
    %p85 = scmp.ne.s32.totalorder %s71, %s72
    %p86 = scmp.eq.s32.totalorder %s15, 1
    %p87 = por %p85, %p86
    %p89 = scmp.ne.s32.totalorder %s72, %s88
    %p90 = scmp.eq.s32.totalorder %s15, 0
    %p91 = por %p89, %p90
    %s92 = ssub.s32 %s17, %s31
    %p93 = scmp.eq.s32.totalorder %s92, 0
    %s95 = sadd.s32 %s94, 1
    %s96 = scalar_select %p93, %s94, %s95
    %p99 = pneg %p93
    %p100 = scmp.eq.s32.totalorder %s9, 1
    %p101 = por %p99, %p100
    %p102 = scmp.ne.s32.totalorder %s94, %s97
    %p103 = scmp.eq.s32.totalorder %s9, 0
    %p104 = por %p102, %p103
    %p105 = scmp.ne.s32.totalorder %s94, %s97
    %p106 = scmp.eq.s32.totalorder %s14, 1
    %p107 = por %p105, %p106
    %p108 = scmp.ne.s32.totalorder %s97, %s98
    %p109 = scmp.eq.s32.totalorder %s14, 0
    %p110 = por %p108, %p109
    %p111 = scmp.ne.s32.totalorder %s97, %s98
    %p112 = scmp.eq.s32.totalorder %s15, 1
    %p113 = por %p111, %p112
    %p115 = scmp.ne.s32.totalorder %s98, %s114
    %p116 = scmp.eq.s32.totalorder %s15, 0
    %p117 = por %p115, %p116
    %s118 = ssub.s32 %s16, %s35
    %s119 = ssub.s32 %s17, %s31
    %s120 = sor.u32 %s118, %s119
    %p121 = scmp.eq.s32.totalorder %s120, 0
    %s123 = sadd.s32 %s122, 1
    %s124 = scalar_select %p121, %s122, %s123
    %p127 = pneg %p121
    %p128 = scmp.eq.s32.totalorder %s9, 1
    %p129 = por %p127, %p128
    %p130 = scmp.ne.s32.totalorder %s122, %s125
    %p131 = scmp.eq.s32.totalorder %s9, 0
    %p132 = por %p130, %p131
    %p133 = scmp.ne.s32.totalorder %s122, %s125
    %p134 = scmp.eq.s32.totalorder %s14, 1
    %p135 = por %p133, %p134
    %p136 = scmp.ne.s32.totalorder %s125, %s126
    %p137 = scmp.eq.s32.totalorder %s14, 0
    %p138 = por %p136, %p137
    %p139 = scmp.ne.s32.totalorder %s125, %s126
    %p140 = scmp.eq.s32.totalorder %s15, 1
    %p141 = por %p139, %p140
    %p143 = scmp.ne.s32.totalorder %s126, %s142
    %p144 = scmp.eq.s32.totalorder %s15, 0
    %p145 = por %p143, %p144
    %p146 = scmp.le.s32.totalorder 1, %s9
    %p147 = scmp.lt.s32.totalorder %s9, 3
    %p148 = pnand %p146, %p147
    %p149 = pneg %p148
    // Predicated region
    $region9: #{conv_ffn_forward.9} parent=5 // pred_check
      _
    $region10: #{conv_ffn_forward.9} parent=5 // pred_check_branch
      %151 = sbr.rel (%p148) target = $region12
    $region11: #{conv_ffn_forward.9} parent=5 // pred_region
      %s152 = ssub.s32 %s9, 1
      // Predicated region
      $region13: #{conv_ffn_forward.9} parent=11 // pred_check
        %p153 = pneg %p84
      $region14: #{conv_ffn_forward.9} parent=11 // pred_check_branch
        %155 = sbr.rel (%p153) target = $region16
      $region15: #{conv_ffn_forward.9} parent=11 // pred_region
        %s156 = smul.u32 4, %s21
        %p157 = scmp.lt.s32.totalorder %s156, 3
        %s158 = scalar_select %p157, %s156, 3
        %p159 = scmp.lt.s32.totalorder %s20, 0
        %s160 = scalar_select %p159, %s20, 0
        %s161 = sadd.s32 %s160, %s158
        %s162 = smul.addr %s161, 4
        %s163 = scalar_lea.vmem %s1, %s162
        %s164 = smul.u32 4, %s21
      $region16: #{conv_ffn_forward.9} parent=11 // pred_fallthru
        _
      // Predicated region
      $region17: #{conv_ffn_forward.9} parent=11 // pred_check
        %p165 = pneg %p110
      $region18: #{conv_ffn_forward.9} parent=11 // pred_check_branch
        %167 = sbr.rel (%p165) target = $region20
      $region19: #{conv_ffn_forward.9} parent=11 // pred_region
        %p168 = scmp.lt.s32.totalorder %s20, 0
        %s169 = scalar_select %p168, %s20, 0
        %s170 = scalar_lea.vmem %s2, %s169
      $region20: #{conv_ffn_forward.9} parent=11 // pred_fallthru
        _
    $region12: #{conv_ffn_forward.9} parent=5 // pred_fallthru
      _
    %p171 = scmp.lt.s32.totalorder %s9, 2
    // Predicated region
    $region21: #{conv_ffn_forward.9} parent=5 // pred_check
      %p172 = pneg %p171
    $region22: #{conv_ffn_forward.9} parent=5 // pred_check_branch
      %174 = sbr.rel (%p172) target = $region24
    $region23: #{conv_ffn_forward.9} parent=5 // pred_region
      // Predicated region
      $region25: #{conv_ffn_forward.9} parent=23 // pred_check
        %p175 = pneg %p50
      $region26: #{conv_ffn_forward.9} parent=23 // pred_check_branch
        %177 = sbr.rel (%p175) target = $region28
      $region27: #{conv_ffn_forward.9} parent=23 // pred_region
        %s178 = smul.u32 42, %s16
        %p179 = scmp.lt.s32.totalorder %s178, 83
        %s180 = scalar_select %p179, %s178, 83
        %p181 = scmp.lt.s32.totalorder %s18, 0
        %s182 = scalar_select %p181, %s18, 0
        %s183 = sadd.s32 %s182, %s180
        %s184 = smul.addr %s183, 4
        %s185 = scalar_lea.vmem %s0, %s184
        %s186 = smul.u32 42, %s16
      $region28: #{conv_ffn_forward.9} parent=23 // pred_fallthru
        _
    $region24: #{conv_ffn_forward.9} parent=5 // pred_fallthru
      _
    %p187 = scmp.le.s32.totalorder 1, %s9
    %p188 = scmp.lt.s32.totalorder %s9, 3
    %p189 = pnand %p187, %p188
    %p190 = pneg %p189
    // Predicated region
    $region29: #{conv_ffn_forward.9} parent=5 // pred_check
      _
    $region30: #{conv_ffn_forward.9} parent=5 // pred_check_branch
      %192 = sbr.rel (%p189) target = $region32
    $region31: #{conv_ffn_forward.9} parent=5 // pred_region
      %s193 = ssub.s32 %s9, 1
      %s194 = smul.u32 42, %s19
      %p195 = scmp.lt.s32.totalorder %s194, 83
      %s196 = scalar_select %p195, %s194, 83
      %p197 = scmp.lt.s32.totalorder %s21, 0
      %s198 = scalar_select %p197, %s21, 0
      %s199 = sadd.s32 %s198, %s196
      %s200 = smul.addr %s199, 4
      %s201 = scalar_lea.vmem %s0, %s200
      %p202 = pneg %p56
      %p203 = pneg %p53
      %s204 = smul.u32 4, %s21
      %p205 = scmp.lt.s32.totalorder %s204, 3
      %s206 = scalar_select %p205, %s204, 3
      %p207 = scmp.lt.s32.totalorder %s20, 0
      %s208 = scalar_select %p207, %s20, 0
      %s209 = sadd.s32 %s208, %s206
      %s210 = smul.addr %s209, 4
      %s211 = scalar_lea.vmem %s1, %s210
      %p212 = pneg %p84
      %p213 = pneg %p81
      %p214 = scmp.lt.s32.totalorder %s20, 0
      %s215 = scalar_select %p214, %s20, 0
      %s216 = scalar_lea.vmem %s2, %s215
      %p217 = pneg %p110
      %p218 = pneg %p107
      %p219 = pneg %p138
      %p220 = pneg %p135
      %s221 = smul.u32 42, %s19
      %p222 = scmp.lt.s32.totalorder %s221, 83
      %s223 = scalar_select %p222, %s221, 83
      %p224 = scmp.lt.s32.totalorder %s20, 0
      %s225 = scalar_select %p224, %s20, 0
      %s226 = sadd.s32 %s225, %s223
      %s227 = smul.addr %s226, 8
      %s228 = scalar_lea.vmem %s3, %s227
      %s229 = smul.u32 42, %s19
      %p230 = scmp.lt.s32.totalorder %s229, 83
      %s231 = scalar_select %p230, %s229, 83
      %p232 = scmp.lt.s32.totalorder %s21, 0
      %s233 = scalar_select %p232, %s21, 0
      %s234 = sadd.s32 %s233, %s231
      %s235 = smul.addr %s234, 4
      %s236 = scalar_lea.vmem %s0, %s235
      %s237 = smul.u32 42, %s19
      %s238 = smul.u32 4, %s21
      %p239 = scmp.lt.s32.totalorder %s238, 3
      %s240 = scalar_select %p239, %s238, 3
      %p241 = scmp.lt.s32.totalorder %s20, 0
      %s242 = scalar_select %p241, %s20, 0
      %s243 = sadd.s32 %s242, %s240
      %s244 = smul.addr %s243, 4
      %s245 = scalar_lea.vmem %s1, %s244
      %s246 = smul.u32 4, %s21
      %p247 = scmp.lt.s32.totalorder %s20, 0
      %s248 = scalar_select %p247, %s20, 0
      %s249 = scalar_lea.vmem %s2, %s248
      %s250 = smul.u32 42, %s19
      %p251 = scmp.lt.s32.totalorder %s250, 83
      %s252 = scalar_select %p251, %s250, 83
      %p253 = scmp.lt.s32.totalorder %s20, 0
      %s254 = scalar_select %p253, %s20, 0
      %s255 = sadd.s32 %s254, %s252
      %s256 = smul.addr %s255, 8
      %s257 = scalar_lea.vmem %s3, %s256
      %s258 = smul.u32 42, %s19
      %p260 = scmp.eq.s32.totalorder %s21, 0
      // Predicated region
      $region33: #{conv_ffn_forward.9} parent=31 // pred_check
        %p261 = pneg %p260
      $region34: #{conv_ffn_forward.9} parent=31 // pred_check_branch
        %263 = sbr.rel (%p261) target = $region36
      $region35: #{conv_ffn_forward.9} parent=31 // pred_region
        %vm264 = vcmask 130048
        %265 = vst.msk [vmem:[#allocation2] sm:$0xff] %vm264, 0.0
        %266 = vst.msk [vmem:[#allocation2 + $0x8] sm:$0xff] %vm264, 0.0
        %267 = vst.msk [vmem:[#allocation2 + $0x10] sm:$0xff] %vm264, 0.0
        %268 = vst.msk [vmem:[#allocation2 + $0x18] sm:$0xff] %vm264, 0.0
        %269 = vst.msk [vmem:[#allocation2 + $0x20] sm:$0xff] %vm264, 0.0
        %270 = vst.msk [vmem:[#allocation2 + $0x28] sm:$0xff] %vm264, 0.0
        %271 = vst.msk [vmem:[#allocation2 + $0x30] sm:$0xff] %vm264, 0.0
        %272 = vst.msk [vmem:[#allocation2 + $0x38] sm:$0xff] %vm264, 0.0
        %273 = vst.msk [vmem:[#allocation2 + $0x40] sm:$0xff] %vm264, 0.0
        %274 = vst.msk [vmem:[#allocation2 + $0x48] sm:$0xff] %vm264, 0.0
        %275 = vst.msk [vmem:[#allocation2 + $0x50] sm:$0xff] %vm264, 0.0
        %276 = vst.msk [vmem:[#allocation2 + $0x58] sm:$0xff] %vm264, 0.0
        %277 = vst.msk [vmem:[#allocation2 + $0x60] sm:$0xff] %vm264, 0.0
        %278 = vst.msk [vmem:[#allocation2 + $0x68] sm:$0xff] %vm264, 0.0
        %279 = vst.msk [vmem:[#allocation2 + $0x70] sm:$0xff] %vm264, 0.0
        %280 = vst.msk [vmem:[#allocation2 + $0x78] sm:$0xff] %vm264, 0.0
        %281 = vst.msk [vmem:[#allocation2 + $0x80] sm:$0xff] %vm264, 0.0
        %282 = vst.msk [vmem:[#allocation2 + $0x88] sm:$0xff] %vm264, 0.0
        %283 = vst.msk [vmem:[#allocation2 + $0x90] sm:$0xff] %vm264, 0.0
        %284 = vst.msk [vmem:[#allocation2 + $0x98] sm:$0xff] %vm264, 0.0
        %285 = vst.msk [vmem:[#allocation2 + $0xa0] sm:$0xff] %vm264, 0.0
        %286 = vst.msk [vmem:[#allocation2 + $0xa8] sm:$0xff] %vm264, 0.0
        %287 = vst.msk [vmem:[#allocation2 + $0xb0] sm:$0xff] %vm264, 0.0
        %288 = vst.msk [vmem:[#allocation2 + $0xb8] sm:$0xff] %vm264, 0.0
        %289 = vst.msk [vmem:[#allocation2 + $0xc0] sm:$0xff] %vm264, 0.0
        %290 = vst.msk [vmem:[#allocation2 + $0xc8] sm:$0xff] %vm264, 0.0
        %291 = vst.msk [vmem:[#allocation2 + $0xd0] sm:$0xff] %vm264, 0.0
        %292 = vst.msk [vmem:[#allocation2 + $0xd8] sm:$0xff] %vm264, 0.0
        %293 = vst.msk [vmem:[#allocation2 + $0xe0] sm:$0xff] %vm264, 0.0
        %294 = vst.msk [vmem:[#allocation2 + $0xe8] sm:$0xff] %vm264, 0.0
        %295 = vst.msk [vmem:[#allocation2 + $0xf0] sm:$0xff] %vm264, 0.0
        %296 = vst.msk [vmem:[#allocation2 + $0xf8] sm:$0xff] %vm264, 0.0
        %297 = vst.msk [vmem:[#allocation2 + $0x100] sm:$0xff] %vm264, 0.0
        %298 = vst.msk [vmem:[#allocation2 + $0x108] sm:$0xff] %vm264, 0.0
        %299 = vst.msk [vmem:[#allocation2 + $0x110] sm:$0xff] %vm264, 0.0
        %300 = vst.msk [vmem:[#allocation2 + $0x118] sm:$0xff] %vm264, 0.0
        %301 = vst.msk [vmem:[#allocation2 + $0x120] sm:$0xff] %vm264, 0.0
        %302 = vst.msk [vmem:[#allocation2 + $0x128] sm:$0xff] %vm264, 0.0
        %303 = vst.msk [vmem:[#allocation2 + $0x130] sm:$0xff] %vm264, 0.0
        %304 = vst.msk [vmem:[#allocation2 + $0x138] sm:$0xff] %vm264, 0.0
        %305 = vst.msk [vmem:[#allocation2 + $0x140] sm:$0xff] %vm264, 0.0
        %306 = vst.msk [vmem:[#allocation2 + $0x148] sm:$0xff] %vm264, 0.0
      $region36: #{conv_ffn_forward.9} parent=31 // pred_fallthru
        _
      %v307 = vld [vmem:[%s236] sm:$0xf]
      %v308 = vld [vmem:[%s236 + $0x4] sm:$0xf]
      %v309 = vld [vmem:[%s236 + $0x8] sm:$0xf]
      %v310 = vld [vmem:[%s236 + $0xc] sm:$0xf]
      %v311 = vld [vmem:[%s236 + $0x10] sm:$0xf]
      %v312 = vld [vmem:[%s236 + $0x14] sm:$0xf]
      %v313 = vld [vmem:[%s236 + $0x18] sm:$0xf]
      %v314 = vld [vmem:[%s236 + $0x1c] sm:$0xf]
      %v315 = vld [vmem:[%s236 + $0x20] sm:$0xf]
      %v316 = vld [vmem:[%s236 + $0x24] sm:$0xf]
      %v317 = vld [vmem:[%s236 + $0x28] sm:$0xf]
      %v318 = vld [vmem:[%s236 + $0x2c] sm:$0xf]
      %v319 = vld [vmem:[%s236 + $0x30] sm:$0xf]
      %v320 = vld [vmem:[%s236 + $0x34] sm:$0xf]
      %v321 = vld [vmem:[%s236 + $0x38] sm:$0xf]
      %v322 = vld [vmem:[%s236 + $0x3c] sm:$0xf]
      %v323 = vld [vmem:[%s236 + $0x40] sm:$0xf]
      %v324 = vld [vmem:[%s236 + $0x44] sm:$0xf]
      %v325 = vld [vmem:[%s236 + $0x48] sm:$0xf]
      %v326 = vld [vmem:[%s236 + $0x4c] sm:$0xf]
      %v327 = vld [vmem:[%s236 + $0x50] sm:$0xf]
      %v328 = vld [vmem:[%s236 + $0x54] sm:$0xf]
      %v329 = vld [vmem:[%s236 + $0x58] sm:$0xf]
      %v330 = vld [vmem:[%s236 + $0x5c] sm:$0xf]
      %v331 = vld [vmem:[%s236 + $0x60] sm:$0xf]
      %v332 = vld [vmem:[%s236 + $0x64] sm:$0xf]
      %v333 = vld [vmem:[%s236 + $0x68] sm:$0xf]
      %v334 = vld [vmem:[%s236 + $0x6c] sm:$0xf]
      %v335 = vld [vmem:[%s236 + $0x70] sm:$0xf]
      %v336 = vld [vmem:[%s236 + $0x74] sm:$0xf]
      %v337 = vld [vmem:[%s236 + $0x78] sm:$0xf]
      %v338 = vld [vmem:[%s236 + $0x7c] sm:$0xf]
      %v339 = vld [vmem:[%s236 + $0x80] sm:$0xf]
      %v340 = vld [vmem:[%s236 + $0x84] sm:$0xf]
      %v341 = vld [vmem:[%s236 + $0x88] sm:$0xf]
      %v342 = vld [vmem:[%s236 + $0x8c] sm:$0xf]
      %v343 = vld [vmem:[%s236 + $0x90] sm:$0xf]
      %v344 = vld [vmem:[%s236 + $0x94] sm:$0xf]
      %v345 = vld [vmem:[%s236 + $0x98] sm:$0xf]
      %v346 = vld [vmem:[%s236 + $0x9c] sm:$0xf]
      %v347 = vld [vmem:[%s236 + $0xa0] sm:$0xf]
      %v348 = vld [vmem:[%s236 + $0xa4] sm:$0xf]
      %v349 = vld [vmem:[%s245] sm:$0xf]
      %v350 = vld [vmem:[%s245 + $0x4] sm:$0xf]
      %v351 = vld [vmem:[%s245 + $0x8] sm:$0xf]
      %v352 = vld [vmem:[%s245 + $0xc] sm:$0xf]
      %v353 = vld [vmem:[#allocation2] sm:$0xff]
      %v354 = vld [vmem:[#allocation2 + $0x8] sm:$0xff]
      %v355 = vld [vmem:[#allocation2 + $0x10] sm:$0xff]
      %v356 = vld [vmem:[#allocation2 + $0x18] sm:$0xff]
      %v357 = vld [vmem:[#allocation2 + $0x20] sm:$0xff]
      %v358 = vld [vmem:[#allocation2 + $0x28] sm:$0xff]
      %v359 = vld [vmem:[#allocation2 + $0x30] sm:$0xff]
      %v360 = vld [vmem:[#allocation2 + $0x38] sm:$0xff]
      %v361 = vld [vmem:[#allocation2 + $0x40] sm:$0xff]
      %v362 = vld [vmem:[#allocation2 + $0x48] sm:$0xff]
      %v363 = vld [vmem:[#allocation2 + $0x50] sm:$0xff]
      %v364 = vld [vmem:[#allocation2 + $0x58] sm:$0xff]
      %v365 = vld [vmem:[#allocation2 + $0x60] sm:$0xff]
      %v366 = vld [vmem:[#allocation2 + $0x68] sm:$0xff]
      %v367 = vld [vmem:[#allocation2 + $0x70] sm:$0xff]
      %v368 = vld [vmem:[#allocation2 + $0x78] sm:$0xff]
      %v369 = vld [vmem:[#allocation2 + $0x80] sm:$0xff]
      %v370 = vld [vmem:[#allocation2 + $0x88] sm:$0xff]
      %v371 = vld [vmem:[#allocation2 + $0x90] sm:$0xff]
      %v372 = vld [vmem:[#allocation2 + $0x98] sm:$0xff]
      %v373 = vld [vmem:[#allocation2 + $0xa0] sm:$0xff]
      %v374 = vld [vmem:[#allocation2 + $0xa8] sm:$0xff]
      %v375 = vld [vmem:[#allocation2 + $0xb0] sm:$0xff]
      %v376 = vld [vmem:[#allocation2 + $0xb8] sm:$0xff]
      %v377 = vld [vmem:[#allocation2 + $0xc0] sm:$0xff]
      %v378 = vld [vmem:[#allocation2 + $0xc8] sm:$0xff]
      %v379 = vld [vmem:[#allocation2 + $0xd0] sm:$0xff]
      %v380 = vld [vmem:[#allocation2 + $0xd8] sm:$0xff]
      %v381 = vld [vmem:[#allocation2 + $0xe0] sm:$0xff]
      %v382 = vld [vmem:[#allocation2 + $0xe8] sm:$0xff]
      %v383 = vld [vmem:[#allocation2 + $0xf0] sm:$0xff]
      %v384 = vld [vmem:[#allocation2 + $0xf8] sm:$0xff]
      %v385 = vld [vmem:[#allocation2 + $0x100] sm:$0xff]
      %v386 = vld [vmem:[#allocation2 + $0x108] sm:$0xff]
      %v387 = vld [vmem:[#allocation2 + $0x110] sm:$0xff]
      %v388 = vld [vmem:[#allocation2 + $0x118] sm:$0xff]
      %v389 = vld [vmem:[#allocation2 + $0x120] sm:$0xff]
      %v390 = vld [vmem:[#allocation2 + $0x128] sm:$0xff]
      %v391 = vld [vmem:[#allocation2 + $0x130] sm:$0xff]
      %v392 = vld [vmem:[#allocation2 + $0x138] sm:$0xff]
      %v393 = vld [vmem:[#allocation2 + $0x140] sm:$0xff]
      %v394 = vld [vmem:[#allocation2 + $0x148] sm:$0xff]
      %v437 = vunpack.c.l.b16 %v307
      %v438 = vunpack.c.l.b16 %v308
      %v439 = vunpack.c.l.b16 %v309
      %v440 = vunpack.c.l.b16 %v310
      %v441 = vunpack.c.l.b16 %v311
      %v442 = vunpack.c.l.b16 %v312
      %v443 = vunpack.c.l.b16 %v313
      %v444 = vunpack.c.l.b16 %v314
      %v445 = vunpack.c.l.b16 %v315
      %v446 = vunpack.c.l.b16 %v316
      %v447 = vunpack.c.l.b16 %v317
      %v448 = vunpack.c.l.b16 %v318
      %v449 = vunpack.c.l.b16 %v319
      %v450 = vunpack.c.l.b16 %v320
      %v451 = vunpack.c.l.b16 %v321
      %v452 = vunpack.c.l.b16 %v322
      %v453 = vunpack.c.l.b16 %v323
      %v454 = vunpack.c.l.b16 %v324
      %v455 = vunpack.c.l.b16 %v325
      %v456 = vunpack.c.l.b16 %v326
      %v457 = vunpack.c.l.b16 %v327
      %v458 = vunpack.c.l.b16 %v328
      %v459 = vunpack.c.l.b16 %v329
      %v460 = vunpack.c.l.b16 %v330
      %v461 = vunpack.c.l.b16 %v331
      %v462 = vunpack.c.l.b16 %v332
      %v463 = vunpack.c.l.b16 %v333
      %v464 = vunpack.c.l.b16 %v334
      %v465 = vunpack.c.l.b16 %v335
      %v466 = vunpack.c.l.b16 %v336
      %v467 = vunpack.c.l.b16 %v337
      %v468 = vunpack.c.l.b16 %v338
      %v469 = vunpack.c.l.b16 %v339
      %v470 = vunpack.c.l.b16 %v340
      %v471 = vunpack.c.l.b16 %v341
      %v472 = vunpack.c.l.b16 %v342
      %v473 = vunpack.c.l.b16 %v343
      %v474 = vunpack.c.l.b16 %v344
      %v475 = vunpack.c.l.b16 %v345
      %v476 = vunpack.c.l.b16 %v346
      %v477 = vunpack.c.l.b16 %v347
      %v478 = vunpack.c.l.b16 %v348
      %v479 = vpack.c.b16 %v438, %v437
      %v480 = vpack.c.b16 %v440, %v439
      %v481 = vpack.c.b16 %v442, %v441
      %v482 = vpack.c.b16 %v444, %v443
      %v483 = vpack.c.b16 %v446, %v445
      %v484 = vpack.c.b16 %v448, %v447
      %v485 = vpack.c.b16 %v450, %v449
      %v486 = vpack.c.b16 %v452, %v451
      %v487 = vpack.c.b16 %v454, %v453
      %v488 = vpack.c.b16 %v456, %v455
      %v489 = vpack.c.b16 %v458, %v457
      %v490 = vpack.c.b16 %v460, %v459
      %v491 = vpack.c.b16 %v462, %v461
      %v492 = vpack.c.b16 %v464, %v463
      %v493 = vpack.c.b16 %v466, %v465
      %v494 = vpack.c.b16 %v468, %v467
      %v495 = vpack.c.b16 %v470, %v469
      %v496 = vpack.c.b16 %v472, %v471
      %v497 = vpack.c.b16 %v474, %v473
      %v498 = vpack.c.b16 %v476, %v475
      %v499 = vpack.c.b16 %v478, %v477
      %v504 = vunpack.c.l.b16 %v349
      %v505 = vunpack.c.l.b16 %v350
      %v506 = vunpack.c.l.b16 %v351
      %v507 = vunpack.c.l.b16 %v352
      %v508 = vpack.c.b16 %v505, %v504
      %v509 = vpack.c.b16 %v507, %v506
      %vm512 = vcmask 261120
      %v514 = vsel %vm512, %v479, 0
      %v517 = vsel %vm512, %v480, 0
      %v520 = vsel %vm512, %v481, 0
      %v523 = vsel %vm512, %v482, 0
      %v526 = vsel %vm512, %v483, 0
      %v529 = vsel %vm512, %v484, 0
      %v532 = vsel %vm512, %v485, 0
      %v535 = vsel %vm512, %v486, 0
      %v538 = vsel %vm512, %v487, 0
      %v541 = vsel %vm512, %v488, 0
      %v544 = vsel %vm512, %v489, 0
      %v547 = vsel %vm512, %v490, 0
      %v550 = vsel %vm512, %v491, 0
      %v553 = vsel %vm512, %v492, 0
      %v556 = vsel %vm512, %v493, 0
      %v559 = vsel %vm512, %v494, 0
      %v562 = vsel %vm512, %v495, 0
      %v565 = vsel %vm512, %v496, 0
      %v568 = vsel %vm512, %v497, 0
      %v571 = vsel %vm512, %v498, 0
      %v574 = vsel %vm512, %v499, 0
      %576 = vmatpush.bf16.msra.mxu0 0
      %577 = vmatpush.bf16.msra.mxu0 0
      %578 = vmatpush.bf16.msra.mxu0 0
      %579 = vmatpush.bf16.msra.mxu0 0
      %580 = vmatpush.bf16.msra.mxu0 0
      %581 = vmatpush.bf16.msra.mxu0 0
      %582 = vmatpush.bf16.msra.mxu0 %v509
      %583 = vmatpush.bf16.msra.mxu0 %v508
      %584 = vmatmul.bf16.gmra.mxu0 %v514
      %v585 = vpop.f32.mrf.mxu0
      %v586 = vadd.f32 0.0, %v585
      %v587 = vpop.f32.mrf.mxu0
      %v588 = vadd.f32 0.0, %v587
      %589 = vmatmul.bf16.gmra.mxu0 %v517
      %v590 = vpop.f32.mrf.mxu0
      %v591 = vadd.f32 0.0, %v590
      %v592 = vpop.f32.mrf.mxu0
      %v593 = vadd.f32 0.0, %v592
      %594 = vmatmul.bf16.gmra.mxu0 %v520
      %v595 = vpop.f32.mrf.mxu0
      %v596 = vadd.f32 0.0, %v595
      %v597 = vpop.f32.mrf.mxu0
      %v598 = vadd.f32 0.0, %v597
      %599 = vmatmul.bf16.gmra.mxu0 %v523
      %v600 = vpop.f32.mrf.mxu0
      %v601 = vadd.f32 0.0, %v600
      %v602 = vpop.f32.mrf.mxu0
      %v603 = vadd.f32 0.0, %v602
      %604 = vmatmul.bf16.gmra.mxu0 %v526
      %v605 = vpop.f32.mrf.mxu0
      %v606 = vadd.f32 0.0, %v605
      %v607 = vpop.f32.mrf.mxu0
      %v608 = vadd.f32 0.0, %v607
      %609 = vmatmul.bf16.gmra.mxu0 %v529
      %v610 = vpop.f32.mrf.mxu0
      %v611 = vadd.f32 0.0, %v610
      %v612 = vpop.f32.mrf.mxu0
      %v613 = vadd.f32 0.0, %v612
      %614 = vmatmul.bf16.gmra.mxu0 %v532
      %v615 = vpop.f32.mrf.mxu0
      %v616 = vadd.f32 0.0, %v615
      %v617 = vpop.f32.mrf.mxu0
      %v618 = vadd.f32 0.0, %v617
      %619 = vmatmul.bf16.gmra.mxu0 %v535
      %v620 = vpop.f32.mrf.mxu0
      %v621 = vadd.f32 0.0, %v620
      %v622 = vpop.f32.mrf.mxu0
      %v623 = vadd.f32 0.0, %v622
      %624 = vmatmul.bf16.gmra.mxu0 %v538
      %v625 = vpop.f32.mrf.mxu0
      %v626 = vadd.f32 0.0, %v625
      %v627 = vpop.f32.mrf.mxu0
      %v628 = vadd.f32 0.0, %v627
      %629 = vmatmul.bf16.gmra.mxu0 %v541
      %v630 = vpop.f32.mrf.mxu0
      %v631 = vadd.f32 0.0, %v630
      %v632 = vpop.f32.mrf.mxu0
      %v633 = vadd.f32 0.0, %v632
      %634 = vmatmul.bf16.gmra.mxu0 %v544
      %v635 = vpop.f32.mrf.mxu0
      %v636 = vadd.f32 0.0, %v635
      %v637 = vpop.f32.mrf.mxu0
      %v638 = vadd.f32 0.0, %v637
      %639 = vmatmul.bf16.gmra.mxu0 %v547
      %v640 = vpop.f32.mrf.mxu0
      %v641 = vadd.f32 0.0, %v640
      %v642 = vpop.f32.mrf.mxu0
      %v643 = vadd.f32 0.0, %v642
      %644 = vmatmul.bf16.gmra.mxu0 %v550
      %v645 = vpop.f32.mrf.mxu0
      %v646 = vadd.f32 0.0, %v645
      %v647 = vpop.f32.mrf.mxu0
      %v648 = vadd.f32 0.0, %v647
      %649 = vmatmul.bf16.gmra.mxu0 %v553
      %v650 = vpop.f32.mrf.mxu0
      %v651 = vadd.f32 0.0, %v650
      %v652 = vpop.f32.mrf.mxu0
      %v653 = vadd.f32 0.0, %v652
      %654 = vmatmul.bf16.gmra.mxu0 %v556
      %v655 = vpop.f32.mrf.mxu0
      %v656 = vadd.f32 0.0, %v655
      %v657 = vpop.f32.mrf.mxu0
      %v658 = vadd.f32 0.0, %v657
      %659 = vmatmul.bf16.gmra.mxu0 %v559
      %v660 = vpop.f32.mrf.mxu0
      %v661 = vadd.f32 0.0, %v660
      %v662 = vpop.f32.mrf.mxu0
      %v663 = vadd.f32 0.0, %v662
      %664 = vmatmul.bf16.gmra.mxu0 %v562
      %v665 = vpop.f32.mrf.mxu0
      %v666 = vadd.f32 0.0, %v665
      %v667 = vpop.f32.mrf.mxu0
      %v668 = vadd.f32 0.0, %v667
      %669 = vmatmul.bf16.gmra.mxu0 %v565
      %v670 = vpop.f32.mrf.mxu0
      %v671 = vadd.f32 0.0, %v670
      %v672 = vpop.f32.mrf.mxu0
      %v673 = vadd.f32 0.0, %v672
      %674 = vmatmul.bf16.gmra.mxu0 %v568
      %v675 = vpop.f32.mrf.mxu0
      %v676 = vadd.f32 0.0, %v675
      %v677 = vpop.f32.mrf.mxu0
      %v678 = vadd.f32 0.0, %v677
      %679 = vmatmul.bf16.gmra.mxu0 %v571
      %v680 = vpop.f32.mrf.mxu0
      %v681 = vadd.f32 0.0, %v680
      %v682 = vpop.f32.mrf.mxu0
      %v683 = vadd.f32 0.0, %v682
      %684 = vmatmul.bf16.gmra.mxu0 %v574
      %v685 = vpop.f32.mrf.mxu0
      %v686 = vadd.f32 0.0, %v685
      %v687 = vpop.f32.mrf.mxu0
      %v688 = vadd.f32 0.0, %v687
      %689 = vdwg.mxu0
      %v690 = vadd.f32 %v353, %v586
      %v691 = vadd.f32 %v354, %v588
      %v692 = vadd.f32 %v355, %v591
      %v693 = vadd.f32 %v356, %v593
      %v694 = vadd.f32 %v357, %v596
      %v695 = vadd.f32 %v358, %v598
      %v696 = vadd.f32 %v359, %v601
      %v697 = vadd.f32 %v360, %v603
      %v698 = vadd.f32 %v361, %v606
      %v699 = vadd.f32 %v362, %v608
      %v700 = vadd.f32 %v363, %v611
      %v701 = vadd.f32 %v364, %v613
      %v702 = vadd.f32 %v365, %v616
      %v703 = vadd.f32 %v366, %v618
      %v704 = vadd.f32 %v367, %v621
      %v705 = vadd.f32 %v368, %v623
      %v706 = vadd.f32 %v369, %v626
      %v707 = vadd.f32 %v370, %v628
      %v708 = vadd.f32 %v371, %v631
      %v709 = vadd.f32 %v372, %v633
      %v710 = vadd.f32 %v373, %v636
      %v711 = vadd.f32 %v374, %v638
      %v712 = vadd.f32 %v375, %v641
      %v713 = vadd.f32 %v376, %v643
      %v714 = vadd.f32 %v377, %v646
      %v715 = vadd.f32 %v378, %v648
      %v716 = vadd.f32 %v379, %v651
      %v717 = vadd.f32 %v380, %v653
      %v718 = vadd.f32 %v381, %v656
      %v719 = vadd.f32 %v382, %v658
      %v720 = vadd.f32 %v383, %v661
      %v721 = vadd.f32 %v384, %v663
      %v722 = vadd.f32 %v385, %v666
      %v723 = vadd.f32 %v386, %v668
      %v724 = vadd.f32 %v387, %v671
      %v725 = vadd.f32 %v388, %v673
      %v726 = vadd.f32 %v389, %v676
      %v727 = vadd.f32 %v390, %v678
      %v728 = vadd.f32 %v391, %v681
      %v729 = vadd.f32 %v392, %v683
      %v730 = vadd.f32 %v393, %v686
      %v731 = vadd.f32 %v394, %v688
      %vm732 = vcmask 130048
      %733 = vst.msk [vmem:[#allocation2] sm:$0xff] %vm732, %v690
      %734 = vst.msk [vmem:[#allocation2 + $0x8] sm:$0xff] %vm732, %v691
      %735 = vst.msk [vmem:[#allocation2 + $0x10] sm:$0xff] %vm732, %v692
      %736 = vst.msk [vmem:[#allocation2 + $0x18] sm:$0xff] %vm732, %v693
      %737 = vst.msk [vmem:[#allocation2 + $0x20] sm:$0xff] %vm732, %v694
      %738 = vst.msk [vmem:[#allocation2 + $0x28] sm:$0xff] %vm732, %v695
      %739 = vst.msk [vmem:[#allocation2 + $0x30] sm:$0xff] %vm732, %v696
      %740 = vst.msk [vmem:[#allocation2 + $0x38] sm:$0xff] %vm732, %v697
      %741 = vst.msk [vmem:[#allocation2 + $0x40] sm:$0xff] %vm732, %v698
      %742 = vst.msk [vmem:[#allocation2 + $0x48] sm:$0xff] %vm732, %v699
      %743 = vst.msk [vmem:[#allocation2 + $0x50] sm:$0xff] %vm732, %v700
      %744 = vst.msk [vmem:[#allocation2 + $0x58] sm:$0xff] %vm732, %v701
      %745 = vst.msk [vmem:[#allocation2 + $0x60] sm:$0xff] %vm732, %v702
      %746 = vst.msk [vmem:[#allocation2 + $0x68] sm:$0xff] %vm732, %v703
      %747 = vst.msk [vmem:[#allocation2 + $0x70] sm:$0xff] %vm732, %v704
      %748 = vst.msk [vmem:[#allocation2 + $0x78] sm:$0xff] %vm732, %v705
      %749 = vst.msk [vmem:[#allocation2 + $0x80] sm:$0xff] %vm732, %v706
      %750 = vst.msk [vmem:[#allocation2 + $0x88] sm:$0xff] %vm732, %v707
      %751 = vst.msk [vmem:[#allocation2 + $0x90] sm:$0xff] %vm732, %v708
      %752 = vst.msk [vmem:[#allocation2 + $0x98] sm:$0xff] %vm732, %v709
      %753 = vst.msk [vmem:[#allocation2 + $0xa0] sm:$0xff] %vm732, %v710
      %754 = vst.msk [vmem:[#allocation2 + $0xa8] sm:$0xff] %vm732, %v711
      %755 = vst.msk [vmem:[#allocation2 + $0xb0] sm:$0xff] %vm732, %v712
      %756 = vst.msk [vmem:[#allocation2 + $0xb8] sm:$0xff] %vm732, %v713
      %757 = vst.msk [vmem:[#allocation2 + $0xc0] sm:$0xff] %vm732, %v714
      %758 = vst.msk [vmem:[#allocation2 + $0xc8] sm:$0xff] %vm732, %v715
      %759 = vst.msk [vmem:[#allocation2 + $0xd0] sm:$0xff] %vm732, %v716
      %760 = vst.msk [vmem:[#allocation2 + $0xd8] sm:$0xff] %vm732, %v717
      %761 = vst.msk [vmem:[#allocation2 + $0xe0] sm:$0xff] %vm732, %v718
      %762 = vst.msk [vmem:[#allocation2 + $0xe8] sm:$0xff] %vm732, %v719
      %763 = vst.msk [vmem:[#allocation2 + $0xf0] sm:$0xff] %vm732, %v720
      %764 = vst.msk [vmem:[#allocation2 + $0xf8] sm:$0xff] %vm732, %v721
      %765 = vst.msk [vmem:[#allocation2 + $0x100] sm:$0xff] %vm732, %v722
      %766 = vst.msk [vmem:[#allocation2 + $0x108] sm:$0xff] %vm732, %v723
      %767 = vst.msk [vmem:[#allocation2 + $0x110] sm:$0xff] %vm732, %v724
      %768 = vst.msk [vmem:[#allocation2 + $0x118] sm:$0xff] %vm732, %v725
      %769 = vst.msk [vmem:[#allocation2 + $0x120] sm:$0xff] %vm732, %v726
      %770 = vst.msk [vmem:[#allocation2 + $0x128] sm:$0xff] %vm732, %v727
      %771 = vst.msk [vmem:[#allocation2 + $0x130] sm:$0xff] %vm732, %v728
      %772 = vst.msk [vmem:[#allocation2 + $0x138] sm:$0xff] %vm732, %v729
      %773 = vst.msk [vmem:[#allocation2 + $0x140] sm:$0xff] %vm732, %v730
      %774 = vst.msk [vmem:[#allocation2 + $0x148] sm:$0xff] %vm732, %v731
      // Predicated region
      $region37: #{conv_ffn_forward.9} parent=31 // pred_check
        %p775 = pneg %p260
      $region38: #{conv_ffn_forward.9} parent=31 // pred_check_branch
        %777 = sbr.rel (%p775) target = $region40
      $region39: #{conv_ffn_forward.9} parent=31 // pred_region
        %v778 = vld [vmem:[#allocation2] sm:$0xff]
        %v779 = vld [vmem:[#allocation2 + $0x8] sm:$0xff]
        %v780 = vld [vmem:[#allocation2 + $0x10] sm:$0xff]
        %v781 = vld [vmem:[#allocation2 + $0x18] sm:$0xff]
        %v782 = vld [vmem:[#allocation2 + $0x20] sm:$0xff]
        %v783 = vld [vmem:[#allocation2 + $0x28] sm:$0xff]
        %v784 = vld [vmem:[#allocation2 + $0x30] sm:$0xff]
        %v785 = vld [vmem:[#allocation2 + $0x38] sm:$0xff]
        %v786 = vld [vmem:[#allocation2 + $0x40] sm:$0xff]
        %v787 = vld [vmem:[#allocation2 + $0x48] sm:$0xff]
        %v788 = vld [vmem:[#allocation2 + $0x50] sm:$0xff]
        %v789 = vld [vmem:[#allocation2 + $0x58] sm:$0xff]
        %v790 = vld [vmem:[#allocation2 + $0x60] sm:$0xff]
        %v791 = vld [vmem:[#allocation2 + $0x68] sm:$0xff]
        %v792 = vld [vmem:[#allocation2 + $0x70] sm:$0xff]
        %v793 = vld [vmem:[#allocation2 + $0x78] sm:$0xff]
        %v794 = vld [vmem:[#allocation2 + $0x80] sm:$0xff]
        %v795 = vld [vmem:[#allocation2 + $0x88] sm:$0xff]
        %v796 = vld [vmem:[#allocation2 + $0x90] sm:$0xff]
        %v797 = vld [vmem:[#allocation2 + $0x98] sm:$0xff]
        %v798 = vld [vmem:[#allocation2 + $0xa0] sm:$0xff]
        %v799 = vld [vmem:[#allocation2 + $0xa8] sm:$0xff]
        %v800 = vld [vmem:[#allocation2 + $0xb0] sm:$0xff]
        %v801 = vld [vmem:[#allocation2 + $0xb8] sm:$0xff]
        %v802 = vld [vmem:[#allocation2 + $0xc0] sm:$0xff]
        %v803 = vld [vmem:[#allocation2 + $0xc8] sm:$0xff]
        %v804 = vld [vmem:[#allocation2 + $0xd0] sm:$0xff]
        %v805 = vld [vmem:[#allocation2 + $0xd8] sm:$0xff]
        %v806 = vld [vmem:[#allocation2 + $0xe0] sm:$0xff]
        %v807 = vld [vmem:[#allocation2 + $0xe8] sm:$0xff]
        %v808 = vld [vmem:[#allocation2 + $0xf0] sm:$0xff]
        %v809 = vld [vmem:[#allocation2 + $0xf8] sm:$0xff]
        %v810 = vld [vmem:[#allocation2 + $0x100] sm:$0xff]
        %v811 = vld [vmem:[#allocation2 + $0x108] sm:$0xff]
        %v812 = vld [vmem:[#allocation2 + $0x110] sm:$0xff]
        %v813 = vld [vmem:[#allocation2 + $0x118] sm:$0xff]
        %v814 = vld [vmem:[#allocation2 + $0x120] sm:$0xff]
        %v815 = vld [vmem:[#allocation2 + $0x128] sm:$0xff]
        %v816 = vld [vmem:[#allocation2 + $0x130] sm:$0xff]
        %v817 = vld [vmem:[#allocation2 + $0x138] sm:$0xff]
        %v818 = vld [vmem:[#allocation2 + $0x140] sm:$0xff]
        %v819 = vld [vmem:[#allocation2 + $0x148] sm:$0xff]
        %v820 = vld [vmem:[%s249] sm:$0x1]
        %v822 = vperm.slane %v820, 0
        %v824 = vadd.f32 %v778, %v822
        %v825 = vadd.f32 %v779, %v822
        %v826 = vadd.f32 %v780, %v822
        %v827 = vadd.f32 %v781, %v822
        %v828 = vadd.f32 %v782, %v822
        %v829 = vadd.f32 %v783, %v822
        %v830 = vadd.f32 %v784, %v822
        %v831 = vadd.f32 %v785, %v822
        %v832 = vadd.f32 %v786, %v822
        %v833 = vadd.f32 %v787, %v822
        %v834 = vadd.f32 %v788, %v822
        %v835 = vadd.f32 %v789, %v822
        %v836 = vadd.f32 %v790, %v822
        %v837 = vadd.f32 %v791, %v822
        %v838 = vadd.f32 %v792, %v822
        %v839 = vadd.f32 %v793, %v822
        %v840 = vadd.f32 %v794, %v822
        %v841 = vadd.f32 %v795, %v822
        %v842 = vadd.f32 %v796, %v822
        %v843 = vadd.f32 %v797, %v822
        %v844 = vadd.f32 %v798, %v822
        %v845 = vadd.f32 %v799, %v822
        %v846 = vadd.f32 %v800, %v822
        %v847 = vadd.f32 %v801, %v822
        %v848 = vadd.f32 %v802, %v822
        %v849 = vadd.f32 %v803, %v822
        %v850 = vadd.f32 %v804, %v822
        %v851 = vadd.f32 %v805, %v822
        %v852 = vadd.f32 %v806, %v822
        %v853 = vadd.f32 %v807, %v822
        %v854 = vadd.f32 %v808, %v822
        %v855 = vadd.f32 %v809, %v822
        %v856 = vadd.f32 %v810, %v822
        %v857 = vadd.f32 %v811, %v822
        %v858 = vadd.f32 %v812, %v822
        %v859 = vadd.f32 %v813, %v822
        %v860 = vadd.f32 %v814, %v822
        %v861 = vadd.f32 %v815, %v822
        %v862 = vadd.f32 %v816, %v822
        %v863 = vadd.f32 %v817, %v822
        %v864 = vadd.f32 %v818, %v822
        %v865 = vadd.f32 %v819, %v822
        %866 = vst.msk [vmem:[%s257] sm:$0xff] %vm732, %v824
        %867 = vst.msk [vmem:[%s257 + $0x8] sm:$0xff] %vm732, %v825
        %868 = vst.msk [vmem:[%s257 + $0x10] sm:$0xff] %vm732, %v826
        %869 = vst.msk [vmem:[%s257 + $0x18] sm:$0xff] %vm732, %v827
        %870 = vst.msk [vmem:[%s257 + $0x20] sm:$0xff] %vm732, %v828
        %871 = vst.msk [vmem:[%s257 + $0x28] sm:$0xff] %vm732, %v829
        %872 = vst.msk [vmem:[%s257 + $0x30] sm:$0xff] %vm732, %v830
        %873 = vst.msk [vmem:[%s257 + $0x38] sm:$0xff] %vm732, %v831
        %874 = vst.msk [vmem:[%s257 + $0x40] sm:$0xff] %vm732, %v832
        %875 = vst.msk [vmem:[%s257 + $0x48] sm:$0xff] %vm732, %v833
        %876 = vst.msk [vmem:[%s257 + $0x50] sm:$0xff] %vm732, %v834
        %877 = vst.msk [vmem:[%s257 + $0x58] sm:$0xff] %vm732, %v835
        %878 = vst.msk [vmem:[%s257 + $0x60] sm:$0xff] %vm732, %v836
        %879 = vst.msk [vmem:[%s257 + $0x68] sm:$0xff] %vm732, %v837
        %880 = vst.msk [vmem:[%s257 + $0x70] sm:$0xff] %vm732, %v838
        %881 = vst.msk [vmem:[%s257 + $0x78] sm:$0xff] %vm732, %v839
        %882 = vst.msk [vmem:[%s257 + $0x80] sm:$0xff] %vm732, %v840
        %883 = vst.msk [vmem:[%s257 + $0x88] sm:$0xff] %vm732, %v841
        %884 = vst.msk [vmem:[%s257 + $0x90] sm:$0xff] %vm732, %v842
        %885 = vst.msk [vmem:[%s257 + $0x98] sm:$0xff] %vm732, %v843
        %886 = vst.msk [vmem:[%s257 + $0xa0] sm:$0xff] %vm732, %v844
        %887 = vst.msk [vmem:[%s257 + $0xa8] sm:$0xff] %vm732, %v845
        %888 = vst.msk [vmem:[%s257 + $0xb0] sm:$0xff] %vm732, %v846
        %889 = vst.msk [vmem:[%s257 + $0xb8] sm:$0xff] %vm732, %v847
        %890 = vst.msk [vmem:[%s257 + $0xc0] sm:$0xff] %vm732, %v848
        %891 = vst.msk [vmem:[%s257 + $0xc8] sm:$0xff] %vm732, %v849
        %892 = vst.msk [vmem:[%s257 + $0xd0] sm:$0xff] %vm732, %v850
        %893 = vst.msk [vmem:[%s257 + $0xd8] sm:$0xff] %vm732, %v851
        %894 = vst.msk [vmem:[%s257 + $0xe0] sm:$0xff] %vm732, %v852
        %895 = vst.msk [vmem:[%s257 + $0xe8] sm:$0xff] %vm732, %v853
        %896 = vst.msk [vmem:[%s257 + $0xf0] sm:$0xff] %vm732, %v854
        %897 = vst.msk [vmem:[%s257 + $0xf8] sm:$0xff] %vm732, %v855
        %898 = vst.msk [vmem:[%s257 + $0x100] sm:$0xff] %vm732, %v856
        %899 = vst.msk [vmem:[%s257 + $0x108] sm:$0xff] %vm732, %v857
        %900 = vst.msk [vmem:[%s257 + $0x110] sm:$0xff] %vm732, %v858
        %901 = vst.msk [vmem:[%s257 + $0x118] sm:$0xff] %vm732, %v859
        %902 = vst.msk [vmem:[%s257 + $0x120] sm:$0xff] %vm732, %v860
        %903 = vst.msk [vmem:[%s257 + $0x128] sm:$0xff] %vm732, %v861
        %904 = vst.msk [vmem:[%s257 + $0x130] sm:$0xff] %vm732, %v862
        %905 = vst.msk [vmem:[%s257 + $0x138] sm:$0xff] %vm732, %v863
        %906 = vst.msk [vmem:[%s257 + $0x140] sm:$0xff] %vm732, %v864
        %907 = vst.msk [vmem:[%s257 + $0x148] sm:$0xff] %vm732, %v865
      $region40: #{conv_ffn_forward.9} parent=31 // pred_fallthru
        _
      %s908 = smul.u32 42, %s19
      %p909 = scmp.lt.s32.totalorder %s908, 83
      %s910 = scalar_select %p909, %s908, 83
      %p911 = scmp.lt.s32.totalorder %s20, 0
      %s912 = scalar_select %p911, %s20, 0
      %s913 = sadd.s32 %s912, %s910
      %s914 = smul.addr %s913, 8
      %s915 = scalar_lea.vmem %s3, %s914
      // Predicated region
      $region41: #{conv_ffn_forward.9} parent=31 // pred_check
        %p916 = pneg %p135
      $region42: #{conv_ffn_forward.9} parent=31 // pred_check_branch
        %918 = sbr.rel (%p916) target = $region44
      $region43: #{conv_ffn_forward.9} parent=31 // pred_region
        %s919 = smul.u32 42, %s19
      $region44: #{conv_ffn_forward.9} parent=31 // pred_fallthru
        _
    $region32: #{conv_ffn_forward.9} parent=5 // pred_fallthru
      _
    %p920 = scmp.le.s32.totalorder 2, %s9
    // Predicated region
    $region45: #{conv_ffn_forward.9} parent=5 // pred_check
      %p921 = pneg %p920
    $region46: #{conv_ffn_forward.9} parent=5 // pred_check_branch
      %923 = sbr.rel (%p921) target = $region48
    $region47: #{conv_ffn_forward.9} parent=5 // pred_region
      %s924 = ssub.s32 %s9, 2
      // Predicated region
      $region49: #{conv_ffn_forward.9} parent=47 // pred_check
        %p925 = pneg %p141
      $region50: #{conv_ffn_forward.9} parent=47 // pred_check_branch
        %927 = sbr.rel (%p925) target = $region52
      $region51: #{conv_ffn_forward.9} parent=47 // pred_region
        %s928 = smul.u32 42, %s22
        %p929 = scmp.lt.s32.totalorder %s928, 83
        %s930 = scalar_select %p929, %s928, 83
        %p931 = scmp.lt.s32.totalorder %s23, 0
        %s932 = scalar_select %p931, %s23, 0
        %s933 = sadd.s32 %s932, %s930
        %s934 = smul.addr %s933, 8
        %s935 = scalar_lea.vmem %s3, %s934
      $region52: #{conv_ffn_forward.9} parent=47 // pred_fallthru
        _
    $region48: #{conv_ffn_forward.9} parent=5 // pred_fallthru
      _
  $region6: #{conv_ffn_forward.9} parent=0 // loop_footer
    %s13 = sadd.s32 1, %s9
  $region7: #{conv_ffn_forward.9} parent=0 // loop_footer_branch
    %8 = sbr.rel target = $region3
  $region8: #{conv_ffn_forward.9} parent=0 // loop_exit
    _

</llo_original>
